<compile_context>
chip_gen: v5e
topology: v5e:2x2
jax: 0.10.0
libtpu: 0.0.40
codegen_flags: <defaults>
</compile_context>

<pallas_src>
import jax
import jax.numpy as jnp
from jax import lax
from jax.experimental import pallas as pl
from jax.experimental.pallas import tpu as pltpu

NB = 8          # images per grid step (raise to 16 to fill the 256-wide MXU on v6e/v7x;
                # keep B/NB >= 2 on v7x so both TensorCores get grid steps)
C1P = 128       # conv1 out-channels, zero-padded (real: 10)
C2P = 128       # conv2 out-channels, zero-padded (real: 20)
R1 = 224        # conv1 im2col rows per image: 4 quadrants * 7 rows * 8 col-slots (8th = pad)
S2 = 49         # conv2 output locations per image (7 * 7)
K1 = 48         # conv1 im2col depth: 4 * 4 * 3
K2 = 16 * C1P   # conv2 im2col depth: 16 taps * padded channels


# ----------------------------------------------------------------------------
# The fused kernel: one grid step = NB images.
# ----------------------------------------------------------------------------
def _clf_kernel(a1_ref, w1_ref, b1_ref, w2_ref, b2_ref, w3_ref, b3_ref,
                w4_ref, b4_ref, out_ref, h1_ref):
    """Shapes:
      a1_ref : (NB*224, 48)  bf16  host im2col; rows ordered (quadrant, a, b_slot, image)
      w1_ref : (48, 128)     bf16  conv1 weight, rows = (ky, kx, cin)
      b1_ref : (1, 128)      f32
      w2_ref : (2048, 128)   bf16  conv2 weight, rows = (ky, kx, cin_pad128)
      b2_ref : (1, 128)      f32
      w3_ref : (49, 128, 128) bf16 fc1 weight as [spatial slot s, cin_pad128, 128]
      b3_ref : (1, 128)      f32
      w4_ref : (128, 128)    bf16  fc2 weight (cols >= 10 zero)
      b4_ref : (1, 128)      f32
      out_ref: (NB, 128)     f32   logits (cols >= 10 padding)
      h1_ref : (4, 8, 8, NB, 128) bf16 scratch: conv1 activation on the zero-padded
               16x16 grid split into 2x2 parity quadrants; quadrant q = 2*pr + pc
               holds padded positions (2a+pr, 2b+pc).
    """
    # ---- conv1 (+bias+ReLU): one MXU matmul, M = NB*224 --------------------
    r1 = jnp.dot(a1_ref[...], w1_ref[...], preferred_element_type=jnp.float32)
    r1 = jnp.maximum(r1 + b1_ref[...], 0.0).astype(jnp.bfloat16)      # (NB*224, 128)

    # ---- scatter into the quadrant scratch; re-zero only the 1-px border ---
    # (every cell conv2 reads is rewritten each step -> megacore / NaN safe)
    zb = jnp.zeros((8, NB, C1P), dtype=jnp.bfloat16)
    for q in range(4):
        pr, pc = q // 2, q % 2
        chunk = r1[q * 56 * NB:(q + 1) * 56 * NB].reshape(7, 8, NB, C1P)
        # interior: aligned (7, 7, NB, 128) store (full sublane x lane tiles)
        h1_ref[q, 1 - pr:8 - pr, 1 - pc:8 - pc, :, :] = chunk[:, 0:7]
        h1_ref[q, 7 * pr, :, :, :] = zb     # zero-pad row (top for pr=0, bottom for pr=1)
        h1_ref[q, :, 7 * pc, :, :] = zb     # zero-pad col (left for pc=0, right for pc=1)

    # ---- conv2 (+bias+ReLU): 16 contiguous tap slices, lane-concat at
    #      128-lane granularity (free) -> ONE (NB*49, 2048) x (2048, 128) matmul
    pieces = []
    for ky in range(4):
        for kx in range(4):
            q = 2 * (ky % 2) + (kx % 2)
            pieces.append(h1_ref[q, ky // 2:ky // 2 + 7, kx // 2:kx // 2 + 7, :, :])
    patch = jnp.concatenate(pieces, axis=-1)             # (7, 7, NB, 2048) bf16
    patch = patch.reshape(S2 * NB, K2)                   # rows ordered (s, image)
    feat = jnp.dot(patch, w2_ref[...], preferred_element_type=jnp.float32)
    feat = jnp.maximum(feat + b2_ref[...], 0.0)          # (NB*49, 128) f32

    # ---- fc1 (+bias+ReLU): features stay in VMEM.  Contract over (s, c) as a
    #      batched-over-s matmul + cheap cross-s VPU sum (avoids the costly
    #      (s, c)->lanes relayout a flat (NB, 6272) view would need). ---------
    feat3 = feat.astype(jnp.bfloat16).reshape(S2, NB, C2P)
    partial = jnp.einsum("snc,sck->snk", feat3, w3_ref[...],
                         preferred_element_type=jnp.float32)          # (49, NB, 128)
    h3 = jnp.maximum(jnp.sum(partial, axis=0) + b3_ref[...], 0.0)     # (NB, 128)

    # ---- fc2: lane-dense logits --------------------------------------------
    out_ref[...] = (jnp.dot(h3.astype(jnp.bfloat16), w4_ref[...],
                            preferred_element_type=jnp.float32) + b4_ref[...])


# ----------------------------------------------------------------------------
# Host-side (one pass of cheap XLA glue): NCHW -> bf16 conv1 im2col, rows
# ordered (grid step, quadrant, row a, col slot b, image).
# ----------------------------------------------------------------------------
def _prep_input(x_nchw, nb):
    B = x_nchw.shape[0]
    G = -(-B // nb)
    Bp = G * nb
    x = jnp.pad(x_nchw, ((0, Bp - B), (0, 0), (0, 0), (0, 0)))
    x = jnp.transpose(x, (0, 2, 3, 1))                        # (Bp, 28, 28, 3)
    x = jnp.pad(x, ((0, 0), (1, 1), (1, 1), (0, 0)))          # (Bp, 30, 30, 3)
    taps = [x[:, ky:ky + 28:2, kx:kx + 28:2, :]
            for ky in range(4) for kx in range(4)]            # each (Bp, 14, 14, 3)
    p = jnp.stack(taps, axis=3).reshape(Bp, 14, 14, K1)       # depth order (ky, kx, cin)
    quads = []
    for pr in range(2):
        for pc in range(2):
            g = p[:, 1 - pr::2, 1 - pc::2, :]                 # (Bp, 7, 7, 48)
            quads.append(jnp.pad(g, ((0, 0), (0, 0), (0, 1), (0, 0))))  # pad b to 8 slots
    a1 = jnp.stack(quads, axis=1)                             # (Bp, 4, 7, 8, 48)
    a1 = a1.reshape(G, nb, R1, K1).transpose(0, 2, 1, 3)      # (G, 224, NB, 48)
    return a1.reshape(G * R1 * nb, K1).astype(jnp.bfloat16), G


# ----------------------------------------------------------------------------
# One-time weight repack (padded / pre-transposed, bf16 for the MXU).
# ----------------------------------------------------------------------------
def prepare_params(params):
    # conv1: OIHW (10,3,4,4) -> (48, 128); row = (ky*4 + kx)*3 + cin.
    w1 = jnp.transpose(params["w1"], (2, 3, 1, 0)).reshape(K1, 10)
    w1p = jnp.pad(w1, ((0, 0), (0, C1P - 10))).astype(jnp.bfloat16)
    b1p = jnp.pad(params["b1"], (0, C1P - 10)).reshape(1, C1P).astype(jnp.float32)

    # conv2: OIHW (20,10,4,4) -> (2048, 128); row = (ky*4 + kx)*128 + cin_pad.
    w2 = jnp.transpose(params["w2"], (2, 3, 1, 0))            # (ky, kx, cin, cout)
    w2 = jnp.pad(w2, ((0, 0), (0, 0), (0, C1P - 10), (0, C2P - 20)))
    w2p = w2.reshape(K2, C2P).astype(jnp.bfloat16)
    b2p = jnp.pad(params["b2"], (0, C2P - 20)).reshape(1, C2P).astype(jnp.float32)

    # fc1: torch (128, 980) with input index c*49 + s  ->  (49, 128, 128) = [s, c_pad, k].
    w3 = params["w3"].reshape(128, 20, S2)                    # (k, c, s)
    w3 = jnp.transpose(w3, (2, 1, 0))                         # (s, c, k)
    w3p = jnp.pad(w3, ((0, 0), (0, C2P - 20), (0, 0))).astype(jnp.bfloat16)
    b3p = params["b3"].reshape(1, 128).astype(jnp.float32)

    # fc2: torch (10, 128) -> (128, 128) padded-N.
    w4p = jnp.pad(params["w4"].T, ((0, 0), (0, 118))).astype(jnp.bfloat16)
    b4p = jnp.pad(params["b4"], (0, 118)).reshape(1, 128).astype(jnp.float32)

    return {"w1p": w1p, "b1p": b1p, "w2p": w2p, "b2p": b2p,
            "w3p": w3p, "b3p": b3p, "w4p": w4p, "b4p": b4p}


# ----------------------------------------------------------------------------
# Full ClfImg forward: one fused pallas_call.
# ----------------------------------------------------------------------------
def clf_img_forward(x, prepped):
    B = x.shape[0]
    a1, G = _prep_input(x, NB)
    Bp = G * NB
    flops = 2 * Bp * (R1 * K1 * C1P + S2 * K2 * C2P + S2 * C2P * 128 + 128 * 128)
    bytes_accessed = (a1.size * 2 + Bp * 128 * 4 + 4 * 128 * 4 +
                      (K1 * C1P + K2 * C2P + S2 * C2P * 128 + 128 * 128) * 2)
    out = pl.pallas_call(
        _clf_kernel,
        out_shape=jax.ShapeDtypeStruct((Bp, 128), jnp.float32),
        grid=(G,),
        in_specs=[
            pl.BlockSpec((R1 * NB, K1), lambda g: (g, 0)),        # conv1 im2col (bf16)
            pl.BlockSpec((K1, C1P), lambda g: (0, 0)),            # w1 (resident)
            pl.BlockSpec((1, C1P), lambda g: (0, 0)),             # b1
            pl.BlockSpec((K2, C2P), lambda g: (0, 0)),            # w2 (resident)
            pl.BlockSpec((1, C2P), lambda g: (0, 0)),             # b2
            pl.BlockSpec((S2, C2P, 128), lambda g: (0, 0, 0)),    # w3 (resident)
            pl.BlockSpec((1, 128), lambda g: (0, 0)),             # b3
            pl.BlockSpec((128, 128), lambda g: (0, 0)),           # w4 (resident)
            pl.BlockSpec((1, 128), lambda g: (0, 0)),             # b4
        ],
        out_specs=pl.BlockSpec((NB, 128), lambda g: (g, 0)),
        scratch_shapes=[pltpu.VMEM((4, 8, 8, NB, C1P), jnp.bfloat16)],
        compiler_params=pltpu.CompilerParams(
            dimension_semantics=("parallel",),
            vmem_limit_bytes=32 * 1024 * 1024),
        cost_estimate=pl.CostEstimate(
            flops=flops, transcendentals=0, bytes_accessed=bytes_accessed),
    )(a1, prepped["w1p"], prepped["b1p"], prepped["w2p"], prepped["b2p"],
      prepped["w3p"], prepped["b3p"], prepped["w4p"], prepped["b4p"])
    return out[:B, :10]


# ----------------------------------------------------------------------------
# Plain-JAX f32 reference (for self-check)
# ----------------------------------------------------------------------------
def clf_img_reference(x, params):
    dn = ("NCHW", "OIHW", "NCHW")
    h = lax.conv_general_dilated(
        x, params["w1"], (2, 2), [(1, 1), (1, 1)], dimension_numbers=dn
    ) + params["b1"][None, :, None, None]
    h = jnp.maximum(h, 0.0)
    h = lax.conv_general_dilated(
        h, params["w2"], (2, 2), [(1, 1), (1, 1)], dimension_numbers=dn
    ) + params["b2"][None, :, None, None]
    h = jnp.maximum(h, 0.0)
    h = h.reshape(h.shape[0], -1)
    h = jnp.maximum(h @ params["w3"].T + params["b3"], 0.0)
    h = h @ params["w4"].T + params["b4"]
    return h


def init_params(key):
    ks = jax.random.split(key, 8)

    def uni(k, shape, fan_in):
        bound = 1.0 / jnp.sqrt(jnp.asarray(fan_in, jnp.float32))
        return jax.random.uniform(k, shape, jnp.float32, -bound, bound)

    return {
        "w1": uni(ks[0], (10, 3, 4, 4), 3 * 4 * 4),
        "b1": uni(ks[1], (10,), 3 * 4 * 4),
        "w2": uni(ks[2], (20, 10, 4, 4), 10 * 4 * 4),
        "b2": uni(ks[3], (20,), 10 * 4 * 4),
        "w3": uni(ks[4], (128, 980), 980),
        "b3": uni(ks[5], (128,), 980),
        "w4": uni(ks[6], (10, 128), 128),
        "b4": uni(ks[7], (10,), 128),
    }


if __name__ == "__main__":
    key = jax.random.PRNGKey(0)
    pkey, xkey = jax.random.split(key)
    params = init_params(pkey)
    prepped = prepare_params(params)   # one-time weight repack (outside hot path)

    # Input must be (B, 3, 28, 28): Linear(980, 128) implies 20 * 7 * 7 = 980.
    x = jax.random.normal(xkey, (2, 3, 28, 28), dtype=jnp.float32)

    fwd = jax.jit(clf_img_forward)
    out = jax.block_until_ready(fwd(x, prepped))
    assert out.shape == (2, 10), out.shape

    ref = clf_img_reference(x, params)
    max_err = float(jnp.max(jnp.abs(out - ref)))
    # bf16 MXU inputs with f32 accumulation -> loosened tolerance vs f32 ref.
    assert jnp.allclose(out, ref, rtol=5e-2, atol=5e-2), max_err

    print("KERNEL_OK")
</pallas_src>

<mosaic_0001>
module attributes {stable_mosaic.version = 11 : i64} {
  func.func @_clf_kernel(%arg0: i32, %arg1: memref<1792x48xbf16, #tpu.memory_space<vmem>>, %arg2: memref<48x128xbf16, #tpu.memory_space<vmem>>, %arg3: memref<1x128xf32, #tpu.memory_space<vmem>>, %arg4: memref<2048x128xbf16, #tpu.memory_space<vmem>>, %arg5: memref<1x128xf32, #tpu.memory_space<vmem>>, %arg6: memref<49x128x128xbf16, #tpu.memory_space<vmem>>, %arg7: memref<1x128xf32, #tpu.memory_space<vmem>>, %arg8: memref<128x128xbf16, #tpu.memory_space<vmem>>, %arg9: memref<1x128xf32, #tpu.memory_space<vmem>>, %arg10: memref<8x128xf32, #tpu.memory_space<vmem>>, %arg11: memref<4x8x8x8x128xbf16, #tpu.memory_space<vmem>>) attributes {dimension_semantics = [#tpu.dimension_semantics<parallel>], iteration_bounds = array<i64: 1>, scalar_prefetch = 0 : i64, scratch_operands = 1 : i64, tpu.core_type = #tpu.core_type<tc>, window_params = [{transform_indices = @transform_0, window_bounds = array<i64: 1792, 48>}, {pipeline_mode = #tpu.pipeline_mode<synchronous>, transform_indices = @transform_1, window_bounds = array<i64: 48, 128>}, {pipeline_mode = #tpu.pipeline_mode<synchronous>, transform_indices = @transform_2, window_bounds = array<i64: 1, 128>}, {pipeline_mode = #tpu.pipeline_mode<synchronous>, transform_indices = @transform_3, window_bounds = array<i64: 2048, 128>}, {pipeline_mode = #tpu.pipeline_mode<synchronous>, transform_indices = @transform_4, window_bounds = array<i64: 1, 128>}, {pipeline_mode = #tpu.pipeline_mode<synchronous>, transform_indices = @transform_5, window_bounds = array<i64: 49, 128, 128>}, {pipeline_mode = #tpu.pipeline_mode<synchronous>, transform_indices = @transform_6, window_bounds = array<i64: 1, 128>}, {pipeline_mode = #tpu.pipeline_mode<synchronous>, transform_indices = @transform_7, window_bounds = array<i64: 128, 128>}, {pipeline_mode = #tpu.pipeline_mode<synchronous>, transform_indices = @transform_8, window_bounds = array<i64: 1, 128>}, {transform_indices = @transform_9, window_bounds = array<i64: 8, 128>}]} {
    %c0 = arith.constant 0 : index
    %c0_0 = arith.constant 0 : index
    %0 = vector.load %arg1[%c0, %c0_0] : memref<1792x48xbf16, #tpu.memory_space<vmem>>, vector<1792x48xbf16>
    %c0_1 = arith.constant 0 : index
    %c0_2 = arith.constant 0 : index
    %1 = vector.load %arg2[%c0_1, %c0_2] : memref<48x128xbf16, #tpu.memory_space<vmem>>, vector<48x128xbf16>
    %cst = arith.constant dense<0.000000e+00> : vector<1792x128xf32>
    %2 = tpu.matmul %0, %1, %cst {dimension_numbers = #tpu.dot_dimension_numbers<[1], [0], [0], [1], [0, 0, 1, 1], [], []>} : vector<1792x48xbf16>, vector<48x128xbf16>, vector<1792x128xf32> -> vector<1792x128xf32>
    %c0_3 = arith.constant 0 : index
    %c0_4 = arith.constant 0 : index
    %3 = vector.load %arg3[%c0_3, %c0_4] : memref<1x128xf32, #tpu.memory_space<vmem>>, vector<1x128xf32>
    %4 = vector.broadcast %3 : vector<1x128xf32> to vector<1792x128xf32>
    %5 = arith.addf %2, %4 : vector<1792x128xf32>
    %cst_5 = arith.constant 0.000000e+00 : f32
    %6 = vector.broadcast %cst_5 : f32 to vector<1792x128xf32>
    %7 = arith.maximumf %5, %6 : vector<1792x128xf32>
    %8 = arith.truncf %7 : vector<1792x128xf32> to vector<1792x128xbf16>
    %cst_6 = arith.constant 0.000000e+00 : bf16
    %9 = vector.broadcast %cst_6 : bf16 to vector<8x8x128xbf16>
    %10 = vector.extract_strided_slice %8 {offsets = [0, 0], sizes = [448, 128], strides = [1, 1]} : vector<1792x128xbf16> to vector<448x128xbf16>
    %11 = vector.shape_cast %10 : vector<448x128xbf16> to vector<7x8x8x128xbf16>
    %12 = vector.extract_strided_slice %11 {offsets = [0, 0, 0, 0], sizes = [7, 7, 8, 128], strides = [1, 1, 1, 1]} : vector<7x8x8x128xbf16> to vector<7x7x8x128xbf16>
    %c0_7 = arith.constant 0 : index
    %c1 = arith.constant 1 : index
    %c1_8 = arith.constant 1 : index
    %c0_9 = arith.constant 0 : index
    %c0_10 = arith.constant 0 : index
    %13 = vector.load %arg11[%c0_7, %c1, %c1_8, %c0_9, %c0_10] : memref<4x8x8x8x128xbf16, #tpu.memory_space<vmem>>, vector<1x7x7x8x128xbf16>
    %14 = vector.shape_cast %13 : vector<1x7x7x8x128xbf16> to vector<7x7x8x128xbf16>
    %15 = vector.shape_cast %12 : vector<7x7x8x128xbf16> to vector<1x7x7x8x128xbf16>
    tpu.vector_store %arg11[%c0_7, %c1, %c1_8, %c0_9, %c0_10], %15 {strides = array<i32>} : memref<4x8x8x8x128xbf16, #tpu.memory_space<vmem>>, vector<1x7x7x8x128xbf16>,
    %c0_11 = arith.constant 0 : index
    %c0_12 = arith.constant 0 : index
    %c0_13 = arith.constant 0 : index
    %c0_14 = arith.constant 0 : index
    %c0_15 = arith.constant 0 : index
    %16 = vector.load %arg11[%c0_11, %c0_12, %c0_13, %c0_14, %c0_15] : memref<4x8x8x8x128xbf16, #tpu.memory_space<vmem>>, vector<1x1x8x8x128xbf16>
    %17 = vector.shape_cast %16 : vector<1x1x8x8x128xbf16> to vector<8x8x128xbf16>
    %18 = vector.shape_cast %9 : vector<8x8x128xbf16> to vector<1x1x8x8x128xbf16>
    tpu.vector_store %arg11[%c0_11, %c0_12, %c0_13, %c0_14, %c0_15], %18 {strides = array<i32>} : memref<4x8x8x8x128xbf16, #tpu.memory_space<vmem>>, vector<1x1x8x8x128xbf16>,
    %c0_16 = arith.constant 0 : index
    %c0_17 = arith.constant 0 : index
    %c0_18 = arith.constant 0 : index
    %c0_19 = arith.constant 0 : index
    %c0_20 = arith.constant 0 : index
    %19 = vector.load %arg11[%c0_16, %c0_17, %c0_18, %c0_19, %c0_20] : memref<4x8x8x8x128xbf16, #tpu.memory_space<vmem>>, vector<1x8x1x8x128xbf16>
    %20 = vector.shape_cast %19 : vector<1x8x1x8x128xbf16> to vector<8x8x128xbf16>
    %21 = vector.shape_cast %9 : vector<8x8x128xbf16> to vector<1x8x1x8x128xbf16>
    tpu.vector_store %arg11[%c0_16, %c0_17, %c0_18, %c0_19, %c0_20], %21 {strides = array<i32>} : memref<4x8x8x8x128xbf16, #tpu.memory_space<vmem>>, vector<1x8x1x8x128xbf16>,
    %22 = vector.extract_strided_slice %8 {offsets = [448, 0], sizes = [448, 128], strides = [1, 1]} : vector<1792x128xbf16> to vector<448x128xbf16>
    %23 = vector.shape_cast %22 : vector<448x128xbf16> to vector<7x8x8x128xbf16>
    %24 = vector.extract_strided_slice %23 {offsets = [0, 0, 0, 0], sizes = [7, 7, 8, 128], strides = [1, 1, 1, 1]} : vector<7x8x8x128xbf16> to vector<7x7x8x128xbf16>
    %c1_21 = arith.constant 1 : index
    %c1_22 = arith.constant 1 : index
    %c0_23 = arith.constant 0 : index
    %c0_24 = arith.constant 0 : index
    %c0_25 = arith.constant 0 : index
    %25 = vector.load %arg11[%c1_21, %c1_22, %c0_23, %c0_24, %c0_25] : memref<4x8x8x8x128xbf16, #tpu.memory_space<vmem>>, vector<1x7x7x8x128xbf16>
    %26 = vector.shape_cast %25 : vector<1x7x7x8x128xbf16> to vector<7x7x8x128xbf16>
    %27 = vector.shape_cast %24 : vector<7x7x8x128xbf16> to vector<1x7x7x8x128xbf16>
    tpu.vector_store %arg11[%c1_21, %c1_22, %c0_23, %c0_24, %c0_25], %27 {strides = array<i32>} : memref<4x8x8x8x128xbf16, #tpu.memory_space<vmem>>, vector<1x7x7x8x128xbf16>,
    %c1_26 = arith.constant 1 : index
    %c0_27 = arith.constant 0 : index
    %c0_28 = arith.constant 0 : index
    %c0_29 = arith.constant 0 : index
    %c0_30 = arith.constant 0 : index
    %28 = vector.load %arg11[%c1_26, %c0_27, %c0_28, %c0_29, %c0_30] : memref<4x8x8x8x128xbf16, #tpu.memory_space<vmem>>, vector<1x1x8x8x128xbf16>
    %29 = vector.shape_cast %28 : vector<1x1x8x8x128xbf16> to vector<8x8x128xbf16>
    %30 = vector.shape_cast %9 : vector<8x8x128xbf16> to vector<1x1x8x8x128xbf16>
    tpu.vector_store %arg11[%c1_26, %c0_27, %c0_28, %c0_29, %c0_30], %30 {strides = array<i32>} : memref<4x8x8x8x128xbf16, #tpu.memory_space<vmem>>, vector<1x1x8x8x128xbf16>,
    %c1_31 = arith.constant 1 : index
    %c0_32 = arith.constant 0 : index
    %c7 = arith.constant 7 : index
    %c0_33 = arith.constant 0 : index
    %c0_34 = arith.constant 0 : index
    %31 = vector.load %arg11[%c1_31, %c0_32, %c7, %c0_33, %c0_34] : memref<4x8x8x8x128xbf16, #tpu.memory_space<vmem>>, vector<1x8x1x8x128xbf16>
    %32 = vector.shape_cast %31 : vector<1x8x1x8x128xbf16> to vector<8x8x128xbf16>
    %33 = vector.shape_cast %9 : vector<8x8x128xbf16> to vector<1x8x1x8x128xbf16>
    tpu.vector_store %arg11[%c1_31, %c0_32, %c7, %c0_33, %c0_34], %33 {strides = array<i32>} : memref<4x8x8x8x128xbf16, #tpu.memory_space<vmem>>, vector<1x8x1x8x128xbf16>,
    %34 = vector.extract_strided_slice %8 {offsets = [896, 0], sizes = [448, 128], strides = [1, 1]} : vector<1792x128xbf16> to vector<448x128xbf16>
    %35 = vector.shape_cast %34 : vector<448x128xbf16> to vector<7x8x8x128xbf16>
    %36 = vector.extract_strided_slice %35 {offsets = [0, 0, 0, 0], sizes = [7, 7, 8, 128], strides = [1, 1, 1, 1]} : vector<7x8x8x128xbf16> to vector<7x7x8x128xbf16>
    %c2 = arith.constant 2 : index
    %c0_35 = arith.constant 0 : index
    %c1_36 = arith.constant 1 : index
    %c0_37 = arith.constant 0 : index
    %c0_38 = arith.constant 0 : index
    %37 = vector.load %arg11[%c2, %c0_35, %c1_36, %c0_37, %c0_38] : memref<4x8x8x8x128xbf16, #tpu.memory_space<vmem>>, vector<1x7x7x8x128xbf16>
    %38 = vector.shape_cast %37 : vector<1x7x7x8x128xbf16> to vector<7x7x8x128xbf16>
    %39 = vector.shape_cast %36 : vector<7x7x8x128xbf16> to vector<1x7x7x8x128xbf16>
    tpu.vector_store %arg11[%c2, %c0_35, %c1_36, %c0_37, %c0_38], %39 {strides = array<i32>} : memref<4x8x8x8x128xbf16, #tpu.memory_space<vmem>>, vector<1x7x7x8x128xbf16>,
    %c2_39 = arith.constant 2 : index
    %c7_40 = arith.constant 7 : index
    %c0_41 = arith.constant 0 : index
    %c0_42 = arith.constant 0 : index
    %c0_43 = arith.constant 0 : index
    %40 = vector.load %arg11[%c2_39, %c7_40, %c0_41, %c0_42, %c0_43] : memref<4x8x8x8x128xbf16, #tpu.memory_space<vmem>>, vector<1x1x8x8x128xbf16>
    %41 = vector.shape_cast %40 : vector<1x1x8x8x128xbf16> to vector<8x8x128xbf16>
    %42 = vector.shape_cast %9 : vector<8x8x128xbf16> to vector<1x1x8x8x128xbf16>
    tpu.vector_store %arg11[%c2_39, %c7_40, %c0_41, %c0_42, %c0_43], %42 {strides = array<i32>} : memref<4x8x8x8x128xbf16, #tpu.memory_space<vmem>>, vector<1x1x8x8x128xbf16>,
    %c2_44 = arith.constant 2 : index
    %c0_45 = arith.constant 0 : index
    %c0_46 = arith.constant 0 : index
    %c0_47 = arith.constant 0 : index
    %c0_48 = arith.constant 0 : index
    %43 = vector.load %arg11[%c2_44, %c0_45, %c0_46, %c0_47, %c0_48] : memref<4x8x8x8x128xbf16, #tpu.memory_space<vmem>>, vector<1x8x1x8x128xbf16>
    %44 = vector.shape_cast %43 : vector<1x8x1x8x128xbf16> to vector<8x8x128xbf16>
    %45 = vector.shape_cast %9 : vector<8x8x128xbf16> to vector<1x8x1x8x128xbf16>
    tpu.vector_store %arg11[%c2_44, %c0_45, %c0_46, %c0_47, %c0_48], %45 {strides = array<i32>} : memref<4x8x8x8x128xbf16, #tpu.memory_space<vmem>>, vector<1x8x1x8x128xbf16>,
    %46 = vector.extract_strided_slice %8 {offsets = [1344, 0], sizes = [448, 128], strides = [1, 1]} : vector<1792x128xbf16> to vector<448x128xbf16>
    %47 = vector.shape_cast %46 : vector<448x128xbf16> to vector<7x8x8x128xbf16>
    %48 = vector.extract_strided_slice %47 {offsets = [0, 0, 0, 0], sizes = [7, 7, 8, 128], strides = [1, 1, 1, 1]} : vector<7x8x8x128xbf16> to vector<7x7x8x128xbf16>
    %c3 = arith.constant 3 : index
    %c0_49 = arith.constant 0 : index
    %c0_50 = arith.constant 0 : index
    %c0_51 = arith.constant 0 : index
    %c0_52 = arith.constant 0 : index
    %49 = vector.load %arg11[%c3, %c0_49, %c0_50, %c0_51, %c0_52] : memref<4x8x8x8x128xbf16, #tpu.memory_space<vmem>>, vector<1x7x7x8x128xbf16>
    %50 = vector.shape_cast %49 : vector<1x7x7x8x128xbf16> to vector<7x7x8x128xbf16>
    %51 = vector.shape_cast %48 : vector<7x7x8x128xbf16> to vector<1x7x7x8x128xbf16>
    tpu.vector_store %arg11[%c3, %c0_49, %c0_50, %c0_51, %c0_52], %51 {strides = array<i32>} : memref<4x8x8x8x128xbf16, #tpu.memory_space<vmem>>, vector<1x7x7x8x128xbf16>,
    %c3_53 = arith.constant 3 : index
    %c7_54 = arith.constant 7 : index
    %c0_55 = arith.constant 0 : index
    %c0_56 = arith.constant 0 : index
    %c0_57 = arith.constant 0 : index
    %52 = vector.load %arg11[%c3_53, %c7_54, %c0_55, %c0_56, %c0_57] : memref<4x8x8x8x128xbf16, #tpu.memory_space<vmem>>, vector<1x1x8x8x128xbf16>
    %53 = vector.shape_cast %52 : vector<1x1x8x8x128xbf16> to vector<8x8x128xbf16>
    %54 = vector.shape_cast %9 : vector<8x8x128xbf16> to vector<1x1x8x8x128xbf16>
    tpu.vector_store %arg11[%c3_53, %c7_54, %c0_55, %c0_56, %c0_57], %54 {strides = array<i32>} : memref<4x8x8x8x128xbf16, #tpu.memory_space<vmem>>, vector<1x1x8x8x128xbf16>,
    %c3_58 = arith.constant 3 : index
    %c0_59 = arith.constant 0 : index
    %c7_60 = arith.constant 7 : index
    %c0_61 = arith.constant 0 : index
    %c0_62 = arith.constant 0 : index
    %55 = vector.load %arg11[%c3_58, %c0_59, %c7_60, %c0_61, %c0_62] : memref<4x8x8x8x128xbf16, #tpu.memory_space<vmem>>, vector<1x8x1x8x128xbf16>
    %56 = vector.shape_cast %55 : vector<1x8x1x8x128xbf16> to vector<8x8x128xbf16>
    %57 = vector.shape_cast %9 : vector<8x8x128xbf16> to vector<1x8x1x8x128xbf16>
    tpu.vector_store %arg11[%c3_58, %c0_59, %c7_60, %c0_61, %c0_62], %57 {strides = array<i32>} : memref<4x8x8x8x128xbf16, #tpu.memory_space<vmem>>, vector<1x8x1x8x128xbf16>,
    %c0_63 = arith.constant 0 : index
    %c0_64 = arith.constant 0 : index
    %c0_65 = arith.constant 0 : index
    %c0_66 = arith.constant 0 : index
    %c0_67 = arith.constant 0 : index
    %58 = vector.load %arg11[%c0_63, %c0_64, %c0_65, %c0_66, %c0_67] : memref<4x8x8x8x128xbf16, #tpu.memory_space<vmem>>, vector<1x7x7x8x128xbf16>
    %59 = vector.shape_cast %58 : vector<1x7x7x8x128xbf16> to vector<7x7x8x128xbf16>
    %c1_68 = arith.constant 1 : index
    %c0_69 = arith.constant 0 : index
    %c0_70 = arith.constant 0 : index
    %c0_71 = arith.constant 0 : index
    %c0_72 = arith.constant 0 : index
    %60 = vector.load %arg11[%c1_68, %c0_69, %c0_70, %c0_71, %c0_72] : memref<4x8x8x8x128xbf16, #tpu.memory_space<vmem>>, vector<1x7x7x8x128xbf16>
    %61 = vector.shape_cast %60 : vector<1x7x7x8x128xbf16> to vector<7x7x8x128xbf16>
    %c0_73 = arith.constant 0 : index
    %c0_74 = arith.constant 0 : index
    %c1_75 = arith.constant 1 : index
    %c0_76 = arith.constant 0 : index
    %c0_77 = arith.constant 0 : index
    %62 = vector.load %arg11[%c0_73, %c0_74, %c1_75, %c0_76, %c0_77] : memref<4x8x8x8x128xbf16, #tpu.memory_space<vmem>>, vector<1x7x7x8x128xbf16>
    %63 = vector.shape_cast %62 : vector<1x7x7x8x128xbf16> to vector<7x7x8x128xbf16>
    %c1_78 = arith.constant 1 : index
    %c0_79 = arith.constant 0 : index
    %c1_80 = arith.constant 1 : index
    %c0_81 = arith.constant 0 : index
    %c0_82 = arith.constant 0 : index
    %64 = vector.load %arg11[%c1_78, %c0_79, %c1_80, %c0_81, %c0_82] : memref<4x8x8x8x128xbf16, #tpu.memory_space<vmem>>, vector<1x7x7x8x128xbf16>
    %65 = vector.shape_cast %64 : vector<1x7x7x8x128xbf16> to vector<7x7x8x128xbf16>
    %c2_83 = arith.constant 2 : index
    %c0_84 = arith.constant 0 : index
    %c0_85 = arith.constant 0 : index
    %c0_86 = arith.constant 0 : index
    %c0_87 = arith.constant 0 : index
    %66 = vector.load %arg11[%c2_83, %c0_84, %c0_85, %c0_86, %c0_87] : memref<4x8x8x8x128xbf16, #tpu.memory_space<vmem>>, vector<1x7x7x8x128xbf16>
    %67 = vector.shape_cast %66 : vector<1x7x7x8x128xbf16> to vector<7x7x8x128xbf16>
    %c3_88 = arith.constant 3 : index
    %c0_89 = arith.constant 0 : index
    %c0_90 = arith.constant 0 : index
    %c0_91 = arith.constant 0 : index
    %c0_92 = arith.constant 0 : index
    %68 = vector.load %arg11[%c3_88, %c0_89, %c0_90, %c0_91, %c0_92] : memref<4x8x8x8x128xbf16, #tpu.memory_space<vmem>>, vector<1x7x7x8x128xbf16>
    %69 = vector.shape_cast %68 : vector<1x7x7x8x128xbf16> to vector<7x7x8x128xbf16>
    %c2_93 = arith.constant 2 : index
    %c0_94 = arith.constant 0 : index
    %c1_95 = arith.constant 1 : index
    %c0_96 = arith.constant 0 : index
    %c0_97 = arith.constant 0 : index
    %70 = vector.load %arg11[%c2_93, %c0_94, %c1_95, %c0_96, %c0_97] : memref<4x8x8x8x128xbf16, #tpu.memory_space<vmem>>, vector<1x7x7x8x128xbf16>
    %71 = vector.shape_cast %70 : vector<1x7x7x8x128xbf16> to vector<7x7x8x128xbf16>
    %c3_98 = arith.constant 3 : index
    %c0_99 = arith.constant 0 : index
    %c1_100 = arith.constant 1 : index
    %c0_101 = arith.constant 0 : index
    %c0_102 = arith.constant 0 : index
    %72 = vector.load %arg11[%c3_98, %c0_99, %c1_100, %c0_101, %c0_102] : memref<4x8x8x8x128xbf16, #tpu.memory_space<vmem>>, vector<1x7x7x8x128xbf16>
    %73 = vector.shape_cast %72 : vector<1x7x7x8x128xbf16> to vector<7x7x8x128xbf16>
    %c0_103 = arith.constant 0 : index
    %c1_104 = arith.constant 1 : index
    %c0_105 = arith.constant 0 : index
    %c0_106 = arith.constant 0 : index
    %c0_107 = arith.constant 0 : index
    %74 = vector.load %arg11[%c0_103, %c1_104, %c0_105, %c0_106, %c0_107] : memref<4x8x8x8x128xbf16, #tpu.memory_space<vmem>>, vector<1x7x7x8x128xbf16>
    %75 = vector.shape_cast %74 : vector<1x7x7x8x128xbf16> to vector<7x7x8x128xbf16>
    %c1_108 = arith.constant 1 : index
    %c1_109 = arith.constant 1 : index
    %c0_110 = arith.constant 0 : index
    %c0_111 = arith.constant 0 : index
    %c0_112 = arith.constant 0 : index
    %76 = vector.load %arg11[%c1_108, %c1_109, %c0_110, %c0_111, %c0_112] : memref<4x8x8x8x128xbf16, #tpu.memory_space<vmem>>, vector<1x7x7x8x128xbf16>
    %77 = vector.shape_cast %76 : vector<1x7x7x8x128xbf16> to vector<7x7x8x128xbf16>
    %c0_113 = arith.constant 0 : index
    %c1_114 = arith.constant 1 : index
    %c1_115 = arith.constant 1 : index
    %c0_116 = arith.constant 0 : index
    %c0_117 = arith.constant 0 : index
    %78 = vector.load %arg11[%c0_113, %c1_114, %c1_115, %c0_116, %c0_117] : memref<4x8x8x8x128xbf16, #tpu.memory_space<vmem>>, vector<1x7x7x8x128xbf16>
    %79 = vector.shape_cast %78 : vector<1x7x7x8x128xbf16> to vector<7x7x8x128xbf16>
    %c1_118 = arith.constant 1 : index
    %c1_119 = arith.constant 1 : index
    %c1_120 = arith.constant 1 : index
    %c0_121 = arith.constant 0 : index
    %c0_122 = arith.constant 0 : index
    %80 = vector.load %arg11[%c1_118, %c1_119, %c1_120, %c0_121, %c0_122] : memref<4x8x8x8x128xbf16, #tpu.memory_space<vmem>>, vector<1x7x7x8x128xbf16>
    %81 = vector.shape_cast %80 : vector<1x7x7x8x128xbf16> to vector<7x7x8x128xbf16>
    %c2_123 = arith.constant 2 : index
    %c1_124 = arith.constant 1 : index
    %c0_125 = arith.constant 0 : index
    %c0_126 = arith.constant 0 : index
    %c0_127 = arith.constant 0 : index
    %82 = vector.load %arg11[%c2_123, %c1_124, %c0_125, %c0_126, %c0_127] : memref<4x8x8x8x128xbf16, #tpu.memory_space<vmem>>, vector<1x7x7x8x128xbf16>
    %83 = vector.shape_cast %82 : vector<1x7x7x8x128xbf16> to vector<7x7x8x128xbf16>
    %c3_128 = arith.constant 3 : index
    %c1_129 = arith.constant 1 : index
    %c0_130 = arith.constant 0 : index
    %c0_131 = arith.constant 0 : index
    %c0_132 = arith.constant 0 : index
    %84 = vector.load %arg11[%c3_128, %c1_129, %c0_130, %c0_131, %c0_132] : memref<4x8x8x8x128xbf16, #tpu.memory_space<vmem>>, vector<1x7x7x8x128xbf16>
    %85 = vector.shape_cast %84 : vector<1x7x7x8x128xbf16> to vector<7x7x8x128xbf16>
    %c2_133 = arith.constant 2 : index
    %c1_134 = arith.constant 1 : index
    %c1_135 = arith.constant 1 : index
    %c0_136 = arith.constant 0 : index
    %c0_137 = arith.constant 0 : index
    %86 = vector.load %arg11[%c2_133, %c1_134, %c1_135, %c0_136, %c0_137] : memref<4x8x8x8x128xbf16, #tpu.memory_space<vmem>>, vector<1x7x7x8x128xbf16>
    %87 = vector.shape_cast %86 : vector<1x7x7x8x128xbf16> to vector<7x7x8x128xbf16>
    %c3_138 = arith.constant 3 : index
    %c1_139 = arith.constant 1 : index
    %c1_140 = arith.constant 1 : index
    %c0_141 = arith.constant 0 : index
    %c0_142 = arith.constant 0 : index
    %88 = vector.load %arg11[%c3_138, %c1_139, %c1_140, %c0_141, %c0_142] : memref<4x8x8x8x128xbf16, #tpu.memory_space<vmem>>, vector<1x7x7x8x128xbf16>
    %89 = vector.shape_cast %88 : vector<1x7x7x8x128xbf16> to vector<7x7x8x128xbf16>
    %90 = tpu.concatenate %59, %61, %63, %65, %67, %69, %71, %73, %75, %77, %79, %81, %83, %85, %87, %89 in 3 : vector<7x7x8x128xbf16>, vector<7x7x8x128xbf16>, vector<7x7x8x128xbf16>, vector<7x7x8x128xbf16>, vector<7x7x8x128xbf16>, vector<7x7x8x128xbf16>, vector<7x7x8x128xbf16>, vector<7x7x8x128xbf16>, vector<7x7x8x128xbf16>, vector<7x7x8x128xbf16>, vector<7x7x8x128xbf16>, vector<7x7x8x128xbf16>, vector<7x7x8x128xbf16>, vector<7x7x8x128xbf16>, vector<7x7x8x128xbf16>, vector<7x7x8x128xbf16> -> vector<7x7x8x2048xbf16>
    %91 = vector.shape_cast %90 : vector<7x7x8x2048xbf16> to vector<392x2048xbf16>
    %c0_143 = arith.constant 0 : index
    %c0_144 = arith.constant 0 : index
    %92 = vector.load %arg4[%c0_143, %c0_144] : memref<2048x128xbf16, #tpu.memory_space<vmem>>, vector<2048x128xbf16>
    %cst_145 = arith.constant dense<0.000000e+00> : vector<392x128xf32>
    %93 = tpu.matmul %91, %92, %cst_145 {dimension_numbers = #tpu.dot_dimension_numbers<[1], [0], [0], [1], [0, 0, 1, 1], [], []>} : vector<392x2048xbf16>, vector<2048x128xbf16>, vector<392x128xf32> -> vector<392x128xf32>
    %c0_146 = arith.constant 0 : index
    %c0_147 = arith.constant 0 : index
    %94 = vector.load %arg5[%c0_146, %c0_147] : memref<1x128xf32, #tpu.memory_space<vmem>>, vector<1x128xf32>
    %95 = vector.broadcast %94 : vector<1x128xf32> to vector<392x128xf32>
    %96 = arith.addf %93, %95 : vector<392x128xf32>
    %cst_148 = arith.constant 0.000000e+00 : f32
    %97 = vector.broadcast %cst_148 : f32 to vector<392x128xf32>
    %98 = arith.maximumf %96, %97 : vector<392x128xf32>
    %99 = arith.truncf %98 : vector<392x128xf32> to vector<392x128xbf16>
    %100 = vector.shape_cast %99 : vector<392x128xbf16> to vector<49x8x128xbf16>
    %c0_149 = arith.constant 0 : index
    %c0_150 = arith.constant 0 : index
    %c0_151 = arith.constant 0 : index
    %101 = vector.load %arg6[%c0_149, %c0_150, %c0_151] : memref<49x128x128xbf16, #tpu.memory_space<vmem>>, vector<49x128x128xbf16>
    "tpu.trace_start"() <{level = 10 : i32, message = "snc,sck->snk"}> : () -> ()
    %cst_152 = arith.constant dense<0.000000e+00> : vector<49x8x128xf32>
    %102 = tpu.matmul %100, %101, %cst_152 {dimension_numbers = #tpu.dot_dimension_numbers<[2], [1], [1], [2], [0, 0, 0, 1, 1, 2], [0], [0]>} : vector<49x8x128xbf16>, vector<49x128x128xbf16>, vector<49x8x128xf32> -> vector<49x8x128xf32>
    "tpu.trace_stop"() : () -> ()
    %cst_153 = arith.constant dense<0.000000e+00> : vector<8x128xf32>
    %103 = vector.multi_reduction <add>, %102, %cst_153 [0] : vector<49x8x128xf32> to vector<8x128xf32>
    %c0_154 = arith.constant 0 : index
    %c0_155 = arith.constant 0 : index
    %104 = vector.load %arg7[%c0_154, %c0_155] : memref<1x128xf32, #tpu.memory_space<vmem>>, vector<1x128xf32>
    %105 = vector.broadcast %104 : vector<1x128xf32> to vector<8x128xf32>
    %106 = arith.addf %103, %105 : vector<8x128xf32>
    %cst_156 = arith.constant 0.000000e+00 : f32
    %107 = vector.broadcast %cst_156 : f32 to vector<8x128xf32>
    %108 = arith.maximumf %106, %107 : vector<8x128xf32>
    %109 = arith.truncf %108 : vector<8x128xf32> to vector<8x128xbf16>
    %c0_157 = arith.constant 0 : index
    %c0_158 = arith.constant 0 : index
    %110 = vector.load %arg8[%c0_157, %c0_158] : memref<128x128xbf16, #tpu.memory_space<vmem>>, vector<128x128xbf16>
    %cst_159 = arith.constant dense<0.000000e+00> : vector<8x128xf32>
    %111 = tpu.matmul %109, %110, %cst_159 {dimension_numbers = #tpu.dot_dimension_numbers<[1], [0], [0], [1], [0, 0, 1, 1], [], []>} : vector<8x128xbf16>, vector<128x128xbf16>, vector<8x128xf32> -> vector<8x128xf32>
    %c0_160 = arith.constant 0 : index
    %c0_161 = arith.constant 0 : index
    %112 = vector.load %arg9[%c0_160, %c0_161] : memref<1x128xf32, #tpu.memory_space<vmem>>, vector<1x128xf32>
    %113 = vector.broadcast %112 : vector<1x128xf32> to vector<8x128xf32>
    %114 = arith.addf %111, %113 : vector<8x128xf32>
    %c0_162 = arith.constant 0 : index
    %c0_163 = arith.constant 0 : index
    %115 = vector.load %arg10[%c0_162, %c0_163] : memref<8x128xf32, #tpu.memory_space<vmem>>, vector<8x128xf32>
    tpu.vector_store %arg10[%c0_162, %c0_163], %114 {strides = array<i32>} : memref<8x128xf32, #tpu.memory_space<vmem>>, vector<8x128xf32>,
    return
  }
  func.func @transform_0(%arg0: i32) -> (i32, i32) {
    %c0_i32 = arith.constant 0 : i32
    %c0_i32_0 = arith.constant 0 : i32
    return %arg0, %c0_i32 : i32, i32
  }
  func.func @transform_1(%arg0: i32) -> (i32, i32) {
    %c0_i32 = arith.constant 0 : i32
    %c0_i32_0 = arith.constant 0 : i32
    %c0_i32_1 = arith.constant 0 : i32
    return %c0_i32, %c0_i32_0 : i32, i32
  }
  func.func @transform_2(%arg0: i32) -> (i32, i32) {
    %c0_i32 = arith.constant 0 : i32
    %c0_i32_0 = arith.constant 0 : i32
    %c0_i32_1 = arith.constant 0 : i32
    return %c0_i32, %c0_i32_0 : i32, i32
  }
  func.func @transform_3(%arg0: i32) -> (i32, i32) {
    %c0_i32 = arith.constant 0 : i32
    %c0_i32_0 = arith.constant 0 : i32
    %c0_i32_1 = arith.constant 0 : i32
    return %c0_i32, %c0_i32_0 : i32, i32
  }
  func.func @transform_4(%arg0: i32) -> (i32, i32) {
    %c0_i32 = arith.constant 0 : i32
    %c0_i32_0 = arith.constant 0 : i32
    %c0_i32_1 = arith.constant 0 : i32
    return %c0_i32, %c0_i32_0 : i32, i32
  }
  func.func @transform_5(%arg0: i32) -> (i32, i32, i32) {
    %c0_i32 = arith.constant 0 : i32
    %c0_i32_0 = arith.constant 0 : i32
    %c0_i32_1 = arith.constant 0 : i32
    %c0_i32_2 = arith.constant 0 : i32
    return %c0_i32, %c0_i32_0, %c0_i32_1 : i32, i32, i32
  }
  func.func @transform_6(%arg0: i32) -> (i32, i32) {
    %c0_i32 = arith.constant 0 : i32
    %c0_i32_0 = arith.constant 0 : i32
    %c0_i32_1 = arith.constant 0 : i32
    return %c0_i32, %c0_i32_0 : i32, i32
  }
  func.func @transform_7(%arg0: i32) -> (i32, i32) {
    %c0_i32 = arith.constant 0 : i32
    %c0_i32_0 = arith.constant 0 : i32
    %c0_i32_1 = arith.constant 0 : i32
    return %c0_i32, %c0_i32_0 : i32, i32
  }
  func.func @transform_8(%arg0: i32) -> (i32, i32) {
    %c0_i32 = arith.constant 0 : i32
    %c0_i32_0 = arith.constant 0 : i32
    %c0_i32_1 = arith.constant 0 : i32
    return %c0_i32, %c0_i32_0 : i32, i32
  }
  func.func @transform_9(%arg0: i32) -> (i32, i32) {
    %c0_i32 = arith.constant 0 : i32
    %c0_i32_0 = arith.constant 0 : i32
    return %arg0, %c0_i32 : i32, i32
  }
}

</mosaic_0001>

<llo_original>
// kernel: clf_img_forward.1
$region0: #{clf_img_forward.1}
  #allocation0 [shape = 'u32[]', space=smem, size = 0x4, offset = 0x4, fixed_abs, tag = 'smem constant byte address 0x4 - core index']
  #allocation1 [shape = 'u32[72,128]{1,0:T(1,128)}', space=vmem, size = 0x9000, scoped, tag = 'internal scratch']
  #allocation2 [shape = 'bf16[4,8,8,8,128]{4,3,2,1,0:T(8,128)(2,1)}', space=vmem, size = 0x80000, scoped, tag = 'scratch operand']
  %s0 = inlined_call_operand.vmem [shape: bf16[1792,48], index: 0, kind: input, shape index: {}]
  %s1 = inlined_call_operand.vmem [shape: bf16[48,128], index: 1, kind: input, shape index: {}]
  %s2 = inlined_call_operand.vmem [shape: f32[1,128], index: 2, kind: input, shape index: {}]
  %s3 = inlined_call_operand.vmem [shape: bf16[2048,128], index: 3, kind: input, shape index: {}]
  %s4 = inlined_call_operand.vmem [shape: f32[1,128], index: 4, kind: input, shape index: {}]
  %s5 = inlined_call_operand.vmem [shape: bf16[49,128,128], index: 5, kind: input, shape index: {}]
  %s6 = inlined_call_operand.vmem [shape: f32[1,128], index: 6, kind: input, shape index: {}]
  %s7 = inlined_call_operand.vmem [shape: bf16[128,128], index: 7, kind: input, shape index: {}]
  %s8 = inlined_call_operand.vmem [shape: f32[1,128], index: 8, kind: input, shape index: {}]
  %s9 = inlined_call_operand.vmem [shape: f32[8,128], index: 9, kind: output, shape index: {}]
  %s10 = sld [smem:[#allocation0]]
  $region46: #{clf_img_forward.1} parent=0
    _
  %s12 = ssub.s32 1, %s10
  %s13 = scalar_select 0, %s12, %s10
  // Predicated region
  $region2: #{clf_img_forward.1} parent=0 // pred_check
    _
  $region3: #{clf_img_forward.1} parent=0 // pred_check_branch
    %15 = sbr.rel (0) target = $region5
  $region4: #{clf_img_forward.1} parent=0 // pred_region
    _
  $region5: #{clf_img_forward.1} parent=0 // pred_fallthru
    _
  // Predicated region
  $region6: #{clf_img_forward.1} parent=0 // pred_check
    _
  $region7: #{clf_img_forward.1} parent=0 // pred_check_branch
    %17 = sbr.rel (0) target = $region9
  $region8: #{clf_img_forward.1} parent=0 // pred_region
    _
  $region9: #{clf_img_forward.1} parent=0 // pred_fallthru
    _
  // Predicated region
  $region10: #{clf_img_forward.1} parent=0 // pred_check
    _
  $region11: #{clf_img_forward.1} parent=0 // pred_check_branch
    %19 = sbr.rel (0) target = $region13
  $region12: #{clf_img_forward.1} parent=0 // pred_region
    _
  $region13: #{clf_img_forward.1} parent=0 // pred_fallthru
    _
  // Predicated region
  $region14: #{clf_img_forward.1} parent=0 // pred_check
    _
  $region15: #{clf_img_forward.1} parent=0 // pred_check_branch
    %21 = sbr.rel (0) target = $region17
  $region16: #{clf_img_forward.1} parent=0 // pred_region
    _
  $region17: #{clf_img_forward.1} parent=0 // pred_fallthru
    _
  // Predicated region
  $region18: #{clf_img_forward.1} parent=0 // pred_check
    _
  $region19: #{clf_img_forward.1} parent=0 // pred_check_branch
    %23 = sbr.rel (0) target = $region21
  $region20: #{clf_img_forward.1} parent=0 // pred_region
    _
  $region21: #{clf_img_forward.1} parent=0 // pred_fallthru
    _
  // Predicated region
  $region22: #{clf_img_forward.1} parent=0 // pred_check
    _
  $region23: #{clf_img_forward.1} parent=0 // pred_check_branch
    %25 = sbr.rel (0) target = $region25
  $region24: #{clf_img_forward.1} parent=0 // pred_region
    _
  $region25: #{clf_img_forward.1} parent=0 // pred_fallthru
    _
  // Predicated region
  $region26: #{clf_img_forward.1} parent=0 // pred_check
    _
  $region27: #{clf_img_forward.1} parent=0 // pred_check_branch
    %27 = sbr.rel (0) target = $region29
  $region28: #{clf_img_forward.1} parent=0 // pred_region
    _
  $region29: #{clf_img_forward.1} parent=0 // pred_fallthru
    _
  // Predicated region
  $region30: #{clf_img_forward.1} parent=0 // pred_check
    _
  $region31: #{clf_img_forward.1} parent=0 // pred_check_branch
    %29 = sbr.rel (0) target = $region33
  $region32: #{clf_img_forward.1} parent=0 // pred_region
    _
  $region33: #{clf_img_forward.1} parent=0 // pred_fallthru
    _
  // Predicated region
  $region34: #{clf_img_forward.1} parent=0 // pred_check
    _
  $region35: #{clf_img_forward.1} parent=0 // pred_check_branch
    %31 = sbr.rel (0) target = $region37
  $region36: #{clf_img_forward.1} parent=0 // pred_region
    _
  $region37: #{clf_img_forward.1} parent=0 // pred_fallthru
    _
  %v33 = vld [vmem:[%s0] sm:$0xf]
  %v34 = vld [vmem:[%s0 + $0x4] sm:$0xf]
  %v35 = vld [vmem:[%s0 + $0x8] sm:$0xf]
  %v36 = vld [vmem:[%s0 + $0xc] sm:$0xf]
  %v37 = vld [vmem:[%s0 + $0x10] sm:$0xf]
  %v38 = vld [vmem:[%s0 + $0x14] sm:$0xf]
  %v39 = vld [vmem:[%s0 + $0x18] sm:$0xf]
  %v40 = vld [vmem:[%s0 + $0x1c] sm:$0xf]
  %v41 = vld [vmem:[%s0 + $0x20] sm:$0xf]
  %v42 = vld [vmem:[%s0 + $0x24] sm:$0xf]
  %v43 = vld [vmem:[%s0 + $0x28] sm:$0xf]
  %v44 = vld [vmem:[%s0 + $0x2c] sm:$0xf]
  %v45 = vld [vmem:[%s0 + $0x30] sm:$0xf]
  %v46 = vld [vmem:[%s0 + $0x34] sm:$0xf]
  %v47 = vld [vmem:[%s0 + $0x38] sm:$0xf]
  %v48 = vld [vmem:[%s0 + $0x3c] sm:$0xf]
  %v49 = vld [vmem:[%s0 + $0x40] sm:$0xf]
  %v50 = vld [vmem:[%s0 + $0x44] sm:$0xf]
  %v51 = vld [vmem:[%s0 + $0x48] sm:$0xf]
  %v52 = vld [vmem:[%s0 + $0x4c] sm:$0xf]
  %v53 = vld [vmem:[%s0 + $0x50] sm:$0xf]
  %v54 = vld [vmem:[%s0 + $0x54] sm:$0xf]
  %v55 = vld [vmem:[%s0 + $0x58] sm:$0xf]
  %v56 = vld [vmem:[%s0 + $0x5c] sm:$0xf]
  %v57 = vld [vmem:[%s0 + $0x60] sm:$0xf]
  %v58 = vld [vmem:[%s0 + $0x64] sm:$0xf]
  %v59 = vld [vmem:[%s0 + $0x68] sm:$0xf]
  %v60 = vld [vmem:[%s0 + $0x6c] sm:$0xf]
  %v61 = vld [vmem:[%s0 + $0x70] sm:$0xf]
  %v62 = vld [vmem:[%s0 + $0x74] sm:$0xf]
  %v63 = vld [vmem:[%s0 + $0x78] sm:$0xf]
  %v64 = vld [vmem:[%s0 + $0x7c] sm:$0xf]
  %v65 = vld [vmem:[%s0 + $0x80] sm:$0xf]
  %v66 = vld [vmem:[%s0 + $0x84] sm:$0xf]
  %v67 = vld [vmem:[%s0 + $0x88] sm:$0xf]
  %v68 = vld [vmem:[%s0 + $0x8c] sm:$0xf]
  %v69 = vld [vmem:[%s0 + $0x90] sm:$0xf]
  %v70 = vld [vmem:[%s0 + $0x94] sm:$0xf]
  %v71 = vld [vmem:[%s0 + $0x98] sm:$0xf]
  %v72 = vld [vmem:[%s0 + $0x9c] sm:$0xf]
  %v73 = vld [vmem:[%s0 + $0xa0] sm:$0xf]
  %v74 = vld [vmem:[%s0 + $0xa4] sm:$0xf]
  %v75 = vld [vmem:[%s0 + $0xa8] sm:$0xf]
  %v76 = vld [vmem:[%s0 + $0xac] sm:$0xf]
  %v77 = vld [vmem:[%s0 + $0xb0] sm:$0xf]
  %v78 = vld [vmem:[%s0 + $0xb4] sm:$0xf]
  %v79 = vld [vmem:[%s0 + $0xb8] sm:$0xf]
  %v80 = vld [vmem:[%s0 + $0xbc] sm:$0xf]
  %v81 = vld [vmem:[%s0 + $0xc0] sm:$0xf]
  %v82 = vld [vmem:[%s0 + $0xc4] sm:$0xf]
  %v83 = vld [vmem:[%s0 + $0xc8] sm:$0xf]
  %v84 = vld [vmem:[%s0 + $0xcc] sm:$0xf]
  %v85 = vld [vmem:[%s0 + $0xd0] sm:$0xf]
  %v86 = vld [vmem:[%s0 + $0xd4] sm:$0xf]
  %v87 = vld [vmem:[%s0 + $0xd8] sm:$0xf]
  %v88 = vld [vmem:[%s0 + $0xdc] sm:$0xf]
  %v89 = vld [vmem:[%s0 + $0xe0] sm:$0xf]
  %v90 = vld [vmem:[%s0 + $0xe4] sm:$0xf]
  %v91 = vld [vmem:[%s0 + $0xe8] sm:$0xf]
  %v92 = vld [vmem:[%s0 + $0xec] sm:$0xf]
  %v93 = vld [vmem:[%s0 + $0xf0] sm:$0xf]
  %v94 = vld [vmem:[%s0 + $0xf4] sm:$0xf]
  %v95 = vld [vmem:[%s0 + $0xf8] sm:$0xf]
  %v96 = vld [vmem:[%s0 + $0xfc] sm:$0xf]
  %v97 = vld [vmem:[%s0 + $0x100] sm:$0xf]
  %v98 = vld [vmem:[%s0 + $0x104] sm:$0xf]
  %v99 = vld [vmem:[%s0 + $0x108] sm:$0xf]
  %v100 = vld [vmem:[%s0 + $0x10c] sm:$0xf]
  %v101 = vld [vmem:[%s0 + $0x110] sm:$0xf]
  %v102 = vld [vmem:[%s0 + $0x114] sm:$0xf]
  %v103 = vld [vmem:[%s0 + $0x118] sm:$0xf]
  %v104 = vld [vmem:[%s0 + $0x11c] sm:$0xf]
  %v105 = vld [vmem:[%s0 + $0x120] sm:$0xf]
  %v106 = vld [vmem:[%s0 + $0x124] sm:$0xf]
  %v107 = vld [vmem:[%s0 + $0x128] sm:$0xf]
  %v108 = vld [vmem:[%s0 + $0x12c] sm:$0xf]
  %v109 = vld [vmem:[%s0 + $0x130] sm:$0xf]
  %v110 = vld [vmem:[%s0 + $0x134] sm:$0xf]
  %v111 = vld [vmem:[%s0 + $0x138] sm:$0xf]
  %v112 = vld [vmem:[%s0 + $0x13c] sm:$0xf]
  %v113 = vld [vmem:[%s0 + $0x140] sm:$0xf]
  %v114 = vld [vmem:[%s0 + $0x144] sm:$0xf]
  %v115 = vld [vmem:[%s0 + $0x148] sm:$0xf]
  %v116 = vld [vmem:[%s0 + $0x14c] sm:$0xf]
  %v117 = vld [vmem:[%s0 + $0x150] sm:$0xf]
  %v118 = vld [vmem:[%s0 + $0x154] sm:$0xf]
  %v119 = vld [vmem:[%s0 + $0x158] sm:$0xf]
  %v120 = vld [vmem:[%s0 + $0x15c] sm:$0xf]
  %v121 = vld [vmem:[%s0 + $0x160] sm:$0xf]
  %v122 = vld [vmem:[%s0 + $0x164] sm:$0xf]
  %v123 = vld [vmem:[%s0 + $0x168] sm:$0xf]
  %v124 = vld [vmem:[%s0 + $0x16c] sm:$0xf]
  %v125 = vld [vmem:[%s0 + $0x170] sm:$0xf]
  %v126 = vld [vmem:[%s0 + $0x174] sm:$0xf]
  %v127 = vld [vmem:[%s0 + $0x178] sm:$0xf]
  %v128 = vld [vmem:[%s0 + $0x17c] sm:$0xf]
  %v129 = vld [vmem:[%s0 + $0x180] sm:$0xf]
  %v130 = vld [vmem:[%s0 + $0x184] sm:$0xf]
  %v131 = vld [vmem:[%s0 + $0x188] sm:$0xf]
  %v132 = vld [vmem:[%s0 + $0x18c] sm:$0xf]
  %v133 = vld [vmem:[%s0 + $0x190] sm:$0xf]
  %v134 = vld [vmem:[%s0 + $0x194] sm:$0xf]
  %v135 = vld [vmem:[%s0 + $0x198] sm:$0xf]
  %v136 = vld [vmem:[%s0 + $0x19c] sm:$0xf]
  %v137 = vld [vmem:[%s0 + $0x1a0] sm:$0xf]
  %v138 = vld [vmem:[%s0 + $0x1a4] sm:$0xf]
  %v139 = vld [vmem:[%s0 + $0x1a8] sm:$0xf]
  %v140 = vld [vmem:[%s0 + $0x1ac] sm:$0xf]
  %v141 = vld [vmem:[%s0 + $0x1b0] sm:$0xf]
  %v142 = vld [vmem:[%s0 + $0x1b4] sm:$0xf]
  %v143 = vld [vmem:[%s0 + $0x1b8] sm:$0xf]
  %v144 = vld [vmem:[%s0 + $0x1bc] sm:$0xf]
  %v145 = vld [vmem:[%s0 + $0x1c0] sm:$0xf]
  %v146 = vld [vmem:[%s0 + $0x1c4] sm:$0xf]
  %v147 = vld [vmem:[%s0 + $0x1c8] sm:$0xf]
  %v148 = vld [vmem:[%s0 + $0x1cc] sm:$0xf]
  %v149 = vld [vmem:[%s0 + $0x1d0] sm:$0xf]
  %v150 = vld [vmem:[%s0 + $0x1d4] sm:$0xf]
  %v151 = vld [vmem:[%s0 + $0x1d8] sm:$0xf]
  %v152 = vld [vmem:[%s0 + $0x1dc] sm:$0xf]
  %v153 = vld [vmem:[%s0 + $0x1e0] sm:$0xf]
  %v154 = vld [vmem:[%s0 + $0x1e4] sm:$0xf]
  %v155 = vld [vmem:[%s0 + $0x1e8] sm:$0xf]
  %v156 = vld [vmem:[%s0 + $0x1ec] sm:$0xf]
  %v157 = vld [vmem:[%s0 + $0x1f0] sm:$0xf]
  %v158 = vld [vmem:[%s0 + $0x1f4] sm:$0xf]
  %v159 = vld [vmem:[%s0 + $0x1f8] sm:$0xf]
  %v160 = vld [vmem:[%s0 + $0x1fc] sm:$0xf]
  %v161 = vld [vmem:[%s0 + $0x200] sm:$0xf]
  %v162 = vld [vmem:[%s0 + $0x204] sm:$0xf]
  %v163 = vld [vmem:[%s0 + $0x208] sm:$0xf]
  %v164 = vld [vmem:[%s0 + $0x20c] sm:$0xf]
  %v165 = vld [vmem:[%s0 + $0x210] sm:$0xf]
  %v166 = vld [vmem:[%s0 + $0x214] sm:$0xf]
  %v167 = vld [vmem:[%s0 + $0x218] sm:$0xf]
  %v168 = vld [vmem:[%s0 + $0x21c] sm:$0xf]
  %v169 = vld [vmem:[%s0 + $0x220] sm:$0xf]
  %v170 = vld [vmem:[%s0 + $0x224] sm:$0xf]
  %v171 = vld [vmem:[%s0 + $0x228] sm:$0xf]
  %v172 = vld [vmem:[%s0 + $0x22c] sm:$0xf]
  %v173 = vld [vmem:[%s0 + $0x230] sm:$0xf]
  %v174 = vld [vmem:[%s0 + $0x234] sm:$0xf]
  %v175 = vld [vmem:[%s0 + $0x238] sm:$0xf]
  %v176 = vld [vmem:[%s0 + $0x23c] sm:$0xf]
  %v177 = vld [vmem:[%s0 + $0x240] sm:$0xf]
  %v178 = vld [vmem:[%s0 + $0x244] sm:$0xf]
  %v179 = vld [vmem:[%s0 + $0x248] sm:$0xf]
  %v180 = vld [vmem:[%s0 + $0x24c] sm:$0xf]
  %v181 = vld [vmem:[%s0 + $0x250] sm:$0xf]
  %v182 = vld [vmem:[%s0 + $0x254] sm:$0xf]
  %v183 = vld [vmem:[%s0 + $0x258] sm:$0xf]
  %v184 = vld [vmem:[%s0 + $0x25c] sm:$0xf]
  %v185 = vld [vmem:[%s0 + $0x260] sm:$0xf]
  %v186 = vld [vmem:[%s0 + $0x264] sm:$0xf]
  %v187 = vld [vmem:[%s0 + $0x268] sm:$0xf]
  %v188 = vld [vmem:[%s0 + $0x26c] sm:$0xf]
  %v189 = vld [vmem:[%s0 + $0x270] sm:$0xf]
  %v190 = vld [vmem:[%s0 + $0x274] sm:$0xf]
  %v191 = vld [vmem:[%s0 + $0x278] sm:$0xf]
  %v192 = vld [vmem:[%s0 + $0x27c] sm:$0xf]
  %v193 = vld [vmem:[%s0 + $0x280] sm:$0xf]
  %v194 = vld [vmem:[%s0 + $0x284] sm:$0xf]
  %v195 = vld [vmem:[%s0 + $0x288] sm:$0xf]
  %v196 = vld [vmem:[%s0 + $0x28c] sm:$0xf]
  %v197 = vld [vmem:[%s0 + $0x290] sm:$0xf]
  %v198 = vld [vmem:[%s0 + $0x294] sm:$0xf]
  %v199 = vld [vmem:[%s0 + $0x298] sm:$0xf]
  %v200 = vld [vmem:[%s0 + $0x29c] sm:$0xf]
  %v201 = vld [vmem:[%s0 + $0x2a0] sm:$0xf]
  %v202 = vld [vmem:[%s0 + $0x2a4] sm:$0xf]
  %v203 = vld [vmem:[%s0 + $0x2a8] sm:$0xf]
  %v204 = vld [vmem:[%s0 + $0x2ac] sm:$0xf]
  %v205 = vld [vmem:[%s0 + $0x2b0] sm:$0xf]
  %v206 = vld [vmem:[%s0 + $0x2b4] sm:$0xf]
  %v207 = vld [vmem:[%s0 + $0x2b8] sm:$0xf]
  %v208 = vld [vmem:[%s0 + $0x2bc] sm:$0xf]
  %v209 = vld [vmem:[%s0 + $0x2c0] sm:$0xf]
  %v210 = vld [vmem:[%s0 + $0x2c4] sm:$0xf]
  %v211 = vld [vmem:[%s0 + $0x2c8] sm:$0xf]
  %v212 = vld [vmem:[%s0 + $0x2cc] sm:$0xf]
  %v213 = vld [vmem:[%s0 + $0x2d0] sm:$0xf]
  %v214 = vld [vmem:[%s0 + $0x2d4] sm:$0xf]
  %v215 = vld [vmem:[%s0 + $0x2d8] sm:$0xf]
  %v216 = vld [vmem:[%s0 + $0x2dc] sm:$0xf]
  %v217 = vld [vmem:[%s0 + $0x2e0] sm:$0xf]
  %v218 = vld [vmem:[%s0 + $0x2e4] sm:$0xf]
  %v219 = vld [vmem:[%s0 + $0x2e8] sm:$0xf]
  %v220 = vld [vmem:[%s0 + $0x2ec] sm:$0xf]
  %v221 = vld [vmem:[%s0 + $0x2f0] sm:$0xf]
  %v222 = vld [vmem:[%s0 + $0x2f4] sm:$0xf]
  %v223 = vld [vmem:[%s0 + $0x2f8] sm:$0xf]
  %v224 = vld [vmem:[%s0 + $0x2fc] sm:$0xf]
  %v225 = vld [vmem:[%s0 + $0x300] sm:$0xf]
  %v226 = vld [vmem:[%s0 + $0x304] sm:$0xf]
  %v227 = vld [vmem:[%s0 + $0x308] sm:$0xf]
  %v228 = vld [vmem:[%s0 + $0x30c] sm:$0xf]
  %v229 = vld [vmem:[%s0 + $0x310] sm:$0xf]
  %v230 = vld [vmem:[%s0 + $0x314] sm:$0xf]
  %v231 = vld [vmem:[%s0 + $0x318] sm:$0xf]
  %v232 = vld [vmem:[%s0 + $0x31c] sm:$0xf]
  %v233 = vld [vmem:[%s0 + $0x320] sm:$0xf]
  %v234 = vld [vmem:[%s0 + $0x324] sm:$0xf]
  %v235 = vld [vmem:[%s0 + $0x328] sm:$0xf]
  %v236 = vld [vmem:[%s0 + $0x32c] sm:$0xf]
  %v237 = vld [vmem:[%s0 + $0x330] sm:$0xf]
  %v238 = vld [vmem:[%s0 + $0x334] sm:$0xf]
  %v239 = vld [vmem:[%s0 + $0x338] sm:$0xf]
  %v240 = vld [vmem:[%s0 + $0x33c] sm:$0xf]
  %v241 = vld [vmem:[%s0 + $0x340] sm:$0xf]
  %v242 = vld [vmem:[%s0 + $0x344] sm:$0xf]
  %v243 = vld [vmem:[%s0 + $0x348] sm:$0xf]
  %v244 = vld [vmem:[%s0 + $0x34c] sm:$0xf]
  %v245 = vld [vmem:[%s0 + $0x350] sm:$0xf]
  %v246 = vld [vmem:[%s0 + $0x354] sm:$0xf]
  %v247 = vld [vmem:[%s0 + $0x358] sm:$0xf]
  %v248 = vld [vmem:[%s0 + $0x35c] sm:$0xf]
  %v249 = vld [vmem:[%s0 + $0x360] sm:$0xf]
  %v250 = vld [vmem:[%s0 + $0x364] sm:$0xf]
  %v251 = vld [vmem:[%s0 + $0x368] sm:$0xf]
  %v252 = vld [vmem:[%s0 + $0x36c] sm:$0xf]
  %v253 = vld [vmem:[%s0 + $0x370] sm:$0xf]
  %v254 = vld [vmem:[%s0 + $0x374] sm:$0xf]
  %v255 = vld [vmem:[%s0 + $0x378] sm:$0xf]
  %v256 = vld [vmem:[%s0 + $0x37c] sm:$0xf]
  %v257 = vld [vmem:[%s1] sm:$0xf]
  %v258 = vld [vmem:[%s1 + $0x4] sm:$0xf]
  %v259 = vld [vmem:[%s1 + $0x8] sm:$0xf]
  %v260 = vld [vmem:[%s1 + $0xc] sm:$0xf]
  %v261 = vld [vmem:[%s1 + $0x10] sm:$0xf]
  %v262 = vld [vmem:[%s1 + $0x14] sm:$0xf]
  %v263 = vld [vmem:[%s2] sm:$0x1]
  %v265 = vperm.slane %v263, 0
  %v491 = vunpack.c.l.b16 %v33
  %v492 = vunpack.c.l.b16 %v34
  %v493 = vunpack.c.l.b16 %v35
  %v494 = vunpack.c.l.b16 %v36
  %v495 = vunpack.c.l.b16 %v37
  %v496 = vunpack.c.l.b16 %v38
  %v497 = vunpack.c.l.b16 %v39
  %v498 = vunpack.c.l.b16 %v40
  %v499 = vunpack.c.l.b16 %v41
  %v500 = vunpack.c.l.b16 %v42
  %v501 = vunpack.c.l.b16 %v43
  %v502 = vunpack.c.l.b16 %v44
  %v503 = vunpack.c.l.b16 %v45
  %v504 = vunpack.c.l.b16 %v46
  %v505 = vunpack.c.l.b16 %v47
  %v506 = vunpack.c.l.b16 %v48
  %v507 = vunpack.c.l.b16 %v49
  %v508 = vunpack.c.l.b16 %v50
  %v509 = vunpack.c.l.b16 %v51
  %v510 = vunpack.c.l.b16 %v52
  %v511 = vunpack.c.l.b16 %v53
  %v512 = vunpack.c.l.b16 %v54
  %v513 = vunpack.c.l.b16 %v55
  %v514 = vunpack.c.l.b16 %v56
  %v515 = vunpack.c.l.b16 %v57
  %v516 = vunpack.c.l.b16 %v58
  %v517 = vunpack.c.l.b16 %v59
  %v518 = vunpack.c.l.b16 %v60
  %v519 = vunpack.c.l.b16 %v61
  %v520 = vunpack.c.l.b16 %v62
  %v521 = vunpack.c.l.b16 %v63
  %v522 = vunpack.c.l.b16 %v64
  %v523 = vunpack.c.l.b16 %v65
  %v524 = vunpack.c.l.b16 %v66
  %v525 = vunpack.c.l.b16 %v67
  %v526 = vunpack.c.l.b16 %v68
  %v527 = vunpack.c.l.b16 %v69
  %v528 = vunpack.c.l.b16 %v70
  %v529 = vunpack.c.l.b16 %v71
  %v530 = vunpack.c.l.b16 %v72
  %v531 = vunpack.c.l.b16 %v73
  %v532 = vunpack.c.l.b16 %v74
  %v533 = vunpack.c.l.b16 %v75
  %v534 = vunpack.c.l.b16 %v76
  %v535 = vunpack.c.l.b16 %v77
  %v536 = vunpack.c.l.b16 %v78
  %v537 = vunpack.c.l.b16 %v79
  %v538 = vunpack.c.l.b16 %v80
  %v539 = vunpack.c.l.b16 %v81
  %v540 = vunpack.c.l.b16 %v82
  %v541 = vunpack.c.l.b16 %v83
  %v542 = vunpack.c.l.b16 %v84
  %v543 = vunpack.c.l.b16 %v85
  %v544 = vunpack.c.l.b16 %v86
  %v545 = vunpack.c.l.b16 %v87
  %v546 = vunpack.c.l.b16 %v88
  %v547 = vunpack.c.l.b16 %v89
  %v548 = vunpack.c.l.b16 %v90
  %v549 = vunpack.c.l.b16 %v91
  %v550 = vunpack.c.l.b16 %v92
  %v551 = vunpack.c.l.b16 %v93
  %v552 = vunpack.c.l.b16 %v94
  %v553 = vunpack.c.l.b16 %v95
  %v554 = vunpack.c.l.b16 %v96
  %v555 = vunpack.c.l.b16 %v97
  %v556 = vunpack.c.l.b16 %v98
  %v557 = vunpack.c.l.b16 %v99
  %v558 = vunpack.c.l.b16 %v100
  %v559 = vunpack.c.l.b16 %v101
  %v560 = vunpack.c.l.b16 %v102
  %v561 = vunpack.c.l.b16 %v103
  %v562 = vunpack.c.l.b16 %v104
  %v563 = vunpack.c.l.b16 %v105
  %v564 = vunpack.c.l.b16 %v106
  %v565 = vunpack.c.l.b16 %v107
  %v566 = vunpack.c.l.b16 %v108
  %v567 = vunpack.c.l.b16 %v109
  %v568 = vunpack.c.l.b16 %v110
  %v569 = vunpack.c.l.b16 %v111
  %v570 = vunpack.c.l.b16 %v112
  %v571 = vunpack.c.l.b16 %v113
  %v572 = vunpack.c.l.b16 %v114
  %v573 = vunpack.c.l.b16 %v115
  %v574 = vunpack.c.l.b16 %v116
  %v575 = vunpack.c.l.b16 %v117
  %v576 = vunpack.c.l.b16 %v118
  %v577 = vunpack.c.l.b16 %v119
  %v578 = vunpack.c.l.b16 %v120
  %v579 = vunpack.c.l.b16 %v121
  %v580 = vunpack.c.l.b16 %v122
  %v581 = vunpack.c.l.b16 %v123
  %v582 = vunpack.c.l.b16 %v124
  %v583 = vunpack.c.l.b16 %v125
  %v584 = vunpack.c.l.b16 %v126
  %v585 = vunpack.c.l.b16 %v127
  %v586 = vunpack.c.l.b16 %v128
  %v587 = vunpack.c.l.b16 %v129
  %v588 = vunpack.c.l.b16 %v130
  %v589 = vunpack.c.l.b16 %v131
  %v590 = vunpack.c.l.b16 %v132
  %v591 = vunpack.c.l.b16 %v133
  %v592 = vunpack.c.l.b16 %v134
  %v593 = vunpack.c.l.b16 %v135
  %v594 = vunpack.c.l.b16 %v136
  %v595 = vunpack.c.l.b16 %v137
  %v596 = vunpack.c.l.b16 %v138
  %v597 = vunpack.c.l.b16 %v139
  %v598 = vunpack.c.l.b16 %v140
  %v599 = vunpack.c.l.b16 %v141
  %v600 = vunpack.c.l.b16 %v142
  %v601 = vunpack.c.l.b16 %v143
  %v602 = vunpack.c.l.b16 %v144
  %v603 = vunpack.c.l.b16 %v145
  %v604 = vunpack.c.l.b16 %v146
  %v605 = vunpack.c.l.b16 %v147
  %v606 = vunpack.c.l.b16 %v148
  %v607 = vunpack.c.l.b16 %v149
  %v608 = vunpack.c.l.b16 %v150
  %v609 = vunpack.c.l.b16 %v151
  %v610 = vunpack.c.l.b16 %v152
  %v611 = vunpack.c.l.b16 %v153
  %v612 = vunpack.c.l.b16 %v154
  %v613 = vunpack.c.l.b16 %v155
  %v614 = vunpack.c.l.b16 %v156
  %v615 = vunpack.c.l.b16 %v157
  %v616 = vunpack.c.l.b16 %v158
  %v617 = vunpack.c.l.b16 %v159
  %v618 = vunpack.c.l.b16 %v160
  %v619 = vunpack.c.l.b16 %v161
  %v620 = vunpack.c.l.b16 %v162
  %v621 = vunpack.c.l.b16 %v163
  %v622 = vunpack.c.l.b16 %v164
  %v623 = vunpack.c.l.b16 %v165
  %v624 = vunpack.c.l.b16 %v166
  %v625 = vunpack.c.l.b16 %v167
  %v626 = vunpack.c.l.b16 %v168
  %v627 = vunpack.c.l.b16 %v169
  %v628 = vunpack.c.l.b16 %v170
  %v629 = vunpack.c.l.b16 %v171
  %v630 = vunpack.c.l.b16 %v172
  %v631 = vunpack.c.l.b16 %v173
  %v632 = vunpack.c.l.b16 %v174
  %v633 = vunpack.c.l.b16 %v175
  %v634 = vunpack.c.l.b16 %v176
  %v635 = vunpack.c.l.b16 %v177
  %v636 = vunpack.c.l.b16 %v178
  %v637 = vunpack.c.l.b16 %v179
  %v638 = vunpack.c.l.b16 %v180
  %v639 = vunpack.c.l.b16 %v181
  %v640 = vunpack.c.l.b16 %v182
  %v641 = vunpack.c.l.b16 %v183
  %v642 = vunpack.c.l.b16 %v184
  %v643 = vunpack.c.l.b16 %v185
  %v644 = vunpack.c.l.b16 %v186
  %v645 = vunpack.c.l.b16 %v187
  %v646 = vunpack.c.l.b16 %v188
  %v647 = vunpack.c.l.b16 %v189
  %v648 = vunpack.c.l.b16 %v190
  %v649 = vunpack.c.l.b16 %v191
  %v650 = vunpack.c.l.b16 %v192
  %v651 = vunpack.c.l.b16 %v193
  %v652 = vunpack.c.l.b16 %v194
  %v653 = vunpack.c.l.b16 %v195
  %v654 = vunpack.c.l.b16 %v196
  %v655 = vunpack.c.l.b16 %v197
  %v656 = vunpack.c.l.b16 %v198
  %v657 = vunpack.c.l.b16 %v199
  %v658 = vunpack.c.l.b16 %v200
  %v659 = vunpack.c.l.b16 %v201
  %v660 = vunpack.c.l.b16 %v202
  %v661 = vunpack.c.l.b16 %v203
  %v662 = vunpack.c.l.b16 %v204
  %v663 = vunpack.c.l.b16 %v205
  %v664 = vunpack.c.l.b16 %v206
  %v665 = vunpack.c.l.b16 %v207
  %v666 = vunpack.c.l.b16 %v208
  %v667 = vunpack.c.l.b16 %v209
  %v668 = vunpack.c.l.b16 %v210
  %v669 = vunpack.c.l.b16 %v211
  %v670 = vunpack.c.l.b16 %v212
  %v671 = vunpack.c.l.b16 %v213
  %v672 = vunpack.c.l.b16 %v214
  %v673 = vunpack.c.l.b16 %v215
  %v674 = vunpack.c.l.b16 %v216
  %v675 = vunpack.c.l.b16 %v217
  %v676 = vunpack.c.l.b16 %v218
  %v677 = vunpack.c.l.b16 %v219
  %v678 = vunpack.c.l.b16 %v220
  %v679 = vunpack.c.l.b16 %v221
  %v680 = vunpack.c.l.b16 %v222
  %v681 = vunpack.c.l.b16 %v223
  %v682 = vunpack.c.l.b16 %v224
  %v683 = vunpack.c.l.b16 %v225
  %v684 = vunpack.c.l.b16 %v226
  %v685 = vunpack.c.l.b16 %v227
  %v686 = vunpack.c.l.b16 %v228
  %v687 = vunpack.c.l.b16 %v229
  %v688 = vunpack.c.l.b16 %v230
  %v689 = vunpack.c.l.b16 %v231
  %v690 = vunpack.c.l.b16 %v232
  %v691 = vunpack.c.l.b16 %v233
  %v692 = vunpack.c.l.b16 %v234
  %v693 = vunpack.c.l.b16 %v235
  %v694 = vunpack.c.l.b16 %v236
  %v695 = vunpack.c.l.b16 %v237
  %v696 = vunpack.c.l.b16 %v238
  %v697 = vunpack.c.l.b16 %v239
  %v698 = vunpack.c.l.b16 %v240
  %v699 = vunpack.c.l.b16 %v241
  %v700 = vunpack.c.l.b16 %v242
  %v701 = vunpack.c.l.b16 %v243
  %v702 = vunpack.c.l.b16 %v244
  %v703 = vunpack.c.l.b16 %v245
  %v704 = vunpack.c.l.b16 %v246
  %v705 = vunpack.c.l.b16 %v247
  %v706 = vunpack.c.l.b16 %v248
  %v707 = vunpack.c.l.b16 %v249
  %v708 = vunpack.c.l.b16 %v250
  %v709 = vunpack.c.l.b16 %v251
  %v710 = vunpack.c.l.b16 %v252
  %v711 = vunpack.c.l.b16 %v253
  %v712 = vunpack.c.l.b16 %v254
  %v713 = vunpack.c.l.b16 %v255
  %v714 = vunpack.c.l.b16 %v256
  %v715 = vpack.c.b16 %v492, %v491
  %v716 = vpack.c.b16 %v494, %v493
  %v717 = vpack.c.b16 %v496, %v495
  %v718 = vpack.c.b16 %v498, %v497
  %v719 = vpack.c.b16 %v500, %v499
  %v720 = vpack.c.b16 %v502, %v501
  %v721 = vpack.c.b16 %v504, %v503
  %v722 = vpack.c.b16 %v506, %v505
  %v723 = vpack.c.b16 %v508, %v507
  %v724 = vpack.c.b16 %v510, %v509
  %v725 = vpack.c.b16 %v512, %v511
  %v726 = vpack.c.b16 %v514, %v513
  %v727 = vpack.c.b16 %v516, %v515
  %v728 = vpack.c.b16 %v518, %v517
  %v729 = vpack.c.b16 %v520, %v519
  %v730 = vpack.c.b16 %v522, %v521
  %v731 = vpack.c.b16 %v524, %v523
  %v732 = vpack.c.b16 %v526, %v525
  %v733 = vpack.c.b16 %v528, %v527
  %v734 = vpack.c.b16 %v530, %v529
  %v735 = vpack.c.b16 %v532, %v531
  %v736 = vpack.c.b16 %v534, %v533
  %v737 = vpack.c.b16 %v536, %v535
  %v738 = vpack.c.b16 %v538, %v537
  %v739 = vpack.c.b16 %v540, %v539
  %v740 = vpack.c.b16 %v542, %v541
  %v741 = vpack.c.b16 %v544, %v543
  %v742 = vpack.c.b16 %v546, %v545
  %v743 = vpack.c.b16 %v548, %v547
  %v744 = vpack.c.b16 %v550, %v549
  %v745 = vpack.c.b16 %v552, %v551
  %v746 = vpack.c.b16 %v554, %v553
  %v747 = vpack.c.b16 %v556, %v555
  %v748 = vpack.c.b16 %v558, %v557
  %v749 = vpack.c.b16 %v560, %v559
  %v750 = vpack.c.b16 %v562, %v561
  %v751 = vpack.c.b16 %v564, %v563
  %v752 = vpack.c.b16 %v566, %v565
  %v753 = vpack.c.b16 %v568, %v567
  %v754 = vpack.c.b16 %v570, %v569
  %v755 = vpack.c.b16 %v572, %v571
  %v756 = vpack.c.b16 %v574, %v573
  %v757 = vpack.c.b16 %v576, %v575
  %v758 = vpack.c.b16 %v578, %v577
  %v759 = vpack.c.b16 %v580, %v579
  %v760 = vpack.c.b16 %v582, %v581
  %v761 = vpack.c.b16 %v584, %v583
  %v762 = vpack.c.b16 %v586, %v585
  %v763 = vpack.c.b16 %v588, %v587
  %v764 = vpack.c.b16 %v590, %v589
  %v765 = vpack.c.b16 %v592, %v591
  %v766 = vpack.c.b16 %v594, %v593
  %v767 = vpack.c.b16 %v596, %v595
  %v768 = vpack.c.b16 %v598, %v597
  %v769 = vpack.c.b16 %v600, %v599
  %v770 = vpack.c.b16 %v602, %v601
  %v771 = vpack.c.b16 %v604, %v603
  %v772 = vpack.c.b16 %v606, %v605
  %v773 = vpack.c.b16 %v608, %v607
  %v774 = vpack.c.b16 %v610, %v609
  %v775 = vpack.c.b16 %v612, %v611
  %v776 = vpack.c.b16 %v614, %v613
  %v777 = vpack.c.b16 %v616, %v615
  %v778 = vpack.c.b16 %v618, %v617
  %v779 = vpack.c.b16 %v620, %v619
  %v780 = vpack.c.b16 %v622, %v621
  %v781 = vpack.c.b16 %v624, %v623
  %v782 = vpack.c.b16 %v626, %v625
  %v783 = vpack.c.b16 %v628, %v627
  %v784 = vpack.c.b16 %v630, %v629
  %v785 = vpack.c.b16 %v632, %v631
  %v786 = vpack.c.b16 %v634, %v633
  %v787 = vpack.c.b16 %v636, %v635
  %v788 = vpack.c.b16 %v638, %v637
  %v789 = vpack.c.b16 %v640, %v639
  %v790 = vpack.c.b16 %v642, %v641
  %v791 = vpack.c.b16 %v644, %v643
  %v792 = vpack.c.b16 %v646, %v645
  %v793 = vpack.c.b16 %v648, %v647
  %v794 = vpack.c.b16 %v650, %v649
  %v795 = vpack.c.b16 %v652, %v651
  %v796 = vpack.c.b16 %v654, %v653
  %v797 = vpack.c.b16 %v656, %v655
  %v798 = vpack.c.b16 %v658, %v657
  %v799 = vpack.c.b16 %v660, %v659
  %v800 = vpack.c.b16 %v662, %v661
  %v801 = vpack.c.b16 %v664, %v663
  %v802 = vpack.c.b16 %v666, %v665
  %v803 = vpack.c.b16 %v668, %v667
  %v804 = vpack.c.b16 %v670, %v669
  %v805 = vpack.c.b16 %v672, %v671
  %v806 = vpack.c.b16 %v674, %v673
  %v807 = vpack.c.b16 %v676, %v675
  %v808 = vpack.c.b16 %v678, %v677
  %v809 = vpack.c.b16 %v680, %v679
  %v810 = vpack.c.b16 %v682, %v681
  %v811 = vpack.c.b16 %v684, %v683
  %v812 = vpack.c.b16 %v686, %v685
  %v813 = vpack.c.b16 %v688, %v687
  %v814 = vpack.c.b16 %v690, %v689
  %v815 = vpack.c.b16 %v692, %v691
  %v816 = vpack.c.b16 %v694, %v693
  %v817 = vpack.c.b16 %v696, %v695
  %v818 = vpack.c.b16 %v698, %v697
  %v819 = vpack.c.b16 %v700, %v699
  %v820 = vpack.c.b16 %v702, %v701
  %v821 = vpack.c.b16 %v704, %v703
  %v822 = vpack.c.b16 %v706, %v705
  %v823 = vpack.c.b16 %v708, %v707
  %v824 = vpack.c.b16 %v710, %v709
  %v825 = vpack.c.b16 %v712, %v711
  %v826 = vpack.c.b16 %v714, %v713
  %v833 = vunpack.c.l.b16 %v257
  %v834 = vunpack.c.l.b16 %v258
  %v835 = vunpack.c.l.b16 %v259
  %v836 = vunpack.c.l.b16 %v260
  %v837 = vunpack.c.l.b16 %v261
  %v838 = vunpack.c.l.b16 %v262
  %v839 = vpack.c.b16 %v834, %v833
  %v840 = vpack.c.b16 %v836, %v835
  %v841 = vpack.c.b16 %v838, %v837
  %vm845 = vcmask 392192
  %v847 = vsel %vm845, %v715, 0
  %v850 = vsel %vm845, %v716, 0
  %v853 = vsel %vm845, %v717, 0
  %v856 = vsel %vm845, %v718, 0
  %v859 = vsel %vm845, %v719, 0
  %v862 = vsel %vm845, %v720, 0
  %v865 = vsel %vm845, %v721, 0
  %v868 = vsel %vm845, %v722, 0
  %v871 = vsel %vm845, %v723, 0
  %v874 = vsel %vm845, %v724, 0
  %v877 = vsel %vm845, %v725, 0
  %v880 = vsel %vm845, %v726, 0
  %v883 = vsel %vm845, %v727, 0
  %v886 = vsel %vm845, %v728, 0
  %v889 = vsel %vm845, %v729, 0
  %v892 = vsel %vm845, %v730, 0
  %v895 = vsel %vm845, %v731, 0
  %v898 = vsel %vm845, %v732, 0
  %v901 = vsel %vm845, %v733, 0
  %v904 = vsel %vm845, %v734, 0
  %v907 = vsel %vm845, %v735, 0
  %v910 = vsel %vm845, %v736, 0
  %v913 = vsel %vm845, %v737, 0
  %v916 = vsel %vm845, %v738, 0
  %v919 = vsel %vm845, %v739, 0
  %v922 = vsel %vm845, %v740, 0
  %v925 = vsel %vm845, %v741, 0
  %v928 = vsel %vm845, %v742, 0
  %v931 = vsel %vm845, %v743, 0
  %v934 = vsel %vm845, %v744, 0
  %v937 = vsel %vm845, %v745, 0
  %v940 = vsel %vm845, %v746, 0
  %v943 = vsel %vm845, %v747, 0
  %v946 = vsel %vm845, %v748, 0
  %v949 = vsel %vm845, %v749, 0
  %v952 = vsel %vm845, %v750, 0
  %v955 = vsel %vm845, %v751, 0
  %v958 = vsel %vm845, %v752, 0
  %v961 = vsel %vm845, %v753, 0
  %v964 = vsel %vm845, %v754, 0
  %v967 = vsel %vm845, %v755, 0
  %v970 = vsel %vm845, %v756, 0
  %v973 = vsel %vm845, %v757, 0
  %v976 = vsel %vm845, %v758, 0
  %v979 = vsel %vm845, %v759, 0
  %v982 = vsel %vm845, %v760, 0
  %v985 = vsel %vm845, %v761, 0
  %v988 = vsel %vm845, %v762, 0
  %v991 = vsel %vm845, %v763, 0
  %v994 = vsel %vm845, %v764, 0
  %v997 = vsel %vm845, %v765, 0
  %v1000 = vsel %vm845, %v766, 0
  %v1003 = vsel %vm845, %v767, 0
  %v1006 = vsel %vm845, %v768, 0
  %v1009 = vsel %vm845, %v769, 0
  %v1012 = vsel %vm845, %v770, 0
  %v1015 = vsel %vm845, %v771, 0
  %v1018 = vsel %vm845, %v772, 0
  %v1021 = vsel %vm845, %v773, 0
  %v1024 = vsel %vm845, %v774, 0
  %v1027 = vsel %vm845, %v775, 0
  %v1030 = vsel %vm845, %v776, 0
  %v1033 = vsel %vm845, %v777, 0
  %v1036 = vsel %vm845, %v778, 0
  %v1039 = vsel %vm845, %v779, 0
  %v1042 = vsel %vm845, %v780, 0
  %v1045 = vsel %vm845, %v781, 0
  %v1048 = vsel %vm845, %v782, 0
  %v1051 = vsel %vm845, %v783, 0
  %v1054 = vsel %vm845, %v784, 0
  %v1057 = vsel %vm845, %v785, 0
  %v1060 = vsel %vm845, %v786, 0
  %v1063 = vsel %vm845, %v787, 0
  %v1066 = vsel %vm845, %v788, 0
  %v1069 = vsel %vm845, %v789, 0
  %v1072 = vsel %vm845, %v790, 0
  %v1075 = vsel %vm845, %v791, 0
  %v1078 = vsel %vm845, %v792, 0
  %v1081 = vsel %vm845, %v793, 0
  %v1084 = vsel %vm845, %v794, 0
  %v1087 = vsel %vm845, %v795, 0
  %v1090 = vsel %vm845, %v796, 0
  %v1093 = vsel %vm845, %v797, 0
  %v1096 = vsel %vm845, %v798, 0
  %v1099 = vsel %vm845, %v799, 0
  %v1102 = vsel %vm845, %v800, 0
  %v1105 = vsel %vm845, %v801, 0
  %v1108 = vsel %vm845, %v802, 0
  %v1111 = vsel %vm845, %v803, 0
  %v1114 = vsel %vm845, %v804, 0
  %v1117 = vsel %vm845, %v805, 0
  %v1120 = vsel %vm845, %v806, 0
  %v1123 = vsel %vm845, %v807, 0
  %v1126 = vsel %vm845, %v808, 0
  %v1129 = vsel %vm845, %v809, 0
  %v1132 = vsel %vm845, %v810, 0
  %v1135 = vsel %vm845, %v811, 0
  %v1138 = vsel %vm845, %v812, 0
  %v1141 = vsel %vm845, %v813, 0
  %v1144 = vsel %vm845, %v814, 0
  %v1147 = vsel %vm845, %v815, 0
  %v1150 = vsel %vm845, %v816, 0
  %v1153 = vsel %vm845, %v817, 0
  %v1156 = vsel %vm845, %v818, 0
  %v1159 = vsel %vm845, %v819, 0
  %v1162 = vsel %vm845, %v820, 0
  %v1165 = vsel %vm845, %v821, 0
  %v1168 = vsel %vm845, %v822, 0
  %v1171 = vsel %vm845, %v823, 0
  %v1174 = vsel %vm845, %v824, 0
  %v1177 = vsel %vm845, %v825, 0
  %v1180 = vsel %vm845, %v826, 0
  %1182 = vmatpush.bf16.msra.mxu0 0
  %1183 = vmatpush.bf16.msra.mxu0 0
  %1184 = vmatpush.bf16.msra.mxu0 0
  %1185 = vmatpush.bf16.msra.mxu0 0
  %1186 = vmatpush.bf16.msra.mxu0 0
  %1187 = vmatpush.bf16.msra.mxu0 %v841
  %1188 = vmatpush.bf16.msra.mxu0 %v840
  %1189 = vmatpush.bf16.msra.mxu0 %v839
  %1190 = vmatmul.bf16.gmra.mxu0 %v847
  %v1191 = vpop.f32.mrf.mxu0
  %v1192 = vadd.f32 %v265, %v1191
  %v1193 = vpop.f32.mrf.mxu0
  %v1194 = vadd.f32 %v265, %v1193
  %1195 = vmatmul.bf16.gmra.mxu0 %v850
  %v1196 = vpop.f32.mrf.mxu0
  %v1197 = vadd.f32 %v265, %v1196
  %v1198 = vpop.f32.mrf.mxu0
  %v1199 = vadd.f32 %v265, %v1198
  %1200 = vmatmul.bf16.gmra.mxu0 %v853
  %v1201 = vpop.f32.mrf.mxu0
  %v1202 = vadd.f32 %v265, %v1201
  %v1203 = vpop.f32.mrf.mxu0
  %v1204 = vadd.f32 %v265, %v1203
  %1205 = vmatmul.bf16.gmra.mxu0 %v856
  %v1206 = vpop.f32.mrf.mxu0
  %v1207 = vadd.f32 %v265, %v1206
  %v1208 = vpop.f32.mrf.mxu0
  %1209 = vmatmul.bf16.gmra.mxu0 %v859
  %v1210 = vpop.f32.mrf.mxu0
  %v1211 = vadd.f32 %v265, %v1210
  %v1212 = vpop.f32.mrf.mxu0
  %v1213 = vadd.f32 %v265, %v1212
  %1214 = vmatmul.bf16.gmra.mxu0 %v862
  %v1215 = vpop.f32.mrf.mxu0
  %v1216 = vadd.f32 %v265, %v1215
  %v1217 = vpop.f32.mrf.mxu0
  %v1218 = vadd.f32 %v265, %v1217
  %1219 = vmatmul.bf16.gmra.mxu0 %v865
  %v1220 = vpop.f32.mrf.mxu0
  %v1221 = vadd.f32 %v265, %v1220
  %v1222 = vpop.f32.mrf.mxu0
  %v1223 = vadd.f32 %v265, %v1222
  %1224 = vmatmul.bf16.gmra.mxu0 %v868
  %v1225 = vpop.f32.mrf.mxu0
  %v1226 = vadd.f32 %v265, %v1225
  %v1227 = vpop.f32.mrf.mxu0
  %1228 = vmatmul.bf16.gmra.mxu0 %v871
  %v1229 = vpop.f32.mrf.mxu0
  %v1230 = vadd.f32 %v265, %v1229
  %v1231 = vpop.f32.mrf.mxu0
  %v1232 = vadd.f32 %v265, %v1231
  %1233 = vmatmul.bf16.gmra.mxu0 %v874
  %v1234 = vpop.f32.mrf.mxu0
  %v1235 = vadd.f32 %v265, %v1234
  %v1236 = vpop.f32.mrf.mxu0
  %v1237 = vadd.f32 %v265, %v1236
  %1238 = vmatmul.bf16.gmra.mxu0 %v877
  %v1239 = vpop.f32.mrf.mxu0
  %v1240 = vadd.f32 %v265, %v1239
  %v1241 = vpop.f32.mrf.mxu0
  %v1242 = vadd.f32 %v265, %v1241
  %1243 = vmatmul.bf16.gmra.mxu0 %v880
  %v1244 = vpop.f32.mrf.mxu0
  %v1245 = vadd.f32 %v265, %v1244
  %v1246 = vpop.f32.mrf.mxu0
  %1247 = vmatmul.bf16.gmra.mxu0 %v883
  %v1248 = vpop.f32.mrf.mxu0
  %v1249 = vadd.f32 %v265, %v1248
  %v1250 = vpop.f32.mrf.mxu0
  %v1251 = vadd.f32 %v265, %v1250
  %1252 = vmatmul.bf16.gmra.mxu0 %v886
  %v1253 = vpop.f32.mrf.mxu0
  %v1254 = vadd.f32 %v265, %v1253
  %v1255 = vpop.f32.mrf.mxu0
  %v1256 = vadd.f32 %v265, %v1255
  %1257 = vmatmul.bf16.gmra.mxu0 %v889
  %v1258 = vpop.f32.mrf.mxu0
  %v1259 = vadd.f32 %v265, %v1258
  %v1260 = vpop.f32.mrf.mxu0
  %v1261 = vadd.f32 %v265, %v1260
  %1262 = vmatmul.bf16.gmra.mxu0 %v892
  %v1263 = vpop.f32.mrf.mxu0
  %v1264 = vadd.f32 %v265, %v1263
  %v1265 = vpop.f32.mrf.mxu0
  %1266 = vmatmul.bf16.gmra.mxu0 %v895
  %v1267 = vpop.f32.mrf.mxu0
  %v1268 = vadd.f32 %v265, %v1267
  %v1269 = vpop.f32.mrf.mxu0
  %v1270 = vadd.f32 %v265, %v1269
  %1271 = vmatmul.bf16.gmra.mxu0 %v898
  %v1272 = vpop.f32.mrf.mxu0
  %v1273 = vadd.f32 %v265, %v1272
  %v1274 = vpop.f32.mrf.mxu0
  %v1275 = vadd.f32 %v265, %v1274
  %1276 = vmatmul.bf16.gmra.mxu0 %v901
  %v1277 = vpop.f32.mrf.mxu0
  %v1278 = vadd.f32 %v265, %v1277
  %v1279 = vpop.f32.mrf.mxu0
  %v1280 = vadd.f32 %v265, %v1279
  %1281 = vmatmul.bf16.gmra.mxu0 %v904
  %v1282 = vpop.f32.mrf.mxu0
  %v1283 = vadd.f32 %v265, %v1282
  %v1284 = vpop.f32.mrf.mxu0
  %1285 = vmatmul.bf16.gmra.mxu0 %v907
  %v1286 = vpop.f32.mrf.mxu0
  %v1287 = vadd.f32 %v265, %v1286
  %v1288 = vpop.f32.mrf.mxu0
  %v1289 = vadd.f32 %v265, %v1288
  %1290 = vmatmul.bf16.gmra.mxu0 %v910
  %v1291 = vpop.f32.mrf.mxu0
  %v1292 = vadd.f32 %v265, %v1291
  %v1293 = vpop.f32.mrf.mxu0
  %v1294 = vadd.f32 %v265, %v1293
  %1295 = vmatmul.bf16.gmra.mxu0 %v913
  %v1296 = vpop.f32.mrf.mxu0
  %v1297 = vadd.f32 %v265, %v1296
  %v1298 = vpop.f32.mrf.mxu0
  %v1299 = vadd.f32 %v265, %v1298
  %1300 = vmatmul.bf16.gmra.mxu0 %v916
  %v1301 = vpop.f32.mrf.mxu0
  %v1302 = vadd.f32 %v265, %v1301
  %v1303 = vpop.f32.mrf.mxu0
  %1304 = vmatmul.bf16.gmra.mxu0 %v919
  %v1305 = vpop.f32.mrf.mxu0
  %v1306 = vadd.f32 %v265, %v1305
  %v1307 = vpop.f32.mrf.mxu0
  %v1308 = vadd.f32 %v265, %v1307
  %1309 = vmatmul.bf16.gmra.mxu0 %v922
  %v1310 = vpop.f32.mrf.mxu0
  %v1311 = vadd.f32 %v265, %v1310
  %v1312 = vpop.f32.mrf.mxu0
  %v1313 = vadd.f32 %v265, %v1312
  %1314 = vmatmul.bf16.gmra.mxu0 %v925
  %v1315 = vpop.f32.mrf.mxu0
  %v1316 = vadd.f32 %v265, %v1315
  %v1317 = vpop.f32.mrf.mxu0
  %v1318 = vadd.f32 %v265, %v1317
  %1319 = vmatmul.bf16.gmra.mxu0 %v928
  %v1320 = vpop.f32.mrf.mxu0
  %v1321 = vadd.f32 %v265, %v1320
  %v1322 = vpop.f32.mrf.mxu0
  %1323 = vmatmul.bf16.gmra.mxu0 %v931
  %v1324 = vpop.f32.mrf.mxu0
  %v1325 = vadd.f32 %v265, %v1324
  %v1326 = vpop.f32.mrf.mxu0
  %v1327 = vadd.f32 %v265, %v1326
  %1328 = vmatmul.bf16.gmra.mxu0 %v934
  %v1329 = vpop.f32.mrf.mxu0
  %v1330 = vadd.f32 %v265, %v1329
  %v1331 = vpop.f32.mrf.mxu0
  %v1332 = vadd.f32 %v265, %v1331
  %1333 = vmatmul.bf16.gmra.mxu0 %v937
  %v1334 = vpop.f32.mrf.mxu0
  %v1335 = vadd.f32 %v265, %v1334
  %v1336 = vpop.f32.mrf.mxu0
  %v1337 = vadd.f32 %v265, %v1336
  %1338 = vmatmul.bf16.gmra.mxu0 %v940
  %v1339 = vpop.f32.mrf.mxu0
  %v1340 = vadd.f32 %v265, %v1339
  %v1341 = vpop.f32.mrf.mxu0
  %1342 = vmatmul.bf16.gmra.mxu0 %v943
  %v1343 = vpop.f32.mrf.mxu0
  %v1344 = vadd.f32 %v265, %v1343
  %v1345 = vpop.f32.mrf.mxu0
  %v1346 = vadd.f32 %v265, %v1345
  %1347 = vmatmul.bf16.gmra.mxu0 %v946
  %v1348 = vpop.f32.mrf.mxu0
  %v1349 = vadd.f32 %v265, %v1348
  %v1350 = vpop.f32.mrf.mxu0
  %v1351 = vadd.f32 %v265, %v1350
  %1352 = vmatmul.bf16.gmra.mxu0 %v949
  %v1353 = vpop.f32.mrf.mxu0
  %v1354 = vadd.f32 %v265, %v1353
  %v1355 = vpop.f32.mrf.mxu0
  %v1356 = vadd.f32 %v265, %v1355
  %1357 = vmatmul.bf16.gmra.mxu0 %v952
  %v1358 = vpop.f32.mrf.mxu0
  %v1359 = vadd.f32 %v265, %v1358
  %v1360 = vpop.f32.mrf.mxu0
  %1361 = vmatmul.bf16.gmra.mxu0 %v955
  %v1362 = vpop.f32.mrf.mxu0
  %v1363 = vadd.f32 %v265, %v1362
  %v1364 = vpop.f32.mrf.mxu0
  %v1365 = vadd.f32 %v265, %v1364
  %1366 = vmatmul.bf16.gmra.mxu0 %v958
  %v1367 = vpop.f32.mrf.mxu0
  %v1368 = vadd.f32 %v265, %v1367
  %v1369 = vpop.f32.mrf.mxu0
  %v1370 = vadd.f32 %v265, %v1369
  %1371 = vmatmul.bf16.gmra.mxu0 %v961
  %v1372 = vpop.f32.mrf.mxu0
  %v1373 = vadd.f32 %v265, %v1372
  %v1374 = vpop.f32.mrf.mxu0
  %v1375 = vadd.f32 %v265, %v1374
  %1376 = vmatmul.bf16.gmra.mxu0 %v964
  %v1377 = vpop.f32.mrf.mxu0
  %v1378 = vadd.f32 %v265, %v1377
  %v1379 = vpop.f32.mrf.mxu0
  %1380 = vmatmul.bf16.gmra.mxu0 %v967
  %v1381 = vpop.f32.mrf.mxu0
  %v1382 = vadd.f32 %v265, %v1381
  %v1383 = vpop.f32.mrf.mxu0
  %v1384 = vadd.f32 %v265, %v1383
  %1385 = vmatmul.bf16.gmra.mxu0 %v970
  %v1386 = vpop.f32.mrf.mxu0
  %v1387 = vadd.f32 %v265, %v1386
  %v1388 = vpop.f32.mrf.mxu0
  %v1389 = vadd.f32 %v265, %v1388
  %1390 = vmatmul.bf16.gmra.mxu0 %v973
  %v1391 = vpop.f32.mrf.mxu0
  %v1392 = vadd.f32 %v265, %v1391
  %v1393 = vpop.f32.mrf.mxu0
  %v1394 = vadd.f32 %v265, %v1393
  %1395 = vmatmul.bf16.gmra.mxu0 %v976
  %v1396 = vpop.f32.mrf.mxu0
  %v1397 = vadd.f32 %v265, %v1396
  %v1398 = vpop.f32.mrf.mxu0
  %1399 = vmatmul.bf16.gmra.mxu0 %v979
  %v1400 = vpop.f32.mrf.mxu0
  %v1401 = vadd.f32 %v265, %v1400
  %v1402 = vpop.f32.mrf.mxu0
  %v1403 = vadd.f32 %v265, %v1402
  %1404 = vmatmul.bf16.gmra.mxu0 %v982
  %v1405 = vpop.f32.mrf.mxu0
  %v1406 = vadd.f32 %v265, %v1405
  %v1407 = vpop.f32.mrf.mxu0
  %v1408 = vadd.f32 %v265, %v1407
  %1409 = vmatmul.bf16.gmra.mxu0 %v985
  %v1410 = vpop.f32.mrf.mxu0
  %v1411 = vadd.f32 %v265, %v1410
  %v1412 = vpop.f32.mrf.mxu0
  %v1413 = vadd.f32 %v265, %v1412
  %1414 = vmatmul.bf16.gmra.mxu0 %v988
  %v1415 = vpop.f32.mrf.mxu0
  %v1416 = vadd.f32 %v265, %v1415
  %v1417 = vpop.f32.mrf.mxu0
  %1418 = vmatmul.bf16.gmra.mxu0 %v991
  %v1419 = vpop.f32.mrf.mxu0
  %v1420 = vadd.f32 %v265, %v1419
  %v1421 = vpop.f32.mrf.mxu0
  %v1422 = vadd.f32 %v265, %v1421
  %1423 = vmatmul.bf16.gmra.mxu0 %v994
  %v1424 = vpop.f32.mrf.mxu0
  %v1425 = vadd.f32 %v265, %v1424
  %v1426 = vpop.f32.mrf.mxu0
  %v1427 = vadd.f32 %v265, %v1426
  %1428 = vmatmul.bf16.gmra.mxu0 %v997
  %v1429 = vpop.f32.mrf.mxu0
  %v1430 = vadd.f32 %v265, %v1429
  %v1431 = vpop.f32.mrf.mxu0
  %v1432 = vadd.f32 %v265, %v1431
  %1433 = vmatmul.bf16.gmra.mxu0 %v1000
  %v1434 = vpop.f32.mrf.mxu0
  %v1435 = vadd.f32 %v265, %v1434
  %v1436 = vpop.f32.mrf.mxu0
  %1437 = vmatmul.bf16.gmra.mxu0 %v1003
  %v1438 = vpop.f32.mrf.mxu0
  %v1439 = vadd.f32 %v265, %v1438
  %v1440 = vpop.f32.mrf.mxu0
  %v1441 = vadd.f32 %v265, %v1440
  %1442 = vmatmul.bf16.gmra.mxu0 %v1006
  %v1443 = vpop.f32.mrf.mxu0
  %v1444 = vadd.f32 %v265, %v1443
  %v1445 = vpop.f32.mrf.mxu0
  %v1446 = vadd.f32 %v265, %v1445
  %1447 = vmatmul.bf16.gmra.mxu0 %v1009
  %v1448 = vpop.f32.mrf.mxu0
  %v1449 = vadd.f32 %v265, %v1448
  %v1450 = vpop.f32.mrf.mxu0
  %v1451 = vadd.f32 %v265, %v1450
  %1452 = vmatmul.bf16.gmra.mxu0 %v1012
  %v1453 = vpop.f32.mrf.mxu0
  %v1454 = vadd.f32 %v265, %v1453
  %v1455 = vpop.f32.mrf.mxu0
  %1456 = vmatmul.bf16.gmra.mxu0 %v1015
  %v1457 = vpop.f32.mrf.mxu0
  %v1458 = vadd.f32 %v265, %v1457
  %v1459 = vpop.f32.mrf.mxu0
  %v1460 = vadd.f32 %v265, %v1459
  %1461 = vmatmul.bf16.gmra.mxu0 %v1018
  %v1462 = vpop.f32.mrf.mxu0
  %v1463 = vadd.f32 %v265, %v1462
  %v1464 = vpop.f32.mrf.mxu0
  %v1465 = vadd.f32 %v265, %v1464
  %1466 = vmatmul.bf16.gmra.mxu0 %v1021
  %v1467 = vpop.f32.mrf.mxu0
  %v1468 = vadd.f32 %v265, %v1467
  %v1469 = vpop.f32.mrf.mxu0
  %v1470 = vadd.f32 %v265, %v1469
  %1471 = vmatmul.bf16.gmra.mxu0 %v1024
  %v1472 = vpop.f32.mrf.mxu0
  %v1473 = vadd.f32 %v265, %v1472
  %v1474 = vpop.f32.mrf.mxu0
  %1475 = vmatmul.bf16.gmra.mxu0 %v1027
  %v1476 = vpop.f32.mrf.mxu0
  %v1477 = vadd.f32 %v265, %v1476
  %v1478 = vpop.f32.mrf.mxu0
  %v1479 = vadd.f32 %v265, %v1478
  %1480 = vmatmul.bf16.gmra.mxu0 %v1030
  %v1481 = vpop.f32.mrf.mxu0
  %v1482 = vadd.f32 %v265, %v1481
  %v1483 = vpop.f32.mrf.mxu0
  %v1484 = vadd.f32 %v265, %v1483
  %1485 = vmatmul.bf16.gmra.mxu0 %v1033
  %v1486 = vpop.f32.mrf.mxu0
  %v1487 = vadd.f32 %v265, %v1486
  %v1488 = vpop.f32.mrf.mxu0
  %v1489 = vadd.f32 %v265, %v1488
  %1490 = vmatmul.bf16.gmra.mxu0 %v1036
  %v1491 = vpop.f32.mrf.mxu0
  %v1492 = vadd.f32 %v265, %v1491
  %v1493 = vpop.f32.mrf.mxu0
  %1494 = vmatmul.bf16.gmra.mxu0 %v1039
  %v1495 = vpop.f32.mrf.mxu0
  %v1496 = vadd.f32 %v265, %v1495
  %v1497 = vpop.f32.mrf.mxu0
  %v1498 = vadd.f32 %v265, %v1497
  %1499 = vmatmul.bf16.gmra.mxu0 %v1042
  %v1500 = vpop.f32.mrf.mxu0
  %v1501 = vadd.f32 %v265, %v1500
  %v1502 = vpop.f32.mrf.mxu0
  %v1503 = vadd.f32 %v265, %v1502
  %1504 = vmatmul.bf16.gmra.mxu0 %v1045
  %v1505 = vpop.f32.mrf.mxu0
  %v1506 = vadd.f32 %v265, %v1505
  %v1507 = vpop.f32.mrf.mxu0
  %v1508 = vadd.f32 %v265, %v1507
  %1509 = vmatmul.bf16.gmra.mxu0 %v1048
  %v1510 = vpop.f32.mrf.mxu0
  %v1511 = vadd.f32 %v265, %v1510
  %v1512 = vpop.f32.mrf.mxu0
  %1513 = vmatmul.bf16.gmra.mxu0 %v1051
  %v1514 = vpop.f32.mrf.mxu0
  %v1515 = vadd.f32 %v265, %v1514
  %v1516 = vpop.f32.mrf.mxu0
  %v1517 = vadd.f32 %v265, %v1516
  %1518 = vmatmul.bf16.gmra.mxu0 %v1054
  %v1519 = vpop.f32.mrf.mxu0
  %v1520 = vadd.f32 %v265, %v1519
  %v1521 = vpop.f32.mrf.mxu0
  %v1522 = vadd.f32 %v265, %v1521
  %1523 = vmatmul.bf16.gmra.mxu0 %v1057
  %v1524 = vpop.f32.mrf.mxu0
  %v1525 = vadd.f32 %v265, %v1524
  %v1526 = vpop.f32.mrf.mxu0
  %v1527 = vadd.f32 %v265, %v1526
  %1528 = vmatmul.bf16.gmra.mxu0 %v1060
  %v1529 = vpop.f32.mrf.mxu0
  %v1530 = vadd.f32 %v265, %v1529
  %v1531 = vpop.f32.mrf.mxu0
  %1532 = vmatmul.bf16.gmra.mxu0 %v1063
  %v1533 = vpop.f32.mrf.mxu0
  %v1534 = vadd.f32 %v265, %v1533
  %v1535 = vpop.f32.mrf.mxu0
  %v1536 = vadd.f32 %v265, %v1535
  %1537 = vmatmul.bf16.gmra.mxu0 %v1066
  %v1538 = vpop.f32.mrf.mxu0
  %v1539 = vadd.f32 %v265, %v1538
  %v1540 = vpop.f32.mrf.mxu0
  %v1541 = vadd.f32 %v265, %v1540
  %1542 = vmatmul.bf16.gmra.mxu0 %v1069
  %v1543 = vpop.f32.mrf.mxu0
  %v1544 = vadd.f32 %v265, %v1543
  %v1545 = vpop.f32.mrf.mxu0
  %v1546 = vadd.f32 %v265, %v1545
  %1547 = vmatmul.bf16.gmra.mxu0 %v1072
  %v1548 = vpop.f32.mrf.mxu0
  %v1549 = vadd.f32 %v265, %v1548
  %v1550 = vpop.f32.mrf.mxu0
  %1551 = vmatmul.bf16.gmra.mxu0 %v1075
  %v1552 = vpop.f32.mrf.mxu0
  %v1553 = vadd.f32 %v265, %v1552
  %v1554 = vpop.f32.mrf.mxu0
  %v1555 = vadd.f32 %v265, %v1554
  %1556 = vmatmul.bf16.gmra.mxu0 %v1078
  %v1557 = vpop.f32.mrf.mxu0
  %v1558 = vadd.f32 %v265, %v1557
  %v1559 = vpop.f32.mrf.mxu0
  %v1560 = vadd.f32 %v265, %v1559
  %1561 = vmatmul.bf16.gmra.mxu0 %v1081
  %v1562 = vpop.f32.mrf.mxu0
  %v1563 = vadd.f32 %v265, %v1562
  %v1564 = vpop.f32.mrf.mxu0
  %v1565 = vadd.f32 %v265, %v1564
  %1566 = vmatmul.bf16.gmra.mxu0 %v1084
  %v1567 = vpop.f32.mrf.mxu0
  %v1568 = vadd.f32 %v265, %v1567
  %v1569 = vpop.f32.mrf.mxu0
  %1570 = vmatmul.bf16.gmra.mxu0 %v1087
  %v1571 = vpop.f32.mrf.mxu0
  %v1572 = vadd.f32 %v265, %v1571
  %v1573 = vpop.f32.mrf.mxu0
  %v1574 = vadd.f32 %v265, %v1573
  %1575 = vmatmul.bf16.gmra.mxu0 %v1090
  %v1576 = vpop.f32.mrf.mxu0
  %v1577 = vadd.f32 %v265, %v1576
  %v1578 = vpop.f32.mrf.mxu0
  %v1579 = vadd.f32 %v265, %v1578
  %1580 = vmatmul.bf16.gmra.mxu0 %v1093
  %v1581 = vpop.f32.mrf.mxu0
  %v1582 = vadd.f32 %v265, %v1581
  %v1583 = vpop.f32.mrf.mxu0
  %v1584 = vadd.f32 %v265, %v1583
  %1585 = vmatmul.bf16.gmra.mxu0 %v1096
  %v1586 = vpop.f32.mrf.mxu0
  %v1587 = vadd.f32 %v265, %v1586
  %v1588 = vpop.f32.mrf.mxu0
  %1589 = vmatmul.bf16.gmra.mxu0 %v1099
  %v1590 = vpop.f32.mrf.mxu0
  %v1591 = vadd.f32 %v265, %v1590
  %v1592 = vpop.f32.mrf.mxu0
  %v1593 = vadd.f32 %v265, %v1592
  %1594 = vmatmul.bf16.gmra.mxu0 %v1102
  %v1595 = vpop.f32.mrf.mxu0
  %v1596 = vadd.f32 %v265, %v1595
  %v1597 = vpop.f32.mrf.mxu0
  %v1598 = vadd.f32 %v265, %v1597
  %1599 = vmatmul.bf16.gmra.mxu0 %v1105
  %v1600 = vpop.f32.mrf.mxu0
  %v1601 = vadd.f32 %v265, %v1600
  %v1602 = vpop.f32.mrf.mxu0
  %v1603 = vadd.f32 %v265, %v1602
  %1604 = vmatmul.bf16.gmra.mxu0 %v1108
  %v1605 = vpop.f32.mrf.mxu0
  %v1606 = vadd.f32 %v265, %v1605
  %v1607 = vpop.f32.mrf.mxu0
  %1608 = vmatmul.bf16.gmra.mxu0 %v1111
  %v1609 = vpop.f32.mrf.mxu0
  %v1610 = vadd.f32 %v265, %v1609
  %v1611 = vpop.f32.mrf.mxu0
  %v1612 = vadd.f32 %v265, %v1611
  %1613 = vmatmul.bf16.gmra.mxu0 %v1114
  %v1614 = vpop.f32.mrf.mxu0
  %v1615 = vadd.f32 %v265, %v1614
  %v1616 = vpop.f32.mrf.mxu0
  %v1617 = vadd.f32 %v265, %v1616
  %1618 = vmatmul.bf16.gmra.mxu0 %v1117
  %v1619 = vpop.f32.mrf.mxu0
  %v1620 = vadd.f32 %v265, %v1619
  %v1621 = vpop.f32.mrf.mxu0
  %v1622 = vadd.f32 %v265, %v1621
  %1623 = vmatmul.bf16.gmra.mxu0 %v1120
  %v1624 = vpop.f32.mrf.mxu0
  %v1625 = vadd.f32 %v265, %v1624
  %v1626 = vpop.f32.mrf.mxu0
  %1627 = vmatmul.bf16.gmra.mxu0 %v1123
  %v1628 = vpop.f32.mrf.mxu0
  %v1629 = vadd.f32 %v265, %v1628
  %v1630 = vpop.f32.mrf.mxu0
  %v1631 = vadd.f32 %v265, %v1630
  %1632 = vmatmul.bf16.gmra.mxu0 %v1126
  %v1633 = vpop.f32.mrf.mxu0
  %v1634 = vadd.f32 %v265, %v1633
  %v1635 = vpop.f32.mrf.mxu0
  %v1636 = vadd.f32 %v265, %v1635
  %1637 = vmatmul.bf16.gmra.mxu0 %v1129
  %v1638 = vpop.f32.mrf.mxu0
  %v1639 = vadd.f32 %v265, %v1638
  %v1640 = vpop.f32.mrf.mxu0
  %v1641 = vadd.f32 %v265, %v1640
  %1642 = vmatmul.bf16.gmra.mxu0 %v1132
  %v1643 = vpop.f32.mrf.mxu0
  %v1644 = vadd.f32 %v265, %v1643
  %v1645 = vpop.f32.mrf.mxu0
  %1646 = vmatmul.bf16.gmra.mxu0 %v1135
  %v1647 = vpop.f32.mrf.mxu0
  %v1648 = vadd.f32 %v265, %v1647
  %v1649 = vpop.f32.mrf.mxu0
  %v1650 = vadd.f32 %v265, %v1649
  %1651 = vmatmul.bf16.gmra.mxu0 %v1138
  %v1652 = vpop.f32.mrf.mxu0
  %v1653 = vadd.f32 %v265, %v1652
  %v1654 = vpop.f32.mrf.mxu0
  %v1655 = vadd.f32 %v265, %v1654
  %1656 = vmatmul.bf16.gmra.mxu0 %v1141
  %v1657 = vpop.f32.mrf.mxu0
  %v1658 = vadd.f32 %v265, %v1657
  %v1659 = vpop.f32.mrf.mxu0
  %v1660 = vadd.f32 %v265, %v1659
  %1661 = vmatmul.bf16.gmra.mxu0 %v1144
  %v1662 = vpop.f32.mrf.mxu0
  %v1663 = vadd.f32 %v265, %v1662
  %v1664 = vpop.f32.mrf.mxu0
  %1665 = vmatmul.bf16.gmra.mxu0 %v1147
  %v1666 = vpop.f32.mrf.mxu0
  %v1667 = vadd.f32 %v265, %v1666
  %v1668 = vpop.f32.mrf.mxu0
  %v1669 = vadd.f32 %v265, %v1668
  %1670 = vmatmul.bf16.gmra.mxu0 %v1150
  %v1671 = vpop.f32.mrf.mxu0
  %v1672 = vadd.f32 %v265, %v1671
  %v1673 = vpop.f32.mrf.mxu0
  %v1674 = vadd.f32 %v265, %v1673
  %1675 = vmatmul.bf16.gmra.mxu0 %v1153
  %v1676 = vpop.f32.mrf.mxu0
  %v1677 = vadd.f32 %v265, %v1676
  %v1678 = vpop.f32.mrf.mxu0
  %v1679 = vadd.f32 %v265, %v1678
  %1680 = vmatmul.bf16.gmra.mxu0 %v1156
  %v1681 = vpop.f32.mrf.mxu0
  %v1682 = vadd.f32 %v265, %v1681
  %v1683 = vpop.f32.mrf.mxu0
  %1684 = vmatmul.bf16.gmra.mxu0 %v1159
  %v1685 = vpop.f32.mrf.mxu0
  %v1686 = vadd.f32 %v265, %v1685
  %v1687 = vpop.f32.mrf.mxu0
  %v1688 = vadd.f32 %v265, %v1687
  %1689 = vmatmul.bf16.gmra.mxu0 %v1162
  %v1690 = vpop.f32.mrf.mxu0
  %v1691 = vadd.f32 %v265, %v1690
  %v1692 = vpop.f32.mrf.mxu0
  %v1693 = vadd.f32 %v265, %v1692
  %1694 = vmatmul.bf16.gmra.mxu0 %v1165
  %v1695 = vpop.f32.mrf.mxu0
  %v1696 = vadd.f32 %v265, %v1695
  %v1697 = vpop.f32.mrf.mxu0
  %v1698 = vadd.f32 %v265, %v1697
  %1699 = vmatmul.bf16.gmra.mxu0 %v1168
  %v1700 = vpop.f32.mrf.mxu0
  %v1701 = vadd.f32 %v265, %v1700
  %v1702 = vpop.f32.mrf.mxu0
  %1703 = vmatmul.bf16.gmra.mxu0 %v1171
  %v1704 = vpop.f32.mrf.mxu0
  %v1705 = vadd.f32 %v265, %v1704
  %v1706 = vpop.f32.mrf.mxu0
  %v1707 = vadd.f32 %v265, %v1706
  %1708 = vmatmul.bf16.gmra.mxu0 %v1174
  %v1709 = vpop.f32.mrf.mxu0
  %v1710 = vadd.f32 %v265, %v1709
  %v1711 = vpop.f32.mrf.mxu0
  %v1712 = vadd.f32 %v265, %v1711
  %1713 = vmatmul.bf16.gmra.mxu0 %v1177
  %v1714 = vpop.f32.mrf.mxu0
  %v1715 = vadd.f32 %v265, %v1714
  %v1716 = vpop.f32.mrf.mxu0
  %v1717 = vadd.f32 %v265, %v1716
  %1718 = vmatmul.bf16.gmra.mxu0 %v1180
  %v1719 = vpop.f32.mrf.mxu0
  %v1720 = vadd.f32 %v265, %v1719
  %v1721 = vpop.f32.mrf.mxu0
  %1722 = vdwg.mxu0
  %v1723 = vmax.f32 %v1192, 0.0
  %v1724 = vmax.f32 %v1194, 0.0
  %v1725 = vmax.f32 %v1197, 0.0
  %v1726 = vmax.f32 %v1199, 0.0
  %v1727 = vmax.f32 %v1202, 0.0
  %v1728 = vmax.f32 %v1204, 0.0
  %v1729 = vmax.f32 %v1207, 0.0
  %v1730 = vmax.f32 %v1211, 0.0
  %v1731 = vmax.f32 %v1213, 0.0
  %v1732 = vmax.f32 %v1216, 0.0
  %v1733 = vmax.f32 %v1218, 0.0
  %v1734 = vmax.f32 %v1221, 0.0
  %v1735 = vmax.f32 %v1223, 0.0
  %v1736 = vmax.f32 %v1226, 0.0
  %v1737 = vmax.f32 %v1230, 0.0
  %v1738 = vmax.f32 %v1232, 0.0
  %v1739 = vmax.f32 %v1235, 0.0
  %v1740 = vmax.f32 %v1237, 0.0
  %v1741 = vmax.f32 %v1240, 0.0
  %v1742 = vmax.f32 %v1242, 0.0
  %v1743 = vmax.f32 %v1245, 0.0
  %v1744 = vmax.f32 %v1249, 0.0
  %v1745 = vmax.f32 %v1251, 0.0
  %v1746 = vmax.f32 %v1254, 0.0
  %v1747 = vmax.f32 %v1256, 0.0
  %v1748 = vmax.f32 %v1259, 0.0
  %v1749 = vmax.f32 %v1261, 0.0
  %v1750 = vmax.f32 %v1264, 0.0
  %v1751 = vmax.f32 %v1268, 0.0
  %v1752 = vmax.f32 %v1270, 0.0
  %v1753 = vmax.f32 %v1273, 0.0
  %v1754 = vmax.f32 %v1275, 0.0
  %v1755 = vmax.f32 %v1278, 0.0
  %v1756 = vmax.f32 %v1280, 0.0
  %v1757 = vmax.f32 %v1283, 0.0
  %v1758 = vmax.f32 %v1287, 0.0
  %v1759 = vmax.f32 %v1289, 0.0
  %v1760 = vmax.f32 %v1292, 0.0
  %v1761 = vmax.f32 %v1294, 0.0
  %v1762 = vmax.f32 %v1297, 0.0
  %v1763 = vmax.f32 %v1299, 0.0
  %v1764 = vmax.f32 %v1302, 0.0
  %v1765 = vmax.f32 %v1306, 0.0
  %v1766 = vmax.f32 %v1308, 0.0
  %v1767 = vmax.f32 %v1311, 0.0
  %v1768 = vmax.f32 %v1313, 0.0
  %v1769 = vmax.f32 %v1316, 0.0
  %v1770 = vmax.f32 %v1318, 0.0
  %v1771 = vmax.f32 %v1321, 0.0
  %v1772 = vmax.f32 %v1325, 0.0
  %v1773 = vmax.f32 %v1327, 0.0
  %v1774 = vmax.f32 %v1330, 0.0
  %v1775 = vmax.f32 %v1332, 0.0
  %v1776 = vmax.f32 %v1335, 0.0
  %v1777 = vmax.f32 %v1337, 0.0
  %v1778 = vmax.f32 %v1340, 0.0
  %v1779 = vmax.f32 %v1344, 0.0
  %v1780 = vmax.f32 %v1346, 0.0
  %v1781 = vmax.f32 %v1349, 0.0
  %v1782 = vmax.f32 %v1351, 0.0
  %v1783 = vmax.f32 %v1354, 0.0
  %v1784 = vmax.f32 %v1356, 0.0
  %v1785 = vmax.f32 %v1359, 0.0
  %v1786 = vmax.f32 %v1363, 0.0
  %v1787 = vmax.f32 %v1365, 0.0
  %v1788 = vmax.f32 %v1368, 0.0
  %v1789 = vmax.f32 %v1370, 0.0
  %v1790 = vmax.f32 %v1373, 0.0
  %v1791 = vmax.f32 %v1375, 0.0
  %v1792 = vmax.f32 %v1378, 0.0
  %v1793 = vmax.f32 %v1382, 0.0
  %v1794 = vmax.f32 %v1384, 0.0
  %v1795 = vmax.f32 %v1387, 0.0
  %v1796 = vmax.f32 %v1389, 0.0
  %v1797 = vmax.f32 %v1392, 0.0
  %v1798 = vmax.f32 %v1394, 0.0
  %v1799 = vmax.f32 %v1397, 0.0
  %v1800 = vmax.f32 %v1401, 0.0
  %v1801 = vmax.f32 %v1403, 0.0
  %v1802 = vmax.f32 %v1406, 0.0
  %v1803 = vmax.f32 %v1408, 0.0
  %v1804 = vmax.f32 %v1411, 0.0
  %v1805 = vmax.f32 %v1413, 0.0
  %v1806 = vmax.f32 %v1416, 0.0
  %v1807 = vmax.f32 %v1420, 0.0
  %v1808 = vmax.f32 %v1422, 0.0
  %v1809 = vmax.f32 %v1425, 0.0
  %v1810 = vmax.f32 %v1427, 0.0
  %v1811 = vmax.f32 %v1430, 0.0
  %v1812 = vmax.f32 %v1432, 0.0
  %v1813 = vmax.f32 %v1435, 0.0
  %v1814 = vmax.f32 %v1439, 0.0
  %v1815 = vmax.f32 %v1441, 0.0
  %v1816 = vmax.f32 %v1444, 0.0
  %v1817 = vmax.f32 %v1446, 0.0
  %v1818 = vmax.f32 %v1449, 0.0
  %v1819 = vmax.f32 %v1451, 0.0
  %v1820 = vmax.f32 %v1454, 0.0
  %v1821 = vmax.f32 %v1458, 0.0
  %v1822 = vmax.f32 %v1460, 0.0
  %v1823 = vmax.f32 %v1463, 0.0
  %v1824 = vmax.f32 %v1465, 0.0
  %v1825 = vmax.f32 %v1468, 0.0
  %v1826 = vmax.f32 %v1470, 0.0
  %v1827 = vmax.f32 %v1473, 0.0
  %v1828 = vmax.f32 %v1477, 0.0
  %v1829 = vmax.f32 %v1479, 0.0
  %v1830 = vmax.f32 %v1482, 0.0
  %v1831 = vmax.f32 %v1484, 0.0
  %v1832 = vmax.f32 %v1487, 0.0
  %v1833 = vmax.f32 %v1489, 0.0
  %v1834 = vmax.f32 %v1492, 0.0
  %v1835 = vmax.f32 %v1496, 0.0
  %v1836 = vmax.f32 %v1498, 0.0
  %v1837 = vmax.f32 %v1501, 0.0
  %v1838 = vmax.f32 %v1503, 0.0
  %v1839 = vmax.f32 %v1506, 0.0
  %v1840 = vmax.f32 %v1508, 0.0
  %v1841 = vmax.f32 %v1511, 0.0
  %v1842 = vmax.f32 %v1515, 0.0
  %v1843 = vmax.f32 %v1517, 0.0
  %v1844 = vmax.f32 %v1520, 0.0
  %v1845 = vmax.f32 %v1522, 0.0
  %v1846 = vmax.f32 %v1525, 0.0
  %v1847 = vmax.f32 %v1527, 0.0
  %v1848 = vmax.f32 %v1530, 0.0
  %v1849 = vmax.f32 %v1534, 0.0
  %v1850 = vmax.f32 %v1536, 0.0
  %v1851 = vmax.f32 %v1539, 0.0
  %v1852 = vmax.f32 %v1541, 0.0
  %v1853 = vmax.f32 %v1544, 0.0
  %v1854 = vmax.f32 %v1546, 0.0
  %v1855 = vmax.f32 %v1549, 0.0
  %v1856 = vmax.f32 %v1553, 0.0
  %v1857 = vmax.f32 %v1555, 0.0
  %v1858 = vmax.f32 %v1558, 0.0
  %v1859 = vmax.f32 %v1560, 0.0
  %v1860 = vmax.f32 %v1563, 0.0
  %v1861 = vmax.f32 %v1565, 0.0
  %v1862 = vmax.f32 %v1568, 0.0
  %v1863 = vmax.f32 %v1572, 0.0
  %v1864 = vmax.f32 %v1574, 0.0
  %v1865 = vmax.f32 %v1577, 0.0
  %v1866 = vmax.f32 %v1579, 0.0
  %v1867 = vmax.f32 %v1582, 0.0
  %v1868 = vmax.f32 %v1584, 0.0
  %v1869 = vmax.f32 %v1587, 0.0
  %v1870 = vmax.f32 %v1591, 0.0
  %v1871 = vmax.f32 %v1593, 0.0
  %v1872 = vmax.f32 %v1596, 0.0
  %v1873 = vmax.f32 %v1598, 0.0
  %v1874 = vmax.f32 %v1601, 0.0
  %v1875 = vmax.f32 %v1603, 0.0
  %v1876 = vmax.f32 %v1606, 0.0
  %v1877 = vmax.f32 %v1610, 0.0
  %v1878 = vmax.f32 %v1612, 0.0
  %v1879 = vmax.f32 %v1615, 0.0
  %v1880 = vmax.f32 %v1617, 0.0
  %v1881 = vmax.f32 %v1620, 0.0
  %v1882 = vmax.f32 %v1622, 0.0
  %v1883 = vmax.f32 %v1625, 0.0
  %v1884 = vmax.f32 %v1629, 0.0
  %v1885 = vmax.f32 %v1631, 0.0
  %v1886 = vmax.f32 %v1634, 0.0
  %v1887 = vmax.f32 %v1636, 0.0
  %v1888 = vmax.f32 %v1639, 0.0
  %v1889 = vmax.f32 %v1641, 0.0
  %v1890 = vmax.f32 %v1644, 0.0
  %v1891 = vmax.f32 %v1648, 0.0
  %v1892 = vmax.f32 %v1650, 0.0
  %v1893 = vmax.f32 %v1653, 0.0
  %v1894 = vmax.f32 %v1655, 0.0
  %v1895 = vmax.f32 %v1658, 0.0
  %v1896 = vmax.f32 %v1660, 0.0
  %v1897 = vmax.f32 %v1663, 0.0
  %v1898 = vmax.f32 %v1667, 0.0
  %v1899 = vmax.f32 %v1669, 0.0
  %v1900 = vmax.f32 %v1672, 0.0
  %v1901 = vmax.f32 %v1674, 0.0
  %v1902 = vmax.f32 %v1677, 0.0
  %v1903 = vmax.f32 %v1679, 0.0
  %v1904 = vmax.f32 %v1682, 0.0
  %v1905 = vmax.f32 %v1686, 0.0
  %v1906 = vmax.f32 %v1688, 0.0
  %v1907 = vmax.f32 %v1691, 0.0
  %v1908 = vmax.f32 %v1693, 0.0
  %v1909 = vmax.f32 %v1696, 0.0
  %v1910 = vmax.f32 %v1698, 0.0
  %v1911 = vmax.f32 %v1701, 0.0
  %v1912 = vmax.f32 %v1705, 0.0
  %v1913 = vmax.f32 %v1707, 0.0
  %v1914 = vmax.f32 %v1710, 0.0
  %v1915 = vmax.f32 %v1712, 0.0
  %v1916 = vmax.f32 %v1715, 0.0
  %v1917 = vmax.f32 %v1717, 0.0
  %v1918 = vmax.f32 %v1720, 0.0
  %v1919 = vpack.c.bf16 %v1723, %v1723
  %v1920 = vpack.c.bf16 %v1724, %v1724
  %v1921 = vpack.c.bf16 %v1725, %v1725
  %v1922 = vpack.c.bf16 %v1726, %v1726
  %v1923 = vpack.c.bf16 %v1727, %v1727
  %v1924 = vpack.c.bf16 %v1728, %v1728
  %v1925 = vpack.c.bf16 %v1729, %v1729
  %v1926 = vpack.c.bf16 %v1730, %v1730
  %v1927 = vpack.c.bf16 %v1731, %v1731
  %v1928 = vpack.c.bf16 %v1732, %v1732
  %v1929 = vpack.c.bf16 %v1733, %v1733
  %v1930 = vpack.c.bf16 %v1734, %v1734
  %v1931 = vpack.c.bf16 %v1735, %v1735
  %v1932 = vpack.c.bf16 %v1736, %v1736
  %v1933 = vpack.c.bf16 %v1737, %v1737
  %v1934 = vpack.c.bf16 %v1738, %v1738
  %v1935 = vpack.c.bf16 %v1739, %v1739
  %v1936 = vpack.c.bf16 %v1740, %v1740
  %v1937 = vpack.c.bf16 %v1741, %v1741
  %v1938 = vpack.c.bf16 %v1742, %v1742
  %v1939 = vpack.c.bf16 %v1743, %v1743
  %v1940 = vpack.c.bf16 %v1744, %v1744
  %v1941 = vpack.c.bf16 %v1745, %v1745
  %v1942 = vpack.c.bf16 %v1746, %v1746
  %v1943 = vpack.c.bf16 %v1747, %v1747
  %v1944 = vpack.c.bf16 %v1748, %v1748
  %v1945 = vpack.c.bf16 %v1749, %v1749
  %v1946 = vpack.c.bf16 %v1750, %v1750
  %v1947 = vpack.c.bf16 %v1751, %v1751
  %v1948 = vpack.c.bf16 %v1752, %v1752
  %v1949 = vpack.c.bf16 %v1753, %v1753
  %v1950 = vpack.c.bf16 %v1754, %v1754
  %v1951 = vpack.c.bf16 %v1755, %v1755
  %v1952 = vpack.c.bf16 %v1756, %v1756
  %v1953 = vpack.c.bf16 %v1757, %v1757
  %v1954 = vpack.c.bf16 %v1758, %v1758
  %v1955 = vpack.c.bf16 %v1759, %v1759
  %v1956 = vpack.c.bf16 %v1760, %v1760
  %v1957 = vpack.c.bf16 %v1761, %v1761
  %v1958 = vpack.c.bf16 %v1762, %v1762
  %v1959 = vpack.c.bf16 %v1763, %v1763
  %v1960 = vpack.c.bf16 %v1764, %v1764
  %v1961 = vpack.c.bf16 %v1765, %v1765
  %v1962 = vpack.c.bf16 %v1766, %v1766
  %v1963 = vpack.c.bf16 %v1767, %v1767
  %v1964 = vpack.c.bf16 %v1768, %v1768
  %v1965 = vpack.c.bf16 %v1769, %v1769
  %v1966 = vpack.c.bf16 %v1770, %v1770
  %v1967 = vpack.c.bf16 %v1771, %v1771
  %v1968 = vpack.c.bf16 %v1772, %v1772
  %v1969 = vpack.c.bf16 %v1773, %v1773
  %v1970 = vpack.c.bf16 %v1774, %v1774
  %v1971 = vpack.c.bf16 %v1775, %v1775
  %v1972 = vpack.c.bf16 %v1776, %v1776
  %v1973 = vpack.c.bf16 %v1777, %v1777
  %v1974 = vpack.c.bf16 %v1778, %v1778
  %v1975 = vpack.c.bf16 %v1779, %v1779
  %v1976 = vpack.c.bf16 %v1780, %v1780
  %v1977 = vpack.c.bf16 %v1781, %v1781
  %v1978 = vpack.c.bf16 %v1782, %v1782
  %v1979 = vpack.c.bf16 %v1783, %v1783
  %v1980 = vpack.c.bf16 %v1784, %v1784
  %v1981 = vpack.c.bf16 %v1785, %v1785
  %v1982 = vpack.c.bf16 %v1786, %v1786
  %v1983 = vpack.c.bf16 %v1787, %v1787
  %v1984 = vpack.c.bf16 %v1788, %v1788
  %v1985 = vpack.c.bf16 %v1789, %v1789
  %v1986 = vpack.c.bf16 %v1790, %v1790
  %v1987 = vpack.c.bf16 %v1791, %v1791
  %v1988 = vpack.c.bf16 %v1792, %v1792
  %v1989 = vpack.c.bf16 %v1793, %v1793
  %v1990 = vpack.c.bf16 %v1794, %v1794
  %v1991 = vpack.c.bf16 %v1795, %v1795
  %v1992 = vpack.c.bf16 %v1796, %v1796
  %v1993 = vpack.c.bf16 %v1797, %v1797
  %v1994 = vpack.c.bf16 %v1798, %v1798
  %v1995 = vpack.c.bf16 %v1799, %v1799
  %v1996 = vpack.c.bf16 %v1800, %v1800
  %v1997 = vpack.c.bf16 %v1801, %v1801
  %v1998 = vpack.c.bf16 %v1802, %v1802
  %v1999 = vpack.c.bf16 %v1803, %v1803
  %v2000 = vpack.c.bf16 %v1804, %v1804
  %v2001 = vpack.c.bf16 %v1805, %v1805
  %v2002 = vpack.c.bf16 %v1806, %v1806
  %v2003 = vpack.c.bf16 %v1807, %v1807
  %v2004 = vpack.c.bf16 %v1808, %v1808
  %v2005 = vpack.c.bf16 %v1809, %v1809
  %v2006 = vpack.c.bf16 %v1810, %v1810
  %v2007 = vpack.c.bf16 %v1811, %v1811
  %v2008 = vpack.c.bf16 %v1812, %v1812
  %v2009 = vpack.c.bf16 %v1813, %v1813
  %v2010 = vpack.c.bf16 %v1814, %v1814
  %v2011 = vpack.c.bf16 %v1815, %v1815
  %v2012 = vpack.c.bf16 %v1816, %v1816
  %v2013 = vpack.c.bf16 %v1817, %v1817
  %v2014 = vpack.c.bf16 %v1818, %v1818
  %v2015 = vpack.c.bf16 %v1819, %v1819
  %v2016 = vpack.c.bf16 %v1820, %v1820
  %v2017 = vpack.c.bf16 %v1821, %v1821
  %v2018 = vpack.c.bf16 %v1822, %v1822
  %v2019 = vpack.c.bf16 %v1823, %v1823
  %v2020 = vpack.c.bf16 %v1824, %v1824
  %v2021 = vpack.c.bf16 %v1825, %v1825
  %v2022 = vpack.c.bf16 %v1826, %v1826
  %v2023 = vpack.c.bf16 %v1827, %v1827
  %v2024 = vpack.c.bf16 %v1828, %v1828
  %v2025 = vpack.c.bf16 %v1829, %v1829
  %v2026 = vpack.c.bf16 %v1830, %v1830
  %v2027 = vpack.c.bf16 %v1831, %v1831
  %v2028 = vpack.c.bf16 %v1832, %v1832
  %v2029 = vpack.c.bf16 %v1833, %v1833
  %v2030 = vpack.c.bf16 %v1834, %v1834
  %v2031 = vpack.c.bf16 %v1835, %v1835
  %v2032 = vpack.c.bf16 %v1836, %v1836
  %v2033 = vpack.c.bf16 %v1837, %v1837
  %v2034 = vpack.c.bf16 %v1838, %v1838
  %v2035 = vpack.c.bf16 %v1839, %v1839
  %v2036 = vpack.c.bf16 %v1840, %v1840
  %v2037 = vpack.c.bf16 %v1841, %v1841
  %v2038 = vpack.c.bf16 %v1842, %v1842
  %v2039 = vpack.c.bf16 %v1843, %v1843
  %v2040 = vpack.c.bf16 %v1844, %v1844
  %v2041 = vpack.c.bf16 %v1845, %v1845
  %v2042 = vpack.c.bf16 %v1846, %v1846
  %v2043 = vpack.c.bf16 %v1847, %v1847
  %v2044 = vpack.c.bf16 %v1848, %v1848
  %v2045 = vpack.c.bf16 %v1849, %v1849
  %v2046 = vpack.c.bf16 %v1850, %v1850
  %v2047 = vpack.c.bf16 %v1851, %v1851
  %v2048 = vpack.c.bf16 %v1852, %v1852
  %v2049 = vpack.c.bf16 %v1853, %v1853
  %v2050 = vpack.c.bf16 %v1854, %v1854
  %v2051 = vpack.c.bf16 %v1855, %v1855
  %v2052 = vpack.c.bf16 %v1856, %v1856
  %v2053 = vpack.c.bf16 %v1857, %v1857
  %v2054 = vpack.c.bf16 %v1858, %v1858
  %v2055 = vpack.c.bf16 %v1859, %v1859
  %v2056 = vpack.c.bf16 %v1860, %v1860
  %v2057 = vpack.c.bf16 %v1861, %v1861
  %v2058 = vpack.c.bf16 %v1862, %v1862
  %v2059 = vpack.c.bf16 %v1863, %v1863
  %v2060 = vpack.c.bf16 %v1864, %v1864
  %v2061 = vpack.c.bf16 %v1865, %v1865
  %v2062 = vpack.c.bf16 %v1866, %v1866
  %v2063 = vpack.c.bf16 %v1867, %v1867
  %v2064 = vpack.c.bf16 %v1868, %v1868
  %v2065 = vpack.c.bf16 %v1869, %v1869
  %v2066 = vpack.c.bf16 %v1870, %v1870
  %v2067 = vpack.c.bf16 %v1871, %v1871
  %v2068 = vpack.c.bf16 %v1872, %v1872
  %v2069 = vpack.c.bf16 %v1873, %v1873
  %v2070 = vpack.c.bf16 %v1874, %v1874
  %v2071 = vpack.c.bf16 %v1875, %v1875
  %v2072 = vpack.c.bf16 %v1876, %v1876
  %v2073 = vpack.c.bf16 %v1877, %v1877
  %v2074 = vpack.c.bf16 %v1878, %v1878
  %v2075 = vpack.c.bf16 %v1879, %v1879
  %v2076 = vpack.c.bf16 %v1880, %v1880
  %v2077 = vpack.c.bf16 %v1881, %v1881
  %v2078 = vpack.c.bf16 %v1882, %v1882
  %v2079 = vpack.c.bf16 %v1883, %v1883
  %v2080 = vpack.c.bf16 %v1884, %v1884
  %v2081 = vpack.c.bf16 %v1885, %v1885
  %v2082 = vpack.c.bf16 %v1886, %v1886
  %v2083 = vpack.c.bf16 %v1887, %v1887
  %v2084 = vpack.c.bf16 %v1888, %v1888
  %v2085 = vpack.c.bf16 %v1889, %v1889
  %v2086 = vpack.c.bf16 %v1890, %v1890
  %v2087 = vpack.c.bf16 %v1891, %v1891
  %v2088 = vpack.c.bf16 %v1892, %v1892
  %v2089 = vpack.c.bf16 %v1893, %v1893
  %v2090 = vpack.c.bf16 %v1894, %v1894
  %v2091 = vpack.c.bf16 %v1895, %v1895
  %v2092 = vpack.c.bf16 %v1896, %v1896
  %v2093 = vpack.c.bf16 %v1897, %v1897
  %v2094 = vpack.c.bf16 %v1898, %v1898
  %v2095 = vpack.c.bf16 %v1899, %v1899
  %v2096 = vpack.c.bf16 %v1900, %v1900
  %v2097 = vpack.c.bf16 %v1901, %v1901
  %v2098 = vpack.c.bf16 %v1902, %v1902
  %v2099 = vpack.c.bf16 %v1903, %v1903
  %v2100 = vpack.c.bf16 %v1904, %v1904
  %v2101 = vpack.c.bf16 %v1905, %v1905
  %v2102 = vpack.c.bf16 %v1906, %v1906
  %v2103 = vpack.c.bf16 %v1907, %v1907
  %v2104 = vpack.c.bf16 %v1908, %v1908
  %v2105 = vpack.c.bf16 %v1909, %v1909
  %v2106 = vpack.c.bf16 %v1910, %v1910
  %v2107 = vpack.c.bf16 %v1911, %v1911
  %v2108 = vpack.c.bf16 %v1912, %v1912
  %v2109 = vpack.c.bf16 %v1913, %v1913
  %v2110 = vpack.c.bf16 %v1914, %v1914
  %v2111 = vpack.c.bf16 %v1915, %v1915
  %v2112 = vpack.c.bf16 %v1916, %v1916
  %v2113 = vpack.c.bf16 %v1917, %v1917
  %v2114 = vpack.c.bf16 %v1918, %v1918
  %s2115 = scalar_lea.vmem [#allocation2], 36
  %2116 = vst [vmem:[%s2115] sm:$0xf] %v1919
  %2117 = vst [vmem:[%s2115 + $0x4] sm:$0xf] %v1920
  %2118 = vst [vmem:[%s2115 + $0x8] sm:$0xf] %v1921
  %2119 = vst [vmem:[%s2115 + $0xc] sm:$0xf] %v1922
  %2120 = vst [vmem:[%s2115 + $0x10] sm:$0xf] %v1923
  %2121 = vst [vmem:[%s2115 + $0x14] sm:$0xf] %v1924
  %2122 = vst [vmem:[%s2115 + $0x18] sm:$0xf] %v1925
  %2123 = vst [vmem:[%s2115 + $0x20] sm:$0xf] %v1926
  %2124 = vst [vmem:[%s2115 + $0x24] sm:$0xf] %v1927
  %2125 = vst [vmem:[%s2115 + $0x28] sm:$0xf] %v1928
  %2126 = vst [vmem:[%s2115 + $0x2c] sm:$0xf] %v1929
  %2127 = vst [vmem:[%s2115 + $0x30] sm:$0xf] %v1930
  %2128 = vst [vmem:[%s2115 + $0x34] sm:$0xf] %v1931
  %2129 = vst [vmem:[%s2115 + $0x38] sm:$0xf] %v1932
  %2130 = vst [vmem:[%s2115 + $0x40] sm:$0xf] %v1933
  %2131 = vst [vmem:[%s2115 + $0x44] sm:$0xf] %v1934
  %2132 = vst [vmem:[%s2115 + $0x48] sm:$0xf] %v1935
  %2133 = vst [vmem:[%s2115 + $0x4c] sm:$0xf] %v1936
  %2134 = vst [vmem:[%s2115 + $0x50] sm:$0xf] %v1937
  %2135 = vst [vmem:[%s2115 + $0x54] sm:$0xf] %v1938
  %2136 = vst [vmem:[%s2115 + $0x58] sm:$0xf] %v1939
  %2137 = vst [vmem:[%s2115 + $0x60] sm:$0xf] %v1940
  %2138 = vst [vmem:[%s2115 + $0x64] sm:$0xf] %v1941
  %2139 = vst [vmem:[%s2115 + $0x68] sm:$0xf] %v1942
  %2140 = vst [vmem:[%s2115 + $0x6c] sm:$0xf] %v1943
  %2141 = vst [vmem:[%s2115 + $0x70] sm:$0xf] %v1944
  %2142 = vst [vmem:[%s2115 + $0x74] sm:$0xf] %v1945
  %2143 = vst [vmem:[%s2115 + $0x78] sm:$0xf] %v1946
  %2144 = vst [vmem:[%s2115 + $0x80] sm:$0xf] %v1947
  %2145 = vst [vmem:[%s2115 + $0x84] sm:$0xf] %v1948
  %2146 = vst [vmem:[%s2115 + $0x88] sm:$0xf] %v1949
  %2147 = vst [vmem:[%s2115 + $0x8c] sm:$0xf] %v1950
  %2148 = vst [vmem:[%s2115 + $0x90] sm:$0xf] %v1951
  %2149 = vst [vmem:[%s2115 + $0x94] sm:$0xf] %v1952
  %2150 = vst [vmem:[%s2115 + $0x98] sm:$0xf] %v1953
  %2151 = vst [vmem:[%s2115 + $0xa0] sm:$0xf] %v1954
  %2152 = vst [vmem:[%s2115 + $0xa4] sm:$0xf] %v1955
  %2153 = vst [vmem:[%s2115 + $0xa8] sm:$0xf] %v1956
  %2154 = vst [vmem:[%s2115 + $0xac] sm:$0xf] %v1957
  %2155 = vst [vmem:[%s2115 + $0xb0] sm:$0xf] %v1958
  %2156 = vst [vmem:[%s2115 + $0xb4] sm:$0xf] %v1959
  %2157 = vst [vmem:[%s2115 + $0xb8] sm:$0xf] %v1960
  %2158 = vst [vmem:[%s2115 + $0xc0] sm:$0xf] %v1961
  %2159 = vst [vmem:[%s2115 + $0xc4] sm:$0xf] %v1962
  %2160 = vst [vmem:[%s2115 + $0xc8] sm:$0xf] %v1963
  %2161 = vst [vmem:[%s2115 + $0xcc] sm:$0xf] %v1964
  %2162 = vst [vmem:[%s2115 + $0xd0] sm:$0xf] %v1965
  %2163 = vst [vmem:[%s2115 + $0xd4] sm:$0xf] %v1966
  %2164 = vst [vmem:[%s2115 + $0xd8] sm:$0xf] %v1967
  %2165 = vst [vmem:[#allocation2] sm:$0xf] 0
  %2166 = vst [vmem:[#allocation2 + $0x4] sm:$0xf] 0
  %2167 = vst [vmem:[#allocation2 + $0x8] sm:$0xf] 0
  %2168 = vst [vmem:[#allocation2 + $0xc] sm:$0xf] 0
  %2169 = vst [vmem:[#allocation2 + $0x10] sm:$0xf] 0
  %2170 = vst [vmem:[#allocation2 + $0x14] sm:$0xf] 0
  %2171 = vst [vmem:[#allocation2 + $0x18] sm:$0xf] 0
  %2172 = vst [vmem:[#allocation2 + $0x1c] sm:$0xf] 0
  %2173 = vst [vmem:[#allocation2] sm:$0xf] 0
  %2174 = vst [vmem:[#allocation2 + $0x20] sm:$0xf] 0
  %2175 = vst [vmem:[#allocation2 + $0x40] sm:$0xf] 0
  %2176 = vst [vmem:[#allocation2 + $0x60] sm:$0xf] 0
  %2177 = vst [vmem:[#allocation2 + $0x80] sm:$0xf] 0
  %2178 = vst [vmem:[#allocation2 + $0xa0] sm:$0xf] 0
  %2179 = vst [vmem:[#allocation2 + $0xc0] sm:$0xf] 0
  %2180 = vst [vmem:[#allocation2 + $0xe0] sm:$0xf] 0
  %s2181 = scalar_lea.vmem [#allocation2], 288
  %2182 = vst [vmem:[%s2181] sm:$0xf] %v1968
  %2183 = vst [vmem:[%s2181 + $0x4] sm:$0xf] %v1969
  %2184 = vst [vmem:[%s2181 + $0x8] sm:$0xf] %v1970
  %2185 = vst [vmem:[%s2181 + $0xc] sm:$0xf] %v1971
  %2186 = vst [vmem:[%s2181 + $0x10] sm:$0xf] %v1972
  %2187 = vst [vmem:[%s2181 + $0x14] sm:$0xf] %v1973
  %2188 = vst [vmem:[%s2181 + $0x18] sm:$0xf] %v1974
  %2189 = vst [vmem:[%s2181 + $0x20] sm:$0xf] %v1975
  %2190 = vst [vmem:[%s2181 + $0x24] sm:$0xf] %v1976
  %2191 = vst [vmem:[%s2181 + $0x28] sm:$0xf] %v1977
  %2192 = vst [vmem:[%s2181 + $0x2c] sm:$0xf] %v1978
  %2193 = vst [vmem:[%s2181 + $0x30] sm:$0xf] %v1979
  %2194 = vst [vmem:[%s2181 + $0x34] sm:$0xf] %v1980
  %2195 = vst [vmem:[%s2181 + $0x38] sm:$0xf] %v1981
  %2196 = vst [vmem:[%s2181 + $0x40] sm:$0xf] %v1982
  %2197 = vst [vmem:[%s2181 + $0x44] sm:$0xf] %v1983
  %2198 = vst [vmem:[%s2181 + $0x48] sm:$0xf] %v1984
  %2199 = vst [vmem:[%s2181 + $0x4c] sm:$0xf] %v1985
  %2200 = vst [vmem:[%s2181 + $0x50] sm:$0xf] %v1986
  %2201 = vst [vmem:[%s2181 + $0x54] sm:$0xf] %v1987
  %2202 = vst [vmem:[%s2181 + $0x58] sm:$0xf] %v1988
  %2203 = vst [vmem:[%s2181 + $0x60] sm:$0xf] %v1989
  %2204 = vst [vmem:[%s2181 + $0x64] sm:$0xf] %v1990
  %2205 = vst [vmem:[%s2181 + $0x68] sm:$0xf] %v1991
  %2206 = vst [vmem:[%s2181 + $0x6c] sm:$0xf] %v1992
  %2207 = vst [vmem:[%s2181 + $0x70] sm:$0xf] %v1993
  %2208 = vst [vmem:[%s2181 + $0x74] sm:$0xf] %v1994
  %2209 = vst [vmem:[%s2181 + $0x78] sm:$0xf] %v1995
  %2210 = vst [vmem:[%s2181 + $0x80] sm:$0xf] %v1996
  %2211 = vst [vmem:[%s2181 + $0x84] sm:$0xf] %v1997
  %2212 = vst [vmem:[%s2181 + $0x88] sm:$0xf] %v1998
  %2213 = vst [vmem:[%s2181 + $0x8c] sm:$0xf] %v1999
  %2214 = vst [vmem:[%s2181 + $0x90] sm:$0xf] %v2000
  %2215 = vst [vmem:[%s2181 + $0x94] sm:$0xf] %v2001
  %2216 = vst [vmem:[%s2181 + $0x98] sm:$0xf] %v2002
  %2217 = vst [vmem:[%s2181 + $0xa0] sm:$0xf] %v2003
  %2218 = vst [vmem:[%s2181 + $0xa4] sm:$0xf] %v2004
  %2219 = vst [vmem:[%s2181 + $0xa8] sm:$0xf] %v2005
  %2220 = vst [vmem:[%s2181 + $0xac] sm:$0xf] %v2006
  %2221 = vst [vmem:[%s2181 + $0xb0] sm:$0xf] %v2007
  %2222 = vst [vmem:[%s2181 + $0xb4] sm:$0xf] %v2008
  %2223 = vst [vmem:[%s2181 + $0xb8] sm:$0xf] %v2009
  %2224 = vst [vmem:[%s2181 + $0xc0] sm:$0xf] %v2010
  %2225 = vst [vmem:[%s2181 + $0xc4] sm:$0xf] %v2011
  %2226 = vst [vmem:[%s2181 + $0xc8] sm:$0xf] %v2012
  %2227 = vst [vmem:[%s2181 + $0xcc] sm:$0xf] %v2013
  %2228 = vst [vmem:[%s2181 + $0xd0] sm:$0xf] %v2014
  %2229 = vst [vmem:[%s2181 + $0xd4] sm:$0xf] %v2015
  %2230 = vst [vmem:[%s2181 + $0xd8] sm:$0xf] %v2016
  %s2231 = scalar_lea.vmem [#allocation2], 256
  %2232 = vst [vmem:[%s2231] sm:$0xf] 0
  %2233 = vst [vmem:[%s2231 + $0x4] sm:$0xf] 0
  %2234 = vst [vmem:[%s2231 + $0x8] sm:$0xf] 0
  %2235 = vst [vmem:[%s2231 + $0xc] sm:$0xf] 0
  %2236 = vst [vmem:[%s2231 + $0x10] sm:$0xf] 0
  %2237 = vst [vmem:[%s2231 + $0x14] sm:$0xf] 0
  %2238 = vst [vmem:[%s2231 + $0x18] sm:$0xf] 0
  %2239 = vst [vmem:[%s2231 + $0x1c] sm:$0xf] 0
  %s2240 = scalar_lea.vmem [#allocation2], 284
  %2241 = vst [vmem:[%s2240] sm:$0xf] 0
  %2242 = vst [vmem:[%s2240 + $0x20] sm:$0xf] 0
  %2243 = vst [vmem:[%s2240 + $0x40] sm:$0xf] 0
  %2244 = vst [vmem:[%s2240 + $0x60] sm:$0xf] 0
  %2245 = vst [vmem:[%s2240 + $0x80] sm:$0xf] 0
  %2246 = vst [vmem:[%s2240 + $0xa0] sm:$0xf] 0
  %2247 = vst [vmem:[%s2240 + $0xc0] sm:$0xf] 0
  %2248 = vst [vmem:[%s2240 + $0xe0] sm:$0xf] 0
  %s2249 = scalar_lea.vmem [#allocation2], 516
  %2250 = vst [vmem:[%s2249] sm:$0xf] %v2017
  %2251 = vst [vmem:[%s2249 + $0x4] sm:$0xf] %v2018
  %2252 = vst [vmem:[%s2249 + $0x8] sm:$0xf] %v2019
  %2253 = vst [vmem:[%s2249 + $0xc] sm:$0xf] %v2020
  %2254 = vst [vmem:[%s2249 + $0x10] sm:$0xf] %v2021
  %2255 = vst [vmem:[%s2249 + $0x14] sm:$0xf] %v2022
  %2256 = vst [vmem:[%s2249 + $0x18] sm:$0xf] %v2023
  %2257 = vst [vmem:[%s2249 + $0x20] sm:$0xf] %v2024
  %2258 = vst [vmem:[%s2249 + $0x24] sm:$0xf] %v2025
  %2259 = vst [vmem:[%s2249 + $0x28] sm:$0xf] %v2026
  %2260 = vst [vmem:[%s2249 + $0x2c] sm:$0xf] %v2027
  %2261 = vst [vmem:[%s2249 + $0x30] sm:$0xf] %v2028
  %2262 = vst [vmem:[%s2249 + $0x34] sm:$0xf] %v2029
  %2263 = vst [vmem:[%s2249 + $0x38] sm:$0xf] %v2030
  %2264 = vst [vmem:[%s2249 + $0x40] sm:$0xf] %v2031
  %2265 = vst [vmem:[%s2249 + $0x44] sm:$0xf] %v2032
  %2266 = vst [vmem:[%s2249 + $0x48] sm:$0xf] %v2033
  %2267 = vst [vmem:[%s2249 + $0x4c] sm:$0xf] %v2034
  %2268 = vst [vmem:[%s2249 + $0x50] sm:$0xf] %v2035
  %2269 = vst [vmem:[%s2249 + $0x54] sm:$0xf] %v2036
  %2270 = vst [vmem:[%s2249 + $0x58] sm:$0xf] %v2037
  %2271 = vst [vmem:[%s2249 + $0x60] sm:$0xf] %v2038
  %2272 = vst [vmem:[%s2249 + $0x64] sm:$0xf] %v2039
  %2273 = vst [vmem:[%s2249 + $0x68] sm:$0xf] %v2040
  %2274 = vst [vmem:[%s2249 + $0x6c] sm:$0xf] %v2041
  %2275 = vst [vmem:[%s2249 + $0x70] sm:$0xf] %v2042
  %2276 = vst [vmem:[%s2249 + $0x74] sm:$0xf] %v2043
  %2277 = vst [vmem:[%s2249 + $0x78] sm:$0xf] %v2044
  %2278 = vst [vmem:[%s2249 + $0x80] sm:$0xf] %v2045
  %2279 = vst [vmem:[%s2249 + $0x84] sm:$0xf] %v2046
  %2280 = vst [vmem:[%s2249 + $0x88] sm:$0xf] %v2047
  %2281 = vst [vmem:[%s2249 + $0x8c] sm:$0xf] %v2048
  %2282 = vst [vmem:[%s2249 + $0x90] sm:$0xf] %v2049
  %2283 = vst [vmem:[%s2249 + $0x94] sm:$0xf] %v2050
  %2284 = vst [vmem:[%s2249 + $0x98] sm:$0xf] %v2051
  %2285 = vst [vmem:[%s2249 + $0xa0] sm:$0xf] %v2052
  %2286 = vst [vmem:[%s2249 + $0xa4] sm:$0xf] %v2053
  %2287 = vst [vmem:[%s2249 + $0xa8] sm:$0xf] %v2054
  %2288 = vst [vmem:[%s2249 + $0xac] sm:$0xf] %v2055
  %2289 = vst [vmem:[%s2249 + $0xb0] sm:$0xf] %v2056
  %2290 = vst [vmem:[%s2249 + $0xb4] sm:$0xf] %v2057
  %2291 = vst [vmem:[%s2249 + $0xb8] sm:$0xf] %v2058
  %2292 = vst [vmem:[%s2249 + $0xc0] sm:$0xf] %v2059
  %2293 = vst [vmem:[%s2249 + $0xc4] sm:$0xf] %v2060
  %2294 = vst [vmem:[%s2249 + $0xc8] sm:$0xf] %v2061
  %2295 = vst [vmem:[%s2249 + $0xcc] sm:$0xf] %v2062
  %2296 = vst [vmem:[%s2249 + $0xd0] sm:$0xf] %v2063
  %2297 = vst [vmem:[%s2249 + $0xd4] sm:$0xf] %v2064
  %2298 = vst [vmem:[%s2249 + $0xd8] sm:$0xf] %v2065
  %s2299 = scalar_lea.vmem [#allocation2], 736
  %2300 = vst [vmem:[%s2299] sm:$0xf] 0
  %2301 = vst [vmem:[%s2299 + $0x4] sm:$0xf] 0
  %2302 = vst [vmem:[%s2299 + $0x8] sm:$0xf] 0
  %2303 = vst [vmem:[%s2299 + $0xc] sm:$0xf] 0
  %2304 = vst [vmem:[%s2299 + $0x10] sm:$0xf] 0
  %2305 = vst [vmem:[%s2299 + $0x14] sm:$0xf] 0
  %2306 = vst [vmem:[%s2299 + $0x18] sm:$0xf] 0
  %2307 = vst [vmem:[%s2299 + $0x1c] sm:$0xf] 0
  %s2308 = scalar_lea.vmem [#allocation2], 512
  %2309 = vst [vmem:[%s2308] sm:$0xf] 0
  %2310 = vst [vmem:[%s2308 + $0x20] sm:$0xf] 0
  %2311 = vst [vmem:[%s2308 + $0x40] sm:$0xf] 0
  %2312 = vst [vmem:[%s2308 + $0x60] sm:$0xf] 0
  %2313 = vst [vmem:[%s2308 + $0x80] sm:$0xf] 0
  %2314 = vst [vmem:[%s2308 + $0xa0] sm:$0xf] 0
  %2315 = vst [vmem:[%s2308 + $0xc0] sm:$0xf] 0
  %2316 = vst [vmem:[%s2308 + $0xe0] sm:$0xf] 0
  %s2317 = scalar_lea.vmem [#allocation2], 768
  %2318 = vst [vmem:[%s2317] sm:$0xf] %v2066
  %2319 = vst [vmem:[%s2317 + $0x4] sm:$0xf] %v2067
  %2320 = vst [vmem:[%s2317 + $0x8] sm:$0xf] %v2068
  %2321 = vst [vmem:[%s2317 + $0xc] sm:$0xf] %v2069
  %2322 = vst [vmem:[%s2317 + $0x10] sm:$0xf] %v2070
  %2323 = vst [vmem:[%s2317 + $0x14] sm:$0xf] %v2071
  %2324 = vst [vmem:[%s2317 + $0x18] sm:$0xf] %v2072
  %2325 = vst [vmem:[%s2317 + $0x20] sm:$0xf] %v2073
  %2326 = vst [vmem:[%s2317 + $0x24] sm:$0xf] %v2074
  %2327 = vst [vmem:[%s2317 + $0x28] sm:$0xf] %v2075
  %2328 = vst [vmem:[%s2317 + $0x2c] sm:$0xf] %v2076
  %2329 = vst [vmem:[%s2317 + $0x30] sm:$0xf] %v2077
  %2330 = vst [vmem:[%s2317 + $0x34] sm:$0xf] %v2078
  %2331 = vst [vmem:[%s2317 + $0x38] sm:$0xf] %v2079
  %2332 = vst [vmem:[%s2317 + $0x40] sm:$0xf] %v2080
  %2333 = vst [vmem:[%s2317 + $0x44] sm:$0xf] %v2081
  %2334 = vst [vmem:[%s2317 + $0x48] sm:$0xf] %v2082
  %2335 = vst [vmem:[%s2317 + $0x4c] sm:$0xf] %v2083
  %2336 = vst [vmem:[%s2317 + $0x50] sm:$0xf] %v2084
  %2337 = vst [vmem:[%s2317 + $0x54] sm:$0xf] %v2085
  %2338 = vst [vmem:[%s2317 + $0x58] sm:$0xf] %v2086
  %2339 = vst [vmem:[%s2317 + $0x60] sm:$0xf] %v2087
  %2340 = vst [vmem:[%s2317 + $0x64] sm:$0xf] %v2088
  %2341 = vst [vmem:[%s2317 + $0x68] sm:$0xf] %v2089
  %2342 = vst [vmem:[%s2317 + $0x6c] sm:$0xf] %v2090
  %2343 = vst [vmem:[%s2317 + $0x70] sm:$0xf] %v2091
  %2344 = vst [vmem:[%s2317 + $0x74] sm:$0xf] %v2092
  %2345 = vst [vmem:[%s2317 + $0x78] sm:$0xf] %v2093
  %2346 = vst [vmem:[%s2317 + $0x80] sm:$0xf] %v2094
  %2347 = vst [vmem:[%s2317 + $0x84] sm:$0xf] %v2095
  %2348 = vst [vmem:[%s2317 + $0x88] sm:$0xf] %v2096
  %2349 = vst [vmem:[%s2317 + $0x8c] sm:$0xf] %v2097
  %2350 = vst [vmem:[%s2317 + $0x90] sm:$0xf] %v2098
  %2351 = vst [vmem:[%s2317 + $0x94] sm:$0xf] %v2099
  %2352 = vst [vmem:[%s2317 + $0x98] sm:$0xf] %v2100
  %2353 = vst [vmem:[%s2317 + $0xa0] sm:$0xf] %v2101
  %2354 = vst [vmem:[%s2317 + $0xa4] sm:$0xf] %v2102
  %2355 = vst [vmem:[%s2317 + $0xa8] sm:$0xf] %v2103
  %2356 = vst [vmem:[%s2317 + $0xac] sm:$0xf] %v2104
  %2357 = vst [vmem:[%s2317 + $0xb0] sm:$0xf] %v2105
  %2358 = vst [vmem:[%s2317 + $0xb4] sm:$0xf] %v2106
  %2359 = vst [vmem:[%s2317 + $0xb8] sm:$0xf] %v2107
  %2360 = vst [vmem:[%s2317 + $0xc0] sm:$0xf] %v2108
  %2361 = vst [vmem:[%s2317 + $0xc4] sm:$0xf] %v2109
  %2362 = vst [vmem:[%s2317 + $0xc8] sm:$0xf] %v2110
  %2363 = vst [vmem:[%s2317 + $0xcc] sm:$0xf] %v2111
  %2364 = vst [vmem:[%s2317 + $0xd0] sm:$0xf] %v2112
  %2365 = vst [vmem:[%s2317 + $0xd4] sm:$0xf] %v2113
  %2366 = vst [vmem:[%s2317 + $0xd8] sm:$0xf] %v2114
  %s2367 = scalar_lea.vmem [#allocation2], 992
  %2368 = vst [vmem:[%s2367] sm:$0xf] 0
  %2369 = vst [vmem:[%s2367 + $0x4] sm:$0xf] 0
  %2370 = vst [vmem:[%s2367 + $0x8] sm:$0xf] 0
  %2371 = vst [vmem:[%s2367 + $0xc] sm:$0xf] 0
  %2372 = vst [vmem:[%s2367 + $0x10] sm:$0xf] 0
  %2373 = vst [vmem:[%s2367 + $0x14] sm:$0xf] 0
  %2374 = vst [vmem:[%s2367 + $0x18] sm:$0xf] 0
  %2375 = vst [vmem:[%s2367 + $0x1c] sm:$0xf] 0
  %s2376 = scalar_lea.vmem [#allocation2], 796
  %2377 = vst [vmem:[%s2376] sm:$0xf] 0
  %2378 = vst [vmem:[%s2376 + $0x20] sm:$0xf] 0
  %2379 = vst [vmem:[%s2376 + $0x40] sm:$0xf] 0
  %2380 = vst [vmem:[%s2376 + $0x60] sm:$0xf] 0
  %2381 = vst [vmem:[%s2376 + $0x80] sm:$0xf] 0
  %2382 = vst [vmem:[%s2376 + $0xa0] sm:$0xf] 0
  %2383 = vst [vmem:[%s2376 + $0xc0] sm:$0xf] 0
  %2384 = vst [vmem:[%s2376 + $0xe0] sm:$0xf] 0
  %v2385 = vld [vmem:[#allocation2] sm:$0xf]
  %v2386 = vld [vmem:[#allocation2 + $0x4] sm:$0xf]
  %v2387 = vld [vmem:[#allocation2 + $0x8] sm:$0xf]
  %v2388 = vld [vmem:[#allocation2 + $0xc] sm:$0xf]
  %v2389 = vld [vmem:[#allocation2 + $0x10] sm:$0xf]
  %v2390 = vld [vmem:[#allocation2 + $0x14] sm:$0xf]
  %v2391 = vld [vmem:[#allocation2 + $0x18] sm:$0xf]
  %v2392 = vld [vmem:[#allocation2 + $0x20] sm:$0xf]
  %v2393 = vld [vmem:[#allocation2 + $0x24] sm:$0xf]
  %v2394 = vld [vmem:[#allocation2 + $0x28] sm:$0xf]
  %v2395 = vld [vmem:[#allocation2 + $0x2c] sm:$0xf]
  %v2396 = vld [vmem:[#allocation2 + $0x30] sm:$0xf]
  %v2397 = vld [vmem:[#allocation2 + $0x34] sm:$0xf]
  %v2398 = vld [vmem:[#allocation2 + $0x38] sm:$0xf]
  %v2399 = vld [vmem:[#allocation2 + $0x40] sm:$0xf]
  %v2400 = vld [vmem:[#allocation2 + $0x44] sm:$0xf]
  %v2401 = vld [vmem:[#allocation2 + $0x48] sm:$0xf]
  %v2402 = vld [vmem:[#allocation2 + $0x4c] sm:$0xf]
  %v2403 = vld [vmem:[#allocation2 + $0x50] sm:$0xf]
  %v2404 = vld [vmem:[#allocation2 + $0x54] sm:$0xf]
  %v2405 = vld [vmem:[#allocation2 + $0x58] sm:$0xf]
  %v2406 = vld [vmem:[#allocation2 + $0x60] sm:$0xf]
  %v2407 = vld [vmem:[#allocation2 + $0x64] sm:$0xf]
  %v2408 = vld [vmem:[#allocation2 + $0x68] sm:$0xf]
  %v2409 = vld [vmem:[#allocation2 + $0x6c] sm:$0xf]
  %v2410 = vld [vmem:[#allocation2 + $0x70] sm:$0xf]
  %v2411 = vld [vmem:[#allocation2 + $0x74] sm:$0xf]
  %v2412 = vld [vmem:[#allocation2 + $0x78] sm:$0xf]
  %v2413 = vld [vmem:[#allocation2 + $0x80] sm:$0xf]
  %v2414 = vld [vmem:[#allocation2 + $0x84] sm:$0xf]
  %v2415 = vld [vmem:[#allocation2 + $0x88] sm:$0xf]
  %v2416 = vld [vmem:[#allocation2 + $0x8c] sm:$0xf]
  %v2417 = vld [vmem:[#allocation2 + $0x90] sm:$0xf]
  %v2418 = vld [vmem:[#allocation2 + $0x94] sm:$0xf]
  %v2419 = vld [vmem:[#allocation2 + $0x98] sm:$0xf]
  %v2420 = vld [vmem:[#allocation2 + $0xa0] sm:$0xf]
  %v2421 = vld [vmem:[#allocation2 + $0xa4] sm:$0xf]
  %v2422 = vld [vmem:[#allocation2 + $0xa8] sm:$0xf]
  %v2423 = vld [vmem:[#allocation2 + $0xac] sm:$0xf]
  %v2424 = vld [vmem:[#allocation2 + $0xb0] sm:$0xf]
  %v2425 = vld [vmem:[#allocation2 + $0xb4] sm:$0xf]
  %v2426 = vld [vmem:[#allocation2 + $0xb8] sm:$0xf]
  %v2427 = vld [vmem:[#allocation2 + $0xc0] sm:$0xf]
  %v2428 = vld [vmem:[#allocation2 + $0xc4] sm:$0xf]
  %v2429 = vld [vmem:[#allocation2 + $0xc8] sm:$0xf]
  %v2430 = vld [vmem:[#allocation2 + $0xcc] sm:$0xf]
  %v2431 = vld [vmem:[#allocation2 + $0xd0] sm:$0xf]
  %v2432 = vld [vmem:[#allocation2 + $0xd4] sm:$0xf]
  %v2433 = vld [vmem:[#allocation2 + $0xd8] sm:$0xf]
  %v2434 = vld [vmem:[%s2231] sm:$0xf]
  %v2435 = vld [vmem:[%s2231 + $0x4] sm:$0xf]
  %v2436 = vld [vmem:[%s2231 + $0x8] sm:$0xf]
  %v2437 = vld [vmem:[%s2231 + $0xc] sm:$0xf]
  %v2438 = vld [vmem:[%s2231 + $0x10] sm:$0xf]
  %v2439 = vld [vmem:[%s2231 + $0x14] sm:$0xf]
  %v2440 = vld [vmem:[%s2231 + $0x18] sm:$0xf]
  %v2441 = vld [vmem:[%s2231 + $0x20] sm:$0xf]
  %v2442 = vld [vmem:[%s2231 + $0x24] sm:$0xf]
  %v2443 = vld [vmem:[%s2231 + $0x28] sm:$0xf]
  %v2444 = vld [vmem:[%s2231 + $0x2c] sm:$0xf]
  %v2445 = vld [vmem:[%s2231 + $0x30] sm:$0xf]
  %v2446 = vld [vmem:[%s2231 + $0x34] sm:$0xf]
  %v2447 = vld [vmem:[%s2231 + $0x38] sm:$0xf]
  %v2448 = vld [vmem:[%s2231 + $0x40] sm:$0xf]
  %v2449 = vld [vmem:[%s2231 + $0x44] sm:$0xf]
  %v2450 = vld [vmem:[%s2231 + $0x48] sm:$0xf]
  %v2451 = vld [vmem:[%s2231 + $0x4c] sm:$0xf]
  %v2452 = vld [vmem:[%s2231 + $0x50] sm:$0xf]
  %v2453 = vld [vmem:[%s2231 + $0x54] sm:$0xf]
  %v2454 = vld [vmem:[%s2231 + $0x58] sm:$0xf]
  %v2455 = vld [vmem:[%s2231 + $0x60] sm:$0xf]
  %v2456 = vld [vmem:[%s2231 + $0x64] sm:$0xf]
  %v2457 = vld [vmem:[%s2231 + $0x68] sm:$0xf]
  %v2458 = vld [vmem:[%s2231 + $0x6c] sm:$0xf]
  %v2459 = vld [vmem:[%s2231 + $0x70] sm:$0xf]
  %v2460 = vld [vmem:[%s2231 + $0x74] sm:$0xf]
  %v2461 = vld [vmem:[%s2231 + $0x78] sm:$0xf]
  %v2462 = vld [vmem:[%s2231 + $0x80] sm:$0xf]
  %v2463 = vld [vmem:[%s2231 + $0x84] sm:$0xf]
  %v2464 = vld [vmem:[%s2231 + $0x88] sm:$0xf]
  %v2465 = vld [vmem:[%s2231 + $0x8c] sm:$0xf]
  %v2466 = vld [vmem:[%s2231 + $0x90] sm:$0xf]
  %v2467 = vld [vmem:[%s2231 + $0x94] sm:$0xf]
  %v2468 = vld [vmem:[%s2231 + $0x98] sm:$0xf]
  %v2469 = vld [vmem:[%s2231 + $0xa0] sm:$0xf]
  %v2470 = vld [vmem:[%s2231 + $0xa4] sm:$0xf]
  %v2471 = vld [vmem:[%s2231 + $0xa8] sm:$0xf]
  %v2472 = vld [vmem:[%s2231 + $0xac] sm:$0xf]
  %v2473 = vld [vmem:[%s2231 + $0xb0] sm:$0xf]
  %v2474 = vld [vmem:[%s2231 + $0xb4] sm:$0xf]
  %v2475 = vld [vmem:[%s2231 + $0xb8] sm:$0xf]
  %v2476 = vld [vmem:[%s2231 + $0xc0] sm:$0xf]
  %v2477 = vld [vmem:[%s2231 + $0xc4] sm:$0xf]
  %v2478 = vld [vmem:[%s2231 + $0xc8] sm:$0xf]
  %v2479 = vld [vmem:[%s2231 + $0xcc] sm:$0xf]
  %v2480 = vld [vmem:[%s2231 + $0xd0] sm:$0xf]
  %v2481 = vld [vmem:[%s2231 + $0xd4] sm:$0xf]
  %v2482 = vld [vmem:[%s2231 + $0xd8] sm:$0xf]
  %s2483 = scalar_lea.vmem [#allocation2], 4
  %v2484 = vld [vmem:[%s2483] sm:$0xf]
  %v2485 = vld [vmem:[%s2483 + $0x4] sm:$0xf]
  %v2486 = vld [vmem:[%s2483 + $0x8] sm:$0xf]
  %v2487 = vld [vmem:[%s2483 + $0xc] sm:$0xf]
  %v2488 = vld [vmem:[%s2483 + $0x10] sm:$0xf]
  %v2489 = vld [vmem:[%s2483 + $0x14] sm:$0xf]
  %v2490 = vld [vmem:[%s2483 + $0x18] sm:$0xf]
  %v2491 = vld [vmem:[%s2483 + $0x20] sm:$0xf]
  %v2492 = vld [vmem:[%s2483 + $0x24] sm:$0xf]
  %v2493 = vld [vmem:[%s2483 + $0x28] sm:$0xf]
  %v2494 = vld [vmem:[%s2483 + $0x2c] sm:$0xf]
  %v2495 = vld [vmem:[%s2483 + $0x30] sm:$0xf]
  %v2496 = vld [vmem:[%s2483 + $0x34] sm:$0xf]
  %v2497 = vld [vmem:[%s2483 + $0x38] sm:$0xf]
  %v2498 = vld [vmem:[%s2483 + $0x40] sm:$0xf]
  %v2499 = vld [vmem:[%s2483 + $0x44] sm:$0xf]
  %v2500 = vld [vmem:[%s2483 + $0x48] sm:$0xf]
  %v2501 = vld [vmem:[%s2483 + $0x4c] sm:$0xf]
  %v2502 = vld [vmem:[%s2483 + $0x50] sm:$0xf]
  %v2503 = vld [vmem:[%s2483 + $0x54] sm:$0xf]
  %v2504 = vld [vmem:[%s2483 + $0x58] sm:$0xf]
  %v2505 = vld [vmem:[%s2483 + $0x60] sm:$0xf]
  %v2506 = vld [vmem:[%s2483 + $0x64] sm:$0xf]
  %v2507 = vld [vmem:[%s2483 + $0x68] sm:$0xf]
  %v2508 = vld [vmem:[%s2483 + $0x6c] sm:$0xf]
  %v2509 = vld [vmem:[%s2483 + $0x70] sm:$0xf]
  %v2510 = vld [vmem:[%s2483 + $0x74] sm:$0xf]
  %v2511 = vld [vmem:[%s2483 + $0x78] sm:$0xf]
  %v2512 = vld [vmem:[%s2483 + $0x80] sm:$0xf]
  %v2513 = vld [vmem:[%s2483 + $0x84] sm:$0xf]
  %v2514 = vld [vmem:[%s2483 + $0x88] sm:$0xf]
  %v2515 = vld [vmem:[%s2483 + $0x8c] sm:$0xf]
  %v2516 = vld [vmem:[%s2483 + $0x90] sm:$0xf]
  %v2517 = vld [vmem:[%s2483 + $0x94] sm:$0xf]
  %v2518 = vld [vmem:[%s2483 + $0x98] sm:$0xf]
  %v2519 = vld [vmem:[%s2483 + $0xa0] sm:$0xf]
  %v2520 = vld [vmem:[%s2483 + $0xa4] sm:$0xf]
  %v2521 = vld [vmem:[%s2483 + $0xa8] sm:$0xf]
  %v2522 = vld [vmem:[%s2483 + $0xac] sm:$0xf]
  %v2523 = vld [vmem:[%s2483 + $0xb0] sm:$0xf]
  %v2524 = vld [vmem:[%s2483 + $0xb4] sm:$0xf]
  %v2525 = vld [vmem:[%s2483 + $0xb8] sm:$0xf]
  %v2526 = vld [vmem:[%s2483 + $0xc0] sm:$0xf]
  %v2527 = vld [vmem:[%s2483 + $0xc4] sm:$0xf]
  %v2528 = vld [vmem:[%s2483 + $0xc8] sm:$0xf]
  %v2529 = vld [vmem:[%s2483 + $0xcc] sm:$0xf]
  %v2530 = vld [vmem:[%s2483 + $0xd0] sm:$0xf]
  %v2531 = vld [vmem:[%s2483 + $0xd4] sm:$0xf]
  %v2532 = vld [vmem:[%s2483 + $0xd8] sm:$0xf]
  %s2533 = scalar_lea.vmem [#allocation2], 260
  %v2534 = vld [vmem:[%s2533] sm:$0xf]
  %v2535 = vld [vmem:[%s2533 + $0x4] sm:$0xf]
  %v2536 = vld [vmem:[%s2533 + $0x8] sm:$0xf]
  %v2537 = vld [vmem:[%s2533 + $0xc] sm:$0xf]
  %v2538 = vld [vmem:[%s2533 + $0x10] sm:$0xf]
  %v2539 = vld [vmem:[%s2533 + $0x14] sm:$0xf]
  %v2540 = vld [vmem:[%s2533 + $0x18] sm:$0xf]
  %v2541 = vld [vmem:[%s2533 + $0x20] sm:$0xf]
  %v2542 = vld [vmem:[%s2533 + $0x24] sm:$0xf]
  %v2543 = vld [vmem:[%s2533 + $0x28] sm:$0xf]
  %v2544 = vld [vmem:[%s2533 + $0x2c] sm:$0xf]
  %v2545 = vld [vmem:[%s2533 + $0x30] sm:$0xf]
  %v2546 = vld [vmem:[%s2533 + $0x34] sm:$0xf]
  %v2547 = vld [vmem:[%s2533 + $0x38] sm:$0xf]
  %v2548 = vld [vmem:[%s2533 + $0x40] sm:$0xf]
  %v2549 = vld [vmem:[%s2533 + $0x44] sm:$0xf]
  %v2550 = vld [vmem:[%s2533 + $0x48] sm:$0xf]
  %v2551 = vld [vmem:[%s2533 + $0x4c] sm:$0xf]
  %v2552 = vld [vmem:[%s2533 + $0x50] sm:$0xf]
  %v2553 = vld [vmem:[%s2533 + $0x54] sm:$0xf]
  %v2554 = vld [vmem:[%s2533 + $0x58] sm:$0xf]
  %v2555 = vld [vmem:[%s2533 + $0x60] sm:$0xf]
  %v2556 = vld [vmem:[%s2533 + $0x64] sm:$0xf]
  %v2557 = vld [vmem:[%s2533 + $0x68] sm:$0xf]
  %v2558 = vld [vmem:[%s2533 + $0x6c] sm:$0xf]
  %v2559 = vld [vmem:[%s2533 + $0x70] sm:$0xf]
  %v2560 = vld [vmem:[%s2533 + $0x74] sm:$0xf]
  %v2561 = vld [vmem:[%s2533 + $0x78] sm:$0xf]
  %v2562 = vld [vmem:[%s2533 + $0x80] sm:$0xf]
  %v2563 = vld [vmem:[%s2533 + $0x84] sm:$0xf]
  %v2564 = vld [vmem:[%s2533 + $0x88] sm:$0xf]
  %v2565 = vld [vmem:[%s2533 + $0x8c] sm:$0xf]
  %v2566 = vld [vmem:[%s2533 + $0x90] sm:$0xf]
  %v2567 = vld [vmem:[%s2533 + $0x94] sm:$0xf]
  %v2568 = vld [vmem:[%s2533 + $0x98] sm:$0xf]
  %v2569 = vld [vmem:[%s2533 + $0xa0] sm:$0xf]
  %v2570 = vld [vmem:[%s2533 + $0xa4] sm:$0xf]
  %v2571 = vld [vmem:[%s2533 + $0xa8] sm:$0xf]
  %v2572 = vld [vmem:[%s2533 + $0xac] sm:$0xf]
  %v2573 = vld [vmem:[%s2533 + $0xb0] sm:$0xf]
  %v2574 = vld [vmem:[%s2533 + $0xb4] sm:$0xf]
  %v2575 = vld [vmem:[%s2533 + $0xb8] sm:$0xf]
  %v2576 = vld [vmem:[%s2533 + $0xc0] sm:$0xf]
  %v2577 = vld [vmem:[%s2533 + $0xc4] sm:$0xf]
  %v2578 = vld [vmem:[%s2533 + $0xc8] sm:$0xf]
  %v2579 = vld [vmem:[%s2533 + $0xcc] sm:$0xf]
  %v2580 = vld [vmem:[%s2533 + $0xd0] sm:$0xf]
  %v2581 = vld [vmem:[%s2533 + $0xd4] sm:$0xf]
  %v2582 = vld [vmem:[%s2533 + $0xd8] sm:$0xf]
  %v2583 = vld [vmem:[%s2308] sm:$0xf]
  %v2584 = vld [vmem:[%s2308 + $0x4] sm:$0xf]
  %v2585 = vld [vmem:[%s2308 + $0x8] sm:$0xf]
  %v2586 = vld [vmem:[%s2308 + $0xc] sm:$0xf]
  %v2587 = vld [vmem:[%s2308 + $0x10] sm:$0xf]
  %v2588 = vld [vmem:[%s2308 + $0x14] sm:$0xf]
  %v2589 = vld [vmem:[%s2308 + $0x18] sm:$0xf]
  %v2590 = vld [vmem:[%s2308 + $0x20] sm:$0xf]
  %v2591 = vld [vmem:[%s2308 + $0x24] sm:$0xf]
  %v2592 = vld [vmem:[%s2308 + $0x28] sm:$0xf]
  %v2593 = vld [vmem:[%s2308 + $0x2c] sm:$0xf]
  %v2594 = vld [vmem:[%s2308 + $0x30] sm:$0xf]
  %v2595 = vld [vmem:[%s2308 + $0x34] sm:$0xf]
  %v2596 = vld [vmem:[%s2308 + $0x38] sm:$0xf]
  %v2597 = vld [vmem:[%s2308 + $0x40] sm:$0xf]
  %v2598 = vld [vmem:[%s2308 + $0x44] sm:$0xf]
  %v2599 = vld [vmem:[%s2308 + $0x48] sm:$0xf]
  %v2600 = vld [vmem:[%s2308 + $0x4c] sm:$0xf]
  %v2601 = vld [vmem:[%s2308 + $0x50] sm:$0xf]
  %v2602 = vld [vmem:[%s2308 + $0x54] sm:$0xf]
  %v2603 = vld [vmem:[%s2308 + $0x58] sm:$0xf]
  %v2604 = vld [vmem:[%s2308 + $0x60] sm:$0xf]
  %v2605 = vld [vmem:[%s2308 + $0x64] sm:$0xf]
  %v2606 = vld [vmem:[%s2308 + $0x68] sm:$0xf]
  %v2607 = vld [vmem:[%s2308 + $0x6c] sm:$0xf]
  %v2608 = vld [vmem:[%s2308 + $0x70] sm:$0xf]
  %v2609 = vld [vmem:[%s2308 + $0x74] sm:$0xf]
  %v2610 = vld [vmem:[%s2308 + $0x78] sm:$0xf]
  %v2611 = vld [vmem:[%s2308 + $0x80] sm:$0xf]
  %v2612 = vld [vmem:[%s2308 + $0x84] sm:$0xf]
  %v2613 = vld [vmem:[%s2308 + $0x88] sm:$0xf]
  %v2614 = vld [vmem:[%s2308 + $0x8c] sm:$0xf]
  %v2615 = vld [vmem:[%s2308 + $0x90] sm:$0xf]
  %v2616 = vld [vmem:[%s2308 + $0x94] sm:$0xf]
  %v2617 = vld [vmem:[%s2308 + $0x98] sm:$0xf]
  %v2618 = vld [vmem:[%s2308 + $0xa0] sm:$0xf]
  %v2619 = vld [vmem:[%s2308 + $0xa4] sm:$0xf]
  %v2620 = vld [vmem:[%s2308 + $0xa8] sm:$0xf]
  %v2621 = vld [vmem:[%s2308 + $0xac] sm:$0xf]
  %v2622 = vld [vmem:[%s2308 + $0xb0] sm:$0xf]
  %v2623 = vld [vmem:[%s2308 + $0xb4] sm:$0xf]
  %v2624 = vld [vmem:[%s2308 + $0xb8] sm:$0xf]
  %v2625 = vld [vmem:[%s2308 + $0xc0] sm:$0xf]
  %v2626 = vld [vmem:[%s2308 + $0xc4] sm:$0xf]
  %v2627 = vld [vmem:[%s2308 + $0xc8] sm:$0xf]
  %v2628 = vld [vmem:[%s2308 + $0xcc] sm:$0xf]
  %v2629 = vld [vmem:[%s2308 + $0xd0] sm:$0xf]
  %v2630 = vld [vmem:[%s2308 + $0xd4] sm:$0xf]
  %v2631 = vld [vmem:[%s2308 + $0xd8] sm:$0xf]
  %v2632 = vld [vmem:[%s2317] sm:$0xf]
  %v2633 = vld [vmem:[%s2317 + $0x4] sm:$0xf]
  %v2634 = vld [vmem:[%s2317 + $0x8] sm:$0xf]
  %v2635 = vld [vmem:[%s2317 + $0xc] sm:$0xf]
  %v2636 = vld [vmem:[%s2317 + $0x10] sm:$0xf]
  %v2637 = vld [vmem:[%s2317 + $0x14] sm:$0xf]
  %v2638 = vld [vmem:[%s2317 + $0x18] sm:$0xf]
  %v2639 = vld [vmem:[%s2317 + $0x20] sm:$0xf]
  %v2640 = vld [vmem:[%s2317 + $0x24] sm:$0xf]
  %v2641 = vld [vmem:[%s2317 + $0x28] sm:$0xf]
  %v2642 = vld [vmem:[%s2317 + $0x2c] sm:$0xf]
  %v2643 = vld [vmem:[%s2317 + $0x30] sm:$0xf]
  %v2644 = vld [vmem:[%s2317 + $0x34] sm:$0xf]
  %v2645 = vld [vmem:[%s2317 + $0x38] sm:$0xf]
  %v2646 = vld [vmem:[%s2317 + $0x40] sm:$0xf]
  %v2647 = vld [vmem:[%s2317 + $0x44] sm:$0xf]
  %v2648 = vld [vmem:[%s2317 + $0x48] sm:$0xf]
  %v2649 = vld [vmem:[%s2317 + $0x4c] sm:$0xf]
  %v2650 = vld [vmem:[%s2317 + $0x50] sm:$0xf]
  %v2651 = vld [vmem:[%s2317 + $0x54] sm:$0xf]
  %v2652 = vld [vmem:[%s2317 + $0x58] sm:$0xf]
  %v2653 = vld [vmem:[%s2317 + $0x60] sm:$0xf]
  %v2654 = vld [vmem:[%s2317 + $0x64] sm:$0xf]
  %v2655 = vld [vmem:[%s2317 + $0x68] sm:$0xf]
  %v2656 = vld [vmem:[%s2317 + $0x6c] sm:$0xf]
  %v2657 = vld [vmem:[%s2317 + $0x70] sm:$0xf]
  %v2658 = vld [vmem:[%s2317 + $0x74] sm:$0xf]
  %v2659 = vld [vmem:[%s2317 + $0x78] sm:$0xf]
  %v2660 = vld [vmem:[%s2317 + $0x80] sm:$0xf]
  %v2661 = vld [vmem:[%s2317 + $0x84] sm:$0xf]
  %v2662 = vld [vmem:[%s2317 + $0x88] sm:$0xf]
  %v2663 = vld [vmem:[%s2317 + $0x8c] sm:$0xf]
  %v2664 = vld [vmem:[%s2317 + $0x90] sm:$0xf]
  %v2665 = vld [vmem:[%s2317 + $0x94] sm:$0xf]
  %v2666 = vld [vmem:[%s2317 + $0x98] sm:$0xf]
  %v2667 = vld [vmem:[%s2317 + $0xa0] sm:$0xf]
  %v2668 = vld [vmem:[%s2317 + $0xa4] sm:$0xf]
  %v2669 = vld [vmem:[%s2317 + $0xa8] sm:$0xf]
  %v2670 = vld [vmem:[%s2317 + $0xac] sm:$0xf]
  %v2671 = vld [vmem:[%s2317 + $0xb0] sm:$0xf]
  %v2672 = vld [vmem:[%s2317 + $0xb4] sm:$0xf]
  %v2673 = vld [vmem:[%s2317 + $0xb8] sm:$0xf]
  %v2674 = vld [vmem:[%s2317 + $0xc0] sm:$0xf]
  %v2675 = vld [vmem:[%s2317 + $0xc4] sm:$0xf]
  %v2676 = vld [vmem:[%s2317 + $0xc8] sm:$0xf]
  %v2677 = vld [vmem:[%s2317 + $0xcc] sm:$0xf]
  %v2678 = vld [vmem:[%s2317 + $0xd0] sm:$0xf]
  %v2679 = vld [vmem:[%s2317 + $0xd4] sm:$0xf]
  %v2680 = vld [vmem:[%s2317 + $0xd8] sm:$0xf]
  %v2681 = vld [vmem:[%s2249] sm:$0xf]
  %v2682 = vld [vmem:[%s2249 + $0x4] sm:$0xf]
  %v2683 = vld [vmem:[%s2249 + $0x8] sm:$0xf]
  %v2684 = vld [vmem:[%s2249 + $0xc] sm:$0xf]
  %v2685 = vld [vmem:[%s2249 + $0x10] sm:$0xf]
  %v2686 = vld [vmem:[%s2249 + $0x14] sm:$0xf]
  %v2687 = vld [vmem:[%s2249 + $0x18] sm:$0xf]
  %v2688 = vld [vmem:[%s2249 + $0x20] sm:$0xf]
  %v2689 = vld [vmem:[%s2249 + $0x24] sm:$0xf]
  %v2690 = vld [vmem:[%s2249 + $0x28] sm:$0xf]
  %v2691 = vld [vmem:[%s2249 + $0x2c] sm:$0xf]
  %v2692 = vld [vmem:[%s2249 + $0x30] sm:$0xf]
  %v2693 = vld [vmem:[%s2249 + $0x34] sm:$0xf]
  %v2694 = vld [vmem:[%s2249 + $0x38] sm:$0xf]
  %v2695 = vld [vmem:[%s2249 + $0x40] sm:$0xf]
  %v2696 = vld [vmem:[%s2249 + $0x44] sm:$0xf]
  %v2697 = vld [vmem:[%s2249 + $0x48] sm:$0xf]
  %v2698 = vld [vmem:[%s2249 + $0x4c] sm:$0xf]
  %v2699 = vld [vmem:[%s2249 + $0x50] sm:$0xf]
  %v2700 = vld [vmem:[%s2249 + $0x54] sm:$0xf]
  %v2701 = vld [vmem:[%s2249 + $0x58] sm:$0xf]
  %v2702 = vld [vmem:[%s2249 + $0x60] sm:$0xf]
  %v2703 = vld [vmem:[%s2249 + $0x64] sm:$0xf]
  %v2704 = vld [vmem:[%s2249 + $0x68] sm:$0xf]
  %v2705 = vld [vmem:[%s2249 + $0x6c] sm:$0xf]
  %v2706 = vld [vmem:[%s2249 + $0x70] sm:$0xf]
  %v2707 = vld [vmem:[%s2249 + $0x74] sm:$0xf]
  %v2708 = vld [vmem:[%s2249 + $0x78] sm:$0xf]
  %v2709 = vld [vmem:[%s2249 + $0x80] sm:$0xf]
  %v2710 = vld [vmem:[%s2249 + $0x84] sm:$0xf]
  %v2711 = vld [vmem:[%s2249 + $0x88] sm:$0xf]
  %v2712 = vld [vmem:[%s2249 + $0x8c] sm:$0xf]
  %v2713 = vld [vmem:[%s2249 + $0x90] sm:$0xf]
  %v2714 = vld [vmem:[%s2249 + $0x94] sm:$0xf]
  %v2715 = vld [vmem:[%s2249 + $0x98] sm:$0xf]
  %v2716 = vld [vmem:[%s2249 + $0xa0] sm:$0xf]
  %v2717 = vld [vmem:[%s2249 + $0xa4] sm:$0xf]
  %v2718 = vld [vmem:[%s2249 + $0xa8] sm:$0xf]
  %v2719 = vld [vmem:[%s2249 + $0xac] sm:$0xf]
  %v2720 = vld [vmem:[%s2249 + $0xb0] sm:$0xf]
  %v2721 = vld [vmem:[%s2249 + $0xb4] sm:$0xf]
  %v2722 = vld [vmem:[%s2249 + $0xb8] sm:$0xf]
  %v2723 = vld [vmem:[%s2249 + $0xc0] sm:$0xf]
  %v2724 = vld [vmem:[%s2249 + $0xc4] sm:$0xf]
  %v2725 = vld [vmem:[%s2249 + $0xc8] sm:$0xf]
  %v2726 = vld [vmem:[%s2249 + $0xcc] sm:$0xf]
  %v2727 = vld [vmem:[%s2249 + $0xd0] sm:$0xf]
  %v2728 = vld [vmem:[%s2249 + $0xd4] sm:$0xf]
  %v2729 = vld [vmem:[%s2249 + $0xd8] sm:$0xf]
  %s2730 = scalar_lea.vmem [#allocation2], 772
  %v2731 = vld [vmem:[%s2730] sm:$0xf]
  %v2732 = vld [vmem:[%s2730 + $0x4] sm:$0xf]
  %v2733 = vld [vmem:[%s2730 + $0x8] sm:$0xf]
  %v2734 = vld [vmem:[%s2730 + $0xc] sm:$0xf]
  %v2735 = vld [vmem:[%s2730 + $0x10] sm:$0xf]
  %v2736 = vld [vmem:[%s2730 + $0x14] sm:$0xf]
  %v2737 = vld [vmem:[%s2730 + $0x18] sm:$0xf]
  %v2738 = vld [vmem:[%s2730 + $0x20] sm:$0xf]
  %v2739 = vld [vmem:[%s2730 + $0x24] sm:$0xf]
  %v2740 = vld [vmem:[%s2730 + $0x28] sm:$0xf]
  %v2741 = vld [vmem:[%s2730 + $0x2c] sm:$0xf]
  %v2742 = vld [vmem:[%s2730 + $0x30] sm:$0xf]
  %v2743 = vld [vmem:[%s2730 + $0x34] sm:$0xf]
  %v2744 = vld [vmem:[%s2730 + $0x38] sm:$0xf]
  %v2745 = vld [vmem:[%s2730 + $0x40] sm:$0xf]
  %v2746 = vld [vmem:[%s2730 + $0x44] sm:$0xf]
  %v2747 = vld [vmem:[%s2730 + $0x48] sm:$0xf]
  %v2748 = vld [vmem:[%s2730 + $0x4c] sm:$0xf]
  %v2749 = vld [vmem:[%s2730 + $0x50] sm:$0xf]
  %v2750 = vld [vmem:[%s2730 + $0x54] sm:$0xf]
  %v2751 = vld [vmem:[%s2730 + $0x58] sm:$0xf]
  %v2752 = vld [vmem:[%s2730 + $0x60] sm:$0xf]
  %v2753 = vld [vmem:[%s2730 + $0x64] sm:$0xf]
  %v2754 = vld [vmem:[%s2730 + $0x68] sm:$0xf]
  %v2755 = vld [vmem:[%s2730 + $0x6c] sm:$0xf]
  %v2756 = vld [vmem:[%s2730 + $0x70] sm:$0xf]
  %v2757 = vld [vmem:[%s2730 + $0x74] sm:$0xf]
  %v2758 = vld [vmem:[%s2730 + $0x78] sm:$0xf]
  %v2759 = vld [vmem:[%s2730 + $0x80] sm:$0xf]
  %v2760 = vld [vmem:[%s2730 + $0x84] sm:$0xf]
  %v2761 = vld [vmem:[%s2730 + $0x88] sm:$0xf]
  %v2762 = vld [vmem:[%s2730 + $0x8c] sm:$0xf]
  %v2763 = vld [vmem:[%s2730 + $0x90] sm:$0xf]
  %v2764 = vld [vmem:[%s2730 + $0x94] sm:$0xf]
  %v2765 = vld [vmem:[%s2730 + $0x98] sm:$0xf]
  %v2766 = vld [vmem:[%s2730 + $0xa0] sm:$0xf]
  %v2767 = vld [vmem:[%s2730 + $0xa4] sm:$0xf]
  %v2768 = vld [vmem:[%s2730 + $0xa8] sm:$0xf]
  %v2769 = vld [vmem:[%s2730 + $0xac] sm:$0xf]
  %v2770 = vld [vmem:[%s2730 + $0xb0] sm:$0xf]
  %v2771 = vld [vmem:[%s2730 + $0xb4] sm:$0xf]
  %v2772 = vld [vmem:[%s2730 + $0xb8] sm:$0xf]
  %v2773 = vld [vmem:[%s2730 + $0xc0] sm:$0xf]
  %v2774 = vld [vmem:[%s2730 + $0xc4] sm:$0xf]
  %v2775 = vld [vmem:[%s2730 + $0xc8] sm:$0xf]
  %v2776 = vld [vmem:[%s2730 + $0xcc] sm:$0xf]
  %v2777 = vld [vmem:[%s2730 + $0xd0] sm:$0xf]
  %v2778 = vld [vmem:[%s2730 + $0xd4] sm:$0xf]
  %v2779 = vld [vmem:[%s2730 + $0xd8] sm:$0xf]
  %s2780 = scalar_lea.vmem [#allocation2], 32
  %v2781 = vld [vmem:[%s2780] sm:$0xf]
  %v2782 = vld [vmem:[%s2780 + $0x4] sm:$0xf]
  %v2783 = vld [vmem:[%s2780 + $0x8] sm:$0xf]
  %v2784 = vld [vmem:[%s2780 + $0xc] sm:$0xf]
  %v2785 = vld [vmem:[%s2780 + $0x10] sm:$0xf]
  %v2786 = vld [vmem:[%s2780 + $0x14] sm:$0xf]
  %v2787 = vld [vmem:[%s2780 + $0x18] sm:$0xf]
  %v2788 = vld [vmem:[%s2780 + $0x20] sm:$0xf]
  %v2789 = vld [vmem:[%s2780 + $0x24] sm:$0xf]
  %v2790 = vld [vmem:[%s2780 + $0x28] sm:$0xf]
  %v2791 = vld [vmem:[%s2780 + $0x2c] sm:$0xf]
  %v2792 = vld [vmem:[%s2780 + $0x30] sm:$0xf]
  %v2793 = vld [vmem:[%s2780 + $0x34] sm:$0xf]
  %v2794 = vld [vmem:[%s2780 + $0x38] sm:$0xf]
  %v2795 = vld [vmem:[%s2780 + $0x40] sm:$0xf]
  %v2796 = vld [vmem:[%s2780 + $0x44] sm:$0xf]
  %v2797 = vld [vmem:[%s2780 + $0x48] sm:$0xf]
  %v2798 = vld [vmem:[%s2780 + $0x4c] sm:$0xf]
  %v2799 = vld [vmem:[%s2780 + $0x50] sm:$0xf]
  %v2800 = vld [vmem:[%s2780 + $0x54] sm:$0xf]
  %v2801 = vld [vmem:[%s2780 + $0x58] sm:$0xf]
  %v2802 = vld [vmem:[%s2780 + $0x60] sm:$0xf]
  %v2803 = vld [vmem:[%s2780 + $0x64] sm:$0xf]
  %v2804 = vld [vmem:[%s2780 + $0x68] sm:$0xf]
  %v2805 = vld [vmem:[%s2780 + $0x6c] sm:$0xf]
  %v2806 = vld [vmem:[%s2780 + $0x70] sm:$0xf]
  %v2807 = vld [vmem:[%s2780 + $0x74] sm:$0xf]
  %v2808 = vld [vmem:[%s2780 + $0x78] sm:$0xf]
  %v2809 = vld [vmem:[%s2780 + $0x80] sm:$0xf]
  %v2810 = vld [vmem:[%s2780 + $0x84] sm:$0xf]
  %v2811 = vld [vmem:[%s2780 + $0x88] sm:$0xf]
  %v2812 = vld [vmem:[%s2780 + $0x8c] sm:$0xf]
  %v2813 = vld [vmem:[%s2780 + $0x90] sm:$0xf]
  %v2814 = vld [vmem:[%s2780 + $0x94] sm:$0xf]
  %v2815 = vld [vmem:[%s2780 + $0x98] sm:$0xf]
  %v2816 = vld [vmem:[%s2780 + $0xa0] sm:$0xf]
  %v2817 = vld [vmem:[%s2780 + $0xa4] sm:$0xf]
  %v2818 = vld [vmem:[%s2780 + $0xa8] sm:$0xf]
  %v2819 = vld [vmem:[%s2780 + $0xac] sm:$0xf]
  %v2820 = vld [vmem:[%s2780 + $0xb0] sm:$0xf]
  %v2821 = vld [vmem:[%s2780 + $0xb4] sm:$0xf]
  %v2822 = vld [vmem:[%s2780 + $0xb8] sm:$0xf]
  %v2823 = vld [vmem:[%s2780 + $0xc0] sm:$0xf]
  %v2824 = vld [vmem:[%s2780 + $0xc4] sm:$0xf]
  %v2825 = vld [vmem:[%s2780 + $0xc8] sm:$0xf]
  %v2826 = vld [vmem:[%s2780 + $0xcc] sm:$0xf]
  %v2827 = vld [vmem:[%s2780 + $0xd0] sm:$0xf]
  %v2828 = vld [vmem:[%s2780 + $0xd4] sm:$0xf]
  %v2829 = vld [vmem:[%s2780 + $0xd8] sm:$0xf]
  %v2830 = vld [vmem:[%s2181] sm:$0xf]
  %v2831 = vld [vmem:[%s2181 + $0x4] sm:$0xf]
  %v2832 = vld [vmem:[%s2181 + $0x8] sm:$0xf]
  %v2833 = vld [vmem:[%s2181 + $0xc] sm:$0xf]
  %v2834 = vld [vmem:[%s2181 + $0x10] sm:$0xf]
  %v2835 = vld [vmem:[%s2181 + $0x14] sm:$0xf]
  %v2836 = vld [vmem:[%s2181 + $0x18] sm:$0xf]
  %v2837 = vld [vmem:[%s2181 + $0x20] sm:$0xf]
  %v2838 = vld [vmem:[%s2181 + $0x24] sm:$0xf]
  %v2839 = vld [vmem:[%s2181 + $0x28] sm:$0xf]
  %v2840 = vld [vmem:[%s2181 + $0x2c] sm:$0xf]
  %v2841 = vld [vmem:[%s2181 + $0x30] sm:$0xf]
  %v2842 = vld [vmem:[%s2181 + $0x34] sm:$0xf]
  %v2843 = vld [vmem:[%s2181 + $0x38] sm:$0xf]
  %v2844 = vld [vmem:[%s2181 + $0x40] sm:$0xf]
  %v2845 = vld [vmem:[%s2181 + $0x44] sm:$0xf]
  %v2846 = vld [vmem:[%s2181 + $0x48] sm:$0xf]
  %v2847 = vld [vmem:[%s2181 + $0x4c] sm:$0xf]
  %v2848 = vld [vmem:[%s2181 + $0x50] sm:$0xf]
  %v2849 = vld [vmem:[%s2181 + $0x54] sm:$0xf]
  %v2850 = vld [vmem:[%s2181 + $0x58] sm:$0xf]
  %v2851 = vld [vmem:[%s2181 + $0x60] sm:$0xf]
  %v2852 = vld [vmem:[%s2181 + $0x64] sm:$0xf]
  %v2853 = vld [vmem:[%s2181 + $0x68] sm:$0xf]
  %v2854 = vld [vmem:[%s2181 + $0x6c] sm:$0xf]
  %v2855 = vld [vmem:[%s2181 + $0x70] sm:$0xf]
  %v2856 = vld [vmem:[%s2181 + $0x74] sm:$0xf]
  %v2857 = vld [vmem:[%s2181 + $0x78] sm:$0xf]
  %v2858 = vld [vmem:[%s2181 + $0x80] sm:$0xf]
  %v2859 = vld [vmem:[%s2181 + $0x84] sm:$0xf]
  %v2860 = vld [vmem:[%s2181 + $0x88] sm:$0xf]
  %v2861 = vld [vmem:[%s2181 + $0x8c] sm:$0xf]
  %v2862 = vld [vmem:[%s2181 + $0x90] sm:$0xf]
  %v2863 = vld [vmem:[%s2181 + $0x94] sm:$0xf]
  %v2864 = vld [vmem:[%s2181 + $0x98] sm:$0xf]
  %v2865 = vld [vmem:[%s2181 + $0xa0] sm:$0xf]
  %v2866 = vld [vmem:[%s2181 + $0xa4] sm:$0xf]
  %v2867 = vld [vmem:[%s2181 + $0xa8] sm:$0xf]
  %v2868 = vld [vmem:[%s2181 + $0xac] sm:$0xf]
  %v2869 = vld [vmem:[%s2181 + $0xb0] sm:$0xf]
  %v2870 = vld [vmem:[%s2181 + $0xb4] sm:$0xf]
  %v2871 = vld [vmem:[%s2181 + $0xb8] sm:$0xf]
  %v2872 = vld [vmem:[%s2181 + $0xc0] sm:$0xf]
  %v2873 = vld [vmem:[%s2181 + $0xc4] sm:$0xf]
  %v2874 = vld [vmem:[%s2181 + $0xc8] sm:$0xf]
  %v2875 = vld [vmem:[%s2181 + $0xcc] sm:$0xf]
  %v2876 = vld [vmem:[%s2181 + $0xd0] sm:$0xf]
  %v2877 = vld [vmem:[%s2181 + $0xd4] sm:$0xf]
  %v2878 = vld [vmem:[%s2181 + $0xd8] sm:$0xf]
  %v2879 = vld [vmem:[%s2115] sm:$0xf]
  %v2880 = vld [vmem:[%s2115 + $0x4] sm:$0xf]
  %v2881 = vld [vmem:[%s2115 + $0x8] sm:$0xf]
  %v2882 = vld [vmem:[%s2115 + $0xc] sm:$0xf]
  %v2883 = vld [vmem:[%s2115 + $0x10] sm:$0xf]
  %v2884 = vld [vmem:[%s2115 + $0x14] sm:$0xf]
  %v2885 = vld [vmem:[%s2115 + $0x18] sm:$0xf]
  %v2886 = vld [vmem:[%s2115 + $0x20] sm:$0xf]
  %v2887 = vld [vmem:[%s2115 + $0x24] sm:$0xf]
  %v2888 = vld [vmem:[%s2115 + $0x28] sm:$0xf]
  %v2889 = vld [vmem:[%s2115 + $0x2c] sm:$0xf]
  %v2890 = vld [vmem:[%s2115 + $0x30] sm:$0xf]
  %v2891 = vld [vmem:[%s2115 + $0x34] sm:$0xf]
  %v2892 = vld [vmem:[%s2115 + $0x38] sm:$0xf]
  %v2893 = vld [vmem:[%s2115 + $0x40] sm:$0xf]
  %v2894 = vld [vmem:[%s2115 + $0x44] sm:$0xf]
  %v2895 = vld [vmem:[%s2115 + $0x48] sm:$0xf]
  %v2896 = vld [vmem:[%s2115 + $0x4c] sm:$0xf]
  %v2897 = vld [vmem:[%s2115 + $0x50] sm:$0xf]
  %v2898 = vld [vmem:[%s2115 + $0x54] sm:$0xf]
  %v2899 = vld [vmem:[%s2115 + $0x58] sm:$0xf]
  %v2900 = vld [vmem:[%s2115 + $0x60] sm:$0xf]
  %v2901 = vld [vmem:[%s2115 + $0x64] sm:$0xf]
  %v2902 = vld [vmem:[%s2115 + $0x68] sm:$0xf]
  %v2903 = vld [vmem:[%s2115 + $0x6c] sm:$0xf]
  %v2904 = vld [vmem:[%s2115 + $0x70] sm:$0xf]
  %v2905 = vld [vmem:[%s2115 + $0x74] sm:$0xf]
  %v2906 = vld [vmem:[%s2115 + $0x78] sm:$0xf]
  %v2907 = vld [vmem:[%s2115 + $0x80] sm:$0xf]
  %v2908 = vld [vmem:[%s2115 + $0x84] sm:$0xf]
  %v2909 = vld [vmem:[%s2115 + $0x88] sm:$0xf]
  %v2910 = vld [vmem:[%s2115 + $0x8c] sm:$0xf]
  %v2911 = vld [vmem:[%s2115 + $0x90] sm:$0xf]
  %v2912 = vld [vmem:[%s2115 + $0x94] sm:$0xf]
  %v2913 = vld [vmem:[%s2115 + $0x98] sm:$0xf]
  %v2914 = vld [vmem:[%s2115 + $0xa0] sm:$0xf]
  %v2915 = vld [vmem:[%s2115 + $0xa4] sm:$0xf]
  %v2916 = vld [vmem:[%s2115 + $0xa8] sm:$0xf]
  %v2917 = vld [vmem:[%s2115 + $0xac] sm:$0xf]
  %v2918 = vld [vmem:[%s2115 + $0xb0] sm:$0xf]
  %v2919 = vld [vmem:[%s2115 + $0xb4] sm:$0xf]
  %v2920 = vld [vmem:[%s2115 + $0xb8] sm:$0xf]
  %v2921 = vld [vmem:[%s2115 + $0xc0] sm:$0xf]
  %v2922 = vld [vmem:[%s2115 + $0xc4] sm:$0xf]
  %v2923 = vld [vmem:[%s2115 + $0xc8] sm:$0xf]
  %v2924 = vld [vmem:[%s2115 + $0xcc] sm:$0xf]
  %v2925 = vld [vmem:[%s2115 + $0xd0] sm:$0xf]
  %v2926 = vld [vmem:[%s2115 + $0xd4] sm:$0xf]
  %v2927 = vld [vmem:[%s2115 + $0xd8] sm:$0xf]
  %s2928 = scalar_lea.vmem [#allocation2], 292
  %v2929 = vld [vmem:[%s2928] sm:$0xf]
  %v2930 = vld [vmem:[%s2928 + $0x4] sm:$0xf]
  %v2931 = vld [vmem:[%s2928 + $0x8] sm:$0xf]
  %v2932 = vld [vmem:[%s2928 + $0xc] sm:$0xf]
  %v2933 = vld [vmem:[%s2928 + $0x10] sm:$0xf]
  %v2934 = vld [vmem:[%s2928 + $0x14] sm:$0xf]
  %v2935 = vld [vmem:[%s2928 + $0x18] sm:$0xf]
  %v2936 = vld [vmem:[%s2928 + $0x20] sm:$0xf]
  %v2937 = vld [vmem:[%s2928 + $0x24] sm:$0xf]
  %v2938 = vld [vmem:[%s2928 + $0x28] sm:$0xf]
  %v2939 = vld [vmem:[%s2928 + $0x2c] sm:$0xf]
  %v2940 = vld [vmem:[%s2928 + $0x30] sm:$0xf]
  %v2941 = vld [vmem:[%s2928 + $0x34] sm:$0xf]
  %v2942 = vld [vmem:[%s2928 + $0x38] sm:$0xf]
  %v2943 = vld [vmem:[%s2928 + $0x40] sm:$0xf]
  %v2944 = vld [vmem:[%s2928 + $0x44] sm:$0xf]
  %v2945 = vld [vmem:[%s2928 + $0x48] sm:$0xf]
  %v2946 = vld [vmem:[%s2928 + $0x4c] sm:$0xf]
  %v2947 = vld [vmem:[%s2928 + $0x50] sm:$0xf]
  %v2948 = vld [vmem:[%s2928 + $0x54] sm:$0xf]
  %v2949 = vld [vmem:[%s2928 + $0x58] sm:$0xf]
  %v2950 = vld [vmem:[%s2928 + $0x60] sm:$0xf]
  %v2951 = vld [vmem:[%s2928 + $0x64] sm:$0xf]
  %v2952 = vld [vmem:[%s2928 + $0x68] sm:$0xf]
  %v2953 = vld [vmem:[%s2928 + $0x6c] sm:$0xf]
  %v2954 = vld [vmem:[%s2928 + $0x70] sm:$0xf]
  %v2955 = vld [vmem:[%s2928 + $0x74] sm:$0xf]
  %v2956 = vld [vmem:[%s2928 + $0x78] sm:$0xf]
  %v2957 = vld [vmem:[%s2928 + $0x80] sm:$0xf]
  %v2958 = vld [vmem:[%s2928 + $0x84] sm:$0xf]
  %v2959 = vld [vmem:[%s2928 + $0x88] sm:$0xf]
  %v2960 = vld [vmem:[%s2928 + $0x8c] sm:$0xf]
  %v2961 = vld [vmem:[%s2928 + $0x90] sm:$0xf]
  %v2962 = vld [vmem:[%s2928 + $0x94] sm:$0xf]
  %v2963 = vld [vmem:[%s2928 + $0x98] sm:$0xf]
  %v2964 = vld [vmem:[%s2928 + $0xa0] sm:$0xf]
  %v2965 = vld [vmem:[%s2928 + $0xa4] sm:$0xf]
  %v2966 = vld [vmem:[%s2928 + $0xa8] sm:$0xf]
  %v2967 = vld [vmem:[%s2928 + $0xac] sm:$0xf]
  %v2968 = vld [vmem:[%s2928 + $0xb0] sm:$0xf]
  %v2969 = vld [vmem:[%s2928 + $0xb4] sm:$0xf]
  %v2970 = vld [vmem:[%s2928 + $0xb8] sm:$0xf]
  %v2971 = vld [vmem:[%s2928 + $0xc0] sm:$0xf]
  %v2972 = vld [vmem:[%s2928 + $0xc4] sm:$0xf]
  %v2973 = vld [vmem:[%s2928 + $0xc8] sm:$0xf]
  %v2974 = vld [vmem:[%s2928 + $0xcc] sm:$0xf]
  %v2975 = vld [vmem:[%s2928 + $0xd0] sm:$0xf]
  %v2976 = vld [vmem:[%s2928 + $0xd4] sm:$0xf]
  %v2977 = vld [vmem:[%s2928 + $0xd8] sm:$0xf]
  %s2978 = scalar_lea.vmem [#allocation2], 544
  %v2979 = vld [vmem:[%s2978] sm:$0xf]
  %v2980 = vld [vmem:[%s2978 + $0x4] sm:$0xf]
  %v2981 = vld [vmem:[%s2978 + $0x8] sm:$0xf]
  %v2982 = vld [vmem:[%s2978 + $0xc] sm:$0xf]
  %v2983 = vld [vmem:[%s2978 + $0x10] sm:$0xf]
  %v2984 = vld [vmem:[%s2978 + $0x14] sm:$0xf]
  %v2985 = vld [vmem:[%s2978 + $0x18] sm:$0xf]
  %v2986 = vld [vmem:[%s2978 + $0x20] sm:$0xf]
  %v2987 = vld [vmem:[%s2978 + $0x24] sm:$0xf]
  %v2988 = vld [vmem:[%s2978 + $0x28] sm:$0xf]
  %v2989 = vld [vmem:[%s2978 + $0x2c] sm:$0xf]
  %v2990 = vld [vmem:[%s2978 + $0x30] sm:$0xf]
  %v2991 = vld [vmem:[%s2978 + $0x34] sm:$0xf]
  %v2992 = vld [vmem:[%s2978 + $0x38] sm:$0xf]
  %v2993 = vld [vmem:[%s2978 + $0x40] sm:$0xf]
  %v2994 = vld [vmem:[%s2978 + $0x44] sm:$0xf]
  %v2995 = vld [vmem:[%s2978 + $0x48] sm:$0xf]
  %v2996 = vld [vmem:[%s2978 + $0x4c] sm:$0xf]
  %v2997 = vld [vmem:[%s2978 + $0x50] sm:$0xf]
  %v2998 = vld [vmem:[%s2978 + $0x54] sm:$0xf]
  %v2999 = vld [vmem:[%s2978 + $0x58] sm:$0xf]
  %v3000 = vld [vmem:[%s2978 + $0x60] sm:$0xf]
  %v3001 = vld [vmem:[%s2978 + $0x64] sm:$0xf]
  %v3002 = vld [vmem:[%s2978 + $0x68] sm:$0xf]
  %v3003 = vld [vmem:[%s2978 + $0x6c] sm:$0xf]
  %v3004 = vld [vmem:[%s2978 + $0x70] sm:$0xf]
  %v3005 = vld [vmem:[%s2978 + $0x74] sm:$0xf]
  %v3006 = vld [vmem:[%s2978 + $0x78] sm:$0xf]
  %v3007 = vld [vmem:[%s2978 + $0x80] sm:$0xf]
  %v3008 = vld [vmem:[%s2978 + $0x84] sm:$0xf]
  %v3009 = vld [vmem:[%s2978 + $0x88] sm:$0xf]
  %v3010 = vld [vmem:[%s2978 + $0x8c] sm:$0xf]
  %v3011 = vld [vmem:[%s2978 + $0x90] sm:$0xf]
  %v3012 = vld [vmem:[%s2978 + $0x94] sm:$0xf]
  %v3013 = vld [vmem:[%s2978 + $0x98] sm:$0xf]
  %v3014 = vld [vmem:[%s2978 + $0xa0] sm:$0xf]
  %v3015 = vld [vmem:[%s2978 + $0xa4] sm:$0xf]
  %v3016 = vld [vmem:[%s2978 + $0xa8] sm:$0xf]
  %v3017 = vld [vmem:[%s2978 + $0xac] sm:$0xf]
  %v3018 = vld [vmem:[%s2978 + $0xb0] sm:$0xf]
  %v3019 = vld [vmem:[%s2978 + $0xb4] sm:$0xf]
  %v3020 = vld [vmem:[%s2978 + $0xb8] sm:$0xf]
  %v3021 = vld [vmem:[%s2978 + $0xc0] sm:$0xf]
  %v3022 = vld [vmem:[%s2978 + $0xc4] sm:$0xf]
  %v3023 = vld [vmem:[%s2978 + $0xc8] sm:$0xf]
  %v3024 = vld [vmem:[%s2978 + $0xcc] sm:$0xf]
  %v3025 = vld [vmem:[%s2978 + $0xd0] sm:$0xf]
  %v3026 = vld [vmem:[%s2978 + $0xd4] sm:$0xf]
  %v3027 = vld [vmem:[%s2978 + $0xd8] sm:$0xf]
  %s3028 = scalar_lea.vmem [#allocation2], 800
  %v3029 = vld [vmem:[%s3028] sm:$0xf]
  %v3030 = vld [vmem:[%s3028 + $0x4] sm:$0xf]
  %v3031 = vld [vmem:[%s3028 + $0x8] sm:$0xf]
  %v3032 = vld [vmem:[%s3028 + $0xc] sm:$0xf]
  %v3033 = vld [vmem:[%s3028 + $0x10] sm:$0xf]
  %v3034 = vld [vmem:[%s3028 + $0x14] sm:$0xf]
  %v3035 = vld [vmem:[%s3028 + $0x18] sm:$0xf]
  %v3036 = vld [vmem:[%s3028 + $0x20] sm:$0xf]
  %v3037 = vld [vmem:[%s3028 + $0x24] sm:$0xf]
  %v3038 = vld [vmem:[%s3028 + $0x28] sm:$0xf]
  %v3039 = vld [vmem:[%s3028 + $0x2c] sm:$0xf]
  %v3040 = vld [vmem:[%s3028 + $0x30] sm:$0xf]
  %v3041 = vld [vmem:[%s3028 + $0x34] sm:$0xf]
  %v3042 = vld [vmem:[%s3028 + $0x38] sm:$0xf]
  %v3043 = vld [vmem:[%s3028 + $0x40] sm:$0xf]
  %v3044 = vld [vmem:[%s3028 + $0x44] sm:$0xf]
  %v3045 = vld [vmem:[%s3028 + $0x48] sm:$0xf]
  %v3046 = vld [vmem:[%s3028 + $0x4c] sm:$0xf]
  %v3047 = vld [vmem:[%s3028 + $0x50] sm:$0xf]
  %v3048 = vld [vmem:[%s3028 + $0x54] sm:$0xf]
  %v3049 = vld [vmem:[%s3028 + $0x58] sm:$0xf]
  %v3050 = vld [vmem:[%s3028 + $0x60] sm:$0xf]
  %v3051 = vld [vmem:[%s3028 + $0x64] sm:$0xf]
  %v3052 = vld [vmem:[%s3028 + $0x68] sm:$0xf]
  %v3053 = vld [vmem:[%s3028 + $0x6c] sm:$0xf]
  %v3054 = vld [vmem:[%s3028 + $0x70] sm:$0xf]
  %v3055 = vld [vmem:[%s3028 + $0x74] sm:$0xf]
  %v3056 = vld [vmem:[%s3028 + $0x78] sm:$0xf]
  %v3057 = vld [vmem:[%s3028 + $0x80] sm:$0xf]
  %v3058 = vld [vmem:[%s3028 + $0x84] sm:$0xf]
  %v3059 = vld [vmem:[%s3028 + $0x88] sm:$0xf]
  %v3060 = vld [vmem:[%s3028 + $0x8c] sm:$0xf]
  %v3061 = vld [vmem:[%s3028 + $0x90] sm:$0xf]
  %v3062 = vld [vmem:[%s3028 + $0x94] sm:$0xf]
  %v3063 = vld [vmem:[%s3028 + $0x98] sm:$0xf]
  %v3064 = vld [vmem:[%s3028 + $0xa0] sm:$0xf]
  %v3065 = vld [vmem:[%s3028 + $0xa4] sm:$0xf]
  %v3066 = vld [vmem:[%s3028 + $0xa8] sm:$0xf]
  %v3067 = vld [vmem:[%s3028 + $0xac] sm:$0xf]
  %v3068 = vld [vmem:[%s3028 + $0xb0] sm:$0xf]
  %v3069 = vld [vmem:[%s3028 + $0xb4] sm:$0xf]
  %v3070 = vld [vmem:[%s3028 + $0xb8] sm:$0xf]
  %v3071 = vld [vmem:[%s3028 + $0xc0] sm:$0xf]
  %v3072 = vld [vmem:[%s3028 + $0xc4] sm:$0xf]
  %v3073 = vld [vmem:[%s3028 + $0xc8] sm:$0xf]
  %v3074 = vld [vmem:[%s3028 + $0xcc] sm:$0xf]
  %v3075 = vld [vmem:[%s3028 + $0xd0] sm:$0xf]
  %v3076 = vld [vmem:[%s3028 + $0xd4] sm:$0xf]
  %v3077 = vld [vmem:[%s3028 + $0xd8] sm:$0xf]
  %s3078 = scalar_lea.vmem [#allocation2], 548
  %v3079 = vld [vmem:[%s3078] sm:$0xf]
  %v3080 = vld [vmem:[%s3078 + $0x4] sm:$0xf]
  %v3081 = vld [vmem:[%s3078 + $0x8] sm:$0xf]
  %v3082 = vld [vmem:[%s3078 + $0xc] sm:$0xf]
  %v3083 = vld [vmem:[%s3078 + $0x10] sm:$0xf]
  %v3084 = vld [vmem:[%s3078 + $0x14] sm:$0xf]
  %v3085 = vld [vmem:[%s3078 + $0x18] sm:$0xf]
  %v3086 = vld [vmem:[%s3078 + $0x20] sm:$0xf]
  %v3087 = vld [vmem:[%s3078 + $0x24] sm:$0xf]
  %v3088 = vld [vmem:[%s3078 + $0x28] sm:$0xf]
  %v3089 = vld [vmem:[%s3078 + $0x2c] sm:$0xf]
  %v3090 = vld [vmem:[%s3078 + $0x30] sm:$0xf]
  %v3091 = vld [vmem:[%s3078 + $0x34] sm:$0xf]
  %v3092 = vld [vmem:[%s3078 + $0x38] sm:$0xf]
  %v3093 = vld [vmem:[%s3078 + $0x40] sm:$0xf]
  %v3094 = vld [vmem:[%s3078 + $0x44] sm:$0xf]
  %v3095 = vld [vmem:[%s3078 + $0x48] sm:$0xf]
  %v3096 = vld [vmem:[%s3078 + $0x4c] sm:$0xf]
  %v3097 = vld [vmem:[%s3078 + $0x50] sm:$0xf]
  %v3098 = vld [vmem:[%s3078 + $0x54] sm:$0xf]
  %v3099 = vld [vmem:[%s3078 + $0x58] sm:$0xf]
  %v3100 = vld [vmem:[%s3078 + $0x60] sm:$0xf]
  %v3101 = vld [vmem:[%s3078 + $0x64] sm:$0xf]
  %v3102 = vld [vmem:[%s3078 + $0x68] sm:$0xf]
  %v3103 = vld [vmem:[%s3078 + $0x6c] sm:$0xf]
  %v3104 = vld [vmem:[%s3078 + $0x70] sm:$0xf]
  %v3105 = vld [vmem:[%s3078 + $0x74] sm:$0xf]
  %v3106 = vld [vmem:[%s3078 + $0x78] sm:$0xf]
  %v3107 = vld [vmem:[%s3078 + $0x80] sm:$0xf]
  %v3108 = vld [vmem:[%s3078 + $0x84] sm:$0xf]
  %v3109 = vld [vmem:[%s3078 + $0x88] sm:$0xf]
  %v3110 = vld [vmem:[%s3078 + $0x8c] sm:$0xf]
  %v3111 = vld [vmem:[%s3078 + $0x90] sm:$0xf]
  %v3112 = vld [vmem:[%s3078 + $0x94] sm:$0xf]
  %v3113 = vld [vmem:[%s3078 + $0x98] sm:$0xf]
  %v3114 = vld [vmem:[%s3078 + $0xa0] sm:$0xf]
  %v3115 = vld [vmem:[%s3078 + $0xa4] sm:$0xf]
  %v3116 = vld [vmem:[%s3078 + $0xa8] sm:$0xf]
  %v3117 = vld [vmem:[%s3078 + $0xac] sm:$0xf]
  %v3118 = vld [vmem:[%s3078 + $0xb0] sm:$0xf]
  %v3119 = vld [vmem:[%s3078 + $0xb4] sm:$0xf]
  %v3120 = vld [vmem:[%s3078 + $0xb8] sm:$0xf]
  %v3121 = vld [vmem:[%s3078 + $0xc0] sm:$0xf]
  %v3122 = vld [vmem:[%s3078 + $0xc4] sm:$0xf]
  %v3123 = vld [vmem:[%s3078 + $0xc8] sm:$0xf]
  %v3124 = vld [vmem:[%s3078 + $0xcc] sm:$0xf]
  %v3125 = vld [vmem:[%s3078 + $0xd0] sm:$0xf]
  %v3126 = vld [vmem:[%s3078 + $0xd4] sm:$0xf]
  %v3127 = vld [vmem:[%s3078 + $0xd8] sm:$0xf]
  %s3128 = scalar_lea.vmem [#allocation2], 804
  %v3129 = vld [vmem:[%s3128] sm:$0xf]
  %v3130 = vld [vmem:[%s3128 + $0x4] sm:$0xf]
  %v3131 = vld [vmem:[%s3128 + $0x8] sm:$0xf]
  %v3132 = vld [vmem:[%s3128 + $0xc] sm:$0xf]
  %v3133 = vld [vmem:[%s3128 + $0x10] sm:$0xf]
  %v3134 = vld [vmem:[%s3128 + $0x14] sm:$0xf]
  %v3135 = vld [vmem:[%s3128 + $0x18] sm:$0xf]
  %v3136 = vld [vmem:[%s3128 + $0x20] sm:$0xf]
  %v3137 = vld [vmem:[%s3128 + $0x24] sm:$0xf]
  %v3138 = vld [vmem:[%s3128 + $0x28] sm:$0xf]
  %v3139 = vld [vmem:[%s3128 + $0x2c] sm:$0xf]
  %v3140 = vld [vmem:[%s3128 + $0x30] sm:$0xf]
  %v3141 = vld [vmem:[%s3128 + $0x34] sm:$0xf]
  %v3142 = vld [vmem:[%s3128 + $0x38] sm:$0xf]
  %v3143 = vld [vmem:[%s3128 + $0x40] sm:$0xf]
  %v3144 = vld [vmem:[%s3128 + $0x44] sm:$0xf]
  %v3145 = vld [vmem:[%s3128 + $0x48] sm:$0xf]
  %v3146 = vld [vmem:[%s3128 + $0x4c] sm:$0xf]
  %v3147 = vld [vmem:[%s3128 + $0x50] sm:$0xf]
  %v3148 = vld [vmem:[%s3128 + $0x54] sm:$0xf]
  %v3149 = vld [vmem:[%s3128 + $0x58] sm:$0xf]
  %v3150 = vld [vmem:[%s3128 + $0x60] sm:$0xf]
  %v3151 = vld [vmem:[%s3128 + $0x64] sm:$0xf]
  %v3152 = vld [vmem:[%s3128 + $0x68] sm:$0xf]
  %v3153 = vld [vmem:[%s3128 + $0x6c] sm:$0xf]
  %v3154 = vld [vmem:[%s3128 + $0x70] sm:$0xf]
  %v3155 = vld [vmem:[%s3128 + $0x74] sm:$0xf]
  %v3156 = vld [vmem:[%s3128 + $0x78] sm:$0xf]
  %v3157 = vld [vmem:[%s3128 + $0x80] sm:$0xf]
  %v3158 = vld [vmem:[%s3128 + $0x84] sm:$0xf]
  %v3159 = vld [vmem:[%s3128 + $0x88] sm:$0xf]
  %v3160 = vld [vmem:[%s3128 + $0x8c] sm:$0xf]
  %v3161 = vld [vmem:[%s3128 + $0x90] sm:$0xf]
  %v3162 = vld [vmem:[%s3128 + $0x94] sm:$0xf]
  %v3163 = vld [vmem:[%s3128 + $0x98] sm:$0xf]
  %v3164 = vld [vmem:[%s3128 + $0xa0] sm:$0xf]
  %v3165 = vld [vmem:[%s3128 + $0xa4] sm:$0xf]
  %v3166 = vld [vmem:[%s3128 + $0xa8] sm:$0xf]
  %v3167 = vld [vmem:[%s3128 + $0xac] sm:$0xf]
  %v3168 = vld [vmem:[%s3128 + $0xb0] sm:$0xf]
  %v3169 = vld [vmem:[%s3128 + $0xb4] sm:$0xf]
  %v3170 = vld [vmem:[%s3128 + $0xb8] sm:$0xf]
  %v3171 = vld [vmem:[%s3128 + $0xc0] sm:$0xf]
  %v3172 = vld [vmem:[%s3128 + $0xc4] sm:$0xf]
  %v3173 = vld [vmem:[%s3128 + $0xc8] sm:$0xf]
  %v3174 = vld [vmem:[%s3128 + $0xcc] sm:$0xf]
  %v3175 = vld [vmem:[%s3128 + $0xd0] sm:$0xf]
  %v3176 = vld [vmem:[%s3128 + $0xd4] sm:$0xf]
  %v3177 = vld [vmem:[%s3128 + $0xd8] sm:$0xf]
  %v3962 = vunpack.c.l.b16 %v2385
  %v3963 = vunpack.c.l.b16 %v2434
  %v3964 = vunpack.c.l.b16 %v2484
  %v3965 = vunpack.c.l.b16 %v2534
  %v3966 = vunpack.c.l.b16 %v2583
  %v3967 = vunpack.c.l.b16 %v2632
  %v3968 = vunpack.c.l.b16 %v2681
  %v3969 = vunpack.c.l.b16 %v2731
  %v3970 = vunpack.c.l.b16 %v2781
  %v3971 = vunpack.c.l.b16 %v2830
  %v3972 = vunpack.c.l.b16 %v2879
  %v3973 = vunpack.c.l.b16 %v2929
  %v3974 = vunpack.c.l.b16 %v2979
  %v3975 = vunpack.c.l.b16 %v3029
  %v3976 = vunpack.c.l.b16 %v3079
  %v3977 = vunpack.c.l.b16 %v3129
  %v3978 = vunpack.c.l.b16 %v2386
  %v3979 = vunpack.c.l.b16 %v2435
  %v3980 = vunpack.c.l.b16 %v2485
  %v3981 = vunpack.c.l.b16 %v2535
  %v3982 = vunpack.c.l.b16 %v2584
  %v3983 = vunpack.c.l.b16 %v2633
  %v3984 = vunpack.c.l.b16 %v2682
  %v3985 = vunpack.c.l.b16 %v2732
  %v3986 = vunpack.c.l.b16 %v2782
  %v3987 = vunpack.c.l.b16 %v2831
  %v3988 = vunpack.c.l.b16 %v2880
  %v3989 = vunpack.c.l.b16 %v2930
  %v3990 = vunpack.c.l.b16 %v2980
  %v3991 = vunpack.c.l.b16 %v3030
  %v3992 = vunpack.c.l.b16 %v3080
  %v3993 = vunpack.c.l.b16 %v3130
  %v3994 = vunpack.c.l.b16 %v2387
  %v3995 = vunpack.c.l.b16 %v2436
  %v3996 = vunpack.c.l.b16 %v2486
  %v3997 = vunpack.c.l.b16 %v2536
  %v3998 = vunpack.c.l.b16 %v2585
  %v3999 = vunpack.c.l.b16 %v2634
  %v4000 = vunpack.c.l.b16 %v2683
  %v4001 = vunpack.c.l.b16 %v2733
  %v4002 = vunpack.c.l.b16 %v2783
  %v4003 = vunpack.c.l.b16 %v2832
  %v4004 = vunpack.c.l.b16 %v2881
  %v4005 = vunpack.c.l.b16 %v2931
  %v4006 = vunpack.c.l.b16 %v2981
  %v4007 = vunpack.c.l.b16 %v3031
  %v4008 = vunpack.c.l.b16 %v3081
  %v4009 = vunpack.c.l.b16 %v3131
  %v4010 = vunpack.c.l.b16 %v2388
  %v4011 = vunpack.c.l.b16 %v2437
  %v4012 = vunpack.c.l.b16 %v2487
  %v4013 = vunpack.c.l.b16 %v2537
  %v4014 = vunpack.c.l.b16 %v2586
  %v4015 = vunpack.c.l.b16 %v2635
  %v4016 = vunpack.c.l.b16 %v2684
  %v4017 = vunpack.c.l.b16 %v2734
  %v4018 = vunpack.c.l.b16 %v2784
  %v4019 = vunpack.c.l.b16 %v2833
  %v4020 = vunpack.c.l.b16 %v2882
  %v4021 = vunpack.c.l.b16 %v2932
  %v4022 = vunpack.c.l.b16 %v2982
  %v4023 = vunpack.c.l.b16 %v3032
  %v4024 = vunpack.c.l.b16 %v3082
  %v4025 = vunpack.c.l.b16 %v3132
  %v4026 = vunpack.c.l.b16 %v2389
  %v4027 = vunpack.c.l.b16 %v2438
  %v4028 = vunpack.c.l.b16 %v2488
  %v4029 = vunpack.c.l.b16 %v2538
  %v4030 = vunpack.c.l.b16 %v2587
  %v4031 = vunpack.c.l.b16 %v2636
  %v4032 = vunpack.c.l.b16 %v2685
  %v4033 = vunpack.c.l.b16 %v2735
  %v4034 = vunpack.c.l.b16 %v2785
  %v4035 = vunpack.c.l.b16 %v2834
  %v4036 = vunpack.c.l.b16 %v2883
  %v4037 = vunpack.c.l.b16 %v2933
  %v4038 = vunpack.c.l.b16 %v2983
  %v4039 = vunpack.c.l.b16 %v3033
  %v4040 = vunpack.c.l.b16 %v3083
  %v4041 = vunpack.c.l.b16 %v3133
  %v4042 = vunpack.c.l.b16 %v2390
  %v4043 = vunpack.c.l.b16 %v2439
  %v4044 = vunpack.c.l.b16 %v2489
  %v4045 = vunpack.c.l.b16 %v2539
  %v4046 = vunpack.c.l.b16 %v2588
  %v4047 = vunpack.c.l.b16 %v2637
  %v4048 = vunpack.c.l.b16 %v2686
  %v4049 = vunpack.c.l.b16 %v2736
  %v4050 = vunpack.c.l.b16 %v2786
  %v4051 = vunpack.c.l.b16 %v2835
  %v4052 = vunpack.c.l.b16 %v2884
  %v4053 = vunpack.c.l.b16 %v2934
  %v4054 = vunpack.c.l.b16 %v2984
  %v4055 = vunpack.c.l.b16 %v3034
  %v4056 = vunpack.c.l.b16 %v3084
  %v4057 = vunpack.c.l.b16 %v3134
  %v4058 = vunpack.c.l.b16 %v2391
  %v4059 = vunpack.c.l.b16 %v2440
  %v4060 = vunpack.c.l.b16 %v2490
  %v4061 = vunpack.c.l.b16 %v2540
  %v4062 = vunpack.c.l.b16 %v2589
  %v4063 = vunpack.c.l.b16 %v2638
  %v4064 = vunpack.c.l.b16 %v2687
  %v4065 = vunpack.c.l.b16 %v2737
  %v4066 = vunpack.c.l.b16 %v2787
  %v4067 = vunpack.c.l.b16 %v2836
  %v4068 = vunpack.c.l.b16 %v2885
  %v4069 = vunpack.c.l.b16 %v2935
  %v4070 = vunpack.c.l.b16 %v2985
  %v4071 = vunpack.c.l.b16 %v3035
  %v4072 = vunpack.c.l.b16 %v3085
  %v4073 = vunpack.c.l.b16 %v3135
  %v4074 = vunpack.c.l.b16 %v2392
  %v4075 = vunpack.c.l.b16 %v2441
  %v4076 = vunpack.c.l.b16 %v2491
  %v4077 = vunpack.c.l.b16 %v2541
  %v4078 = vunpack.c.l.b16 %v2590
  %v4079 = vunpack.c.l.b16 %v2639
  %v4080 = vunpack.c.l.b16 %v2688
  %v4081 = vunpack.c.l.b16 %v2738
  %v4082 = vunpack.c.l.b16 %v2788
  %v4083 = vunpack.c.l.b16 %v2837
  %v4084 = vunpack.c.l.b16 %v2886
  %v4085 = vunpack.c.l.b16 %v2936
  %v4086 = vunpack.c.l.b16 %v2986
  %v4087 = vunpack.c.l.b16 %v3036
  %v4088 = vunpack.c.l.b16 %v3086
  %v4089 = vunpack.c.l.b16 %v3136
  %v4090 = vunpack.c.l.b16 %v2393
  %v4091 = vunpack.c.l.b16 %v2442
  %v4092 = vunpack.c.l.b16 %v2492
  %v4093 = vunpack.c.l.b16 %v2542
  %v4094 = vunpack.c.l.b16 %v2591
  %v4095 = vunpack.c.l.b16 %v2640
  %v4096 = vunpack.c.l.b16 %v2689
  %v4097 = vunpack.c.l.b16 %v2739
  %v4098 = vunpack.c.l.b16 %v2789
  %v4099 = vunpack.c.l.b16 %v2838
  %v4100 = vunpack.c.l.b16 %v2887
  %v4101 = vunpack.c.l.b16 %v2937
  %v4102 = vunpack.c.l.b16 %v2987
  %v4103 = vunpack.c.l.b16 %v3037
  %v4104 = vunpack.c.l.b16 %v3087
  %v4105 = vunpack.c.l.b16 %v3137
  %v4106 = vunpack.c.l.b16 %v2394
  %v4107 = vunpack.c.l.b16 %v2443
  %v4108 = vunpack.c.l.b16 %v2493
  %v4109 = vunpack.c.l.b16 %v2543
  %v4110 = vunpack.c.l.b16 %v2592
  %v4111 = vunpack.c.l.b16 %v2641
  %v4112 = vunpack.c.l.b16 %v2690
  %v4113 = vunpack.c.l.b16 %v2740
  %v4114 = vunpack.c.l.b16 %v2790
  %v4115 = vunpack.c.l.b16 %v2839
  %v4116 = vunpack.c.l.b16 %v2888
  %v4117 = vunpack.c.l.b16 %v2938
  %v4118 = vunpack.c.l.b16 %v2988
  %v4119 = vunpack.c.l.b16 %v3038
  %v4120 = vunpack.c.l.b16 %v3088
  %v4121 = vunpack.c.l.b16 %v3138
  %v4122 = vunpack.c.l.b16 %v2395
  %v4123 = vunpack.c.l.b16 %v2444
  %v4124 = vunpack.c.l.b16 %v2494
  %v4125 = vunpack.c.l.b16 %v2544
  %v4126 = vunpack.c.l.b16 %v2593
  %v4127 = vunpack.c.l.b16 %v2642
  %v4128 = vunpack.c.l.b16 %v2691
  %v4129 = vunpack.c.l.b16 %v2741
  %v4130 = vunpack.c.l.b16 %v2791
  %v4131 = vunpack.c.l.b16 %v2840
  %v4132 = vunpack.c.l.b16 %v2889
  %v4133 = vunpack.c.l.b16 %v2939
  %v4134 = vunpack.c.l.b16 %v2989
  %v4135 = vunpack.c.l.b16 %v3039
  %v4136 = vunpack.c.l.b16 %v3089
  %v4137 = vunpack.c.l.b16 %v3139
  %v4138 = vunpack.c.l.b16 %v2396
  %v4139 = vunpack.c.l.b16 %v2445
  %v4140 = vunpack.c.l.b16 %v2495
  %v4141 = vunpack.c.l.b16 %v2545
  %v4142 = vunpack.c.l.b16 %v2594
  %v4143 = vunpack.c.l.b16 %v2643
  %v4144 = vunpack.c.l.b16 %v2692
  %v4145 = vunpack.c.l.b16 %v2742
  %v4146 = vunpack.c.l.b16 %v2792
  %v4147 = vunpack.c.l.b16 %v2841
  %v4148 = vunpack.c.l.b16 %v2890
  %v4149 = vunpack.c.l.b16 %v2940
  %v4150 = vunpack.c.l.b16 %v2990
  %v4151 = vunpack.c.l.b16 %v3040
  %v4152 = vunpack.c.l.b16 %v3090
  %v4153 = vunpack.c.l.b16 %v3140
  %v4154 = vunpack.c.l.b16 %v2397
  %v4155 = vunpack.c.l.b16 %v2446
  %v4156 = vunpack.c.l.b16 %v2496
  %v4157 = vunpack.c.l.b16 %v2546
  %v4158 = vunpack.c.l.b16 %v2595
  %v4159 = vunpack.c.l.b16 %v2644
  %v4160 = vunpack.c.l.b16 %v2693
  %v4161 = vunpack.c.l.b16 %v2743
  %v4162 = vunpack.c.l.b16 %v2793
  %v4163 = vunpack.c.l.b16 %v2842
  %v4164 = vunpack.c.l.b16 %v2891
  %v4165 = vunpack.c.l.b16 %v2941
  %v4166 = vunpack.c.l.b16 %v2991
  %v4167 = vunpack.c.l.b16 %v3041
  %v4168 = vunpack.c.l.b16 %v3091
  %v4169 = vunpack.c.l.b16 %v3141
  %v4170 = vunpack.c.l.b16 %v2398
  %v4171 = vunpack.c.l.b16 %v2447
  %v4172 = vunpack.c.l.b16 %v2497
  %v4173 = vunpack.c.l.b16 %v2547
  %v4174 = vunpack.c.l.b16 %v2596
  %v4175 = vunpack.c.l.b16 %v2645
  %v4176 = vunpack.c.l.b16 %v2694
  %v4177 = vunpack.c.l.b16 %v2744
  %v4178 = vunpack.c.l.b16 %v2794
  %v4179 = vunpack.c.l.b16 %v2843
  %v4180 = vunpack.c.l.b16 %v2892
  %v4181 = vunpack.c.l.b16 %v2942
  %v4182 = vunpack.c.l.b16 %v2992
  %v4183 = vunpack.c.l.b16 %v3042
  %v4184 = vunpack.c.l.b16 %v3092
  %v4185 = vunpack.c.l.b16 %v3142
  %v4186 = vunpack.c.l.b16 %v2399
  %v4187 = vunpack.c.l.b16 %v2448
  %v4188 = vunpack.c.l.b16 %v2498
  %v4189 = vunpack.c.l.b16 %v2548
  %v4190 = vunpack.c.l.b16 %v2597
  %v4191 = vunpack.c.l.b16 %v2646
  %v4192 = vunpack.c.l.b16 %v2695
  %v4193 = vunpack.c.l.b16 %v2745
  %v4194 = vunpack.c.l.b16 %v2795
  %v4195 = vunpack.c.l.b16 %v2844
  %v4196 = vunpack.c.l.b16 %v2893
  %v4197 = vunpack.c.l.b16 %v2943
  %v4198 = vunpack.c.l.b16 %v2993
  %v4199 = vunpack.c.l.b16 %v3043
  %v4200 = vunpack.c.l.b16 %v3093
  %v4201 = vunpack.c.l.b16 %v3143
  %v4202 = vunpack.c.l.b16 %v2400
  %v4203 = vunpack.c.l.b16 %v2449
  %v4204 = vunpack.c.l.b16 %v2499
  %v4205 = vunpack.c.l.b16 %v2549
  %v4206 = vunpack.c.l.b16 %v2598
  %v4207 = vunpack.c.l.b16 %v2647
  %v4208 = vunpack.c.l.b16 %v2696
  %v4209 = vunpack.c.l.b16 %v2746
  %v4210 = vunpack.c.l.b16 %v2796
  %v4211 = vunpack.c.l.b16 %v2845
  %v4212 = vunpack.c.l.b16 %v2894
  %v4213 = vunpack.c.l.b16 %v2944
  %v4214 = vunpack.c.l.b16 %v2994
  %v4215 = vunpack.c.l.b16 %v3044
  %v4216 = vunpack.c.l.b16 %v3094
  %v4217 = vunpack.c.l.b16 %v3144
  %v4218 = vunpack.c.l.b16 %v2401
  %v4219 = vunpack.c.l.b16 %v2450
  %v4220 = vunpack.c.l.b16 %v2500
  %v4221 = vunpack.c.l.b16 %v2550
  %v4222 = vunpack.c.l.b16 %v2599
  %v4223 = vunpack.c.l.b16 %v2648
  %v4224 = vunpack.c.l.b16 %v2697
  %v4225 = vunpack.c.l.b16 %v2747
  %v4226 = vunpack.c.l.b16 %v2797
  %v4227 = vunpack.c.l.b16 %v2846
  %v4228 = vunpack.c.l.b16 %v2895
  %v4229 = vunpack.c.l.b16 %v2945
  %v4230 = vunpack.c.l.b16 %v2995
  %v4231 = vunpack.c.l.b16 %v3045
  %v4232 = vunpack.c.l.b16 %v3095
  %v4233 = vunpack.c.l.b16 %v3145
  %v4234 = vunpack.c.l.b16 %v2402
  %v4235 = vunpack.c.l.b16 %v2451
  %v4236 = vunpack.c.l.b16 %v2501
  %v4237 = vunpack.c.l.b16 %v2551
  %v4238 = vunpack.c.l.b16 %v2600
  %v4239 = vunpack.c.l.b16 %v2649
  %v4240 = vunpack.c.l.b16 %v2698
  %v4241 = vunpack.c.l.b16 %v2748
  %v4242 = vunpack.c.l.b16 %v2798
  %v4243 = vunpack.c.l.b16 %v2847
  %v4244 = vunpack.c.l.b16 %v2896
  %v4245 = vunpack.c.l.b16 %v2946
  %v4246 = vunpack.c.l.b16 %v2996
  %v4247 = vunpack.c.l.b16 %v3046
  %v4248 = vunpack.c.l.b16 %v3096
  %v4249 = vunpack.c.l.b16 %v3146
  %v4250 = vunpack.c.l.b16 %v2403
  %v4251 = vunpack.c.l.b16 %v2452
  %v4252 = vunpack.c.l.b16 %v2502
  %v4253 = vunpack.c.l.b16 %v2552
  %v4254 = vunpack.c.l.b16 %v2601
  %v4255 = vunpack.c.l.b16 %v2650
  %v4256 = vunpack.c.l.b16 %v2699
  %v4257 = vunpack.c.l.b16 %v2749
  %v4258 = vunpack.c.l.b16 %v2799
  %v4259 = vunpack.c.l.b16 %v2848
  %v4260 = vunpack.c.l.b16 %v2897
  %v4261 = vunpack.c.l.b16 %v2947
  %v4262 = vunpack.c.l.b16 %v2997
  %v4263 = vunpack.c.l.b16 %v3047
  %v4264 = vunpack.c.l.b16 %v3097
  %v4265 = vunpack.c.l.b16 %v3147
  %v4266 = vunpack.c.l.b16 %v2404
  %v4267 = vunpack.c.l.b16 %v2453
  %v4268 = vunpack.c.l.b16 %v2503
  %v4269 = vunpack.c.l.b16 %v2553
  %v4270 = vunpack.c.l.b16 %v2602
  %v4271 = vunpack.c.l.b16 %v2651
  %v4272 = vunpack.c.l.b16 %v2700
  %v4273 = vunpack.c.l.b16 %v2750
  %v4274 = vunpack.c.l.b16 %v2800
  %v4275 = vunpack.c.l.b16 %v2849
  %v4276 = vunpack.c.l.b16 %v2898
  %v4277 = vunpack.c.l.b16 %v2948
  %v4278 = vunpack.c.l.b16 %v2998
  %v4279 = vunpack.c.l.b16 %v3048
  %v4280 = vunpack.c.l.b16 %v3098
  %v4281 = vunpack.c.l.b16 %v3148
  %v4282 = vunpack.c.l.b16 %v2405
  %v4283 = vunpack.c.l.b16 %v2454
  %v4284 = vunpack.c.l.b16 %v2504
  %v4285 = vunpack.c.l.b16 %v2554
  %v4286 = vunpack.c.l.b16 %v2603
  %v4287 = vunpack.c.l.b16 %v2652
  %v4288 = vunpack.c.l.b16 %v2701
  %v4289 = vunpack.c.l.b16 %v2751
  %v4290 = vunpack.c.l.b16 %v2801
  %v4291 = vunpack.c.l.b16 %v2850
  %v4292 = vunpack.c.l.b16 %v2899
  %v4293 = vunpack.c.l.b16 %v2949
  %v4294 = vunpack.c.l.b16 %v2999
  %v4295 = vunpack.c.l.b16 %v3049
  %v4296 = vunpack.c.l.b16 %v3099
  %v4297 = vunpack.c.l.b16 %v3149
  %v4298 = vunpack.c.l.b16 %v2406
  %v4299 = vunpack.c.l.b16 %v2455
  %v4300 = vunpack.c.l.b16 %v2505
  %v4301 = vunpack.c.l.b16 %v2555
  %v4302 = vunpack.c.l.b16 %v2604
  %v4303 = vunpack.c.l.b16 %v2653
  %v4304 = vunpack.c.l.b16 %v2702
  %v4305 = vunpack.c.l.b16 %v2752
  %v4306 = vunpack.c.l.b16 %v2802
  %v4307 = vunpack.c.l.b16 %v2851
  %v4308 = vunpack.c.l.b16 %v2900
  %v4309 = vunpack.c.l.b16 %v2950
  %v4310 = vunpack.c.l.b16 %v3000
  %v4311 = vunpack.c.l.b16 %v3050
  %v4312 = vunpack.c.l.b16 %v3100
  %v4313 = vunpack.c.l.b16 %v3150
  %v4314 = vunpack.c.l.b16 %v2407
  %v4315 = vunpack.c.l.b16 %v2456
  %v4316 = vunpack.c.l.b16 %v2506
  %v4317 = vunpack.c.l.b16 %v2556
  %v4318 = vunpack.c.l.b16 %v2605
  %v4319 = vunpack.c.l.b16 %v2654
  %v4320 = vunpack.c.l.b16 %v2703
  %v4321 = vunpack.c.l.b16 %v2753
  %v4322 = vunpack.c.l.b16 %v2803
  %v4323 = vunpack.c.l.b16 %v2852
  %v4324 = vunpack.c.l.b16 %v2901
  %v4325 = vunpack.c.l.b16 %v2951
  %v4326 = vunpack.c.l.b16 %v3001
  %v4327 = vunpack.c.l.b16 %v3051
  %v4328 = vunpack.c.l.b16 %v3101
  %v4329 = vunpack.c.l.b16 %v3151
  %v4330 = vunpack.c.l.b16 %v2408
  %v4331 = vunpack.c.l.b16 %v2457
  %v4332 = vunpack.c.l.b16 %v2507
  %v4333 = vunpack.c.l.b16 %v2557
  %v4334 = vunpack.c.l.b16 %v2606
  %v4335 = vunpack.c.l.b16 %v2655
  %v4336 = vunpack.c.l.b16 %v2704
  %v4337 = vunpack.c.l.b16 %v2754
  %v4338 = vunpack.c.l.b16 %v2804
  %v4339 = vunpack.c.l.b16 %v2853
  %v4340 = vunpack.c.l.b16 %v2902
  %v4341 = vunpack.c.l.b16 %v2952
  %v4342 = vunpack.c.l.b16 %v3002
  %v4343 = vunpack.c.l.b16 %v3052
  %v4344 = vunpack.c.l.b16 %v3102
  %v4345 = vunpack.c.l.b16 %v3152
  %v4346 = vunpack.c.l.b16 %v2409
  %v4347 = vunpack.c.l.b16 %v2458
  %v4348 = vunpack.c.l.b16 %v2508
  %v4349 = vunpack.c.l.b16 %v2558
  %v4350 = vunpack.c.l.b16 %v2607
  %v4351 = vunpack.c.l.b16 %v2656
  %v4352 = vunpack.c.l.b16 %v2705
  %v4353 = vunpack.c.l.b16 %v2755
  %v4354 = vunpack.c.l.b16 %v2805
  %v4355 = vunpack.c.l.b16 %v2854
  %v4356 = vunpack.c.l.b16 %v2903
  %v4357 = vunpack.c.l.b16 %v2953
  %v4358 = vunpack.c.l.b16 %v3003
  %v4359 = vunpack.c.l.b16 %v3053
  %v4360 = vunpack.c.l.b16 %v3103
  %v4361 = vunpack.c.l.b16 %v3153
  %v4362 = vunpack.c.l.b16 %v2410
  %v4363 = vunpack.c.l.b16 %v2459
  %v4364 = vunpack.c.l.b16 %v2509
  %v4365 = vunpack.c.l.b16 %v2559
  %v4366 = vunpack.c.l.b16 %v2608
  %v4367 = vunpack.c.l.b16 %v2657
  %v4368 = vunpack.c.l.b16 %v2706
  %v4369 = vunpack.c.l.b16 %v2756
  %v4370 = vunpack.c.l.b16 %v2806
  %v4371 = vunpack.c.l.b16 %v2855
  %v4372 = vunpack.c.l.b16 %v2904
  %v4373 = vunpack.c.l.b16 %v2954
  %v4374 = vunpack.c.l.b16 %v3004
  %v4375 = vunpack.c.l.b16 %v3054
  %v4376 = vunpack.c.l.b16 %v3104
  %v4377 = vunpack.c.l.b16 %v3154
  %v4378 = vunpack.c.l.b16 %v2411
  %v4379 = vunpack.c.l.b16 %v2460
  %v4380 = vunpack.c.l.b16 %v2510
  %v4381 = vunpack.c.l.b16 %v2560
  %v4382 = vunpack.c.l.b16 %v2609
  %v4383 = vunpack.c.l.b16 %v2658
  %v4384 = vunpack.c.l.b16 %v2707
  %v4385 = vunpack.c.l.b16 %v2757
  %v4386 = vunpack.c.l.b16 %v2807
  %v4387 = vunpack.c.l.b16 %v2856
  %v4388 = vunpack.c.l.b16 %v2905
  %v4389 = vunpack.c.l.b16 %v2955
  %v4390 = vunpack.c.l.b16 %v3005
  %v4391 = vunpack.c.l.b16 %v3055
  %v4392 = vunpack.c.l.b16 %v3105
  %v4393 = vunpack.c.l.b16 %v3155
  %v4394 = vunpack.c.l.b16 %v2412
  %v4395 = vunpack.c.l.b16 %v2461
  %v4396 = vunpack.c.l.b16 %v2511
  %v4397 = vunpack.c.l.b16 %v2561
  %v4398 = vunpack.c.l.b16 %v2610
  %v4399 = vunpack.c.l.b16 %v2659
  %v4400 = vunpack.c.l.b16 %v2708
  %v4401 = vunpack.c.l.b16 %v2758
  %v4402 = vunpack.c.l.b16 %v2808
  %v4403 = vunpack.c.l.b16 %v2857
  %v4404 = vunpack.c.l.b16 %v2906
  %v4405 = vunpack.c.l.b16 %v2956
  %v4406 = vunpack.c.l.b16 %v3006
  %v4407 = vunpack.c.l.b16 %v3056
  %v4408 = vunpack.c.l.b16 %v3106
  %v4409 = vunpack.c.l.b16 %v3156
  %v4410 = vunpack.c.l.b16 %v2413
  %v4411 = vunpack.c.l.b16 %v2462
  %v4412 = vunpack.c.l.b16 %v2512
  %v4413 = vunpack.c.l.b16 %v2562
  %v4414 = vunpack.c.l.b16 %v2611
  %v4415 = vunpack.c.l.b16 %v2660
  %v4416 = vunpack.c.l.b16 %v2709
  %v4417 = vunpack.c.l.b16 %v2759
  %v4418 = vunpack.c.l.b16 %v2809
  %v4419 = vunpack.c.l.b16 %v2858
  %v4420 = vunpack.c.l.b16 %v2907
  %v4421 = vunpack.c.l.b16 %v2957
  %v4422 = vunpack.c.l.b16 %v3007
  %v4423 = vunpack.c.l.b16 %v3057
  %v4424 = vunpack.c.l.b16 %v3107
  %v4425 = vunpack.c.l.b16 %v3157
  %v4426 = vunpack.c.l.b16 %v2414
  %v4427 = vunpack.c.l.b16 %v2463
  %v4428 = vunpack.c.l.b16 %v2513
  %v4429 = vunpack.c.l.b16 %v2563
  %v4430 = vunpack.c.l.b16 %v2612
  %v4431 = vunpack.c.l.b16 %v2661
  %v4432 = vunpack.c.l.b16 %v2710
  %v4433 = vunpack.c.l.b16 %v2760
  %v4434 = vunpack.c.l.b16 %v2810
  %v4435 = vunpack.c.l.b16 %v2859
  %v4436 = vunpack.c.l.b16 %v2908
  %v4437 = vunpack.c.l.b16 %v2958
  %v4438 = vunpack.c.l.b16 %v3008
  %v4439 = vunpack.c.l.b16 %v3058
  %v4440 = vunpack.c.l.b16 %v3108
  %v4441 = vunpack.c.l.b16 %v3158
  %v4442 = vunpack.c.l.b16 %v2415
  %v4443 = vunpack.c.l.b16 %v2464
  %v4444 = vunpack.c.l.b16 %v2514
  %v4445 = vunpack.c.l.b16 %v2564
  %v4446 = vunpack.c.l.b16 %v2613
  %v4447 = vunpack.c.l.b16 %v2662
  %v4448 = vunpack.c.l.b16 %v2711
  %v4449 = vunpack.c.l.b16 %v2761
  %v4450 = vunpack.c.l.b16 %v2811
  %v4451 = vunpack.c.l.b16 %v2860
  %v4452 = vunpack.c.l.b16 %v2909
  %v4453 = vunpack.c.l.b16 %v2959
  %v4454 = vunpack.c.l.b16 %v3009
  %v4455 = vunpack.c.l.b16 %v3059
  %v4456 = vunpack.c.l.b16 %v3109
  %v4457 = vunpack.c.l.b16 %v3159
  %v4458 = vunpack.c.l.b16 %v2416
  %v4459 = vunpack.c.l.b16 %v2465
  %v4460 = vunpack.c.l.b16 %v2515
  %v4461 = vunpack.c.l.b16 %v2565
  %v4462 = vunpack.c.l.b16 %v2614
  %v4463 = vunpack.c.l.b16 %v2663
  %v4464 = vunpack.c.l.b16 %v2712
  %v4465 = vunpack.c.l.b16 %v2762
  %v4466 = vunpack.c.l.b16 %v2812
  %v4467 = vunpack.c.l.b16 %v2861
  %v4468 = vunpack.c.l.b16 %v2910
  %v4469 = vunpack.c.l.b16 %v2960
  %v4470 = vunpack.c.l.b16 %v3010
  %v4471 = vunpack.c.l.b16 %v3060
  %v4472 = vunpack.c.l.b16 %v3110
  %v4473 = vunpack.c.l.b16 %v3160
  %v4474 = vunpack.c.l.b16 %v2417
  %v4475 = vunpack.c.l.b16 %v2466
  %v4476 = vunpack.c.l.b16 %v2516
  %v4477 = vunpack.c.l.b16 %v2566
  %v4478 = vunpack.c.l.b16 %v2615
  %v4479 = vunpack.c.l.b16 %v2664
  %v4480 = vunpack.c.l.b16 %v2713
  %v4481 = vunpack.c.l.b16 %v2763
  %v4482 = vunpack.c.l.b16 %v2813
  %v4483 = vunpack.c.l.b16 %v2862
  %v4484 = vunpack.c.l.b16 %v2911
  %v4485 = vunpack.c.l.b16 %v2961
  %v4486 = vunpack.c.l.b16 %v3011
  %v4487 = vunpack.c.l.b16 %v3061
  %v4488 = vunpack.c.l.b16 %v3111
  %v4489 = vunpack.c.l.b16 %v3161
  %v4490 = vunpack.c.l.b16 %v2418
  %v4491 = vunpack.c.l.b16 %v2467
  %v4492 = vunpack.c.l.b16 %v2517
  %v4493 = vunpack.c.l.b16 %v2567
  %v4494 = vunpack.c.l.b16 %v2616
  %v4495 = vunpack.c.l.b16 %v2665
  %v4496 = vunpack.c.l.b16 %v2714
  %v4497 = vunpack.c.l.b16 %v2764
  %v4498 = vunpack.c.l.b16 %v2814
  %v4499 = vunpack.c.l.b16 %v2863
  %v4500 = vunpack.c.l.b16 %v2912
  %v4501 = vunpack.c.l.b16 %v2962
  %v4502 = vunpack.c.l.b16 %v3012
  %v4503 = vunpack.c.l.b16 %v3062
  %v4504 = vunpack.c.l.b16 %v3112
  %v4505 = vunpack.c.l.b16 %v3162
  %v4506 = vunpack.c.l.b16 %v2419
  %v4507 = vunpack.c.l.b16 %v2468
  %v4508 = vunpack.c.l.b16 %v2518
  %v4509 = vunpack.c.l.b16 %v2568
  %v4510 = vunpack.c.l.b16 %v2617
  %v4511 = vunpack.c.l.b16 %v2666
  %v4512 = vunpack.c.l.b16 %v2715
  %v4513 = vunpack.c.l.b16 %v2765
  %v4514 = vunpack.c.l.b16 %v2815
  %v4515 = vunpack.c.l.b16 %v2864
  %v4516 = vunpack.c.l.b16 %v2913
  %v4517 = vunpack.c.l.b16 %v2963
  %v4518 = vunpack.c.l.b16 %v3013
  %v4519 = vunpack.c.l.b16 %v3063
  %v4520 = vunpack.c.l.b16 %v3113
  %v4521 = vunpack.c.l.b16 %v3163
  %v4522 = vunpack.c.l.b16 %v2420
  %v4523 = vunpack.c.l.b16 %v2469
  %v4524 = vunpack.c.l.b16 %v2519
  %v4525 = vunpack.c.l.b16 %v2569
  %v4526 = vunpack.c.l.b16 %v2618
  %v4527 = vunpack.c.l.b16 %v2667
  %v4528 = vunpack.c.l.b16 %v2716
  %v4529 = vunpack.c.l.b16 %v2766
  %v4530 = vunpack.c.l.b16 %v2816
  %v4531 = vunpack.c.l.b16 %v2865
  %v4532 = vunpack.c.l.b16 %v2914
  %v4533 = vunpack.c.l.b16 %v2964
  %v4534 = vunpack.c.l.b16 %v3014
  %v4535 = vunpack.c.l.b16 %v3064
  %v4536 = vunpack.c.l.b16 %v3114
  %v4537 = vunpack.c.l.b16 %v3164
  %v4538 = vunpack.c.l.b16 %v2421
  %v4539 = vunpack.c.l.b16 %v2470
  %v4540 = vunpack.c.l.b16 %v2520
  %v4541 = vunpack.c.l.b16 %v2570
  %v4542 = vunpack.c.l.b16 %v2619
  %v4543 = vunpack.c.l.b16 %v2668
  %v4544 = vunpack.c.l.b16 %v2717
  %v4545 = vunpack.c.l.b16 %v2767
  %v4546 = vunpack.c.l.b16 %v2817
  %v4547 = vunpack.c.l.b16 %v2866
  %v4548 = vunpack.c.l.b16 %v2915
  %v4549 = vunpack.c.l.b16 %v2965
  %v4550 = vunpack.c.l.b16 %v3015
  %v4551 = vunpack.c.l.b16 %v3065
  %v4552 = vunpack.c.l.b16 %v3115
  %v4553 = vunpack.c.l.b16 %v3165
  %v4554 = vunpack.c.l.b16 %v2422
  %v4555 = vunpack.c.l.b16 %v2471
  %v4556 = vunpack.c.l.b16 %v2521
  %v4557 = vunpack.c.l.b16 %v2571
  %v4558 = vunpack.c.l.b16 %v2620
  %v4559 = vunpack.c.l.b16 %v2669
  %v4560 = vunpack.c.l.b16 %v2718
  %v4561 = vunpack.c.l.b16 %v2768
  %v4562 = vunpack.c.l.b16 %v2818
  %v4563 = vunpack.c.l.b16 %v2867
  %v4564 = vunpack.c.l.b16 %v2916
  %v4565 = vunpack.c.l.b16 %v2966
  %v4566 = vunpack.c.l.b16 %v3016
  %v4567 = vunpack.c.l.b16 %v3066
  %v4568 = vunpack.c.l.b16 %v3116
  %v4569 = vunpack.c.l.b16 %v3166
  %v4570 = vunpack.c.l.b16 %v2423
  %v4571 = vunpack.c.l.b16 %v2472
  %v4572 = vunpack.c.l.b16 %v2522
  %v4573 = vunpack.c.l.b16 %v2572
  %v4574 = vunpack.c.l.b16 %v2621
  %v4575 = vunpack.c.l.b16 %v2670
  %v4576 = vunpack.c.l.b16 %v2719
  %v4577 = vunpack.c.l.b16 %v2769
  %v4578 = vunpack.c.l.b16 %v2819
  %v4579 = vunpack.c.l.b16 %v2868
  %v4580 = vunpack.c.l.b16 %v2917
  %v4581 = vunpack.c.l.b16 %v2967
  %v4582 = vunpack.c.l.b16 %v3017
  %v4583 = vunpack.c.l.b16 %v3067
  %v4584 = vunpack.c.l.b16 %v3117
  %v4585 = vunpack.c.l.b16 %v3167
  %v4586 = vunpack.c.l.b16 %v2424
  %v4587 = vunpack.c.l.b16 %v2473
  %v4588 = vunpack.c.l.b16 %v2523
  %v4589 = vunpack.c.l.b16 %v2573
  %v4590 = vunpack.c.l.b16 %v2622
  %v4591 = vunpack.c.l.b16 %v2671
  %v4592 = vunpack.c.l.b16 %v2720
  %v4593 = vunpack.c.l.b16 %v2770
  %v4594 = vunpack.c.l.b16 %v2820
  %v4595 = vunpack.c.l.b16 %v2869
  %v4596 = vunpack.c.l.b16 %v2918
  %v4597 = vunpack.c.l.b16 %v2968
  %v4598 = vunpack.c.l.b16 %v3018
  %v4599 = vunpack.c.l.b16 %v3068
  %v4600 = vunpack.c.l.b16 %v3118
  %v4601 = vunpack.c.l.b16 %v3168
  %v4602 = vunpack.c.l.b16 %v2425
  %v4603 = vunpack.c.l.b16 %v2474
  %v4604 = vunpack.c.l.b16 %v2524
  %v4605 = vunpack.c.l.b16 %v2574
  %v4606 = vunpack.c.l.b16 %v2623
  %v4607 = vunpack.c.l.b16 %v2672
  %v4608 = vunpack.c.l.b16 %v2721
  %v4609 = vunpack.c.l.b16 %v2771
  %v4610 = vunpack.c.l.b16 %v2821
  %v4611 = vunpack.c.l.b16 %v2870
  %v4612 = vunpack.c.l.b16 %v2919
  %v4613 = vunpack.c.l.b16 %v2969
  %v4614 = vunpack.c.l.b16 %v3019
  %v4615 = vunpack.c.l.b16 %v3069
  %v4616 = vunpack.c.l.b16 %v3119
  %v4617 = vunpack.c.l.b16 %v3169
  %v4618 = vunpack.c.l.b16 %v2426
  %v4619 = vunpack.c.l.b16 %v2475
  %v4620 = vunpack.c.l.b16 %v2525
  %v4621 = vunpack.c.l.b16 %v2575
  %v4622 = vunpack.c.l.b16 %v2624
  %v4623 = vunpack.c.l.b16 %v2673
  %v4624 = vunpack.c.l.b16 %v2722
  %v4625 = vunpack.c.l.b16 %v2772
  %v4626 = vunpack.c.l.b16 %v2822
  %v4627 = vunpack.c.l.b16 %v2871
  %v4628 = vunpack.c.l.b16 %v2920
  %v4629 = vunpack.c.l.b16 %v2970
  %v4630 = vunpack.c.l.b16 %v3020
  %v4631 = vunpack.c.l.b16 %v3070
  %v4632 = vunpack.c.l.b16 %v3120
  %v4633 = vunpack.c.l.b16 %v3170
  %v4634 = vunpack.c.l.b16 %v2427
  %v4635 = vunpack.c.l.b16 %v2476
  %v4636 = vunpack.c.l.b16 %v2526
  %v4637 = vunpack.c.l.b16 %v2576
  %v4638 = vunpack.c.l.b16 %v2625
  %v4639 = vunpack.c.l.b16 %v2674
  %v4640 = vunpack.c.l.b16 %v2723
  %v4641 = vunpack.c.l.b16 %v2773
  %v4642 = vunpack.c.l.b16 %v2823
  %v4643 = vunpack.c.l.b16 %v2872
  %v4644 = vunpack.c.l.b16 %v2921
  %v4645 = vunpack.c.l.b16 %v2971
  %v4646 = vunpack.c.l.b16 %v3021
  %v4647 = vunpack.c.l.b16 %v3071
  %v4648 = vunpack.c.l.b16 %v3121
  %v4649 = vunpack.c.l.b16 %v3171
  %v4650 = vunpack.c.l.b16 %v2428
  %v4651 = vunpack.c.l.b16 %v2477
  %v4652 = vunpack.c.l.b16 %v2527
  %v4653 = vunpack.c.l.b16 %v2577
  %v4654 = vunpack.c.l.b16 %v2626
  %v4655 = vunpack.c.l.b16 %v2675
  %v4656 = vunpack.c.l.b16 %v2724
  %v4657 = vunpack.c.l.b16 %v2774
  %v4658 = vunpack.c.l.b16 %v2824
  %v4659 = vunpack.c.l.b16 %v2873
  %v4660 = vunpack.c.l.b16 %v2922
  %v4661 = vunpack.c.l.b16 %v2972
  %v4662 = vunpack.c.l.b16 %v3022
  %v4663 = vunpack.c.l.b16 %v3072
  %v4664 = vunpack.c.l.b16 %v3122
  %v4665 = vunpack.c.l.b16 %v3172
  %v4666 = vunpack.c.l.b16 %v2429
  %v4667 = vunpack.c.l.b16 %v2478
  %v4668 = vunpack.c.l.b16 %v2528
  %v4669 = vunpack.c.l.b16 %v2578
  %v4670 = vunpack.c.l.b16 %v2627
  %v4671 = vunpack.c.l.b16 %v2676
  %v4672 = vunpack.c.l.b16 %v2725
  %v4673 = vunpack.c.l.b16 %v2775
  %v4674 = vunpack.c.l.b16 %v2825
  %v4675 = vunpack.c.l.b16 %v2874
  %v4676 = vunpack.c.l.b16 %v2923
  %v4677 = vunpack.c.l.b16 %v2973
  %v4678 = vunpack.c.l.b16 %v3023
  %v4679 = vunpack.c.l.b16 %v3073
  %v4680 = vunpack.c.l.b16 %v3123
  %v4681 = vunpack.c.l.b16 %v3173
  %v4682 = vunpack.c.l.b16 %v2430
  %v4683 = vunpack.c.l.b16 %v2479
  %v4684 = vunpack.c.l.b16 %v2529
  %v4685 = vunpack.c.l.b16 %v2579
  %v4686 = vunpack.c.l.b16 %v2628
  %v4687 = vunpack.c.l.b16 %v2677
  %v4688 = vunpack.c.l.b16 %v2726
  %v4689 = vunpack.c.l.b16 %v2776
  %v4690 = vunpack.c.l.b16 %v2826
  %v4691 = vunpack.c.l.b16 %v2875
  %v4692 = vunpack.c.l.b16 %v2924
  %v4693 = vunpack.c.l.b16 %v2974
  %v4694 = vunpack.c.l.b16 %v3024
  %v4695 = vunpack.c.l.b16 %v3074
  %v4696 = vunpack.c.l.b16 %v3124
  %v4697 = vunpack.c.l.b16 %v3174
  %v4698 = vunpack.c.l.b16 %v2431
  %v4699 = vunpack.c.l.b16 %v2480
  %v4700 = vunpack.c.l.b16 %v2530
  %v4701 = vunpack.c.l.b16 %v2580
  %v4702 = vunpack.c.l.b16 %v2629
  %v4703 = vunpack.c.l.b16 %v2678
  %v4704 = vunpack.c.l.b16 %v2727
  %v4705 = vunpack.c.l.b16 %v2777
  %v4706 = vunpack.c.l.b16 %v2827
  %v4707 = vunpack.c.l.b16 %v2876
  %v4708 = vunpack.c.l.b16 %v2925
  %v4709 = vunpack.c.l.b16 %v2975
  %v4710 = vunpack.c.l.b16 %v3025
  %v4711 = vunpack.c.l.b16 %v3075
  %v4712 = vunpack.c.l.b16 %v3125
  %v4713 = vunpack.c.l.b16 %v3175
  %v4714 = vunpack.c.l.b16 %v2432
  %v4715 = vunpack.c.l.b16 %v2481
  %v4716 = vunpack.c.l.b16 %v2531
  %v4717 = vunpack.c.l.b16 %v2581
  %v4718 = vunpack.c.l.b16 %v2630
  %v4719 = vunpack.c.l.b16 %v2679
  %v4720 = vunpack.c.l.b16 %v2728
  %v4721 = vunpack.c.l.b16 %v2778
  %v4722 = vunpack.c.l.b16 %v2828
  %v4723 = vunpack.c.l.b16 %v2877
  %v4724 = vunpack.c.l.b16 %v2926
  %v4725 = vunpack.c.l.b16 %v2976
  %v4726 = vunpack.c.l.b16 %v3026
  %v4727 = vunpack.c.l.b16 %v3076
  %v4728 = vunpack.c.l.b16 %v3126
  %v4729 = vunpack.c.l.b16 %v3176
  %v4730 = vunpack.c.l.b16 %v2433
  %v4731 = vunpack.c.l.b16 %v2482
  %v4732 = vunpack.c.l.b16 %v2532
  %v4733 = vunpack.c.l.b16 %v2582
  %v4734 = vunpack.c.l.b16 %v2631
  %v4735 = vunpack.c.l.b16 %v2680
  %v4736 = vunpack.c.l.b16 %v2729
  %v4737 = vunpack.c.l.b16 %v2779
  %v4738 = vunpack.c.l.b16 %v2829
  %v4739 = vunpack.c.l.b16 %v2878
  %v4740 = vunpack.c.l.b16 %v2927
  %v4741 = vunpack.c.l.b16 %v2977
  %v4742 = vunpack.c.l.b16 %v3027
  %v4743 = vunpack.c.l.b16 %v3077
  %v4744 = vunpack.c.l.b16 %v3127
  %v4745 = vunpack.c.l.b16 %v3177
  %v4746 = vld [vmem:[%s3] sm:$0xf]
  %v4747 = vld [vmem:[%s3 + $0x4] sm:$0xf]
  %v4748 = vld [vmem:[%s3 + $0x8] sm:$0xf]
  %v4749 = vld [vmem:[%s3 + $0xc] sm:$0xf]
  %v4750 = vld [vmem:[%s3 + $0x10] sm:$0xf]
  %v4751 = vld [vmem:[%s3 + $0x14] sm:$0xf]
  %v4752 = vld [vmem:[%s3 + $0x18] sm:$0xf]
  %v4753 = vld [vmem:[%s3 + $0x1c] sm:$0xf]
  %v4754 = vld [vmem:[%s3 + $0x20] sm:$0xf]
  %v4755 = vld [vmem:[%s3 + $0x24] sm:$0xf]
  %v4756 = vld [vmem:[%s3 + $0x28] sm:$0xf]
  %v4757 = vld [vmem:[%s3 + $0x2c] sm:$0xf]
  %v4758 = vld [vmem:[%s3 + $0x30] sm:$0xf]
  %v4759 = vld [vmem:[%s3 + $0x34] sm:$0xf]
  %v4760 = vld [vmem:[%s3 + $0x38] sm:$0xf]
  %v4761 = vld [vmem:[%s3 + $0x3c] sm:$0xf]
  %v4762 = vld [vmem:[%s3 + $0x40] sm:$0xf]
  %v4763 = vld [vmem:[%s3 + $0x44] sm:$0xf]
  %v4764 = vld [vmem:[%s3 + $0x48] sm:$0xf]
  %v4765 = vld [vmem:[%s3 + $0x4c] sm:$0xf]
  %v4766 = vld [vmem:[%s3 + $0x50] sm:$0xf]
  %v4767 = vld [vmem:[%s3 + $0x54] sm:$0xf]
  %v4768 = vld [vmem:[%s3 + $0x58] sm:$0xf]
  %v4769 = vld [vmem:[%s3 + $0x5c] sm:$0xf]
  %v4770 = vld [vmem:[%s3 + $0x60] sm:$0xf]
  %v4771 = vld [vmem:[%s3 + $0x64] sm:$0xf]
  %v4772 = vld [vmem:[%s3 + $0x68] sm:$0xf]
  %v4773 = vld [vmem:[%s3 + $0x6c] sm:$0xf]
  %v4774 = vld [vmem:[%s3 + $0x70] sm:$0xf]
  %v4775 = vld [vmem:[%s3 + $0x74] sm:$0xf]
  %v4776 = vld [vmem:[%s3 + $0x78] sm:$0xf]
  %v4777 = vld [vmem:[%s3 + $0x7c] sm:$0xf]
  %v4778 = vld [vmem:[%s3 + $0x80] sm:$0xf]
  %v4779 = vld [vmem:[%s3 + $0x84] sm:$0xf]
  %v4780 = vld [vmem:[%s3 + $0x88] sm:$0xf]
  %v4781 = vld [vmem:[%s3 + $0x8c] sm:$0xf]
  %v4782 = vld [vmem:[%s3 + $0x90] sm:$0xf]
  %v4783 = vld [vmem:[%s3 + $0x94] sm:$0xf]
  %v4784 = vld [vmem:[%s3 + $0x98] sm:$0xf]
  %v4785 = vld [vmem:[%s3 + $0x9c] sm:$0xf]
  %v4786 = vld [vmem:[%s3 + $0xa0] sm:$0xf]
  %v4787 = vld [vmem:[%s3 + $0xa4] sm:$0xf]
  %v4788 = vld [vmem:[%s3 + $0xa8] sm:$0xf]
  %v4789 = vld [vmem:[%s3 + $0xac] sm:$0xf]
  %v4790 = vld [vmem:[%s3 + $0xb0] sm:$0xf]
  %v4791 = vld [vmem:[%s3 + $0xb4] sm:$0xf]
  %v4792 = vld [vmem:[%s3 + $0xb8] sm:$0xf]
  %v4793 = vld [vmem:[%s3 + $0xbc] sm:$0xf]
  %v4794 = vld [vmem:[%s3 + $0xc0] sm:$0xf]
  %v4795 = vld [vmem:[%s3 + $0xc4] sm:$0xf]
  %v4796 = vld [vmem:[%s3 + $0xc8] sm:$0xf]
  %v4797 = vld [vmem:[%s3 + $0xcc] sm:$0xf]
  %v4798 = vld [vmem:[%s3 + $0xd0] sm:$0xf]
  %v4799 = vld [vmem:[%s3 + $0xd4] sm:$0xf]
  %v4800 = vld [vmem:[%s3 + $0xd8] sm:$0xf]
  %v4801 = vld [vmem:[%s3 + $0xdc] sm:$0xf]
  %v4802 = vld [vmem:[%s3 + $0xe0] sm:$0xf]
  %v4803 = vld [vmem:[%s3 + $0xe4] sm:$0xf]
  %v4804 = vld [vmem:[%s3 + $0xe8] sm:$0xf]
  %v4805 = vld [vmem:[%s3 + $0xec] sm:$0xf]
  %v4806 = vld [vmem:[%s3 + $0xf0] sm:$0xf]
  %v4807 = vld [vmem:[%s3 + $0xf4] sm:$0xf]
  %v4808 = vld [vmem:[%s3 + $0xf8] sm:$0xf]
  %v4809 = vld [vmem:[%s3 + $0xfc] sm:$0xf]
  %v4810 = vld [vmem:[%s3 + $0x100] sm:$0xf]
  %v4811 = vld [vmem:[%s3 + $0x104] sm:$0xf]
  %v4812 = vld [vmem:[%s3 + $0x108] sm:$0xf]
  %v4813 = vld [vmem:[%s3 + $0x10c] sm:$0xf]
  %v4814 = vld [vmem:[%s3 + $0x110] sm:$0xf]
  %v4815 = vld [vmem:[%s3 + $0x114] sm:$0xf]
  %v4816 = vld [vmem:[%s3 + $0x118] sm:$0xf]
  %v4817 = vld [vmem:[%s3 + $0x11c] sm:$0xf]
  %v4818 = vld [vmem:[%s3 + $0x120] sm:$0xf]
  %v4819 = vld [vmem:[%s3 + $0x124] sm:$0xf]
  %v4820 = vld [vmem:[%s3 + $0x128] sm:$0xf]
  %v4821 = vld [vmem:[%s3 + $0x12c] sm:$0xf]
  %v4822 = vld [vmem:[%s3 + $0x130] sm:$0xf]
  %v4823 = vld [vmem:[%s3 + $0x134] sm:$0xf]
  %v4824 = vld [vmem:[%s3 + $0x138] sm:$0xf]
  %v4825 = vld [vmem:[%s3 + $0x13c] sm:$0xf]
  %v4826 = vld [vmem:[%s3 + $0x140] sm:$0xf]
  %v4827 = vld [vmem:[%s3 + $0x144] sm:$0xf]
  %v4828 = vld [vmem:[%s3 + $0x148] sm:$0xf]
  %v4829 = vld [vmem:[%s3 + $0x14c] sm:$0xf]
  %v4830 = vld [vmem:[%s3 + $0x150] sm:$0xf]
  %v4831 = vld [vmem:[%s3 + $0x154] sm:$0xf]
  %v4832 = vld [vmem:[%s3 + $0x158] sm:$0xf]
  %v4833 = vld [vmem:[%s3 + $0x15c] sm:$0xf]
  %v4834 = vld [vmem:[%s3 + $0x160] sm:$0xf]
  %v4835 = vld [vmem:[%s3 + $0x164] sm:$0xf]
  %v4836 = vld [vmem:[%s3 + $0x168] sm:$0xf]
  %v4837 = vld [vmem:[%s3 + $0x16c] sm:$0xf]
  %v4838 = vld [vmem:[%s3 + $0x170] sm:$0xf]
  %v4839 = vld [vmem:[%s3 + $0x174] sm:$0xf]
  %v4840 = vld [vmem:[%s3 + $0x178] sm:$0xf]
  %v4841 = vld [vmem:[%s3 + $0x17c] sm:$0xf]
  %v4842 = vld [vmem:[%s3 + $0x180] sm:$0xf]
  %v4843 = vld [vmem:[%s3 + $0x184] sm:$0xf]
  %v4844 = vld [vmem:[%s3 + $0x188] sm:$0xf]
  %v4845 = vld [vmem:[%s3 + $0x18c] sm:$0xf]
  %v4846 = vld [vmem:[%s3 + $0x190] sm:$0xf]
  %v4847 = vld [vmem:[%s3 + $0x194] sm:$0xf]
  %v4848 = vld [vmem:[%s3 + $0x198] sm:$0xf]
  %v4849 = vld [vmem:[%s3 + $0x19c] sm:$0xf]
  %v4850 = vld [vmem:[%s3 + $0x1a0] sm:$0xf]
  %v4851 = vld [vmem:[%s3 + $0x1a4] sm:$0xf]
  %v4852 = vld [vmem:[%s3 + $0x1a8] sm:$0xf]
  %v4853 = vld [vmem:[%s3 + $0x1ac] sm:$0xf]
  %v4854 = vld [vmem:[%s3 + $0x1b0] sm:$0xf]
  %v4855 = vld [vmem:[%s3 + $0x1b4] sm:$0xf]
  %v4856 = vld [vmem:[%s3 + $0x1b8] sm:$0xf]
  %v4857 = vld [vmem:[%s3 + $0x1bc] sm:$0xf]
  %v4858 = vld [vmem:[%s3 + $0x1c0] sm:$0xf]
  %v4859 = vld [vmem:[%s3 + $0x1c4] sm:$0xf]
  %v4860 = vld [vmem:[%s3 + $0x1c8] sm:$0xf]
  %v4861 = vld [vmem:[%s3 + $0x1cc] sm:$0xf]
  %v4862 = vld [vmem:[%s3 + $0x1d0] sm:$0xf]
  %v4863 = vld [vmem:[%s3 + $0x1d4] sm:$0xf]
  %v4864 = vld [vmem:[%s3 + $0x1d8] sm:$0xf]
  %v4865 = vld [vmem:[%s3 + $0x1dc] sm:$0xf]
  %v4866 = vld [vmem:[%s3 + $0x1e0] sm:$0xf]
  %v4867 = vld [vmem:[%s3 + $0x1e4] sm:$0xf]
  %v4868 = vld [vmem:[%s3 + $0x1e8] sm:$0xf]
  %v4869 = vld [vmem:[%s3 + $0x1ec] sm:$0xf]
  %v4870 = vld [vmem:[%s3 + $0x1f0] sm:$0xf]
  %v4871 = vld [vmem:[%s3 + $0x1f4] sm:$0xf]
  %v4872 = vld [vmem:[%s3 + $0x1f8] sm:$0xf]
  %v4873 = vld [vmem:[%s3 + $0x1fc] sm:$0xf]
  %v4874 = vld [vmem:[%s3 + $0x200] sm:$0xf]
  %v4875 = vld [vmem:[%s3 + $0x204] sm:$0xf]
  %v4876 = vld [vmem:[%s3 + $0x208] sm:$0xf]
  %v4877 = vld [vmem:[%s3 + $0x20c] sm:$0xf]
  %v4878 = vld [vmem:[%s3 + $0x210] sm:$0xf]
  %v4879 = vld [vmem:[%s3 + $0x214] sm:$0xf]
  %v4880 = vld [vmem:[%s3 + $0x218] sm:$0xf]
  %v4881 = vld [vmem:[%s3 + $0x21c] sm:$0xf]
  %v4882 = vld [vmem:[%s3 + $0x220] sm:$0xf]
  %v4883 = vld [vmem:[%s3 + $0x224] sm:$0xf]
  %v4884 = vld [vmem:[%s3 + $0x228] sm:$0xf]
  %v4885 = vld [vmem:[%s3 + $0x22c] sm:$0xf]
  %v4886 = vld [vmem:[%s3 + $0x230] sm:$0xf]
  %v4887 = vld [vmem:[%s3 + $0x234] sm:$0xf]
  %v4888 = vld [vmem:[%s3 + $0x238] sm:$0xf]
  %v4889 = vld [vmem:[%s3 + $0x23c] sm:$0xf]
  %v4890 = vld [vmem:[%s3 + $0x240] sm:$0xf]
  %v4891 = vld [vmem:[%s3 + $0x244] sm:$0xf]
  %v4892 = vld [vmem:[%s3 + $0x248] sm:$0xf]
  %v4893 = vld [vmem:[%s3 + $0x24c] sm:$0xf]
  %v4894 = vld [vmem:[%s3 + $0x250] sm:$0xf]
  %v4895 = vld [vmem:[%s3 + $0x254] sm:$0xf]
  %v4896 = vld [vmem:[%s3 + $0x258] sm:$0xf]
  %v4897 = vld [vmem:[%s3 + $0x25c] sm:$0xf]
  %v4898 = vld [vmem:[%s3 + $0x260] sm:$0xf]
  %v4899 = vld [vmem:[%s3 + $0x264] sm:$0xf]
  %v4900 = vld [vmem:[%s3 + $0x268] sm:$0xf]
  %v4901 = vld [vmem:[%s3 + $0x26c] sm:$0xf]
  %v4902 = vld [vmem:[%s3 + $0x270] sm:$0xf]
  %v4903 = vld [vmem:[%s3 + $0x274] sm:$0xf]
  %v4904 = vld [vmem:[%s3 + $0x278] sm:$0xf]
  %v4905 = vld [vmem:[%s3 + $0x27c] sm:$0xf]
  %v4906 = vld [vmem:[%s3 + $0x280] sm:$0xf]
  %v4907 = vld [vmem:[%s3 + $0x284] sm:$0xf]
  %v4908 = vld [vmem:[%s3 + $0x288] sm:$0xf]
  %v4909 = vld [vmem:[%s3 + $0x28c] sm:$0xf]
  %v4910 = vld [vmem:[%s3 + $0x290] sm:$0xf]
  %v4911 = vld [vmem:[%s3 + $0x294] sm:$0xf]
  %v4912 = vld [vmem:[%s3 + $0x298] sm:$0xf]
  %v4913 = vld [vmem:[%s3 + $0x29c] sm:$0xf]
  %v4914 = vld [vmem:[%s3 + $0x2a0] sm:$0xf]
  %v4915 = vld [vmem:[%s3 + $0x2a4] sm:$0xf]
  %v4916 = vld [vmem:[%s3 + $0x2a8] sm:$0xf]
  %v4917 = vld [vmem:[%s3 + $0x2ac] sm:$0xf]
  %v4918 = vld [vmem:[%s3 + $0x2b0] sm:$0xf]
  %v4919 = vld [vmem:[%s3 + $0x2b4] sm:$0xf]
  %v4920 = vld [vmem:[%s3 + $0x2b8] sm:$0xf]
  %v4921 = vld [vmem:[%s3 + $0x2bc] sm:$0xf]
  %v4922 = vld [vmem:[%s3 + $0x2c0] sm:$0xf]
  %v4923 = vld [vmem:[%s3 + $0x2c4] sm:$0xf]
  %v4924 = vld [vmem:[%s3 + $0x2c8] sm:$0xf]
  %v4925 = vld [vmem:[%s3 + $0x2cc] sm:$0xf]
  %v4926 = vld [vmem:[%s3 + $0x2d0] sm:$0xf]
  %v4927 = vld [vmem:[%s3 + $0x2d4] sm:$0xf]
  %v4928 = vld [vmem:[%s3 + $0x2d8] sm:$0xf]
  %v4929 = vld [vmem:[%s3 + $0x2dc] sm:$0xf]
  %v4930 = vld [vmem:[%s3 + $0x2e0] sm:$0xf]
  %v4931 = vld [vmem:[%s3 + $0x2e4] sm:$0xf]
  %v4932 = vld [vmem:[%s3 + $0x2e8] sm:$0xf]
  %v4933 = vld [vmem:[%s3 + $0x2ec] sm:$0xf]
  %v4934 = vld [vmem:[%s3 + $0x2f0] sm:$0xf]
  %v4935 = vld [vmem:[%s3 + $0x2f4] sm:$0xf]
  %v4936 = vld [vmem:[%s3 + $0x2f8] sm:$0xf]
  %v4937 = vld [vmem:[%s3 + $0x2fc] sm:$0xf]
  %v4938 = vld [vmem:[%s3 + $0x300] sm:$0xf]
  %v4939 = vld [vmem:[%s3 + $0x304] sm:$0xf]
  %v4940 = vld [vmem:[%s3 + $0x308] sm:$0xf]
  %v4941 = vld [vmem:[%s3 + $0x30c] sm:$0xf]
  %v4942 = vld [vmem:[%s3 + $0x310] sm:$0xf]
  %v4943 = vld [vmem:[%s3 + $0x314] sm:$0xf]
  %v4944 = vld [vmem:[%s3 + $0x318] sm:$0xf]
  %v4945 = vld [vmem:[%s3 + $0x31c] sm:$0xf]
  %v4946 = vld [vmem:[%s3 + $0x320] sm:$0xf]
  %v4947 = vld [vmem:[%s3 + $0x324] sm:$0xf]
  %v4948 = vld [vmem:[%s3 + $0x328] sm:$0xf]
  %v4949 = vld [vmem:[%s3 + $0x32c] sm:$0xf]
  %v4950 = vld [vmem:[%s3 + $0x330] sm:$0xf]
  %v4951 = vld [vmem:[%s3 + $0x334] sm:$0xf]
  %v4952 = vld [vmem:[%s3 + $0x338] sm:$0xf]
  %v4953 = vld [vmem:[%s3 + $0x33c] sm:$0xf]
  %v4954 = vld [vmem:[%s3 + $0x340] sm:$0xf]
  %v4955 = vld [vmem:[%s3 + $0x344] sm:$0xf]
  %v4956 = vld [vmem:[%s3 + $0x348] sm:$0xf]
  %v4957 = vld [vmem:[%s3 + $0x34c] sm:$0xf]
  %v4958 = vld [vmem:[%s3 + $0x350] sm:$0xf]
  %v4959 = vld [vmem:[%s3 + $0x354] sm:$0xf]
  %v4960 = vld [vmem:[%s3 + $0x358] sm:$0xf]
  %v4961 = vld [vmem:[%s3 + $0x35c] sm:$0xf]
  %v4962 = vld [vmem:[%s3 + $0x360] sm:$0xf]
  %v4963 = vld [vmem:[%s3 + $0x364] sm:$0xf]
  %v4964 = vld [vmem:[%s3 + $0x368] sm:$0xf]
  %v4965 = vld [vmem:[%s3 + $0x36c] sm:$0xf]
  %v4966 = vld [vmem:[%s3 + $0x370] sm:$0xf]
  %v4967 = vld [vmem:[%s3 + $0x374] sm:$0xf]
  %v4968 = vld [vmem:[%s3 + $0x378] sm:$0xf]
  %v4969 = vld [vmem:[%s3 + $0x37c] sm:$0xf]
  %v4970 = vld [vmem:[%s3 + $0x380] sm:$0xf]
  %v4971 = vld [vmem:[%s3 + $0x384] sm:$0xf]
  %v4972 = vld [vmem:[%s3 + $0x388] sm:$0xf]
  %v4973 = vld [vmem:[%s3 + $0x38c] sm:$0xf]
  %v4974 = vld [vmem:[%s3 + $0x390] sm:$0xf]
  %v4975 = vld [vmem:[%s3 + $0x394] sm:$0xf]
  %v4976 = vld [vmem:[%s3 + $0x398] sm:$0xf]
  %v4977 = vld [vmem:[%s3 + $0x39c] sm:$0xf]
  %v4978 = vld [vmem:[%s3 + $0x3a0] sm:$0xf]
  %v4979 = vld [vmem:[%s3 + $0x3a4] sm:$0xf]
  %v4980 = vld [vmem:[%s3 + $0x3a8] sm:$0xf]
  %v4981 = vld [vmem:[%s3 + $0x3ac] sm:$0xf]
  %v4982 = vld [vmem:[%s3 + $0x3b0] sm:$0xf]
  %v4983 = vld [vmem:[%s3 + $0x3b4] sm:$0xf]
  %v4984 = vld [vmem:[%s3 + $0x3b8] sm:$0xf]
  %v4985 = vld [vmem:[%s3 + $0x3bc] sm:$0xf]
  %v4986 = vld [vmem:[%s3 + $0x3c0] sm:$0xf]
  %v4987 = vld [vmem:[%s3 + $0x3c4] sm:$0xf]
  %v4988 = vld [vmem:[%s3 + $0x3c8] sm:$0xf]
  %v4989 = vld [vmem:[%s3 + $0x3cc] sm:$0xf]
  %v4990 = vld [vmem:[%s3 + $0x3d0] sm:$0xf]
  %v4991 = vld [vmem:[%s3 + $0x3d4] sm:$0xf]
  %v4992 = vld [vmem:[%s3 + $0x3d8] sm:$0xf]
  %v4993 = vld [vmem:[%s3 + $0x3dc] sm:$0xf]
  %v4994 = vld [vmem:[%s3 + $0x3e0] sm:$0xf]
  %v4995 = vld [vmem:[%s3 + $0x3e4] sm:$0xf]
  %v4996 = vld [vmem:[%s3 + $0x3e8] sm:$0xf]
  %v4997 = vld [vmem:[%s3 + $0x3ec] sm:$0xf]
  %v4998 = vld [vmem:[%s3 + $0x3f0] sm:$0xf]
  %v4999 = vld [vmem:[%s3 + $0x3f4] sm:$0xf]
  %v5000 = vld [vmem:[%s3 + $0x3f8] sm:$0xf]
  %v5001 = vld [vmem:[%s3 + $0x3fc] sm:$0xf]
  %v5002 = vld [vmem:[%s4] sm:$0x1]
  %v5004 = vperm.slane %v5002, 0
  %v5006 = vpack.c.b16 %v3978, %v3962
  %v5007 = vpack.c.b16 %v3979, %v3963
  %v5008 = vpack.c.b16 %v3980, %v3964
  %v5009 = vpack.c.b16 %v3981, %v3965
  %v5010 = vpack.c.b16 %v3982, %v3966
  %v5011 = vpack.c.b16 %v3983, %v3967
  %v5012 = vpack.c.b16 %v3984, %v3968
  %v5013 = vpack.c.b16 %v3985, %v3969
  %v5014 = vpack.c.b16 %v3986, %v3970
  %v5015 = vpack.c.b16 %v3987, %v3971
  %v5016 = vpack.c.b16 %v3988, %v3972
  %v5017 = vpack.c.b16 %v3989, %v3973
  %v5018 = vpack.c.b16 %v3990, %v3974
  %v5019 = vpack.c.b16 %v3991, %v3975
  %v5020 = vpack.c.b16 %v3992, %v3976
  %v5021 = vpack.c.b16 %v3993, %v3977
  %v5022 = vpack.c.b16 %v4010, %v3994
  %v5023 = vpack.c.b16 %v4011, %v3995
  %v5024 = vpack.c.b16 %v4012, %v3996
  %v5025 = vpack.c.b16 %v4013, %v3997
  %v5026 = vpack.c.b16 %v4014, %v3998
  %v5027 = vpack.c.b16 %v4015, %v3999
  %v5028 = vpack.c.b16 %v4016, %v4000
  %v5029 = vpack.c.b16 %v4017, %v4001
  %v5030 = vpack.c.b16 %v4018, %v4002
  %v5031 = vpack.c.b16 %v4019, %v4003
  %v5032 = vpack.c.b16 %v4020, %v4004
  %v5033 = vpack.c.b16 %v4021, %v4005
  %v5034 = vpack.c.b16 %v4022, %v4006
  %v5035 = vpack.c.b16 %v4023, %v4007
  %v5036 = vpack.c.b16 %v4024, %v4008
  %v5037 = vpack.c.b16 %v4025, %v4009
  %v5038 = vpack.c.b16 %v4042, %v4026
  %v5039 = vpack.c.b16 %v4043, %v4027
  %v5040 = vpack.c.b16 %v4044, %v4028
  %v5041 = vpack.c.b16 %v4045, %v4029
  %v5042 = vpack.c.b16 %v4046, %v4030
  %v5043 = vpack.c.b16 %v4047, %v4031
  %v5044 = vpack.c.b16 %v4048, %v4032
  %v5045 = vpack.c.b16 %v4049, %v4033
  %v5046 = vpack.c.b16 %v4050, %v4034
  %v5047 = vpack.c.b16 %v4051, %v4035
  %v5048 = vpack.c.b16 %v4052, %v4036
  %v5049 = vpack.c.b16 %v4053, %v4037
  %v5050 = vpack.c.b16 %v4054, %v4038
  %v5051 = vpack.c.b16 %v4055, %v4039
  %v5052 = vpack.c.b16 %v4056, %v4040
  %v5053 = vpack.c.b16 %v4057, %v4041
  %v5054 = vpack.c.b16 %v4074, %v4058
  %v5055 = vpack.c.b16 %v4075, %v4059
  %v5056 = vpack.c.b16 %v4076, %v4060
  %v5057 = vpack.c.b16 %v4077, %v4061
  %v5058 = vpack.c.b16 %v4078, %v4062
  %v5059 = vpack.c.b16 %v4079, %v4063
  %v5060 = vpack.c.b16 %v4080, %v4064
  %v5061 = vpack.c.b16 %v4081, %v4065
  %v5062 = vpack.c.b16 %v4082, %v4066
  %v5063 = vpack.c.b16 %v4083, %v4067
  %v5064 = vpack.c.b16 %v4084, %v4068
  %v5065 = vpack.c.b16 %v4085, %v4069
  %v5066 = vpack.c.b16 %v4086, %v4070
  %v5067 = vpack.c.b16 %v4087, %v4071
  %v5068 = vpack.c.b16 %v4088, %v4072
  %v5069 = vpack.c.b16 %v4089, %v4073
  %v5070 = vpack.c.b16 %v4106, %v4090
  %v5071 = vpack.c.b16 %v4107, %v4091
  %v5072 = vpack.c.b16 %v4108, %v4092
  %v5073 = vpack.c.b16 %v4109, %v4093
  %v5074 = vpack.c.b16 %v4110, %v4094
  %v5075 = vpack.c.b16 %v4111, %v4095
  %v5076 = vpack.c.b16 %v4112, %v4096
  %v5077 = vpack.c.b16 %v4113, %v4097
  %v5078 = vpack.c.b16 %v4114, %v4098
  %v5079 = vpack.c.b16 %v4115, %v4099
  %v5080 = vpack.c.b16 %v4116, %v4100
  %v5081 = vpack.c.b16 %v4117, %v4101
  %v5082 = vpack.c.b16 %v4118, %v4102
  %v5083 = vpack.c.b16 %v4119, %v4103
  %v5084 = vpack.c.b16 %v4120, %v4104
  %v5085 = vpack.c.b16 %v4121, %v4105
  %v5086 = vpack.c.b16 %v4138, %v4122
  %v5087 = vpack.c.b16 %v4139, %v4123
  %v5088 = vpack.c.b16 %v4140, %v4124
  %v5089 = vpack.c.b16 %v4141, %v4125
  %v5090 = vpack.c.b16 %v4142, %v4126
  %v5091 = vpack.c.b16 %v4143, %v4127
  %v5092 = vpack.c.b16 %v4144, %v4128
  %v5093 = vpack.c.b16 %v4145, %v4129
  %v5094 = vpack.c.b16 %v4146, %v4130
  %v5095 = vpack.c.b16 %v4147, %v4131
  %v5096 = vpack.c.b16 %v4148, %v4132
  %v5097 = vpack.c.b16 %v4149, %v4133
  %v5098 = vpack.c.b16 %v4150, %v4134
  %v5099 = vpack.c.b16 %v4151, %v4135
  %v5100 = vpack.c.b16 %v4152, %v4136
  %v5101 = vpack.c.b16 %v4153, %v4137
  %v5102 = vpack.c.b16 %v4170, %v4154
  %v5103 = vpack.c.b16 %v4171, %v4155
  %v5104 = vpack.c.b16 %v4172, %v4156
  %v5105 = vpack.c.b16 %v4173, %v4157
  %v5106 = vpack.c.b16 %v4174, %v4158
  %v5107 = vpack.c.b16 %v4175, %v4159
  %v5108 = vpack.c.b16 %v4176, %v4160
  %v5109 = vpack.c.b16 %v4177, %v4161
  %v5110 = vpack.c.b16 %v4178, %v4162
  %v5111 = vpack.c.b16 %v4179, %v4163
  %v5112 = vpack.c.b16 %v4180, %v4164
  %v5113 = vpack.c.b16 %v4181, %v4165
  %v5114 = vpack.c.b16 %v4182, %v4166
  %v5115 = vpack.c.b16 %v4183, %v4167
  %v5116 = vpack.c.b16 %v4184, %v4168
  %v5117 = vpack.c.b16 %v4185, %v4169
  %v5118 = vpack.c.b16 %v4202, %v4186
  %v5119 = vpack.c.b16 %v4203, %v4187
  %v5120 = vpack.c.b16 %v4204, %v4188
  %v5121 = vpack.c.b16 %v4205, %v4189
  %v5122 = vpack.c.b16 %v4206, %v4190
  %v5123 = vpack.c.b16 %v4207, %v4191
  %v5124 = vpack.c.b16 %v4208, %v4192
  %v5125 = vpack.c.b16 %v4209, %v4193
  %v5126 = vpack.c.b16 %v4210, %v4194
  %v5127 = vpack.c.b16 %v4211, %v4195
  %v5128 = vpack.c.b16 %v4212, %v4196
  %v5129 = vpack.c.b16 %v4213, %v4197
  %v5130 = vpack.c.b16 %v4214, %v4198
  %v5131 = vpack.c.b16 %v4215, %v4199
  %v5132 = vpack.c.b16 %v4216, %v4200
  %v5133 = vpack.c.b16 %v4217, %v4201
  %v5134 = vpack.c.b16 %v4234, %v4218
  %v5135 = vpack.c.b16 %v4235, %v4219
  %v5136 = vpack.c.b16 %v4236, %v4220
  %v5137 = vpack.c.b16 %v4237, %v4221
  %v5138 = vpack.c.b16 %v4238, %v4222
  %v5139 = vpack.c.b16 %v4239, %v4223
  %v5140 = vpack.c.b16 %v4240, %v4224
  %v5141 = vpack.c.b16 %v4241, %v4225
  %v5142 = vpack.c.b16 %v4242, %v4226
  %v5143 = vpack.c.b16 %v4243, %v4227
  %v5144 = vpack.c.b16 %v4244, %v4228
  %v5145 = vpack.c.b16 %v4245, %v4229
  %v5146 = vpack.c.b16 %v4246, %v4230
  %v5147 = vpack.c.b16 %v4247, %v4231
  %v5148 = vpack.c.b16 %v4248, %v4232
  %v5149 = vpack.c.b16 %v4249, %v4233
  %v5150 = vpack.c.b16 %v4266, %v4250
  %v5151 = vpack.c.b16 %v4267, %v4251
  %v5152 = vpack.c.b16 %v4268, %v4252
  %v5153 = vpack.c.b16 %v4269, %v4253
  %v5154 = vpack.c.b16 %v4270, %v4254
  %v5155 = vpack.c.b16 %v4271, %v4255
  %v5156 = vpack.c.b16 %v4272, %v4256
  %v5157 = vpack.c.b16 %v4273, %v4257
  %v5158 = vpack.c.b16 %v4274, %v4258
  %v5159 = vpack.c.b16 %v4275, %v4259
  %v5160 = vpack.c.b16 %v4276, %v4260
  %v5161 = vpack.c.b16 %v4277, %v4261
  %v5162 = vpack.c.b16 %v4278, %v4262
  %v5163 = vpack.c.b16 %v4279, %v4263
  %v5164 = vpack.c.b16 %v4280, %v4264
  %v5165 = vpack.c.b16 %v4281, %v4265
  %v5166 = vpack.c.b16 %v4298, %v4282
  %v5167 = vpack.c.b16 %v4299, %v4283
  %v5168 = vpack.c.b16 %v4300, %v4284
  %v5169 = vpack.c.b16 %v4301, %v4285
  %v5170 = vpack.c.b16 %v4302, %v4286
  %v5171 = vpack.c.b16 %v4303, %v4287
  %v5172 = vpack.c.b16 %v4304, %v4288
  %v5173 = vpack.c.b16 %v4305, %v4289
  %v5174 = vpack.c.b16 %v4306, %v4290
  %v5175 = vpack.c.b16 %v4307, %v4291
  %v5176 = vpack.c.b16 %v4308, %v4292
  %v5177 = vpack.c.b16 %v4309, %v4293
  %v5178 = vpack.c.b16 %v4310, %v4294
  %v5179 = vpack.c.b16 %v4311, %v4295
  %v5180 = vpack.c.b16 %v4312, %v4296
  %v5181 = vpack.c.b16 %v4313, %v4297
  %v5182 = vpack.c.b16 %v4330, %v4314
  %v5183 = vpack.c.b16 %v4331, %v4315
  %v5184 = vpack.c.b16 %v4332, %v4316
  %v5185 = vpack.c.b16 %v4333, %v4317
  %v5186 = vpack.c.b16 %v4334, %v4318
  %v5187 = vpack.c.b16 %v4335, %v4319
  %v5188 = vpack.c.b16 %v4336, %v4320
  %v5189 = vpack.c.b16 %v4337, %v4321
  %v5190 = vpack.c.b16 %v4338, %v4322
  %v5191 = vpack.c.b16 %v4339, %v4323
  %v5192 = vpack.c.b16 %v4340, %v4324
  %v5193 = vpack.c.b16 %v4341, %v4325
  %v5194 = vpack.c.b16 %v4342, %v4326
  %v5195 = vpack.c.b16 %v4343, %v4327
  %v5196 = vpack.c.b16 %v4344, %v4328
  %v5197 = vpack.c.b16 %v4345, %v4329
  %v5198 = vpack.c.b16 %v4362, %v4346
  %v5199 = vpack.c.b16 %v4363, %v4347
  %v5200 = vpack.c.b16 %v4364, %v4348
  %v5201 = vpack.c.b16 %v4365, %v4349
  %v5202 = vpack.c.b16 %v4366, %v4350
  %v5203 = vpack.c.b16 %v4367, %v4351
  %v5204 = vpack.c.b16 %v4368, %v4352
  %v5205 = vpack.c.b16 %v4369, %v4353
  %v5206 = vpack.c.b16 %v4370, %v4354
  %v5207 = vpack.c.b16 %v4371, %v4355
  %v5208 = vpack.c.b16 %v4372, %v4356
  %v5209 = vpack.c.b16 %v4373, %v4357
  %v5210 = vpack.c.b16 %v4374, %v4358
  %v5211 = vpack.c.b16 %v4375, %v4359
  %v5212 = vpack.c.b16 %v4376, %v4360
  %v5213 = vpack.c.b16 %v4377, %v4361
  %v5214 = vpack.c.b16 %v4394, %v4378
  %v5215 = vpack.c.b16 %v4395, %v4379
  %v5216 = vpack.c.b16 %v4396, %v4380
  %v5217 = vpack.c.b16 %v4397, %v4381
  %v5218 = vpack.c.b16 %v4398, %v4382
  %v5219 = vpack.c.b16 %v4399, %v4383
  %v5220 = vpack.c.b16 %v4400, %v4384
  %v5221 = vpack.c.b16 %v4401, %v4385
  %v5222 = vpack.c.b16 %v4402, %v4386
  %v5223 = vpack.c.b16 %v4403, %v4387
  %v5224 = vpack.c.b16 %v4404, %v4388
  %v5225 = vpack.c.b16 %v4405, %v4389
  %v5226 = vpack.c.b16 %v4406, %v4390
  %v5227 = vpack.c.b16 %v4407, %v4391
  %v5228 = vpack.c.b16 %v4408, %v4392
  %v5229 = vpack.c.b16 %v4409, %v4393
  %v5230 = vpack.c.b16 %v4426, %v4410
  %v5231 = vpack.c.b16 %v4427, %v4411
  %v5232 = vpack.c.b16 %v4428, %v4412
  %v5233 = vpack.c.b16 %v4429, %v4413
  %v5234 = vpack.c.b16 %v4430, %v4414
  %v5235 = vpack.c.b16 %v4431, %v4415
  %v5236 = vpack.c.b16 %v4432, %v4416
  %v5237 = vpack.c.b16 %v4433, %v4417
  %v5238 = vpack.c.b16 %v4434, %v4418
  %v5239 = vpack.c.b16 %v4435, %v4419
  %v5240 = vpack.c.b16 %v4436, %v4420
  %v5241 = vpack.c.b16 %v4437, %v4421
  %v5242 = vpack.c.b16 %v4438, %v4422
  %v5243 = vpack.c.b16 %v4439, %v4423
  %v5244 = vpack.c.b16 %v4440, %v4424
  %v5245 = vpack.c.b16 %v4441, %v4425
  %v5246 = vpack.c.b16 %v4458, %v4442
  %v5247 = vpack.c.b16 %v4459, %v4443
  %v5248 = vpack.c.b16 %v4460, %v4444
  %v5249 = vpack.c.b16 %v4461, %v4445
  %v5250 = vpack.c.b16 %v4462, %v4446
  %v5251 = vpack.c.b16 %v4463, %v4447
  %v5252 = vpack.c.b16 %v4464, %v4448
  %v5253 = vpack.c.b16 %v4465, %v4449
  %v5254 = vpack.c.b16 %v4466, %v4450
  %v5255 = vpack.c.b16 %v4467, %v4451
  %v5256 = vpack.c.b16 %v4468, %v4452
  %v5257 = vpack.c.b16 %v4469, %v4453
  %v5258 = vpack.c.b16 %v4470, %v4454
  %v5259 = vpack.c.b16 %v4471, %v4455
  %v5260 = vpack.c.b16 %v4472, %v4456
  %v5261 = vpack.c.b16 %v4473, %v4457
  %v5262 = vpack.c.b16 %v4490, %v4474
  %v5263 = vpack.c.b16 %v4491, %v4475
  %v5264 = vpack.c.b16 %v4492, %v4476
  %v5265 = vpack.c.b16 %v4493, %v4477
  %v5266 = vpack.c.b16 %v4494, %v4478
  %v5267 = vpack.c.b16 %v4495, %v4479
  %v5268 = vpack.c.b16 %v4496, %v4480
  %v5269 = vpack.c.b16 %v4497, %v4481
  %v5270 = vpack.c.b16 %v4498, %v4482
  %v5271 = vpack.c.b16 %v4499, %v4483
  %v5272 = vpack.c.b16 %v4500, %v4484
  %v5273 = vpack.c.b16 %v4501, %v4485
  %v5274 = vpack.c.b16 %v4502, %v4486
  %v5275 = vpack.c.b16 %v4503, %v4487
  %v5276 = vpack.c.b16 %v4504, %v4488
  %v5277 = vpack.c.b16 %v4505, %v4489
  %v5278 = vpack.c.b16 %v4522, %v4506
  %v5279 = vpack.c.b16 %v4523, %v4507
  %v5280 = vpack.c.b16 %v4524, %v4508
  %v5281 = vpack.c.b16 %v4525, %v4509
  %v5282 = vpack.c.b16 %v4526, %v4510
  %v5283 = vpack.c.b16 %v4527, %v4511
  %v5284 = vpack.c.b16 %v4528, %v4512
  %v5285 = vpack.c.b16 %v4529, %v4513
  %v5286 = vpack.c.b16 %v4530, %v4514
  %v5287 = vpack.c.b16 %v4531, %v4515
  %v5288 = vpack.c.b16 %v4532, %v4516
  %v5289 = vpack.c.b16 %v4533, %v4517
  %v5290 = vpack.c.b16 %v4534, %v4518
  %v5291 = vpack.c.b16 %v4535, %v4519
  %v5292 = vpack.c.b16 %v4536, %v4520
  %v5293 = vpack.c.b16 %v4537, %v4521
  %v5294 = vpack.c.b16 %v4554, %v4538
  %v5295 = vpack.c.b16 %v4555, %v4539
  %v5296 = vpack.c.b16 %v4556, %v4540
  %v5297 = vpack.c.b16 %v4557, %v4541
  %v5298 = vpack.c.b16 %v4558, %v4542
  %v5299 = vpack.c.b16 %v4559, %v4543
  %v5300 = vpack.c.b16 %v4560, %v4544
  %v5301 = vpack.c.b16 %v4561, %v4545
  %v5302 = vpack.c.b16 %v4562, %v4546
  %v5303 = vpack.c.b16 %v4563, %v4547
  %v5304 = vpack.c.b16 %v4564, %v4548
  %v5305 = vpack.c.b16 %v4565, %v4549
  %v5306 = vpack.c.b16 %v4566, %v4550
  %v5307 = vpack.c.b16 %v4567, %v4551
  %v5308 = vpack.c.b16 %v4568, %v4552
  %v5309 = vpack.c.b16 %v4569, %v4553
  %v5310 = vpack.c.b16 %v4586, %v4570
  %v5311 = vpack.c.b16 %v4587, %v4571
  %v5312 = vpack.c.b16 %v4588, %v4572
  %v5313 = vpack.c.b16 %v4589, %v4573
  %v5314 = vpack.c.b16 %v4590, %v4574
  %v5315 = vpack.c.b16 %v4591, %v4575
  %v5316 = vpack.c.b16 %v4592, %v4576
  %v5317 = vpack.c.b16 %v4593, %v4577
  %v5318 = vpack.c.b16 %v4594, %v4578
  %v5319 = vpack.c.b16 %v4595, %v4579
  %v5320 = vpack.c.b16 %v4596, %v4580
  %v5321 = vpack.c.b16 %v4597, %v4581
  %v5322 = vpack.c.b16 %v4598, %v4582
  %v5323 = vpack.c.b16 %v4599, %v4583
  %v5324 = vpack.c.b16 %v4600, %v4584
  %v5325 = vpack.c.b16 %v4601, %v4585
  %v5326 = vpack.c.b16 %v4618, %v4602
  %v5327 = vpack.c.b16 %v4619, %v4603
  %v5328 = vpack.c.b16 %v4620, %v4604
  %v5329 = vpack.c.b16 %v4621, %v4605
  %v5330 = vpack.c.b16 %v4622, %v4606
  %v5331 = vpack.c.b16 %v4623, %v4607
  %v5332 = vpack.c.b16 %v4624, %v4608
  %v5333 = vpack.c.b16 %v4625, %v4609
  %v5334 = vpack.c.b16 %v4626, %v4610
  %v5335 = vpack.c.b16 %v4627, %v4611
  %v5336 = vpack.c.b16 %v4628, %v4612
  %v5337 = vpack.c.b16 %v4629, %v4613
  %v5338 = vpack.c.b16 %v4630, %v4614
  %v5339 = vpack.c.b16 %v4631, %v4615
  %v5340 = vpack.c.b16 %v4632, %v4616
  %v5341 = vpack.c.b16 %v4633, %v4617
  %v5342 = vpack.c.b16 %v4650, %v4634
  %v5343 = vpack.c.b16 %v4651, %v4635
  %v5344 = vpack.c.b16 %v4652, %v4636
  %v5345 = vpack.c.b16 %v4653, %v4637
  %v5346 = vpack.c.b16 %v4654, %v4638
  %v5347 = vpack.c.b16 %v4655, %v4639
  %v5348 = vpack.c.b16 %v4656, %v4640
  %v5349 = vpack.c.b16 %v4657, %v4641
  %v5350 = vpack.c.b16 %v4658, %v4642
  %v5351 = vpack.c.b16 %v4659, %v4643
  %v5352 = vpack.c.b16 %v4660, %v4644
  %v5353 = vpack.c.b16 %v4661, %v4645
  %v5354 = vpack.c.b16 %v4662, %v4646
  %v5355 = vpack.c.b16 %v4663, %v4647
  %v5356 = vpack.c.b16 %v4664, %v4648
  %v5357 = vpack.c.b16 %v4665, %v4649
  %v5358 = vpack.c.b16 %v4682, %v4666
  %v5359 = vpack.c.b16 %v4683, %v4667
  %v5360 = vpack.c.b16 %v4684, %v4668
  %v5361 = vpack.c.b16 %v4685, %v4669
  %v5362 = vpack.c.b16 %v4686, %v4670
  %v5363 = vpack.c.b16 %v4687, %v4671
  %v5364 = vpack.c.b16 %v4688, %v4672
  %v5365 = vpack.c.b16 %v4689, %v4673
  %v5366 = vpack.c.b16 %v4690, %v4674
  %v5367 = vpack.c.b16 %v4691, %v4675
  %v5368 = vpack.c.b16 %v4692, %v4676
  %v5369 = vpack.c.b16 %v4693, %v4677
  %v5370 = vpack.c.b16 %v4694, %v4678
  %v5371 = vpack.c.b16 %v4695, %v4679
  %v5372 = vpack.c.b16 %v4696, %v4680
  %v5373 = vpack.c.b16 %v4697, %v4681
  %v5374 = vpack.c.b16 %v4714, %v4698
  %v5375 = vpack.c.b16 %v4715, %v4699
  %v5376 = vpack.c.b16 %v4716, %v4700
  %v5377 = vpack.c.b16 %v4717, %v4701
  %v5378 = vpack.c.b16 %v4718, %v4702
  %v5379 = vpack.c.b16 %v4719, %v4703
  %v5380 = vpack.c.b16 %v4720, %v4704
  %v5381 = vpack.c.b16 %v4721, %v4705
  %v5382 = vpack.c.b16 %v4722, %v4706
  %v5383 = vpack.c.b16 %v4723, %v4707
  %v5384 = vpack.c.b16 %v4724, %v4708
  %v5385 = vpack.c.b16 %v4725, %v4709
  %v5386 = vpack.c.b16 %v4726, %v4710
  %v5387 = vpack.c.b16 %v4727, %v4711
  %v5388 = vpack.c.b16 %v4728, %v4712
  %v5389 = vpack.c.b16 %v4729, %v4713
  %v5390 = vpack.c.b16 %v4730, %v4730
  %v5391 = vpack.c.b16 %v4731, %v4731
  %v5392 = vpack.c.b16 %v4732, %v4732
  %v5393 = vpack.c.b16 %v4733, %v4733
  %v5394 = vpack.c.b16 %v4734, %v4734
  %v5395 = vpack.c.b16 %v4735, %v4735
  %v5396 = vpack.c.b16 %v4736, %v4736
  %v5397 = vpack.c.b16 %v4737, %v4737
  %v5398 = vpack.c.b16 %v4738, %v4738
  %v5399 = vpack.c.b16 %v4739, %v4739
  %v5400 = vpack.c.b16 %v4740, %v4740
  %v5401 = vpack.c.b16 %v4741, %v4741
  %v5402 = vpack.c.b16 %v4742, %v4742
  %v5403 = vpack.c.b16 %v4743, %v4743
  %v5404 = vpack.c.b16 %v4744, %v4744
  %v5405 = vpack.c.b16 %v4745, %v4745
  %v6062 = vunpack.c.l.b16 %v4746
  %v6063 = vunpack.c.l.b16 %v4747
  %v6064 = vunpack.c.l.b16 %v4748
  %v6065 = vunpack.c.l.b16 %v4749
  %v6066 = vunpack.c.l.b16 %v4750
  %v6067 = vunpack.c.l.b16 %v4751
  %v6068 = vunpack.c.l.b16 %v4752
  %v6069 = vunpack.c.l.b16 %v4753
  %v6070 = vunpack.c.l.b16 %v4754
  %v6071 = vunpack.c.l.b16 %v4755
  %v6072 = vunpack.c.l.b16 %v4756
  %v6073 = vunpack.c.l.b16 %v4757
  %v6074 = vunpack.c.l.b16 %v4758
  %v6075 = vunpack.c.l.b16 %v4759
  %v6076 = vunpack.c.l.b16 %v4760
  %v6077 = vunpack.c.l.b16 %v4761
  %v6078 = vunpack.c.l.b16 %v4762
  %v6079 = vunpack.c.l.b16 %v4763
  %v6080 = vunpack.c.l.b16 %v4764
  %v6081 = vunpack.c.l.b16 %v4765
  %v6082 = vunpack.c.l.b16 %v4766
  %v6083 = vunpack.c.l.b16 %v4767
  %v6084 = vunpack.c.l.b16 %v4768
  %v6085 = vunpack.c.l.b16 %v4769
  %v6086 = vunpack.c.l.b16 %v4770
  %v6087 = vunpack.c.l.b16 %v4771
  %v6088 = vunpack.c.l.b16 %v4772
  %v6089 = vunpack.c.l.b16 %v4773
  %v6090 = vunpack.c.l.b16 %v4774
  %v6091 = vunpack.c.l.b16 %v4775
  %v6092 = vunpack.c.l.b16 %v4776
  %v6093 = vunpack.c.l.b16 %v4777
  %v6094 = vunpack.c.l.b16 %v4778
  %v6095 = vunpack.c.l.b16 %v4779
  %v6096 = vunpack.c.l.b16 %v4780
  %v6097 = vunpack.c.l.b16 %v4781
  %v6098 = vunpack.c.l.b16 %v4782
  %v6099 = vunpack.c.l.b16 %v4783
  %v6100 = vunpack.c.l.b16 %v4784
  %v6101 = vunpack.c.l.b16 %v4785
  %v6102 = vunpack.c.l.b16 %v4786
  %v6103 = vunpack.c.l.b16 %v4787
  %v6104 = vunpack.c.l.b16 %v4788
  %v6105 = vunpack.c.l.b16 %v4789
  %v6106 = vunpack.c.l.b16 %v4790
  %v6107 = vunpack.c.l.b16 %v4791
  %v6108 = vunpack.c.l.b16 %v4792
  %v6109 = vunpack.c.l.b16 %v4793
  %v6110 = vunpack.c.l.b16 %v4794
  %v6111 = vunpack.c.l.b16 %v4795
  %v6112 = vunpack.c.l.b16 %v4796
  %v6113 = vunpack.c.l.b16 %v4797
  %v6114 = vunpack.c.l.b16 %v4798
  %v6115 = vunpack.c.l.b16 %v4799
  %v6116 = vunpack.c.l.b16 %v4800
  %v6117 = vunpack.c.l.b16 %v4801
  %v6118 = vunpack.c.l.b16 %v4802
  %v6119 = vunpack.c.l.b16 %v4803
  %v6120 = vunpack.c.l.b16 %v4804
  %v6121 = vunpack.c.l.b16 %v4805
  %v6122 = vunpack.c.l.b16 %v4806
  %v6123 = vunpack.c.l.b16 %v4807
  %v6124 = vunpack.c.l.b16 %v4808
  %v6125 = vunpack.c.l.b16 %v4809
  %v6126 = vunpack.c.l.b16 %v4810
  %v6127 = vunpack.c.l.b16 %v4811
  %v6128 = vunpack.c.l.b16 %v4812
  %v6129 = vunpack.c.l.b16 %v4813
  %v6130 = vunpack.c.l.b16 %v4814
  %v6131 = vunpack.c.l.b16 %v4815
  %v6132 = vunpack.c.l.b16 %v4816
  %v6133 = vunpack.c.l.b16 %v4817
  %v6134 = vunpack.c.l.b16 %v4818
  %v6135 = vunpack.c.l.b16 %v4819
  %v6136 = vunpack.c.l.b16 %v4820
  %v6137 = vunpack.c.l.b16 %v4821
  %v6138 = vunpack.c.l.b16 %v4822
  %v6139 = vunpack.c.l.b16 %v4823
  %v6140 = vunpack.c.l.b16 %v4824
  %v6141 = vunpack.c.l.b16 %v4825
  %v6142 = vunpack.c.l.b16 %v4826
  %v6143 = vunpack.c.l.b16 %v4827
  %v6144 = vunpack.c.l.b16 %v4828
  %v6145 = vunpack.c.l.b16 %v4829
  %v6146 = vunpack.c.l.b16 %v4830
  %v6147 = vunpack.c.l.b16 %v4831
  %v6148 = vunpack.c.l.b16 %v4832
  %v6149 = vunpack.c.l.b16 %v4833
  %v6150 = vunpack.c.l.b16 %v4834
  %v6151 = vunpack.c.l.b16 %v4835
  %v6152 = vunpack.c.l.b16 %v4836
  %v6153 = vunpack.c.l.b16 %v4837
  %v6154 = vunpack.c.l.b16 %v4838
  %v6155 = vunpack.c.l.b16 %v4839
  %v6156 = vunpack.c.l.b16 %v4840
  %v6157 = vunpack.c.l.b16 %v4841
  %v6158 = vunpack.c.l.b16 %v4842
  %v6159 = vunpack.c.l.b16 %v4843
  %v6160 = vunpack.c.l.b16 %v4844
  %v6161 = vunpack.c.l.b16 %v4845
  %v6162 = vunpack.c.l.b16 %v4846
  %v6163 = vunpack.c.l.b16 %v4847
  %v6164 = vunpack.c.l.b16 %v4848
  %v6165 = vunpack.c.l.b16 %v4849
  %v6166 = vunpack.c.l.b16 %v4850
  %v6167 = vunpack.c.l.b16 %v4851
  %v6168 = vunpack.c.l.b16 %v4852
  %v6169 = vunpack.c.l.b16 %v4853
  %v6170 = vunpack.c.l.b16 %v4854
  %v6171 = vunpack.c.l.b16 %v4855
  %v6172 = vunpack.c.l.b16 %v4856
  %v6173 = vunpack.c.l.b16 %v4857
  %v6174 = vunpack.c.l.b16 %v4858
  %v6175 = vunpack.c.l.b16 %v4859
  %v6176 = vunpack.c.l.b16 %v4860
  %v6177 = vunpack.c.l.b16 %v4861
  %v6178 = vunpack.c.l.b16 %v4862
  %v6179 = vunpack.c.l.b16 %v4863
  %v6180 = vunpack.c.l.b16 %v4864
  %v6181 = vunpack.c.l.b16 %v4865
  %v6182 = vunpack.c.l.b16 %v4866
  %v6183 = vunpack.c.l.b16 %v4867
  %v6184 = vunpack.c.l.b16 %v4868
  %v6185 = vunpack.c.l.b16 %v4869
  %v6186 = vunpack.c.l.b16 %v4870
  %v6187 = vunpack.c.l.b16 %v4871
  %v6188 = vunpack.c.l.b16 %v4872
  %v6189 = vunpack.c.l.b16 %v4873
  %v6190 = vunpack.c.l.b16 %v4874
  %v6191 = vunpack.c.l.b16 %v4875
  %v6192 = vunpack.c.l.b16 %v4876
  %v6193 = vunpack.c.l.b16 %v4877
  %v6194 = vunpack.c.l.b16 %v4878
  %v6195 = vunpack.c.l.b16 %v4879
  %v6196 = vunpack.c.l.b16 %v4880
  %v6197 = vunpack.c.l.b16 %v4881
  %v6198 = vunpack.c.l.b16 %v4882
  %v6199 = vunpack.c.l.b16 %v4883
  %v6200 = vunpack.c.l.b16 %v4884
  %v6201 = vunpack.c.l.b16 %v4885
  %v6202 = vunpack.c.l.b16 %v4886
  %v6203 = vunpack.c.l.b16 %v4887
  %v6204 = vunpack.c.l.b16 %v4888
  %v6205 = vunpack.c.l.b16 %v4889
  %v6206 = vunpack.c.l.b16 %v4890
  %v6207 = vunpack.c.l.b16 %v4891
  %v6208 = vunpack.c.l.b16 %v4892
  %v6209 = vunpack.c.l.b16 %v4893
  %v6210 = vunpack.c.l.b16 %v4894
  %v6211 = vunpack.c.l.b16 %v4895
  %v6212 = vunpack.c.l.b16 %v4896
  %v6213 = vunpack.c.l.b16 %v4897
  %v6214 = vunpack.c.l.b16 %v4898
  %v6215 = vunpack.c.l.b16 %v4899
  %v6216 = vunpack.c.l.b16 %v4900
  %v6217 = vunpack.c.l.b16 %v4901
  %v6218 = vunpack.c.l.b16 %v4902
  %v6219 = vunpack.c.l.b16 %v4903
  %v6220 = vunpack.c.l.b16 %v4904
  %v6221 = vunpack.c.l.b16 %v4905
  %v6222 = vunpack.c.l.b16 %v4906
  %v6223 = vunpack.c.l.b16 %v4907
  %v6224 = vunpack.c.l.b16 %v4908
  %v6225 = vunpack.c.l.b16 %v4909
  %v6226 = vunpack.c.l.b16 %v4910
  %v6227 = vunpack.c.l.b16 %v4911
  %v6228 = vunpack.c.l.b16 %v4912
  %v6229 = vunpack.c.l.b16 %v4913
  %v6230 = vunpack.c.l.b16 %v4914
  %v6231 = vunpack.c.l.b16 %v4915
  %v6232 = vunpack.c.l.b16 %v4916
  %v6233 = vunpack.c.l.b16 %v4917
  %v6234 = vunpack.c.l.b16 %v4918
  %v6235 = vunpack.c.l.b16 %v4919
  %v6236 = vunpack.c.l.b16 %v4920
  %v6237 = vunpack.c.l.b16 %v4921
  %v6238 = vunpack.c.l.b16 %v4922
  %v6239 = vunpack.c.l.b16 %v4923
  %v6240 = vunpack.c.l.b16 %v4924
  %v6241 = vunpack.c.l.b16 %v4925
  %v6242 = vunpack.c.l.b16 %v4926
  %v6243 = vunpack.c.l.b16 %v4927
  %v6244 = vunpack.c.l.b16 %v4928
  %v6245 = vunpack.c.l.b16 %v4929
  %v6246 = vunpack.c.l.b16 %v4930
  %v6247 = vunpack.c.l.b16 %v4931
  %v6248 = vunpack.c.l.b16 %v4932
  %v6249 = vunpack.c.l.b16 %v4933
  %v6250 = vunpack.c.l.b16 %v4934
  %v6251 = vunpack.c.l.b16 %v4935
  %v6252 = vunpack.c.l.b16 %v4936
  %v6253 = vunpack.c.l.b16 %v4937
  %v6254 = vunpack.c.l.b16 %v4938
  %v6255 = vunpack.c.l.b16 %v4939
  %v6256 = vunpack.c.l.b16 %v4940
  %v6257 = vunpack.c.l.b16 %v4941
  %v6258 = vunpack.c.l.b16 %v4942
  %v6259 = vunpack.c.l.b16 %v4943
  %v6260 = vunpack.c.l.b16 %v4944
  %v6261 = vunpack.c.l.b16 %v4945
  %v6262 = vunpack.c.l.b16 %v4946
  %v6263 = vunpack.c.l.b16 %v4947
  %v6264 = vunpack.c.l.b16 %v4948
  %v6265 = vunpack.c.l.b16 %v4949
  %v6266 = vunpack.c.l.b16 %v4950
  %v6267 = vunpack.c.l.b16 %v4951
  %v6268 = vunpack.c.l.b16 %v4952
  %v6269 = vunpack.c.l.b16 %v4953
  %v6270 = vunpack.c.l.b16 %v4954
  %v6271 = vunpack.c.l.b16 %v4955
  %v6272 = vunpack.c.l.b16 %v4956
  %v6273 = vunpack.c.l.b16 %v4957
  %v6274 = vunpack.c.l.b16 %v4958
  %v6275 = vunpack.c.l.b16 %v4959
  %v6276 = vunpack.c.l.b16 %v4960
  %v6277 = vunpack.c.l.b16 %v4961
  %v6278 = vunpack.c.l.b16 %v4962
  %v6279 = vunpack.c.l.b16 %v4963
  %v6280 = vunpack.c.l.b16 %v4964
  %v6281 = vunpack.c.l.b16 %v4965
  %v6282 = vunpack.c.l.b16 %v4966
  %v6283 = vunpack.c.l.b16 %v4967
  %v6284 = vunpack.c.l.b16 %v4968
  %v6285 = vunpack.c.l.b16 %v4969
  %v6286 = vunpack.c.l.b16 %v4970
  %v6287 = vunpack.c.l.b16 %v4971
  %v6288 = vunpack.c.l.b16 %v4972
  %v6289 = vunpack.c.l.b16 %v4973
  %v6290 = vunpack.c.l.b16 %v4974
  %v6291 = vunpack.c.l.b16 %v4975
  %v6292 = vunpack.c.l.b16 %v4976
  %v6293 = vunpack.c.l.b16 %v4977
  %v6294 = vunpack.c.l.b16 %v4978
  %v6295 = vunpack.c.l.b16 %v4979
  %v6296 = vunpack.c.l.b16 %v4980
  %v6297 = vunpack.c.l.b16 %v4981
  %v6298 = vunpack.c.l.b16 %v4982
  %v6299 = vunpack.c.l.b16 %v4983
  %v6300 = vunpack.c.l.b16 %v4984
  %v6301 = vunpack.c.l.b16 %v4985
  %v6302 = vunpack.c.l.b16 %v4986
  %v6303 = vunpack.c.l.b16 %v4987
  %v6304 = vunpack.c.l.b16 %v4988
  %v6305 = vunpack.c.l.b16 %v4989
  %v6306 = vunpack.c.l.b16 %v4990
  %v6307 = vunpack.c.l.b16 %v4991
  %v6308 = vunpack.c.l.b16 %v4992
  %v6309 = vunpack.c.l.b16 %v4993
  %v6310 = vunpack.c.l.b16 %v4994
  %v6311 = vunpack.c.l.b16 %v4995
  %v6312 = vunpack.c.l.b16 %v4996
  %v6313 = vunpack.c.l.b16 %v4997
  %v6314 = vunpack.c.l.b16 %v4998
  %v6315 = vunpack.c.l.b16 %v4999
  %v6316 = vunpack.c.l.b16 %v5000
  %v6317 = vunpack.c.l.b16 %v5001
  %v6318 = vpack.c.b16 %v6063, %v6062
  %v6319 = vpack.c.b16 %v6065, %v6064
  %v6320 = vpack.c.b16 %v6067, %v6066
  %v6321 = vpack.c.b16 %v6069, %v6068
  %v6322 = vpack.c.b16 %v6071, %v6070
  %v6323 = vpack.c.b16 %v6073, %v6072
  %v6324 = vpack.c.b16 %v6075, %v6074
  %v6325 = vpack.c.b16 %v6077, %v6076
  %v6326 = vpack.c.b16 %v6079, %v6078
  %v6327 = vpack.c.b16 %v6081, %v6080
  %v6328 = vpack.c.b16 %v6083, %v6082
  %v6329 = vpack.c.b16 %v6085, %v6084
  %v6330 = vpack.c.b16 %v6087, %v6086
  %v6331 = vpack.c.b16 %v6089, %v6088
  %v6332 = vpack.c.b16 %v6091, %v6090
  %v6333 = vpack.c.b16 %v6093, %v6092
  %v6334 = vpack.c.b16 %v6095, %v6094
  %v6335 = vpack.c.b16 %v6097, %v6096
  %v6336 = vpack.c.b16 %v6099, %v6098
  %v6337 = vpack.c.b16 %v6101, %v6100
  %v6338 = vpack.c.b16 %v6103, %v6102
  %v6339 = vpack.c.b16 %v6105, %v6104
  %v6340 = vpack.c.b16 %v6107, %v6106
  %v6341 = vpack.c.b16 %v6109, %v6108
  %v6342 = vpack.c.b16 %v6111, %v6110
  %v6343 = vpack.c.b16 %v6113, %v6112
  %v6344 = vpack.c.b16 %v6115, %v6114
  %v6345 = vpack.c.b16 %v6117, %v6116
  %v6346 = vpack.c.b16 %v6119, %v6118
  %v6347 = vpack.c.b16 %v6121, %v6120
  %v6348 = vpack.c.b16 %v6123, %v6122
  %v6349 = vpack.c.b16 %v6125, %v6124
  %v6350 = vpack.c.b16 %v6127, %v6126
  %v6351 = vpack.c.b16 %v6129, %v6128
  %v6352 = vpack.c.b16 %v6131, %v6130
  %v6353 = vpack.c.b16 %v6133, %v6132
  %v6354 = vpack.c.b16 %v6135, %v6134
  %v6355 = vpack.c.b16 %v6137, %v6136
  %v6356 = vpack.c.b16 %v6139, %v6138
  %v6357 = vpack.c.b16 %v6141, %v6140
  %v6358 = vpack.c.b16 %v6143, %v6142
  %v6359 = vpack.c.b16 %v6145, %v6144
  %v6360 = vpack.c.b16 %v6147, %v6146
  %v6361 = vpack.c.b16 %v6149, %v6148
  %v6362 = vpack.c.b16 %v6151, %v6150
  %v6363 = vpack.c.b16 %v6153, %v6152
  %v6364 = vpack.c.b16 %v6155, %v6154
  %v6365 = vpack.c.b16 %v6157, %v6156
  %v6366 = vpack.c.b16 %v6159, %v6158
  %v6367 = vpack.c.b16 %v6161, %v6160
  %v6368 = vpack.c.b16 %v6163, %v6162
  %v6369 = vpack.c.b16 %v6165, %v6164
  %v6370 = vpack.c.b16 %v6167, %v6166
  %v6371 = vpack.c.b16 %v6169, %v6168
  %v6372 = vpack.c.b16 %v6171, %v6170
  %v6373 = vpack.c.b16 %v6173, %v6172
  %v6374 = vpack.c.b16 %v6175, %v6174
  %v6375 = vpack.c.b16 %v6177, %v6176
  %v6376 = vpack.c.b16 %v6179, %v6178
  %v6377 = vpack.c.b16 %v6181, %v6180
  %v6378 = vpack.c.b16 %v6183, %v6182
  %v6379 = vpack.c.b16 %v6185, %v6184
  %v6380 = vpack.c.b16 %v6187, %v6186
  %v6381 = vpack.c.b16 %v6189, %v6188
  %v6382 = vpack.c.b16 %v6191, %v6190
  %v6383 = vpack.c.b16 %v6193, %v6192
  %v6384 = vpack.c.b16 %v6195, %v6194
  %v6385 = vpack.c.b16 %v6197, %v6196
  %v6386 = vpack.c.b16 %v6199, %v6198
  %v6387 = vpack.c.b16 %v6201, %v6200
  %v6388 = vpack.c.b16 %v6203, %v6202
  %v6389 = vpack.c.b16 %v6205, %v6204
  %v6390 = vpack.c.b16 %v6207, %v6206
  %v6391 = vpack.c.b16 %v6209, %v6208
  %v6392 = vpack.c.b16 %v6211, %v6210
  %v6393 = vpack.c.b16 %v6213, %v6212
  %v6394 = vpack.c.b16 %v6215, %v6214
  %v6395 = vpack.c.b16 %v6217, %v6216
  %v6396 = vpack.c.b16 %v6219, %v6218
  %v6397 = vpack.c.b16 %v6221, %v6220
  %v6398 = vpack.c.b16 %v6223, %v6222
  %v6399 = vpack.c.b16 %v6225, %v6224
  %v6400 = vpack.c.b16 %v6227, %v6226
  %v6401 = vpack.c.b16 %v6229, %v6228
  %v6402 = vpack.c.b16 %v6231, %v6230
  %v6403 = vpack.c.b16 %v6233, %v6232
  %v6404 = vpack.c.b16 %v6235, %v6234
  %v6405 = vpack.c.b16 %v6237, %v6236
  %v6406 = vpack.c.b16 %v6239, %v6238
  %v6407 = vpack.c.b16 %v6241, %v6240
  %v6408 = vpack.c.b16 %v6243, %v6242
  %v6409 = vpack.c.b16 %v6245, %v6244
  %v6410 = vpack.c.b16 %v6247, %v6246
  %v6411 = vpack.c.b16 %v6249, %v6248
  %v6412 = vpack.c.b16 %v6251, %v6250
  %v6413 = vpack.c.b16 %v6253, %v6252
  %v6414 = vpack.c.b16 %v6255, %v6254
  %v6415 = vpack.c.b16 %v6257, %v6256
  %v6416 = vpack.c.b16 %v6259, %v6258
  %v6417 = vpack.c.b16 %v6261, %v6260
  %v6418 = vpack.c.b16 %v6263, %v6262
  %v6419 = vpack.c.b16 %v6265, %v6264
  %v6420 = vpack.c.b16 %v6267, %v6266
  %v6421 = vpack.c.b16 %v6269, %v6268
  %v6422 = vpack.c.b16 %v6271, %v6270
  %v6423 = vpack.c.b16 %v6273, %v6272
  %v6424 = vpack.c.b16 %v6275, %v6274
  %v6425 = vpack.c.b16 %v6277, %v6276
  %v6426 = vpack.c.b16 %v6279, %v6278
  %v6427 = vpack.c.b16 %v6281, %v6280
  %v6428 = vpack.c.b16 %v6283, %v6282
  %v6429 = vpack.c.b16 %v6285, %v6284
  %v6430 = vpack.c.b16 %v6287, %v6286
  %v6431 = vpack.c.b16 %v6289, %v6288
  %v6432 = vpack.c.b16 %v6291, %v6290
  %v6433 = vpack.c.b16 %v6293, %v6292
  %v6434 = vpack.c.b16 %v6295, %v6294
  %v6435 = vpack.c.b16 %v6297, %v6296
  %v6436 = vpack.c.b16 %v6299, %v6298
  %v6437 = vpack.c.b16 %v6301, %v6300
  %v6438 = vpack.c.b16 %v6303, %v6302
  %v6439 = vpack.c.b16 %v6305, %v6304
  %v6440 = vpack.c.b16 %v6307, %v6306
  %v6441 = vpack.c.b16 %v6309, %v6308
  %v6442 = vpack.c.b16 %v6311, %v6310
  %v6443 = vpack.c.b16 %v6313, %v6312
  %v6444 = vpack.c.b16 %v6315, %v6314
  %v6445 = vpack.c.b16 %v6317, %v6316
  %6574 = vmatpush.bf16.msra.mxu0 %v6325
  %6575 = vmatpush.bf16.msra.mxu0 %v6324
  %6576 = vmatpush.bf16.msra.mxu0 %v6323
  %6577 = vmatpush.bf16.msra.mxu0 %v6322
  %6578 = vmatpush.bf16.msra.mxu0 %v6321
  %6579 = vmatpush.bf16.msra.mxu0 %v6320
  %6580 = vmatpush.bf16.msra.mxu0 %v6319
  %6581 = vmatpush.bf16.msra.mxu0 %v6318
  %6582 = vmatmul.bf16.gmra.mxu0 %v5006
  %v6583 = vpop.f32.mrf.mxu0
  %v6584 = vadd.f32 %v5004, %v6583
  %v6585 = vpop.f32.mrf.mxu0
  %v6586 = vadd.f32 %v5004, %v6585
  %6587 = vmatmul.bf16.gmra.mxu0 %v5022
  %v6588 = vpop.f32.mrf.mxu0
  %v6589 = vadd.f32 %v5004, %v6588
  %v6590 = vpop.f32.mrf.mxu0
  %v6591 = vadd.f32 %v5004, %v6590
  %6592 = vmatmul.bf16.gmra.mxu0 %v5038
  %v6593 = vpop.f32.mrf.mxu0
  %v6594 = vadd.f32 %v5004, %v6593
  %v6595 = vpop.f32.mrf.mxu0
  %v6596 = vadd.f32 %v5004, %v6595
  %6597 = vmatmul.bf16.gmra.mxu0 %v5054
  %v6598 = vpop.f32.mrf.mxu0
  %v6599 = vadd.f32 %v5004, %v6598
  %v6600 = vpop.f32.mrf.mxu0
  %v6601 = vadd.f32 %v5004, %v6600
  %6602 = vmatmul.bf16.gmra.mxu0 %v5070
  %v6603 = vpop.f32.mrf.mxu0
  %v6604 = vadd.f32 %v5004, %v6603
  %v6605 = vpop.f32.mrf.mxu0
  %v6606 = vadd.f32 %v5004, %v6605
  %6607 = vmatmul.bf16.gmra.mxu0 %v5086
  %v6608 = vpop.f32.mrf.mxu0
  %v6609 = vadd.f32 %v5004, %v6608
  %v6610 = vpop.f32.mrf.mxu0
  %v6611 = vadd.f32 %v5004, %v6610
  %6612 = vmatmul.bf16.gmra.mxu0 %v5102
  %v6613 = vpop.f32.mrf.mxu0
  %v6614 = vadd.f32 %v5004, %v6613
  %v6615 = vpop.f32.mrf.mxu0
  %v6616 = vadd.f32 %v5004, %v6615
  %6617 = vmatmul.bf16.gmra.mxu0 %v5118
  %v6618 = vpop.f32.mrf.mxu0
  %v6619 = vadd.f32 %v5004, %v6618
  %v6620 = vpop.f32.mrf.mxu0
  %v6621 = vadd.f32 %v5004, %v6620
  %6622 = vmatmul.bf16.gmra.mxu0 %v5134
  %v6623 = vpop.f32.mrf.mxu0
  %v6624 = vadd.f32 %v5004, %v6623
  %v6625 = vpop.f32.mrf.mxu0
  %v6626 = vadd.f32 %v5004, %v6625
  %6627 = vmatmul.bf16.gmra.mxu0 %v5150
  %v6628 = vpop.f32.mrf.mxu0
  %v6629 = vadd.f32 %v5004, %v6628
  %v6630 = vpop.f32.mrf.mxu0
  %v6631 = vadd.f32 %v5004, %v6630
  %6632 = vmatmul.bf16.gmra.mxu0 %v5166
  %v6633 = vpop.f32.mrf.mxu0
  %v6634 = vadd.f32 %v5004, %v6633
  %v6635 = vpop.f32.mrf.mxu0
  %v6636 = vadd.f32 %v5004, %v6635
  %6637 = vmatmul.bf16.gmra.mxu0 %v5182
  %v6638 = vpop.f32.mrf.mxu0
  %v6639 = vadd.f32 %v5004, %v6638
  %v6640 = vpop.f32.mrf.mxu0
  %v6641 = vadd.f32 %v5004, %v6640
  %6642 = vmatmul.bf16.gmra.mxu0 %v5198
  %v6643 = vpop.f32.mrf.mxu0
  %v6644 = vadd.f32 %v5004, %v6643
  %v6645 = vpop.f32.mrf.mxu0
  %v6646 = vadd.f32 %v5004, %v6645
  %6647 = vmatmul.bf16.gmra.mxu0 %v5214
  %v6648 = vpop.f32.mrf.mxu0
  %v6649 = vadd.f32 %v5004, %v6648
  %v6650 = vpop.f32.mrf.mxu0
  %v6651 = vadd.f32 %v5004, %v6650
  %6652 = vmatmul.bf16.gmra.mxu0 %v5230
  %v6653 = vpop.f32.mrf.mxu0
  %v6654 = vadd.f32 %v5004, %v6653
  %v6655 = vpop.f32.mrf.mxu0
  %v6656 = vadd.f32 %v5004, %v6655
  %6657 = vmatmul.bf16.gmra.mxu0 %v5246
  %v6658 = vpop.f32.mrf.mxu0
  %v6659 = vadd.f32 %v5004, %v6658
  %v6660 = vpop.f32.mrf.mxu0
  %v6661 = vadd.f32 %v5004, %v6660
  %6662 = vmatmul.bf16.gmra.mxu0 %v5262
  %v6663 = vpop.f32.mrf.mxu0
  %v6664 = vadd.f32 %v5004, %v6663
  %v6665 = vpop.f32.mrf.mxu0
  %v6666 = vadd.f32 %v5004, %v6665
  %6667 = vmatmul.bf16.gmra.mxu0 %v5278
  %v6668 = vpop.f32.mrf.mxu0
  %v6669 = vadd.f32 %v5004, %v6668
  %v6670 = vpop.f32.mrf.mxu0
  %v6671 = vadd.f32 %v5004, %v6670
  %6672 = vmatmul.bf16.gmra.mxu0 %v5294
  %v6673 = vpop.f32.mrf.mxu0
  %v6674 = vadd.f32 %v5004, %v6673
  %v6675 = vpop.f32.mrf.mxu0
  %v6676 = vadd.f32 %v5004, %v6675
  %6677 = vmatmul.bf16.gmra.mxu0 %v5310
  %v6678 = vpop.f32.mrf.mxu0
  %v6679 = vadd.f32 %v5004, %v6678
  %v6680 = vpop.f32.mrf.mxu0
  %v6681 = vadd.f32 %v5004, %v6680
  %6682 = vmatmul.bf16.gmra.mxu0 %v5326
  %v6683 = vpop.f32.mrf.mxu0
  %v6684 = vadd.f32 %v5004, %v6683
  %v6685 = vpop.f32.mrf.mxu0
  %v6686 = vadd.f32 %v5004, %v6685
  %6687 = vmatmul.bf16.gmra.mxu0 %v5342
  %v6688 = vpop.f32.mrf.mxu0
  %v6689 = vadd.f32 %v5004, %v6688
  %v6690 = vpop.f32.mrf.mxu0
  %v6691 = vadd.f32 %v5004, %v6690
  %6692 = vmatmul.bf16.gmra.mxu0 %v5358
  %v6693 = vpop.f32.mrf.mxu0
  %v6694 = vadd.f32 %v5004, %v6693
  %v6695 = vpop.f32.mrf.mxu0
  %v6696 = vadd.f32 %v5004, %v6695
  %6697 = vmatmul.bf16.gmra.mxu0 %v5374
  %v6698 = vpop.f32.mrf.mxu0
  %v6699 = vadd.f32 %v5004, %v6698
  %v6700 = vpop.f32.mrf.mxu0
  %v6701 = vadd.f32 %v5004, %v6700
  %6702 = vmatmul.bf16.gmra.mxu0 %v5390
  %v6703 = vpop.f32.mrf.mxu0
  %v6704 = vadd.f32 %v5004, %v6703
  %v6705 = vpop.f32.mrf.mxu0
  %6706 = vdwg.mxu0
  %6707 = vmatpush.bf16.msra.mxu0 %v6333
  %6708 = vmatpush.bf16.msra.mxu0 %v6332
  %6709 = vmatpush.bf16.msra.mxu0 %v6331
  %6710 = vmatpush.bf16.msra.mxu0 %v6330
  %6711 = vmatpush.bf16.msra.mxu0 %v6329
  %6712 = vmatpush.bf16.msra.mxu0 %v6328
  %6713 = vmatpush.bf16.msra.mxu0 %v6327
  %6714 = vmatpush.bf16.msra.mxu0 %v6326
  %6715 = vmatmul.bf16.gmra.mxu0 %v5007
  %v6716 = vpop.f32.mrf.mxu0
  %v6717 = vadd.f32 %v6584, %v6716
  %v6718 = vpop.f32.mrf.mxu0
  %v6719 = vadd.f32 %v6586, %v6718
  %6720 = vmatmul.bf16.gmra.mxu0 %v5023
  %v6721 = vpop.f32.mrf.mxu0
  %v6722 = vadd.f32 %v6589, %v6721
  %v6723 = vpop.f32.mrf.mxu0
  %v6724 = vadd.f32 %v6591, %v6723
  %6725 = vmatmul.bf16.gmra.mxu0 %v5039
  %v6726 = vpop.f32.mrf.mxu0
  %v6727 = vadd.f32 %v6594, %v6726
  %v6728 = vpop.f32.mrf.mxu0
  %v6729 = vadd.f32 %v6596, %v6728
  %6730 = vmatmul.bf16.gmra.mxu0 %v5055
  %v6731 = vpop.f32.mrf.mxu0
  %v6732 = vadd.f32 %v6599, %v6731
  %v6733 = vpop.f32.mrf.mxu0
  %v6734 = vadd.f32 %v6601, %v6733
  %6735 = vmatmul.bf16.gmra.mxu0 %v5071
  %v6736 = vpop.f32.mrf.mxu0
  %v6737 = vadd.f32 %v6604, %v6736
  %v6738 = vpop.f32.mrf.mxu0
  %v6739 = vadd.f32 %v6606, %v6738
  %6740 = vmatmul.bf16.gmra.mxu0 %v5087
  %v6741 = vpop.f32.mrf.mxu0
  %v6742 = vadd.f32 %v6609, %v6741
  %v6743 = vpop.f32.mrf.mxu0
  %v6744 = vadd.f32 %v6611, %v6743
  %6745 = vmatmul.bf16.gmra.mxu0 %v5103
  %v6746 = vpop.f32.mrf.mxu0
  %v6747 = vadd.f32 %v6614, %v6746
  %v6748 = vpop.f32.mrf.mxu0
  %v6749 = vadd.f32 %v6616, %v6748
  %6750 = vmatmul.bf16.gmra.mxu0 %v5119
  %v6751 = vpop.f32.mrf.mxu0
  %v6752 = vadd.f32 %v6619, %v6751
  %v6753 = vpop.f32.mrf.mxu0
  %v6754 = vadd.f32 %v6621, %v6753
  %6755 = vmatmul.bf16.gmra.mxu0 %v5135
  %v6756 = vpop.f32.mrf.mxu0
  %v6757 = vadd.f32 %v6624, %v6756
  %v6758 = vpop.f32.mrf.mxu0
  %v6759 = vadd.f32 %v6626, %v6758
  %6760 = vmatmul.bf16.gmra.mxu0 %v5151
  %v6761 = vpop.f32.mrf.mxu0
  %v6762 = vadd.f32 %v6629, %v6761
  %v6763 = vpop.f32.mrf.mxu0
  %v6764 = vadd.f32 %v6631, %v6763
  %6765 = vmatmul.bf16.gmra.mxu0 %v5167
  %v6766 = vpop.f32.mrf.mxu0
  %v6767 = vadd.f32 %v6634, %v6766
  %v6768 = vpop.f32.mrf.mxu0
  %v6769 = vadd.f32 %v6636, %v6768
  %6770 = vmatmul.bf16.gmra.mxu0 %v5183
  %v6771 = vpop.f32.mrf.mxu0
  %v6772 = vadd.f32 %v6639, %v6771
  %v6773 = vpop.f32.mrf.mxu0
  %v6774 = vadd.f32 %v6641, %v6773
  %6775 = vmatmul.bf16.gmra.mxu0 %v5199
  %v6776 = vpop.f32.mrf.mxu0
  %v6777 = vadd.f32 %v6644, %v6776
  %v6778 = vpop.f32.mrf.mxu0
  %v6779 = vadd.f32 %v6646, %v6778
  %6780 = vmatmul.bf16.gmra.mxu0 %v5215
  %v6781 = vpop.f32.mrf.mxu0
  %v6782 = vadd.f32 %v6649, %v6781
  %v6783 = vpop.f32.mrf.mxu0
  %v6784 = vadd.f32 %v6651, %v6783
  %6785 = vmatmul.bf16.gmra.mxu0 %v5231
  %v6786 = vpop.f32.mrf.mxu0
  %v6787 = vadd.f32 %v6654, %v6786
  %v6788 = vpop.f32.mrf.mxu0
  %v6789 = vadd.f32 %v6656, %v6788
  %6790 = vmatmul.bf16.gmra.mxu0 %v5247
  %v6791 = vpop.f32.mrf.mxu0
  %v6792 = vadd.f32 %v6659, %v6791
  %v6793 = vpop.f32.mrf.mxu0
  %v6794 = vadd.f32 %v6661, %v6793
  %6795 = vmatmul.bf16.gmra.mxu0 %v5263
  %v6796 = vpop.f32.mrf.mxu0
  %v6797 = vadd.f32 %v6664, %v6796
  %v6798 = vpop.f32.mrf.mxu0
  %v6799 = vadd.f32 %v6666, %v6798
  %6800 = vmatmul.bf16.gmra.mxu0 %v5279
  %v6801 = vpop.f32.mrf.mxu0
  %v6802 = vadd.f32 %v6669, %v6801
  %v6803 = vpop.f32.mrf.mxu0
  %v6804 = vadd.f32 %v6671, %v6803
  %6805 = vmatmul.bf16.gmra.mxu0 %v5295
  %v6806 = vpop.f32.mrf.mxu0
  %v6807 = vadd.f32 %v6674, %v6806
  %v6808 = vpop.f32.mrf.mxu0
  %v6809 = vadd.f32 %v6676, %v6808
  %6810 = vmatmul.bf16.gmra.mxu0 %v5311
  %v6811 = vpop.f32.mrf.mxu0
  %v6812 = vadd.f32 %v6679, %v6811
  %v6813 = vpop.f32.mrf.mxu0
  %v6814 = vadd.f32 %v6681, %v6813
  %6815 = vmatmul.bf16.gmra.mxu0 %v5327
  %v6816 = vpop.f32.mrf.mxu0
  %v6817 = vadd.f32 %v6684, %v6816
  %v6818 = vpop.f32.mrf.mxu0
  %v6819 = vadd.f32 %v6686, %v6818
  %6820 = vmatmul.bf16.gmra.mxu0 %v5343
  %v6821 = vpop.f32.mrf.mxu0
  %v6822 = vadd.f32 %v6689, %v6821
  %v6823 = vpop.f32.mrf.mxu0
  %v6824 = vadd.f32 %v6691, %v6823
  %6825 = vmatmul.bf16.gmra.mxu0 %v5359
  %v6826 = vpop.f32.mrf.mxu0
  %v6827 = vadd.f32 %v6694, %v6826
  %v6828 = vpop.f32.mrf.mxu0
  %v6829 = vadd.f32 %v6696, %v6828
  %6830 = vmatmul.bf16.gmra.mxu0 %v5375
  %v6831 = vpop.f32.mrf.mxu0
  %v6832 = vadd.f32 %v6699, %v6831
  %v6833 = vpop.f32.mrf.mxu0
  %v6834 = vadd.f32 %v6701, %v6833
  %6835 = vmatmul.bf16.gmra.mxu0 %v5391
  %v6836 = vpop.f32.mrf.mxu0
  %v6837 = vadd.f32 %v6704, %v6836
  %v6838 = vpop.f32.mrf.mxu0
  %6839 = vdwg.mxu0
  %6840 = vmatpush.bf16.msra.mxu0 %v6341
  %6841 = vmatpush.bf16.msra.mxu0 %v6340
  %6842 = vmatpush.bf16.msra.mxu0 %v6339
  %6843 = vmatpush.bf16.msra.mxu0 %v6338
  %6844 = vmatpush.bf16.msra.mxu0 %v6337
  %6845 = vmatpush.bf16.msra.mxu0 %v6336
  %6846 = vmatpush.bf16.msra.mxu0 %v6335
  %6847 = vmatpush.bf16.msra.mxu0 %v6334
  %6848 = vmatmul.bf16.gmra.mxu0 %v5008
  %v6849 = vpop.f32.mrf.mxu0
  %v6850 = vadd.f32 %v6717, %v6849
  %v6851 = vpop.f32.mrf.mxu0
  %v6852 = vadd.f32 %v6719, %v6851
  %6853 = vmatmul.bf16.gmra.mxu0 %v5024
  %v6854 = vpop.f32.mrf.mxu0
  %v6855 = vadd.f32 %v6722, %v6854
  %v6856 = vpop.f32.mrf.mxu0
  %v6857 = vadd.f32 %v6724, %v6856
  %6858 = vmatmul.bf16.gmra.mxu0 %v5040
  %v6859 = vpop.f32.mrf.mxu0
  %v6860 = vadd.f32 %v6727, %v6859
  %v6861 = vpop.f32.mrf.mxu0
  %v6862 = vadd.f32 %v6729, %v6861
  %6863 = vmatmul.bf16.gmra.mxu0 %v5056
  %v6864 = vpop.f32.mrf.mxu0
  %v6865 = vadd.f32 %v6732, %v6864
  %v6866 = vpop.f32.mrf.mxu0
  %v6867 = vadd.f32 %v6734, %v6866
  %6868 = vmatmul.bf16.gmra.mxu0 %v5072
  %v6869 = vpop.f32.mrf.mxu0
  %v6870 = vadd.f32 %v6737, %v6869
  %v6871 = vpop.f32.mrf.mxu0
  %v6872 = vadd.f32 %v6739, %v6871
  %6873 = vmatmul.bf16.gmra.mxu0 %v5088
  %v6874 = vpop.f32.mrf.mxu0
  %v6875 = vadd.f32 %v6742, %v6874
  %v6876 = vpop.f32.mrf.mxu0
  %v6877 = vadd.f32 %v6744, %v6876
  %6878 = vmatmul.bf16.gmra.mxu0 %v5104
  %v6879 = vpop.f32.mrf.mxu0
  %v6880 = vadd.f32 %v6747, %v6879
  %v6881 = vpop.f32.mrf.mxu0
  %v6882 = vadd.f32 %v6749, %v6881
  %6883 = vmatmul.bf16.gmra.mxu0 %v5120
  %v6884 = vpop.f32.mrf.mxu0
  %v6885 = vadd.f32 %v6752, %v6884
  %v6886 = vpop.f32.mrf.mxu0
  %v6887 = vadd.f32 %v6754, %v6886
  %6888 = vmatmul.bf16.gmra.mxu0 %v5136
  %v6889 = vpop.f32.mrf.mxu0
  %v6890 = vadd.f32 %v6757, %v6889
  %v6891 = vpop.f32.mrf.mxu0
  %v6892 = vadd.f32 %v6759, %v6891
  %6893 = vmatmul.bf16.gmra.mxu0 %v5152
  %v6894 = vpop.f32.mrf.mxu0
  %v6895 = vadd.f32 %v6762, %v6894
  %v6896 = vpop.f32.mrf.mxu0
  %v6897 = vadd.f32 %v6764, %v6896
  %6898 = vmatmul.bf16.gmra.mxu0 %v5168
  %v6899 = vpop.f32.mrf.mxu0
  %v6900 = vadd.f32 %v6767, %v6899
  %v6901 = vpop.f32.mrf.mxu0
  %v6902 = vadd.f32 %v6769, %v6901
  %6903 = vmatmul.bf16.gmra.mxu0 %v5184
  %v6904 = vpop.f32.mrf.mxu0
  %v6905 = vadd.f32 %v6772, %v6904
  %v6906 = vpop.f32.mrf.mxu0
  %v6907 = vadd.f32 %v6774, %v6906
  %6908 = vmatmul.bf16.gmra.mxu0 %v5200
  %v6909 = vpop.f32.mrf.mxu0
  %v6910 = vadd.f32 %v6777, %v6909
  %v6911 = vpop.f32.mrf.mxu0
  %v6912 = vadd.f32 %v6779, %v6911
  %6913 = vmatmul.bf16.gmra.mxu0 %v5216
  %v6914 = vpop.f32.mrf.mxu0
  %v6915 = vadd.f32 %v6782, %v6914
  %v6916 = vpop.f32.mrf.mxu0
  %v6917 = vadd.f32 %v6784, %v6916
  %6918 = vmatmul.bf16.gmra.mxu0 %v5232
  %v6919 = vpop.f32.mrf.mxu0
  %v6920 = vadd.f32 %v6787, %v6919
  %v6921 = vpop.f32.mrf.mxu0
  %v6922 = vadd.f32 %v6789, %v6921
  %6923 = vmatmul.bf16.gmra.mxu0 %v5248
  %v6924 = vpop.f32.mrf.mxu0
  %v6925 = vadd.f32 %v6792, %v6924
  %v6926 = vpop.f32.mrf.mxu0
  %v6927 = vadd.f32 %v6794, %v6926
  %6928 = vmatmul.bf16.gmra.mxu0 %v5264
  %v6929 = vpop.f32.mrf.mxu0
  %v6930 = vadd.f32 %v6797, %v6929
  %v6931 = vpop.f32.mrf.mxu0
  %v6932 = vadd.f32 %v6799, %v6931
  %6933 = vmatmul.bf16.gmra.mxu0 %v5280
  %v6934 = vpop.f32.mrf.mxu0
  %v6935 = vadd.f32 %v6802, %v6934
  %v6936 = vpop.f32.mrf.mxu0
  %v6937 = vadd.f32 %v6804, %v6936
  %6938 = vmatmul.bf16.gmra.mxu0 %v5296
  %v6939 = vpop.f32.mrf.mxu0
  %v6940 = vadd.f32 %v6807, %v6939
  %v6941 = vpop.f32.mrf.mxu0
  %v6942 = vadd.f32 %v6809, %v6941
  %6943 = vmatmul.bf16.gmra.mxu0 %v5312
  %v6944 = vpop.f32.mrf.mxu0
  %v6945 = vadd.f32 %v6812, %v6944
  %v6946 = vpop.f32.mrf.mxu0
  %v6947 = vadd.f32 %v6814, %v6946
  %6948 = vmatmul.bf16.gmra.mxu0 %v5328
  %v6949 = vpop.f32.mrf.mxu0
  %v6950 = vadd.f32 %v6817, %v6949
  %v6951 = vpop.f32.mrf.mxu0
  %v6952 = vadd.f32 %v6819, %v6951
  %6953 = vmatmul.bf16.gmra.mxu0 %v5344
  %v6954 = vpop.f32.mrf.mxu0
  %v6955 = vadd.f32 %v6822, %v6954
  %v6956 = vpop.f32.mrf.mxu0
  %v6957 = vadd.f32 %v6824, %v6956
  %6958 = vmatmul.bf16.gmra.mxu0 %v5360
  %v6959 = vpop.f32.mrf.mxu0
  %v6960 = vadd.f32 %v6827, %v6959
  %v6961 = vpop.f32.mrf.mxu0
  %v6962 = vadd.f32 %v6829, %v6961
  %6963 = vmatmul.bf16.gmra.mxu0 %v5376
  %v6964 = vpop.f32.mrf.mxu0
  %v6965 = vadd.f32 %v6832, %v6964
  %v6966 = vpop.f32.mrf.mxu0
  %v6967 = vadd.f32 %v6834, %v6966
  %6968 = vmatmul.bf16.gmra.mxu0 %v5392
  %v6969 = vpop.f32.mrf.mxu0
  %v6970 = vadd.f32 %v6837, %v6969
  %v6971 = vpop.f32.mrf.mxu0
  %6972 = vdwg.mxu0
  %6973 = vmatpush.bf16.msra.mxu0 %v6349
  %6974 = vmatpush.bf16.msra.mxu0 %v6348
  %6975 = vmatpush.bf16.msra.mxu0 %v6347
  %6976 = vmatpush.bf16.msra.mxu0 %v6346
  %6977 = vmatpush.bf16.msra.mxu0 %v6345
  %6978 = vmatpush.bf16.msra.mxu0 %v6344
  %6979 = vmatpush.bf16.msra.mxu0 %v6343
  %6980 = vmatpush.bf16.msra.mxu0 %v6342
  %6981 = vmatmul.bf16.gmra.mxu0 %v5009
  %v6982 = vpop.f32.mrf.mxu0
  %v6983 = vadd.f32 %v6850, %v6982
  %v6984 = vpop.f32.mrf.mxu0
  %v6985 = vadd.f32 %v6852, %v6984
  %6986 = vmatmul.bf16.gmra.mxu0 %v5025
  %v6987 = vpop.f32.mrf.mxu0
  %v6988 = vadd.f32 %v6855, %v6987
  %v6989 = vpop.f32.mrf.mxu0
  %v6990 = vadd.f32 %v6857, %v6989
  %6991 = vmatmul.bf16.gmra.mxu0 %v5041
  %v6992 = vpop.f32.mrf.mxu0
  %v6993 = vadd.f32 %v6860, %v6992
  %v6994 = vpop.f32.mrf.mxu0
  %v6995 = vadd.f32 %v6862, %v6994
  %6996 = vmatmul.bf16.gmra.mxu0 %v5057
  %v6997 = vpop.f32.mrf.mxu0
  %v6998 = vadd.f32 %v6865, %v6997
  %v6999 = vpop.f32.mrf.mxu0
  %v7000 = vadd.f32 %v6867, %v6999
  %7001 = vmatmul.bf16.gmra.mxu0 %v5073
  %v7002 = vpop.f32.mrf.mxu0
  %v7003 = vadd.f32 %v6870, %v7002
  %v7004 = vpop.f32.mrf.mxu0
  %v7005 = vadd.f32 %v6872, %v7004
  %7006 = vmatmul.bf16.gmra.mxu0 %v5089
  %v7007 = vpop.f32.mrf.mxu0
  %v7008 = vadd.f32 %v6875, %v7007
  %v7009 = vpop.f32.mrf.mxu0
  %v7010 = vadd.f32 %v6877, %v7009
  %7011 = vmatmul.bf16.gmra.mxu0 %v5105
  %v7012 = vpop.f32.mrf.mxu0
  %v7013 = vadd.f32 %v6880, %v7012
  %v7014 = vpop.f32.mrf.mxu0
  %v7015 = vadd.f32 %v6882, %v7014
  %7016 = vmatmul.bf16.gmra.mxu0 %v5121
  %v7017 = vpop.f32.mrf.mxu0
  %v7018 = vadd.f32 %v6885, %v7017
  %v7019 = vpop.f32.mrf.mxu0
  %v7020 = vadd.f32 %v6887, %v7019
  %7021 = vmatmul.bf16.gmra.mxu0 %v5137
  %v7022 = vpop.f32.mrf.mxu0
  %v7023 = vadd.f32 %v6890, %v7022
  %v7024 = vpop.f32.mrf.mxu0
  %v7025 = vadd.f32 %v6892, %v7024
  %7026 = vmatmul.bf16.gmra.mxu0 %v5153
  %v7027 = vpop.f32.mrf.mxu0
  %v7028 = vadd.f32 %v6895, %v7027
  %v7029 = vpop.f32.mrf.mxu0
  %v7030 = vadd.f32 %v6897, %v7029
  %7031 = vmatmul.bf16.gmra.mxu0 %v5169
  %v7032 = vpop.f32.mrf.mxu0
  %v7033 = vadd.f32 %v6900, %v7032
  %v7034 = vpop.f32.mrf.mxu0
  %v7035 = vadd.f32 %v6902, %v7034
  %7036 = vmatmul.bf16.gmra.mxu0 %v5185
  %v7037 = vpop.f32.mrf.mxu0
  %v7038 = vadd.f32 %v6905, %v7037
  %v7039 = vpop.f32.mrf.mxu0
  %v7040 = vadd.f32 %v6907, %v7039
  %7041 = vmatmul.bf16.gmra.mxu0 %v5201
  %v7042 = vpop.f32.mrf.mxu0
  %v7043 = vadd.f32 %v6910, %v7042
  %v7044 = vpop.f32.mrf.mxu0
  %v7045 = vadd.f32 %v6912, %v7044
  %7046 = vmatmul.bf16.gmra.mxu0 %v5217
  %v7047 = vpop.f32.mrf.mxu0
  %v7048 = vadd.f32 %v6915, %v7047
  %v7049 = vpop.f32.mrf.mxu0
  %v7050 = vadd.f32 %v6917, %v7049
  %7051 = vmatmul.bf16.gmra.mxu0 %v5233
  %v7052 = vpop.f32.mrf.mxu0
  %v7053 = vadd.f32 %v6920, %v7052
  %v7054 = vpop.f32.mrf.mxu0
  %v7055 = vadd.f32 %v6922, %v7054
  %7056 = vmatmul.bf16.gmra.mxu0 %v5249
  %v7057 = vpop.f32.mrf.mxu0
  %v7058 = vadd.f32 %v6925, %v7057
  %v7059 = vpop.f32.mrf.mxu0
  %v7060 = vadd.f32 %v6927, %v7059
  %7061 = vmatmul.bf16.gmra.mxu0 %v5265
  %v7062 = vpop.f32.mrf.mxu0
  %v7063 = vadd.f32 %v6930, %v7062
  %v7064 = vpop.f32.mrf.mxu0
  %v7065 = vadd.f32 %v6932, %v7064
  %7066 = vmatmul.bf16.gmra.mxu0 %v5281
  %v7067 = vpop.f32.mrf.mxu0
  %v7068 = vadd.f32 %v6935, %v7067
  %v7069 = vpop.f32.mrf.mxu0
  %v7070 = vadd.f32 %v6937, %v7069
  %7071 = vmatmul.bf16.gmra.mxu0 %v5297
  %v7072 = vpop.f32.mrf.mxu0
  %v7073 = vadd.f32 %v6940, %v7072
  %v7074 = vpop.f32.mrf.mxu0
  %v7075 = vadd.f32 %v6942, %v7074
  %7076 = vmatmul.bf16.gmra.mxu0 %v5313
  %v7077 = vpop.f32.mrf.mxu0
  %v7078 = vadd.f32 %v6945, %v7077
  %v7079 = vpop.f32.mrf.mxu0
  %v7080 = vadd.f32 %v6947, %v7079
  %7081 = vmatmul.bf16.gmra.mxu0 %v5329
  %v7082 = vpop.f32.mrf.mxu0
  %v7083 = vadd.f32 %v6950, %v7082
  %v7084 = vpop.f32.mrf.mxu0
  %v7085 = vadd.f32 %v6952, %v7084
  %7086 = vmatmul.bf16.gmra.mxu0 %v5345
  %v7087 = vpop.f32.mrf.mxu0
  %v7088 = vadd.f32 %v6955, %v7087
  %v7089 = vpop.f32.mrf.mxu0
  %v7090 = vadd.f32 %v6957, %v7089
  %7091 = vmatmul.bf16.gmra.mxu0 %v5361
  %v7092 = vpop.f32.mrf.mxu0
  %v7093 = vadd.f32 %v6960, %v7092
  %v7094 = vpop.f32.mrf.mxu0
  %v7095 = vadd.f32 %v6962, %v7094
  %7096 = vmatmul.bf16.gmra.mxu0 %v5377
  %v7097 = vpop.f32.mrf.mxu0
  %v7098 = vadd.f32 %v6965, %v7097
  %v7099 = vpop.f32.mrf.mxu0
  %v7100 = vadd.f32 %v6967, %v7099
  %7101 = vmatmul.bf16.gmra.mxu0 %v5393
  %v7102 = vpop.f32.mrf.mxu0
  %v7103 = vadd.f32 %v6970, %v7102
  %v7104 = vpop.f32.mrf.mxu0
  %7105 = vdwg.mxu0
  %7106 = vmatpush.bf16.msra.mxu0 %v6357
  %7107 = vmatpush.bf16.msra.mxu0 %v6356
  %7108 = vmatpush.bf16.msra.mxu0 %v6355
  %7109 = vmatpush.bf16.msra.mxu0 %v6354
  %7110 = vmatpush.bf16.msra.mxu0 %v6353
  %7111 = vmatpush.bf16.msra.mxu0 %v6352
  %7112 = vmatpush.bf16.msra.mxu0 %v6351
  %7113 = vmatpush.bf16.msra.mxu0 %v6350
  %7114 = vmatmul.bf16.gmra.mxu0 %v5010
  %v7115 = vpop.f32.mrf.mxu0
  %v7116 = vadd.f32 %v6983, %v7115
  %v7117 = vpop.f32.mrf.mxu0
  %v7118 = vadd.f32 %v6985, %v7117
  %7119 = vmatmul.bf16.gmra.mxu0 %v5026
  %v7120 = vpop.f32.mrf.mxu0
  %v7121 = vadd.f32 %v6988, %v7120
  %v7122 = vpop.f32.mrf.mxu0
  %v7123 = vadd.f32 %v6990, %v7122
  %7124 = vmatmul.bf16.gmra.mxu0 %v5042
  %v7125 = vpop.f32.mrf.mxu0
  %v7126 = vadd.f32 %v6993, %v7125
  %v7127 = vpop.f32.mrf.mxu0
  %v7128 = vadd.f32 %v6995, %v7127
  %7129 = vmatmul.bf16.gmra.mxu0 %v5058
  %v7130 = vpop.f32.mrf.mxu0
  %v7131 = vadd.f32 %v6998, %v7130
  %v7132 = vpop.f32.mrf.mxu0
  %v7133 = vadd.f32 %v7000, %v7132
  %7134 = vmatmul.bf16.gmra.mxu0 %v5074
  %v7135 = vpop.f32.mrf.mxu0
  %v7136 = vadd.f32 %v7003, %v7135
  %v7137 = vpop.f32.mrf.mxu0
  %v7138 = vadd.f32 %v7005, %v7137
  %7139 = vmatmul.bf16.gmra.mxu0 %v5090
  %v7140 = vpop.f32.mrf.mxu0
  %v7141 = vadd.f32 %v7008, %v7140
  %v7142 = vpop.f32.mrf.mxu0
  %v7143 = vadd.f32 %v7010, %v7142
  %7144 = vmatmul.bf16.gmra.mxu0 %v5106
  %v7145 = vpop.f32.mrf.mxu0
  %v7146 = vadd.f32 %v7013, %v7145
  %v7147 = vpop.f32.mrf.mxu0
  %v7148 = vadd.f32 %v7015, %v7147
  %7149 = vmatmul.bf16.gmra.mxu0 %v5122
  %v7150 = vpop.f32.mrf.mxu0
  %v7151 = vadd.f32 %v7018, %v7150
  %v7152 = vpop.f32.mrf.mxu0
  %v7153 = vadd.f32 %v7020, %v7152
  %7154 = vmatmul.bf16.gmra.mxu0 %v5138
  %v7155 = vpop.f32.mrf.mxu0
  %v7156 = vadd.f32 %v7023, %v7155
  %v7157 = vpop.f32.mrf.mxu0
  %v7158 = vadd.f32 %v7025, %v7157
  %7159 = vmatmul.bf16.gmra.mxu0 %v5154
  %v7160 = vpop.f32.mrf.mxu0
  %v7161 = vadd.f32 %v7028, %v7160
  %v7162 = vpop.f32.mrf.mxu0
  %v7163 = vadd.f32 %v7030, %v7162
  %7164 = vmatmul.bf16.gmra.mxu0 %v5170
  %v7165 = vpop.f32.mrf.mxu0
  %v7166 = vadd.f32 %v7033, %v7165
  %v7167 = vpop.f32.mrf.mxu0
  %v7168 = vadd.f32 %v7035, %v7167
  %7169 = vmatmul.bf16.gmra.mxu0 %v5186
  %v7170 = vpop.f32.mrf.mxu0
  %v7171 = vadd.f32 %v7038, %v7170
  %v7172 = vpop.f32.mrf.mxu0
  %v7173 = vadd.f32 %v7040, %v7172
  %7174 = vmatmul.bf16.gmra.mxu0 %v5202
  %v7175 = vpop.f32.mrf.mxu0
  %v7176 = vadd.f32 %v7043, %v7175
  %v7177 = vpop.f32.mrf.mxu0
  %v7178 = vadd.f32 %v7045, %v7177
  %7179 = vmatmul.bf16.gmra.mxu0 %v5218
  %v7180 = vpop.f32.mrf.mxu0
  %v7181 = vadd.f32 %v7048, %v7180
  %v7182 = vpop.f32.mrf.mxu0
  %v7183 = vadd.f32 %v7050, %v7182
  %7184 = vmatmul.bf16.gmra.mxu0 %v5234
  %v7185 = vpop.f32.mrf.mxu0
  %v7186 = vadd.f32 %v7053, %v7185
  %v7187 = vpop.f32.mrf.mxu0
  %v7188 = vadd.f32 %v7055, %v7187
  %7189 = vmatmul.bf16.gmra.mxu0 %v5250
  %v7190 = vpop.f32.mrf.mxu0
  %v7191 = vadd.f32 %v7058, %v7190
  %v7192 = vpop.f32.mrf.mxu0
  %v7193 = vadd.f32 %v7060, %v7192
  %7194 = vmatmul.bf16.gmra.mxu0 %v5266
  %v7195 = vpop.f32.mrf.mxu0
  %v7196 = vadd.f32 %v7063, %v7195
  %v7197 = vpop.f32.mrf.mxu0
  %v7198 = vadd.f32 %v7065, %v7197
  %7199 = vmatmul.bf16.gmra.mxu0 %v5282
  %v7200 = vpop.f32.mrf.mxu0
  %v7201 = vadd.f32 %v7068, %v7200
  %v7202 = vpop.f32.mrf.mxu0
  %v7203 = vadd.f32 %v7070, %v7202
  %7204 = vmatmul.bf16.gmra.mxu0 %v5298
  %v7205 = vpop.f32.mrf.mxu0
  %v7206 = vadd.f32 %v7073, %v7205
  %v7207 = vpop.f32.mrf.mxu0
  %v7208 = vadd.f32 %v7075, %v7207
  %7209 = vmatmul.bf16.gmra.mxu0 %v5314
  %v7210 = vpop.f32.mrf.mxu0
  %v7211 = vadd.f32 %v7078, %v7210
  %v7212 = vpop.f32.mrf.mxu0
  %v7213 = vadd.f32 %v7080, %v7212
  %7214 = vmatmul.bf16.gmra.mxu0 %v5330
  %v7215 = vpop.f32.mrf.mxu0
  %v7216 = vadd.f32 %v7083, %v7215
  %v7217 = vpop.f32.mrf.mxu0
  %v7218 = vadd.f32 %v7085, %v7217
  %7219 = vmatmul.bf16.gmra.mxu0 %v5346
  %v7220 = vpop.f32.mrf.mxu0
  %v7221 = vadd.f32 %v7088, %v7220
  %v7222 = vpop.f32.mrf.mxu0
  %v7223 = vadd.f32 %v7090, %v7222
  %7224 = vmatmul.bf16.gmra.mxu0 %v5362
  %v7225 = vpop.f32.mrf.mxu0
  %v7226 = vadd.f32 %v7093, %v7225
  %v7227 = vpop.f32.mrf.mxu0
  %v7228 = vadd.f32 %v7095, %v7227
  %7229 = vmatmul.bf16.gmra.mxu0 %v5378
  %v7230 = vpop.f32.mrf.mxu0
  %v7231 = vadd.f32 %v7098, %v7230
  %v7232 = vpop.f32.mrf.mxu0
  %v7233 = vadd.f32 %v7100, %v7232
  %7234 = vmatmul.bf16.gmra.mxu0 %v5394
  %v7235 = vpop.f32.mrf.mxu0
  %v7236 = vadd.f32 %v7103, %v7235
  %v7237 = vpop.f32.mrf.mxu0
  %7238 = vdwg.mxu0
  %7239 = vmatpush.bf16.msra.mxu0 %v6365
  %7240 = vmatpush.bf16.msra.mxu0 %v6364
  %7241 = vmatpush.bf16.msra.mxu0 %v6363
  %7242 = vmatpush.bf16.msra.mxu0 %v6362
  %7243 = vmatpush.bf16.msra.mxu0 %v6361
  %7244 = vmatpush.bf16.msra.mxu0 %v6360
  %7245 = vmatpush.bf16.msra.mxu0 %v6359
  %7246 = vmatpush.bf16.msra.mxu0 %v6358
  %7247 = vmatmul.bf16.gmra.mxu0 %v5011
  %v7248 = vpop.f32.mrf.mxu0
  %v7249 = vadd.f32 %v7116, %v7248
  %v7250 = vpop.f32.mrf.mxu0
  %v7251 = vadd.f32 %v7118, %v7250
  %7252 = vmatmul.bf16.gmra.mxu0 %v5027
  %v7253 = vpop.f32.mrf.mxu0
  %v7254 = vadd.f32 %v7121, %v7253
  %v7255 = vpop.f32.mrf.mxu0
  %v7256 = vadd.f32 %v7123, %v7255
  %7257 = vmatmul.bf16.gmra.mxu0 %v5043
  %v7258 = vpop.f32.mrf.mxu0
  %v7259 = vadd.f32 %v7126, %v7258
  %v7260 = vpop.f32.mrf.mxu0
  %v7261 = vadd.f32 %v7128, %v7260
  %7262 = vmatmul.bf16.gmra.mxu0 %v5059
  %v7263 = vpop.f32.mrf.mxu0
  %v7264 = vadd.f32 %v7131, %v7263
  %v7265 = vpop.f32.mrf.mxu0
  %v7266 = vadd.f32 %v7133, %v7265
  %7267 = vmatmul.bf16.gmra.mxu0 %v5075
  %v7268 = vpop.f32.mrf.mxu0
  %v7269 = vadd.f32 %v7136, %v7268
  %v7270 = vpop.f32.mrf.mxu0
  %v7271 = vadd.f32 %v7138, %v7270
  %7272 = vmatmul.bf16.gmra.mxu0 %v5091
  %v7273 = vpop.f32.mrf.mxu0
  %v7274 = vadd.f32 %v7141, %v7273
  %v7275 = vpop.f32.mrf.mxu0
  %v7276 = vadd.f32 %v7143, %v7275
  %7277 = vmatmul.bf16.gmra.mxu0 %v5107
  %v7278 = vpop.f32.mrf.mxu0
  %v7279 = vadd.f32 %v7146, %v7278
  %v7280 = vpop.f32.mrf.mxu0
  %v7281 = vadd.f32 %v7148, %v7280
  %7282 = vmatmul.bf16.gmra.mxu0 %v5123
  %v7283 = vpop.f32.mrf.mxu0
  %v7284 = vadd.f32 %v7151, %v7283
  %v7285 = vpop.f32.mrf.mxu0
  %v7286 = vadd.f32 %v7153, %v7285
  %7287 = vmatmul.bf16.gmra.mxu0 %v5139
  %v7288 = vpop.f32.mrf.mxu0
  %v7289 = vadd.f32 %v7156, %v7288
  %v7290 = vpop.f32.mrf.mxu0
  %v7291 = vadd.f32 %v7158, %v7290
  %7292 = vmatmul.bf16.gmra.mxu0 %v5155
  %v7293 = vpop.f32.mrf.mxu0
  %v7294 = vadd.f32 %v7161, %v7293
  %v7295 = vpop.f32.mrf.mxu0
  %v7296 = vadd.f32 %v7163, %v7295
  %7297 = vmatmul.bf16.gmra.mxu0 %v5171
  %v7298 = vpop.f32.mrf.mxu0
  %v7299 = vadd.f32 %v7166, %v7298
  %v7300 = vpop.f32.mrf.mxu0
  %v7301 = vadd.f32 %v7168, %v7300
  %7302 = vmatmul.bf16.gmra.mxu0 %v5187
  %v7303 = vpop.f32.mrf.mxu0
  %v7304 = vadd.f32 %v7171, %v7303
  %v7305 = vpop.f32.mrf.mxu0
  %v7306 = vadd.f32 %v7173, %v7305
  %7307 = vmatmul.bf16.gmra.mxu0 %v5203
  %v7308 = vpop.f32.mrf.mxu0
  %v7309 = vadd.f32 %v7176, %v7308
  %v7310 = vpop.f32.mrf.mxu0
  %v7311 = vadd.f32 %v7178, %v7310
  %7312 = vmatmul.bf16.gmra.mxu0 %v5219
  %v7313 = vpop.f32.mrf.mxu0
  %v7314 = vadd.f32 %v7181, %v7313
  %v7315 = vpop.f32.mrf.mxu0
  %v7316 = vadd.f32 %v7183, %v7315
  %7317 = vmatmul.bf16.gmra.mxu0 %v5235
  %v7318 = vpop.f32.mrf.mxu0
  %v7319 = vadd.f32 %v7186, %v7318
  %v7320 = vpop.f32.mrf.mxu0
  %v7321 = vadd.f32 %v7188, %v7320
  %7322 = vmatmul.bf16.gmra.mxu0 %v5251
  %v7323 = vpop.f32.mrf.mxu0
  %v7324 = vadd.f32 %v7191, %v7323
  %v7325 = vpop.f32.mrf.mxu0
  %v7326 = vadd.f32 %v7193, %v7325
  %7327 = vmatmul.bf16.gmra.mxu0 %v5267
  %v7328 = vpop.f32.mrf.mxu0
  %v7329 = vadd.f32 %v7196, %v7328
  %v7330 = vpop.f32.mrf.mxu0
  %v7331 = vadd.f32 %v7198, %v7330
  %7332 = vmatmul.bf16.gmra.mxu0 %v5283
  %v7333 = vpop.f32.mrf.mxu0
  %v7334 = vadd.f32 %v7201, %v7333
  %v7335 = vpop.f32.mrf.mxu0
  %v7336 = vadd.f32 %v7203, %v7335
  %7337 = vmatmul.bf16.gmra.mxu0 %v5299
  %v7338 = vpop.f32.mrf.mxu0
  %v7339 = vadd.f32 %v7206, %v7338
  %v7340 = vpop.f32.mrf.mxu0
  %v7341 = vadd.f32 %v7208, %v7340
  %7342 = vmatmul.bf16.gmra.mxu0 %v5315
  %v7343 = vpop.f32.mrf.mxu0
  %v7344 = vadd.f32 %v7211, %v7343
  %v7345 = vpop.f32.mrf.mxu0
  %v7346 = vadd.f32 %v7213, %v7345
  %7347 = vmatmul.bf16.gmra.mxu0 %v5331
  %v7348 = vpop.f32.mrf.mxu0
  %v7349 = vadd.f32 %v7216, %v7348
  %v7350 = vpop.f32.mrf.mxu0
  %v7351 = vadd.f32 %v7218, %v7350
  %7352 = vmatmul.bf16.gmra.mxu0 %v5347
  %v7353 = vpop.f32.mrf.mxu0
  %v7354 = vadd.f32 %v7221, %v7353
  %v7355 = vpop.f32.mrf.mxu0
  %v7356 = vadd.f32 %v7223, %v7355
  %7357 = vmatmul.bf16.gmra.mxu0 %v5363
  %v7358 = vpop.f32.mrf.mxu0
  %v7359 = vadd.f32 %v7226, %v7358
  %v7360 = vpop.f32.mrf.mxu0
  %v7361 = vadd.f32 %v7228, %v7360
  %7362 = vmatmul.bf16.gmra.mxu0 %v5379
  %v7363 = vpop.f32.mrf.mxu0
  %v7364 = vadd.f32 %v7231, %v7363
  %v7365 = vpop.f32.mrf.mxu0
  %v7366 = vadd.f32 %v7233, %v7365
  %7367 = vmatmul.bf16.gmra.mxu0 %v5395
  %v7368 = vpop.f32.mrf.mxu0
  %v7369 = vadd.f32 %v7236, %v7368
  %v7370 = vpop.f32.mrf.mxu0
  %7371 = vdwg.mxu0
  %7372 = vmatpush.bf16.msra.mxu0 %v6373
  %7373 = vmatpush.bf16.msra.mxu0 %v6372
  %7374 = vmatpush.bf16.msra.mxu0 %v6371
  %7375 = vmatpush.bf16.msra.mxu0 %v6370
  %7376 = vmatpush.bf16.msra.mxu0 %v6369
  %7377 = vmatpush.bf16.msra.mxu0 %v6368
  %7378 = vmatpush.bf16.msra.mxu0 %v6367
  %7379 = vmatpush.bf16.msra.mxu0 %v6366
  %7380 = vmatmul.bf16.gmra.mxu0 %v5012
  %v7381 = vpop.f32.mrf.mxu0
  %v7382 = vadd.f32 %v7249, %v7381
  %v7383 = vpop.f32.mrf.mxu0
  %v7384 = vadd.f32 %v7251, %v7383
  %7385 = vmatmul.bf16.gmra.mxu0 %v5028
  %v7386 = vpop.f32.mrf.mxu0
  %v7387 = vadd.f32 %v7254, %v7386
  %v7388 = vpop.f32.mrf.mxu0
  %v7389 = vadd.f32 %v7256, %v7388
  %7390 = vmatmul.bf16.gmra.mxu0 %v5044
  %v7391 = vpop.f32.mrf.mxu0
  %v7392 = vadd.f32 %v7259, %v7391
  %v7393 = vpop.f32.mrf.mxu0
  %v7394 = vadd.f32 %v7261, %v7393
  %7395 = vmatmul.bf16.gmra.mxu0 %v5060
  %v7396 = vpop.f32.mrf.mxu0
  %v7397 = vadd.f32 %v7264, %v7396
  %v7398 = vpop.f32.mrf.mxu0
  %v7399 = vadd.f32 %v7266, %v7398
  %7400 = vmatmul.bf16.gmra.mxu0 %v5076
  %v7401 = vpop.f32.mrf.mxu0
  %v7402 = vadd.f32 %v7269, %v7401
  %v7403 = vpop.f32.mrf.mxu0
  %v7404 = vadd.f32 %v7271, %v7403
  %7405 = vmatmul.bf16.gmra.mxu0 %v5092
  %v7406 = vpop.f32.mrf.mxu0
  %v7407 = vadd.f32 %v7274, %v7406
  %v7408 = vpop.f32.mrf.mxu0
  %v7409 = vadd.f32 %v7276, %v7408
  %7410 = vmatmul.bf16.gmra.mxu0 %v5108
  %v7411 = vpop.f32.mrf.mxu0
  %v7412 = vadd.f32 %v7279, %v7411
  %v7413 = vpop.f32.mrf.mxu0
  %v7414 = vadd.f32 %v7281, %v7413
  %7415 = vmatmul.bf16.gmra.mxu0 %v5124
  %v7416 = vpop.f32.mrf.mxu0
  %v7417 = vadd.f32 %v7284, %v7416
  %v7418 = vpop.f32.mrf.mxu0
  %v7419 = vadd.f32 %v7286, %v7418
  %7420 = vmatmul.bf16.gmra.mxu0 %v5140
  %v7421 = vpop.f32.mrf.mxu0
  %v7422 = vadd.f32 %v7289, %v7421
  %v7423 = vpop.f32.mrf.mxu0
  %v7424 = vadd.f32 %v7291, %v7423
  %7425 = vmatmul.bf16.gmra.mxu0 %v5156
  %v7426 = vpop.f32.mrf.mxu0
  %v7427 = vadd.f32 %v7294, %v7426
  %v7428 = vpop.f32.mrf.mxu0
  %v7429 = vadd.f32 %v7296, %v7428
  %7430 = vmatmul.bf16.gmra.mxu0 %v5172
  %v7431 = vpop.f32.mrf.mxu0
  %v7432 = vadd.f32 %v7299, %v7431
  %v7433 = vpop.f32.mrf.mxu0
  %v7434 = vadd.f32 %v7301, %v7433
  %7435 = vmatmul.bf16.gmra.mxu0 %v5188
  %v7436 = vpop.f32.mrf.mxu0
  %v7437 = vadd.f32 %v7304, %v7436
  %v7438 = vpop.f32.mrf.mxu0
  %v7439 = vadd.f32 %v7306, %v7438
  %7440 = vmatmul.bf16.gmra.mxu0 %v5204
  %v7441 = vpop.f32.mrf.mxu0
  %v7442 = vadd.f32 %v7309, %v7441
  %v7443 = vpop.f32.mrf.mxu0
  %v7444 = vadd.f32 %v7311, %v7443
  %7445 = vmatmul.bf16.gmra.mxu0 %v5220
  %v7446 = vpop.f32.mrf.mxu0
  %v7447 = vadd.f32 %v7314, %v7446
  %v7448 = vpop.f32.mrf.mxu0
  %v7449 = vadd.f32 %v7316, %v7448
  %7450 = vmatmul.bf16.gmra.mxu0 %v5236
  %v7451 = vpop.f32.mrf.mxu0
  %v7452 = vadd.f32 %v7319, %v7451
  %v7453 = vpop.f32.mrf.mxu0
  %v7454 = vadd.f32 %v7321, %v7453
  %7455 = vmatmul.bf16.gmra.mxu0 %v5252
  %v7456 = vpop.f32.mrf.mxu0
  %v7457 = vadd.f32 %v7324, %v7456
  %v7458 = vpop.f32.mrf.mxu0
  %v7459 = vadd.f32 %v7326, %v7458
  %7460 = vmatmul.bf16.gmra.mxu0 %v5268
  %v7461 = vpop.f32.mrf.mxu0
  %v7462 = vadd.f32 %v7329, %v7461
  %v7463 = vpop.f32.mrf.mxu0
  %v7464 = vadd.f32 %v7331, %v7463
  %7465 = vmatmul.bf16.gmra.mxu0 %v5284
  %v7466 = vpop.f32.mrf.mxu0
  %v7467 = vadd.f32 %v7334, %v7466
  %v7468 = vpop.f32.mrf.mxu0
  %v7469 = vadd.f32 %v7336, %v7468
  %7470 = vmatmul.bf16.gmra.mxu0 %v5300
  %v7471 = vpop.f32.mrf.mxu0
  %v7472 = vadd.f32 %v7339, %v7471
  %v7473 = vpop.f32.mrf.mxu0
  %v7474 = vadd.f32 %v7341, %v7473
  %7475 = vmatmul.bf16.gmra.mxu0 %v5316
  %v7476 = vpop.f32.mrf.mxu0
  %v7477 = vadd.f32 %v7344, %v7476
  %v7478 = vpop.f32.mrf.mxu0
  %v7479 = vadd.f32 %v7346, %v7478
  %7480 = vmatmul.bf16.gmra.mxu0 %v5332
  %v7481 = vpop.f32.mrf.mxu0
  %v7482 = vadd.f32 %v7349, %v7481
  %v7483 = vpop.f32.mrf.mxu0
  %v7484 = vadd.f32 %v7351, %v7483
  %7485 = vmatmul.bf16.gmra.mxu0 %v5348
  %v7486 = vpop.f32.mrf.mxu0
  %v7487 = vadd.f32 %v7354, %v7486
  %v7488 = vpop.f32.mrf.mxu0
  %v7489 = vadd.f32 %v7356, %v7488
  %7490 = vmatmul.bf16.gmra.mxu0 %v5364
  %v7491 = vpop.f32.mrf.mxu0
  %v7492 = vadd.f32 %v7359, %v7491
  %v7493 = vpop.f32.mrf.mxu0
  %v7494 = vadd.f32 %v7361, %v7493
  %7495 = vmatmul.bf16.gmra.mxu0 %v5380
  %v7496 = vpop.f32.mrf.mxu0
  %v7497 = vadd.f32 %v7364, %v7496
  %v7498 = vpop.f32.mrf.mxu0
  %v7499 = vadd.f32 %v7366, %v7498
  %7500 = vmatmul.bf16.gmra.mxu0 %v5396
  %v7501 = vpop.f32.mrf.mxu0
  %v7502 = vadd.f32 %v7369, %v7501
  %v7503 = vpop.f32.mrf.mxu0
  %7504 = vdwg.mxu0
  %7505 = vmatpush.bf16.msra.mxu0 %v6381
  %7506 = vmatpush.bf16.msra.mxu0 %v6380
  %7507 = vmatpush.bf16.msra.mxu0 %v6379
  %7508 = vmatpush.bf16.msra.mxu0 %v6378
  %7509 = vmatpush.bf16.msra.mxu0 %v6377
  %7510 = vmatpush.bf16.msra.mxu0 %v6376
  %7511 = vmatpush.bf16.msra.mxu0 %v6375
  %7512 = vmatpush.bf16.msra.mxu0 %v6374
  %7513 = vmatmul.bf16.gmra.mxu0 %v5013
  %v7514 = vpop.f32.mrf.mxu0
  %v7515 = vadd.f32 %v7382, %v7514
  %v7516 = vpop.f32.mrf.mxu0
  %v7517 = vadd.f32 %v7384, %v7516
  %7518 = vmatmul.bf16.gmra.mxu0 %v5029
  %v7519 = vpop.f32.mrf.mxu0
  %v7520 = vadd.f32 %v7387, %v7519
  %v7521 = vpop.f32.mrf.mxu0
  %v7522 = vadd.f32 %v7389, %v7521
  %7523 = vmatmul.bf16.gmra.mxu0 %v5045
  %v7524 = vpop.f32.mrf.mxu0
  %v7525 = vadd.f32 %v7392, %v7524
  %v7526 = vpop.f32.mrf.mxu0
  %v7527 = vadd.f32 %v7394, %v7526
  %7528 = vmatmul.bf16.gmra.mxu0 %v5061
  %v7529 = vpop.f32.mrf.mxu0
  %v7530 = vadd.f32 %v7397, %v7529
  %v7531 = vpop.f32.mrf.mxu0
  %v7532 = vadd.f32 %v7399, %v7531
  %7533 = vmatmul.bf16.gmra.mxu0 %v5077
  %v7534 = vpop.f32.mrf.mxu0
  %v7535 = vadd.f32 %v7402, %v7534
  %v7536 = vpop.f32.mrf.mxu0
  %v7537 = vadd.f32 %v7404, %v7536
  %7538 = vmatmul.bf16.gmra.mxu0 %v5093
  %v7539 = vpop.f32.mrf.mxu0
  %v7540 = vadd.f32 %v7407, %v7539
  %v7541 = vpop.f32.mrf.mxu0
  %v7542 = vadd.f32 %v7409, %v7541
  %7543 = vmatmul.bf16.gmra.mxu0 %v5109
  %v7544 = vpop.f32.mrf.mxu0
  %v7545 = vadd.f32 %v7412, %v7544
  %v7546 = vpop.f32.mrf.mxu0
  %v7547 = vadd.f32 %v7414, %v7546
  %7548 = vmatmul.bf16.gmra.mxu0 %v5125
  %v7549 = vpop.f32.mrf.mxu0
  %v7550 = vadd.f32 %v7417, %v7549
  %v7551 = vpop.f32.mrf.mxu0
  %v7552 = vadd.f32 %v7419, %v7551
  %7553 = vmatmul.bf16.gmra.mxu0 %v5141
  %v7554 = vpop.f32.mrf.mxu0
  %v7555 = vadd.f32 %v7422, %v7554
  %v7556 = vpop.f32.mrf.mxu0
  %v7557 = vadd.f32 %v7424, %v7556
  %7558 = vmatmul.bf16.gmra.mxu0 %v5157
  %v7559 = vpop.f32.mrf.mxu0
  %v7560 = vadd.f32 %v7427, %v7559
  %v7561 = vpop.f32.mrf.mxu0
  %v7562 = vadd.f32 %v7429, %v7561
  %7563 = vmatmul.bf16.gmra.mxu0 %v5173
  %v7564 = vpop.f32.mrf.mxu0
  %v7565 = vadd.f32 %v7432, %v7564
  %v7566 = vpop.f32.mrf.mxu0
  %v7567 = vadd.f32 %v7434, %v7566
  %7568 = vmatmul.bf16.gmra.mxu0 %v5189
  %v7569 = vpop.f32.mrf.mxu0
  %v7570 = vadd.f32 %v7437, %v7569
  %v7571 = vpop.f32.mrf.mxu0
  %v7572 = vadd.f32 %v7439, %v7571
  %7573 = vmatmul.bf16.gmra.mxu0 %v5205
  %v7574 = vpop.f32.mrf.mxu0
  %v7575 = vadd.f32 %v7442, %v7574
  %v7576 = vpop.f32.mrf.mxu0
  %v7577 = vadd.f32 %v7444, %v7576
  %7578 = vmatmul.bf16.gmra.mxu0 %v5221
  %v7579 = vpop.f32.mrf.mxu0
  %v7580 = vadd.f32 %v7447, %v7579
  %v7581 = vpop.f32.mrf.mxu0
  %v7582 = vadd.f32 %v7449, %v7581
  %7583 = vmatmul.bf16.gmra.mxu0 %v5237
  %v7584 = vpop.f32.mrf.mxu0
  %v7585 = vadd.f32 %v7452, %v7584
  %v7586 = vpop.f32.mrf.mxu0
  %v7587 = vadd.f32 %v7454, %v7586
  %7588 = vmatmul.bf16.gmra.mxu0 %v5253
  %v7589 = vpop.f32.mrf.mxu0
  %v7590 = vadd.f32 %v7457, %v7589
  %v7591 = vpop.f32.mrf.mxu0
  %v7592 = vadd.f32 %v7459, %v7591
  %7593 = vmatmul.bf16.gmra.mxu0 %v5269
  %v7594 = vpop.f32.mrf.mxu0
  %v7595 = vadd.f32 %v7462, %v7594
  %v7596 = vpop.f32.mrf.mxu0
  %v7597 = vadd.f32 %v7464, %v7596
  %7598 = vmatmul.bf16.gmra.mxu0 %v5285
  %v7599 = vpop.f32.mrf.mxu0
  %v7600 = vadd.f32 %v7467, %v7599
  %v7601 = vpop.f32.mrf.mxu0
  %v7602 = vadd.f32 %v7469, %v7601
  %7603 = vmatmul.bf16.gmra.mxu0 %v5301
  %v7604 = vpop.f32.mrf.mxu0
  %v7605 = vadd.f32 %v7472, %v7604
  %v7606 = vpop.f32.mrf.mxu0
  %v7607 = vadd.f32 %v7474, %v7606
  %7608 = vmatmul.bf16.gmra.mxu0 %v5317
  %v7609 = vpop.f32.mrf.mxu0
  %v7610 = vadd.f32 %v7477, %v7609
  %v7611 = vpop.f32.mrf.mxu0
  %v7612 = vadd.f32 %v7479, %v7611
  %7613 = vmatmul.bf16.gmra.mxu0 %v5333
  %v7614 = vpop.f32.mrf.mxu0
  %v7615 = vadd.f32 %v7482, %v7614
  %v7616 = vpop.f32.mrf.mxu0
  %v7617 = vadd.f32 %v7484, %v7616
  %7618 = vmatmul.bf16.gmra.mxu0 %v5349
  %v7619 = vpop.f32.mrf.mxu0
  %v7620 = vadd.f32 %v7487, %v7619
  %v7621 = vpop.f32.mrf.mxu0
  %v7622 = vadd.f32 %v7489, %v7621
  %7623 = vmatmul.bf16.gmra.mxu0 %v5365
  %v7624 = vpop.f32.mrf.mxu0
  %v7625 = vadd.f32 %v7492, %v7624
  %v7626 = vpop.f32.mrf.mxu0
  %v7627 = vadd.f32 %v7494, %v7626
  %7628 = vmatmul.bf16.gmra.mxu0 %v5381
  %v7629 = vpop.f32.mrf.mxu0
  %v7630 = vadd.f32 %v7497, %v7629
  %v7631 = vpop.f32.mrf.mxu0
  %v7632 = vadd.f32 %v7499, %v7631
  %7633 = vmatmul.bf16.gmra.mxu0 %v5397
  %v7634 = vpop.f32.mrf.mxu0
  %v7635 = vadd.f32 %v7502, %v7634
  %v7636 = vpop.f32.mrf.mxu0
  %7637 = vdwg.mxu0
  %7638 = vmatpush.bf16.msra.mxu0 %v6389
  %7639 = vmatpush.bf16.msra.mxu0 %v6388
  %7640 = vmatpush.bf16.msra.mxu0 %v6387
  %7641 = vmatpush.bf16.msra.mxu0 %v6386
  %7642 = vmatpush.bf16.msra.mxu0 %v6385
  %7643 = vmatpush.bf16.msra.mxu0 %v6384
  %7644 = vmatpush.bf16.msra.mxu0 %v6383
  %7645 = vmatpush.bf16.msra.mxu0 %v6382
  %7646 = vmatmul.bf16.gmra.mxu0 %v5014
  %v7647 = vpop.f32.mrf.mxu0
  %v7648 = vadd.f32 %v7515, %v7647
  %v7649 = vpop.f32.mrf.mxu0
  %v7650 = vadd.f32 %v7517, %v7649
  %7651 = vmatmul.bf16.gmra.mxu0 %v5030
  %v7652 = vpop.f32.mrf.mxu0
  %v7653 = vadd.f32 %v7520, %v7652
  %v7654 = vpop.f32.mrf.mxu0
  %v7655 = vadd.f32 %v7522, %v7654
  %7656 = vmatmul.bf16.gmra.mxu0 %v5046
  %v7657 = vpop.f32.mrf.mxu0
  %v7658 = vadd.f32 %v7525, %v7657
  %v7659 = vpop.f32.mrf.mxu0
  %v7660 = vadd.f32 %v7527, %v7659
  %7661 = vmatmul.bf16.gmra.mxu0 %v5062
  %v7662 = vpop.f32.mrf.mxu0
  %v7663 = vadd.f32 %v7530, %v7662
  %v7664 = vpop.f32.mrf.mxu0
  %v7665 = vadd.f32 %v7532, %v7664
  %7666 = vmatmul.bf16.gmra.mxu0 %v5078
  %v7667 = vpop.f32.mrf.mxu0
  %v7668 = vadd.f32 %v7535, %v7667
  %v7669 = vpop.f32.mrf.mxu0
  %v7670 = vadd.f32 %v7537, %v7669
  %7671 = vmatmul.bf16.gmra.mxu0 %v5094
  %v7672 = vpop.f32.mrf.mxu0
  %v7673 = vadd.f32 %v7540, %v7672
  %v7674 = vpop.f32.mrf.mxu0
  %v7675 = vadd.f32 %v7542, %v7674
  %7676 = vmatmul.bf16.gmra.mxu0 %v5110
  %v7677 = vpop.f32.mrf.mxu0
  %v7678 = vadd.f32 %v7545, %v7677
  %v7679 = vpop.f32.mrf.mxu0
  %v7680 = vadd.f32 %v7547, %v7679
  %7681 = vmatmul.bf16.gmra.mxu0 %v5126
  %v7682 = vpop.f32.mrf.mxu0
  %v7683 = vadd.f32 %v7550, %v7682
  %v7684 = vpop.f32.mrf.mxu0
  %v7685 = vadd.f32 %v7552, %v7684
  %7686 = vmatmul.bf16.gmra.mxu0 %v5142
  %v7687 = vpop.f32.mrf.mxu0
  %v7688 = vadd.f32 %v7555, %v7687
  %v7689 = vpop.f32.mrf.mxu0
  %v7690 = vadd.f32 %v7557, %v7689
  %7691 = vmatmul.bf16.gmra.mxu0 %v5158
  %v7692 = vpop.f32.mrf.mxu0
  %v7693 = vadd.f32 %v7560, %v7692
  %v7694 = vpop.f32.mrf.mxu0
  %v7695 = vadd.f32 %v7562, %v7694
  %7696 = vmatmul.bf16.gmra.mxu0 %v5174
  %v7697 = vpop.f32.mrf.mxu0
  %v7698 = vadd.f32 %v7565, %v7697
  %v7699 = vpop.f32.mrf.mxu0
  %v7700 = vadd.f32 %v7567, %v7699
  %7701 = vmatmul.bf16.gmra.mxu0 %v5190
  %v7702 = vpop.f32.mrf.mxu0
  %v7703 = vadd.f32 %v7570, %v7702
  %v7704 = vpop.f32.mrf.mxu0
  %v7705 = vadd.f32 %v7572, %v7704
  %7706 = vmatmul.bf16.gmra.mxu0 %v5206
  %v7707 = vpop.f32.mrf.mxu0
  %v7708 = vadd.f32 %v7575, %v7707
  %v7709 = vpop.f32.mrf.mxu0
  %v7710 = vadd.f32 %v7577, %v7709
  %7711 = vmatmul.bf16.gmra.mxu0 %v5222
  %v7712 = vpop.f32.mrf.mxu0
  %v7713 = vadd.f32 %v7580, %v7712
  %v7714 = vpop.f32.mrf.mxu0
  %v7715 = vadd.f32 %v7582, %v7714
  %7716 = vmatmul.bf16.gmra.mxu0 %v5238
  %v7717 = vpop.f32.mrf.mxu0
  %v7718 = vadd.f32 %v7585, %v7717
  %v7719 = vpop.f32.mrf.mxu0
  %v7720 = vadd.f32 %v7587, %v7719
  %7721 = vmatmul.bf16.gmra.mxu0 %v5254
  %v7722 = vpop.f32.mrf.mxu0
  %v7723 = vadd.f32 %v7590, %v7722
  %v7724 = vpop.f32.mrf.mxu0
  %v7725 = vadd.f32 %v7592, %v7724
  %7726 = vmatmul.bf16.gmra.mxu0 %v5270
  %v7727 = vpop.f32.mrf.mxu0
  %v7728 = vadd.f32 %v7595, %v7727
  %v7729 = vpop.f32.mrf.mxu0
  %v7730 = vadd.f32 %v7597, %v7729
  %7731 = vmatmul.bf16.gmra.mxu0 %v5286
  %v7732 = vpop.f32.mrf.mxu0
  %v7733 = vadd.f32 %v7600, %v7732
  %v7734 = vpop.f32.mrf.mxu0
  %v7735 = vadd.f32 %v7602, %v7734
  %7736 = vmatmul.bf16.gmra.mxu0 %v5302
  %v7737 = vpop.f32.mrf.mxu0
  %v7738 = vadd.f32 %v7605, %v7737
  %v7739 = vpop.f32.mrf.mxu0
  %v7740 = vadd.f32 %v7607, %v7739
  %7741 = vmatmul.bf16.gmra.mxu0 %v5318
  %v7742 = vpop.f32.mrf.mxu0
  %v7743 = vadd.f32 %v7610, %v7742
  %v7744 = vpop.f32.mrf.mxu0
  %v7745 = vadd.f32 %v7612, %v7744
  %7746 = vmatmul.bf16.gmra.mxu0 %v5334
  %v7747 = vpop.f32.mrf.mxu0
  %v7748 = vadd.f32 %v7615, %v7747
  %v7749 = vpop.f32.mrf.mxu0
  %v7750 = vadd.f32 %v7617, %v7749
  %7751 = vmatmul.bf16.gmra.mxu0 %v5350
  %v7752 = vpop.f32.mrf.mxu0
  %v7753 = vadd.f32 %v7620, %v7752
  %v7754 = vpop.f32.mrf.mxu0
  %v7755 = vadd.f32 %v7622, %v7754
  %7756 = vmatmul.bf16.gmra.mxu0 %v5366
  %v7757 = vpop.f32.mrf.mxu0
  %v7758 = vadd.f32 %v7625, %v7757
  %v7759 = vpop.f32.mrf.mxu0
  %v7760 = vadd.f32 %v7627, %v7759
  %7761 = vmatmul.bf16.gmra.mxu0 %v5382
  %v7762 = vpop.f32.mrf.mxu0
  %v7763 = vadd.f32 %v7630, %v7762
  %v7764 = vpop.f32.mrf.mxu0
  %v7765 = vadd.f32 %v7632, %v7764
  %7766 = vmatmul.bf16.gmra.mxu0 %v5398
  %v7767 = vpop.f32.mrf.mxu0
  %v7768 = vadd.f32 %v7635, %v7767
  %v7769 = vpop.f32.mrf.mxu0
  %7770 = vdwg.mxu0
  %7771 = vmatpush.bf16.msra.mxu0 %v6397
  %7772 = vmatpush.bf16.msra.mxu0 %v6396
  %7773 = vmatpush.bf16.msra.mxu0 %v6395
  %7774 = vmatpush.bf16.msra.mxu0 %v6394
  %7775 = vmatpush.bf16.msra.mxu0 %v6393
  %7776 = vmatpush.bf16.msra.mxu0 %v6392
  %7777 = vmatpush.bf16.msra.mxu0 %v6391
  %7778 = vmatpush.bf16.msra.mxu0 %v6390
  %7779 = vmatmul.bf16.gmra.mxu0 %v5015
  %v7780 = vpop.f32.mrf.mxu0
  %v7781 = vadd.f32 %v7648, %v7780
  %v7782 = vpop.f32.mrf.mxu0
  %v7783 = vadd.f32 %v7650, %v7782
  %7784 = vmatmul.bf16.gmra.mxu0 %v5031
  %v7785 = vpop.f32.mrf.mxu0
  %v7786 = vadd.f32 %v7653, %v7785
  %v7787 = vpop.f32.mrf.mxu0
  %v7788 = vadd.f32 %v7655, %v7787
  %7789 = vmatmul.bf16.gmra.mxu0 %v5047
  %v7790 = vpop.f32.mrf.mxu0
  %v7791 = vadd.f32 %v7658, %v7790
  %v7792 = vpop.f32.mrf.mxu0
  %v7793 = vadd.f32 %v7660, %v7792
  %7794 = vmatmul.bf16.gmra.mxu0 %v5063
  %v7795 = vpop.f32.mrf.mxu0
  %v7796 = vadd.f32 %v7663, %v7795
  %v7797 = vpop.f32.mrf.mxu0
  %v7798 = vadd.f32 %v7665, %v7797
  %7799 = vmatmul.bf16.gmra.mxu0 %v5079
  %v7800 = vpop.f32.mrf.mxu0
  %v7801 = vadd.f32 %v7668, %v7800
  %v7802 = vpop.f32.mrf.mxu0
  %v7803 = vadd.f32 %v7670, %v7802
  %7804 = vmatmul.bf16.gmra.mxu0 %v5095
  %v7805 = vpop.f32.mrf.mxu0
  %v7806 = vadd.f32 %v7673, %v7805
  %v7807 = vpop.f32.mrf.mxu0
  %v7808 = vadd.f32 %v7675, %v7807
  %7809 = vmatmul.bf16.gmra.mxu0 %v5111
  %v7810 = vpop.f32.mrf.mxu0
  %v7811 = vadd.f32 %v7678, %v7810
  %v7812 = vpop.f32.mrf.mxu0
  %v7813 = vadd.f32 %v7680, %v7812
  %7814 = vmatmul.bf16.gmra.mxu0 %v5127
  %v7815 = vpop.f32.mrf.mxu0
  %v7816 = vadd.f32 %v7683, %v7815
  %v7817 = vpop.f32.mrf.mxu0
  %v7818 = vadd.f32 %v7685, %v7817
  %7819 = vmatmul.bf16.gmra.mxu0 %v5143
  %v7820 = vpop.f32.mrf.mxu0
  %v7821 = vadd.f32 %v7688, %v7820
  %v7822 = vpop.f32.mrf.mxu0
  %v7823 = vadd.f32 %v7690, %v7822
  %7824 = vmatmul.bf16.gmra.mxu0 %v5159
  %v7825 = vpop.f32.mrf.mxu0
  %v7826 = vadd.f32 %v7693, %v7825
  %v7827 = vpop.f32.mrf.mxu0
  %v7828 = vadd.f32 %v7695, %v7827
  %7829 = vmatmul.bf16.gmra.mxu0 %v5175
  %v7830 = vpop.f32.mrf.mxu0
  %v7831 = vadd.f32 %v7698, %v7830
  %v7832 = vpop.f32.mrf.mxu0
  %v7833 = vadd.f32 %v7700, %v7832
  %7834 = vmatmul.bf16.gmra.mxu0 %v5191
  %v7835 = vpop.f32.mrf.mxu0
  %v7836 = vadd.f32 %v7703, %v7835
  %v7837 = vpop.f32.mrf.mxu0
  %v7838 = vadd.f32 %v7705, %v7837
  %7839 = vmatmul.bf16.gmra.mxu0 %v5207
  %v7840 = vpop.f32.mrf.mxu0
  %v7841 = vadd.f32 %v7708, %v7840
  %v7842 = vpop.f32.mrf.mxu0
  %v7843 = vadd.f32 %v7710, %v7842
  %7844 = vmatmul.bf16.gmra.mxu0 %v5223
  %v7845 = vpop.f32.mrf.mxu0
  %v7846 = vadd.f32 %v7713, %v7845
  %v7847 = vpop.f32.mrf.mxu0
  %v7848 = vadd.f32 %v7715, %v7847
  %7849 = vmatmul.bf16.gmra.mxu0 %v5239
  %v7850 = vpop.f32.mrf.mxu0
  %v7851 = vadd.f32 %v7718, %v7850
  %v7852 = vpop.f32.mrf.mxu0
  %v7853 = vadd.f32 %v7720, %v7852
  %7854 = vmatmul.bf16.gmra.mxu0 %v5255
  %v7855 = vpop.f32.mrf.mxu0
  %v7856 = vadd.f32 %v7723, %v7855
  %v7857 = vpop.f32.mrf.mxu0
  %v7858 = vadd.f32 %v7725, %v7857
  %7859 = vmatmul.bf16.gmra.mxu0 %v5271
  %v7860 = vpop.f32.mrf.mxu0
  %v7861 = vadd.f32 %v7728, %v7860
  %v7862 = vpop.f32.mrf.mxu0
  %v7863 = vadd.f32 %v7730, %v7862
  %7864 = vmatmul.bf16.gmra.mxu0 %v5287
  %v7865 = vpop.f32.mrf.mxu0
  %v7866 = vadd.f32 %v7733, %v7865
  %v7867 = vpop.f32.mrf.mxu0
  %v7868 = vadd.f32 %v7735, %v7867
  %7869 = vmatmul.bf16.gmra.mxu0 %v5303
  %v7870 = vpop.f32.mrf.mxu0
  %v7871 = vadd.f32 %v7738, %v7870
  %v7872 = vpop.f32.mrf.mxu0
  %v7873 = vadd.f32 %v7740, %v7872
  %7874 = vmatmul.bf16.gmra.mxu0 %v5319
  %v7875 = vpop.f32.mrf.mxu0
  %v7876 = vadd.f32 %v7743, %v7875
  %v7877 = vpop.f32.mrf.mxu0
  %v7878 = vadd.f32 %v7745, %v7877
  %7879 = vmatmul.bf16.gmra.mxu0 %v5335
  %v7880 = vpop.f32.mrf.mxu0
  %v7881 = vadd.f32 %v7748, %v7880
  %v7882 = vpop.f32.mrf.mxu0
  %v7883 = vadd.f32 %v7750, %v7882
  %7884 = vmatmul.bf16.gmra.mxu0 %v5351
  %v7885 = vpop.f32.mrf.mxu0
  %v7886 = vadd.f32 %v7753, %v7885
  %v7887 = vpop.f32.mrf.mxu0
  %v7888 = vadd.f32 %v7755, %v7887
  %7889 = vmatmul.bf16.gmra.mxu0 %v5367
  %v7890 = vpop.f32.mrf.mxu0
  %v7891 = vadd.f32 %v7758, %v7890
  %v7892 = vpop.f32.mrf.mxu0
  %v7893 = vadd.f32 %v7760, %v7892
  %7894 = vmatmul.bf16.gmra.mxu0 %v5383
  %v7895 = vpop.f32.mrf.mxu0
  %v7896 = vadd.f32 %v7763, %v7895
  %v7897 = vpop.f32.mrf.mxu0
  %v7898 = vadd.f32 %v7765, %v7897
  %7899 = vmatmul.bf16.gmra.mxu0 %v5399
  %v7900 = vpop.f32.mrf.mxu0
  %v7901 = vadd.f32 %v7768, %v7900
  %v7902 = vpop.f32.mrf.mxu0
  %7903 = vdwg.mxu0
  %7904 = vmatpush.bf16.msra.mxu0 %v6405
  %7905 = vmatpush.bf16.msra.mxu0 %v6404
  %7906 = vmatpush.bf16.msra.mxu0 %v6403
  %7907 = vmatpush.bf16.msra.mxu0 %v6402
  %7908 = vmatpush.bf16.msra.mxu0 %v6401
  %7909 = vmatpush.bf16.msra.mxu0 %v6400
  %7910 = vmatpush.bf16.msra.mxu0 %v6399
  %7911 = vmatpush.bf16.msra.mxu0 %v6398
  %7912 = vmatmul.bf16.gmra.mxu0 %v5016
  %v7913 = vpop.f32.mrf.mxu0
  %v7914 = vadd.f32 %v7781, %v7913
  %v7915 = vpop.f32.mrf.mxu0
  %v7916 = vadd.f32 %v7783, %v7915
  %7917 = vmatmul.bf16.gmra.mxu0 %v5032
  %v7918 = vpop.f32.mrf.mxu0
  %v7919 = vadd.f32 %v7786, %v7918
  %v7920 = vpop.f32.mrf.mxu0
  %v7921 = vadd.f32 %v7788, %v7920
  %7922 = vmatmul.bf16.gmra.mxu0 %v5048
  %v7923 = vpop.f32.mrf.mxu0
  %v7924 = vadd.f32 %v7791, %v7923
  %v7925 = vpop.f32.mrf.mxu0
  %v7926 = vadd.f32 %v7793, %v7925
  %7927 = vmatmul.bf16.gmra.mxu0 %v5064
  %v7928 = vpop.f32.mrf.mxu0
  %v7929 = vadd.f32 %v7796, %v7928
  %v7930 = vpop.f32.mrf.mxu0
  %v7931 = vadd.f32 %v7798, %v7930
  %7932 = vmatmul.bf16.gmra.mxu0 %v5080
  %v7933 = vpop.f32.mrf.mxu0
  %v7934 = vadd.f32 %v7801, %v7933
  %v7935 = vpop.f32.mrf.mxu0
  %v7936 = vadd.f32 %v7803, %v7935
  %7937 = vmatmul.bf16.gmra.mxu0 %v5096
  %v7938 = vpop.f32.mrf.mxu0
  %v7939 = vadd.f32 %v7806, %v7938
  %v7940 = vpop.f32.mrf.mxu0
  %v7941 = vadd.f32 %v7808, %v7940
  %7942 = vmatmul.bf16.gmra.mxu0 %v5112
  %v7943 = vpop.f32.mrf.mxu0
  %v7944 = vadd.f32 %v7811, %v7943
  %v7945 = vpop.f32.mrf.mxu0
  %v7946 = vadd.f32 %v7813, %v7945
  %7947 = vmatmul.bf16.gmra.mxu0 %v5128
  %v7948 = vpop.f32.mrf.mxu0
  %v7949 = vadd.f32 %v7816, %v7948
  %v7950 = vpop.f32.mrf.mxu0
  %v7951 = vadd.f32 %v7818, %v7950
  %7952 = vmatmul.bf16.gmra.mxu0 %v5144
  %v7953 = vpop.f32.mrf.mxu0
  %v7954 = vadd.f32 %v7821, %v7953
  %v7955 = vpop.f32.mrf.mxu0
  %v7956 = vadd.f32 %v7823, %v7955
  %7957 = vmatmul.bf16.gmra.mxu0 %v5160
  %v7958 = vpop.f32.mrf.mxu0
  %v7959 = vadd.f32 %v7826, %v7958
  %v7960 = vpop.f32.mrf.mxu0
  %v7961 = vadd.f32 %v7828, %v7960
  %7962 = vmatmul.bf16.gmra.mxu0 %v5176
  %v7963 = vpop.f32.mrf.mxu0
  %v7964 = vadd.f32 %v7831, %v7963
  %v7965 = vpop.f32.mrf.mxu0
  %v7966 = vadd.f32 %v7833, %v7965
  %7967 = vmatmul.bf16.gmra.mxu0 %v5192
  %v7968 = vpop.f32.mrf.mxu0
  %v7969 = vadd.f32 %v7836, %v7968
  %v7970 = vpop.f32.mrf.mxu0
  %v7971 = vadd.f32 %v7838, %v7970
  %7972 = vmatmul.bf16.gmra.mxu0 %v5208
  %v7973 = vpop.f32.mrf.mxu0
  %v7974 = vadd.f32 %v7841, %v7973
  %v7975 = vpop.f32.mrf.mxu0
  %v7976 = vadd.f32 %v7843, %v7975
  %7977 = vmatmul.bf16.gmra.mxu0 %v5224
  %v7978 = vpop.f32.mrf.mxu0
  %v7979 = vadd.f32 %v7846, %v7978
  %v7980 = vpop.f32.mrf.mxu0
  %v7981 = vadd.f32 %v7848, %v7980
  %7982 = vmatmul.bf16.gmra.mxu0 %v5240
  %v7983 = vpop.f32.mrf.mxu0
  %v7984 = vadd.f32 %v7851, %v7983
  %v7985 = vpop.f32.mrf.mxu0
  %v7986 = vadd.f32 %v7853, %v7985
  %7987 = vmatmul.bf16.gmra.mxu0 %v5256
  %v7988 = vpop.f32.mrf.mxu0
  %v7989 = vadd.f32 %v7856, %v7988
  %v7990 = vpop.f32.mrf.mxu0
  %v7991 = vadd.f32 %v7858, %v7990
  %7992 = vmatmul.bf16.gmra.mxu0 %v5272
  %v7993 = vpop.f32.mrf.mxu0
  %v7994 = vadd.f32 %v7861, %v7993
  %v7995 = vpop.f32.mrf.mxu0
  %v7996 = vadd.f32 %v7863, %v7995
  %7997 = vmatmul.bf16.gmra.mxu0 %v5288
  %v7998 = vpop.f32.mrf.mxu0
  %v7999 = vadd.f32 %v7866, %v7998
  %v8000 = vpop.f32.mrf.mxu0
  %v8001 = vadd.f32 %v7868, %v8000
  %8002 = vmatmul.bf16.gmra.mxu0 %v5304
  %v8003 = vpop.f32.mrf.mxu0
  %v8004 = vadd.f32 %v7871, %v8003
  %v8005 = vpop.f32.mrf.mxu0
  %v8006 = vadd.f32 %v7873, %v8005
  %8007 = vmatmul.bf16.gmra.mxu0 %v5320
  %v8008 = vpop.f32.mrf.mxu0
  %v8009 = vadd.f32 %v7876, %v8008
  %v8010 = vpop.f32.mrf.mxu0
  %v8011 = vadd.f32 %v7878, %v8010
  %8012 = vmatmul.bf16.gmra.mxu0 %v5336
  %v8013 = vpop.f32.mrf.mxu0
  %v8014 = vadd.f32 %v7881, %v8013
  %v8015 = vpop.f32.mrf.mxu0
  %v8016 = vadd.f32 %v7883, %v8015
  %8017 = vmatmul.bf16.gmra.mxu0 %v5352
  %v8018 = vpop.f32.mrf.mxu0
  %v8019 = vadd.f32 %v7886, %v8018
  %v8020 = vpop.f32.mrf.mxu0
  %v8021 = vadd.f32 %v7888, %v8020
  %8022 = vmatmul.bf16.gmra.mxu0 %v5368
  %v8023 = vpop.f32.mrf.mxu0
  %v8024 = vadd.f32 %v7891, %v8023
  %v8025 = vpop.f32.mrf.mxu0
  %v8026 = vadd.f32 %v7893, %v8025
  %8027 = vmatmul.bf16.gmra.mxu0 %v5384
  %v8028 = vpop.f32.mrf.mxu0
  %v8029 = vadd.f32 %v7896, %v8028
  %v8030 = vpop.f32.mrf.mxu0
  %v8031 = vadd.f32 %v7898, %v8030
  %8032 = vmatmul.bf16.gmra.mxu0 %v5400
  %v8033 = vpop.f32.mrf.mxu0
  %v8034 = vadd.f32 %v7901, %v8033
  %v8035 = vpop.f32.mrf.mxu0
  %8036 = vdwg.mxu0
  %8037 = vmatpush.bf16.msra.mxu0 %v6413
  %8038 = vmatpush.bf16.msra.mxu0 %v6412
  %8039 = vmatpush.bf16.msra.mxu0 %v6411
  %8040 = vmatpush.bf16.msra.mxu0 %v6410
  %8041 = vmatpush.bf16.msra.mxu0 %v6409
  %8042 = vmatpush.bf16.msra.mxu0 %v6408
  %8043 = vmatpush.bf16.msra.mxu0 %v6407
  %8044 = vmatpush.bf16.msra.mxu0 %v6406
  %8045 = vmatmul.bf16.gmra.mxu0 %v5017
  %v8046 = vpop.f32.mrf.mxu0
  %v8047 = vadd.f32 %v7914, %v8046
  %v8048 = vpop.f32.mrf.mxu0
  %v8049 = vadd.f32 %v7916, %v8048
  %8050 = vmatmul.bf16.gmra.mxu0 %v5033
  %v8051 = vpop.f32.mrf.mxu0
  %v8052 = vadd.f32 %v7919, %v8051
  %v8053 = vpop.f32.mrf.mxu0
  %v8054 = vadd.f32 %v7921, %v8053
  %8055 = vmatmul.bf16.gmra.mxu0 %v5049
  %v8056 = vpop.f32.mrf.mxu0
  %v8057 = vadd.f32 %v7924, %v8056
  %v8058 = vpop.f32.mrf.mxu0
  %v8059 = vadd.f32 %v7926, %v8058
  %8060 = vmatmul.bf16.gmra.mxu0 %v5065
  %v8061 = vpop.f32.mrf.mxu0
  %v8062 = vadd.f32 %v7929, %v8061
  %v8063 = vpop.f32.mrf.mxu0
  %v8064 = vadd.f32 %v7931, %v8063
  %8065 = vmatmul.bf16.gmra.mxu0 %v5081
  %v8066 = vpop.f32.mrf.mxu0
  %v8067 = vadd.f32 %v7934, %v8066
  %v8068 = vpop.f32.mrf.mxu0
  %v8069 = vadd.f32 %v7936, %v8068
  %8070 = vmatmul.bf16.gmra.mxu0 %v5097
  %v8071 = vpop.f32.mrf.mxu0
  %v8072 = vadd.f32 %v7939, %v8071
  %v8073 = vpop.f32.mrf.mxu0
  %v8074 = vadd.f32 %v7941, %v8073
  %8075 = vmatmul.bf16.gmra.mxu0 %v5113
  %v8076 = vpop.f32.mrf.mxu0
  %v8077 = vadd.f32 %v7944, %v8076
  %v8078 = vpop.f32.mrf.mxu0
  %v8079 = vadd.f32 %v7946, %v8078
  %8080 = vmatmul.bf16.gmra.mxu0 %v5129
  %v8081 = vpop.f32.mrf.mxu0
  %v8082 = vadd.f32 %v7949, %v8081
  %v8083 = vpop.f32.mrf.mxu0
  %v8084 = vadd.f32 %v7951, %v8083
  %8085 = vmatmul.bf16.gmra.mxu0 %v5145
  %v8086 = vpop.f32.mrf.mxu0
  %v8087 = vadd.f32 %v7954, %v8086
  %v8088 = vpop.f32.mrf.mxu0
  %v8089 = vadd.f32 %v7956, %v8088
  %8090 = vmatmul.bf16.gmra.mxu0 %v5161
  %v8091 = vpop.f32.mrf.mxu0
  %v8092 = vadd.f32 %v7959, %v8091
  %v8093 = vpop.f32.mrf.mxu0
  %v8094 = vadd.f32 %v7961, %v8093
  %8095 = vmatmul.bf16.gmra.mxu0 %v5177
  %v8096 = vpop.f32.mrf.mxu0
  %v8097 = vadd.f32 %v7964, %v8096
  %v8098 = vpop.f32.mrf.mxu0
  %v8099 = vadd.f32 %v7966, %v8098
  %8100 = vmatmul.bf16.gmra.mxu0 %v5193
  %v8101 = vpop.f32.mrf.mxu0
  %v8102 = vadd.f32 %v7969, %v8101
  %v8103 = vpop.f32.mrf.mxu0
  %v8104 = vadd.f32 %v7971, %v8103
  %8105 = vmatmul.bf16.gmra.mxu0 %v5209
  %v8106 = vpop.f32.mrf.mxu0
  %v8107 = vadd.f32 %v7974, %v8106
  %v8108 = vpop.f32.mrf.mxu0
  %v8109 = vadd.f32 %v7976, %v8108
  %8110 = vmatmul.bf16.gmra.mxu0 %v5225
  %v8111 = vpop.f32.mrf.mxu0
  %v8112 = vadd.f32 %v7979, %v8111
  %v8113 = vpop.f32.mrf.mxu0
  %v8114 = vadd.f32 %v7981, %v8113
  %8115 = vmatmul.bf16.gmra.mxu0 %v5241
  %v8116 = vpop.f32.mrf.mxu0
  %v8117 = vadd.f32 %v7984, %v8116
  %v8118 = vpop.f32.mrf.mxu0
  %v8119 = vadd.f32 %v7986, %v8118
  %8120 = vmatmul.bf16.gmra.mxu0 %v5257
  %v8121 = vpop.f32.mrf.mxu0
  %v8122 = vadd.f32 %v7989, %v8121
  %v8123 = vpop.f32.mrf.mxu0
  %v8124 = vadd.f32 %v7991, %v8123
  %8125 = vmatmul.bf16.gmra.mxu0 %v5273
  %v8126 = vpop.f32.mrf.mxu0
  %v8127 = vadd.f32 %v7994, %v8126
  %v8128 = vpop.f32.mrf.mxu0
  %v8129 = vadd.f32 %v7996, %v8128
  %8130 = vmatmul.bf16.gmra.mxu0 %v5289
  %v8131 = vpop.f32.mrf.mxu0
  %v8132 = vadd.f32 %v7999, %v8131
  %v8133 = vpop.f32.mrf.mxu0
  %v8134 = vadd.f32 %v8001, %v8133
  %8135 = vmatmul.bf16.gmra.mxu0 %v5305
  %v8136 = vpop.f32.mrf.mxu0
  %v8137 = vadd.f32 %v8004, %v8136
  %v8138 = vpop.f32.mrf.mxu0
  %v8139 = vadd.f32 %v8006, %v8138
  %8140 = vmatmul.bf16.gmra.mxu0 %v5321
  %v8141 = vpop.f32.mrf.mxu0
  %v8142 = vadd.f32 %v8009, %v8141
  %v8143 = vpop.f32.mrf.mxu0
  %v8144 = vadd.f32 %v8011, %v8143
  %8145 = vmatmul.bf16.gmra.mxu0 %v5337
  %v8146 = vpop.f32.mrf.mxu0
  %v8147 = vadd.f32 %v8014, %v8146
  %v8148 = vpop.f32.mrf.mxu0
  %v8149 = vadd.f32 %v8016, %v8148
  %8150 = vmatmul.bf16.gmra.mxu0 %v5353
  %v8151 = vpop.f32.mrf.mxu0
  %v8152 = vadd.f32 %v8019, %v8151
  %v8153 = vpop.f32.mrf.mxu0
  %v8154 = vadd.f32 %v8021, %v8153
  %8155 = vmatmul.bf16.gmra.mxu0 %v5369
  %v8156 = vpop.f32.mrf.mxu0
  %v8157 = vadd.f32 %v8024, %v8156
  %v8158 = vpop.f32.mrf.mxu0
  %v8159 = vadd.f32 %v8026, %v8158
  %8160 = vmatmul.bf16.gmra.mxu0 %v5385
  %v8161 = vpop.f32.mrf.mxu0
  %v8162 = vadd.f32 %v8029, %v8161
  %v8163 = vpop.f32.mrf.mxu0
  %v8164 = vadd.f32 %v8031, %v8163
  %8165 = vmatmul.bf16.gmra.mxu0 %v5401
  %v8166 = vpop.f32.mrf.mxu0
  %v8167 = vadd.f32 %v8034, %v8166
  %v8168 = vpop.f32.mrf.mxu0
  %8169 = vdwg.mxu0
  %8170 = vmatpush.bf16.msra.mxu0 %v6421
  %8171 = vmatpush.bf16.msra.mxu0 %v6420
  %8172 = vmatpush.bf16.msra.mxu0 %v6419
  %8173 = vmatpush.bf16.msra.mxu0 %v6418
  %8174 = vmatpush.bf16.msra.mxu0 %v6417
  %8175 = vmatpush.bf16.msra.mxu0 %v6416
  %8176 = vmatpush.bf16.msra.mxu0 %v6415
  %8177 = vmatpush.bf16.msra.mxu0 %v6414
  %8178 = vmatmul.bf16.gmra.mxu0 %v5018
  %v8179 = vpop.f32.mrf.mxu0
  %v8180 = vadd.f32 %v8047, %v8179
  %v8181 = vpop.f32.mrf.mxu0
  %v8182 = vadd.f32 %v8049, %v8181
  %8183 = vmatmul.bf16.gmra.mxu0 %v5034
  %v8184 = vpop.f32.mrf.mxu0
  %v8185 = vadd.f32 %v8052, %v8184
  %v8186 = vpop.f32.mrf.mxu0
  %v8187 = vadd.f32 %v8054, %v8186
  %8188 = vmatmul.bf16.gmra.mxu0 %v5050
  %v8189 = vpop.f32.mrf.mxu0
  %v8190 = vadd.f32 %v8057, %v8189
  %v8191 = vpop.f32.mrf.mxu0
  %v8192 = vadd.f32 %v8059, %v8191
  %8193 = vmatmul.bf16.gmra.mxu0 %v5066
  %v8194 = vpop.f32.mrf.mxu0
  %v8195 = vadd.f32 %v8062, %v8194
  %v8196 = vpop.f32.mrf.mxu0
  %v8197 = vadd.f32 %v8064, %v8196
  %8198 = vmatmul.bf16.gmra.mxu0 %v5082
  %v8199 = vpop.f32.mrf.mxu0
  %v8200 = vadd.f32 %v8067, %v8199
  %v8201 = vpop.f32.mrf.mxu0
  %v8202 = vadd.f32 %v8069, %v8201
  %8203 = vmatmul.bf16.gmra.mxu0 %v5098
  %v8204 = vpop.f32.mrf.mxu0
  %v8205 = vadd.f32 %v8072, %v8204
  %v8206 = vpop.f32.mrf.mxu0
  %v8207 = vadd.f32 %v8074, %v8206
  %8208 = vmatmul.bf16.gmra.mxu0 %v5114
  %v8209 = vpop.f32.mrf.mxu0
  %v8210 = vadd.f32 %v8077, %v8209
  %v8211 = vpop.f32.mrf.mxu0
  %v8212 = vadd.f32 %v8079, %v8211
  %8213 = vmatmul.bf16.gmra.mxu0 %v5130
  %v8214 = vpop.f32.mrf.mxu0
  %v8215 = vadd.f32 %v8082, %v8214
  %v8216 = vpop.f32.mrf.mxu0
  %v8217 = vadd.f32 %v8084, %v8216
  %8218 = vmatmul.bf16.gmra.mxu0 %v5146
  %v8219 = vpop.f32.mrf.mxu0
  %v8220 = vadd.f32 %v8087, %v8219
  %v8221 = vpop.f32.mrf.mxu0
  %v8222 = vadd.f32 %v8089, %v8221
  %8223 = vmatmul.bf16.gmra.mxu0 %v5162
  %v8224 = vpop.f32.mrf.mxu0
  %v8225 = vadd.f32 %v8092, %v8224
  %v8226 = vpop.f32.mrf.mxu0
  %v8227 = vadd.f32 %v8094, %v8226
  %8228 = vmatmul.bf16.gmra.mxu0 %v5178
  %v8229 = vpop.f32.mrf.mxu0
  %v8230 = vadd.f32 %v8097, %v8229
  %v8231 = vpop.f32.mrf.mxu0
  %v8232 = vadd.f32 %v8099, %v8231
  %8233 = vmatmul.bf16.gmra.mxu0 %v5194
  %v8234 = vpop.f32.mrf.mxu0
  %v8235 = vadd.f32 %v8102, %v8234
  %v8236 = vpop.f32.mrf.mxu0
  %v8237 = vadd.f32 %v8104, %v8236
  %8238 = vmatmul.bf16.gmra.mxu0 %v5210
  %v8239 = vpop.f32.mrf.mxu0
  %v8240 = vadd.f32 %v8107, %v8239
  %v8241 = vpop.f32.mrf.mxu0
  %v8242 = vadd.f32 %v8109, %v8241
  %8243 = vmatmul.bf16.gmra.mxu0 %v5226
  %v8244 = vpop.f32.mrf.mxu0
  %v8245 = vadd.f32 %v8112, %v8244
  %v8246 = vpop.f32.mrf.mxu0
  %v8247 = vadd.f32 %v8114, %v8246
  %8248 = vmatmul.bf16.gmra.mxu0 %v5242
  %v8249 = vpop.f32.mrf.mxu0
  %v8250 = vadd.f32 %v8117, %v8249
  %v8251 = vpop.f32.mrf.mxu0
  %v8252 = vadd.f32 %v8119, %v8251
  %8253 = vmatmul.bf16.gmra.mxu0 %v5258
  %v8254 = vpop.f32.mrf.mxu0
  %v8255 = vadd.f32 %v8122, %v8254
  %v8256 = vpop.f32.mrf.mxu0
  %v8257 = vadd.f32 %v8124, %v8256
  %8258 = vmatmul.bf16.gmra.mxu0 %v5274
  %v8259 = vpop.f32.mrf.mxu0
  %v8260 = vadd.f32 %v8127, %v8259
  %v8261 = vpop.f32.mrf.mxu0
  %v8262 = vadd.f32 %v8129, %v8261
  %8263 = vmatmul.bf16.gmra.mxu0 %v5290
  %v8264 = vpop.f32.mrf.mxu0
  %v8265 = vadd.f32 %v8132, %v8264
  %v8266 = vpop.f32.mrf.mxu0
  %v8267 = vadd.f32 %v8134, %v8266
  %8268 = vmatmul.bf16.gmra.mxu0 %v5306
  %v8269 = vpop.f32.mrf.mxu0
  %v8270 = vadd.f32 %v8137, %v8269
  %v8271 = vpop.f32.mrf.mxu0
  %v8272 = vadd.f32 %v8139, %v8271
  %8273 = vmatmul.bf16.gmra.mxu0 %v5322
  %v8274 = vpop.f32.mrf.mxu0
  %v8275 = vadd.f32 %v8142, %v8274
  %v8276 = vpop.f32.mrf.mxu0
  %v8277 = vadd.f32 %v8144, %v8276
  %8278 = vmatmul.bf16.gmra.mxu0 %v5338
  %v8279 = vpop.f32.mrf.mxu0
  %v8280 = vadd.f32 %v8147, %v8279
  %v8281 = vpop.f32.mrf.mxu0
  %v8282 = vadd.f32 %v8149, %v8281
  %8283 = vmatmul.bf16.gmra.mxu0 %v5354
  %v8284 = vpop.f32.mrf.mxu0
  %v8285 = vadd.f32 %v8152, %v8284
  %v8286 = vpop.f32.mrf.mxu0
  %v8287 = vadd.f32 %v8154, %v8286
  %8288 = vmatmul.bf16.gmra.mxu0 %v5370
  %v8289 = vpop.f32.mrf.mxu0
  %v8290 = vadd.f32 %v8157, %v8289
  %v8291 = vpop.f32.mrf.mxu0
  %v8292 = vadd.f32 %v8159, %v8291
  %8293 = vmatmul.bf16.gmra.mxu0 %v5386
  %v8294 = vpop.f32.mrf.mxu0
  %v8295 = vadd.f32 %v8162, %v8294
  %v8296 = vpop.f32.mrf.mxu0
  %v8297 = vadd.f32 %v8164, %v8296
  %8298 = vmatmul.bf16.gmra.mxu0 %v5402
  %v8299 = vpop.f32.mrf.mxu0
  %v8300 = vadd.f32 %v8167, %v8299
  %v8301 = vpop.f32.mrf.mxu0
  %8302 = vdwg.mxu0
  %8303 = vmatpush.bf16.msra.mxu0 %v6429
  %8304 = vmatpush.bf16.msra.mxu0 %v6428
  %8305 = vmatpush.bf16.msra.mxu0 %v6427
  %8306 = vmatpush.bf16.msra.mxu0 %v6426
  %8307 = vmatpush.bf16.msra.mxu0 %v6425
  %8308 = vmatpush.bf16.msra.mxu0 %v6424
  %8309 = vmatpush.bf16.msra.mxu0 %v6423
  %8310 = vmatpush.bf16.msra.mxu0 %v6422
  %8311 = vmatmul.bf16.gmra.mxu0 %v5019
  %v8312 = vpop.f32.mrf.mxu0
  %v8313 = vadd.f32 %v8180, %v8312
  %v8314 = vpop.f32.mrf.mxu0
  %v8315 = vadd.f32 %v8182, %v8314
  %8316 = vmatmul.bf16.gmra.mxu0 %v5035
  %v8317 = vpop.f32.mrf.mxu0
  %v8318 = vadd.f32 %v8185, %v8317
  %v8319 = vpop.f32.mrf.mxu0
  %v8320 = vadd.f32 %v8187, %v8319
  %8321 = vmatmul.bf16.gmra.mxu0 %v5051
  %v8322 = vpop.f32.mrf.mxu0
  %v8323 = vadd.f32 %v8190, %v8322
  %v8324 = vpop.f32.mrf.mxu0
  %v8325 = vadd.f32 %v8192, %v8324
  %8326 = vmatmul.bf16.gmra.mxu0 %v5067
  %v8327 = vpop.f32.mrf.mxu0
  %v8328 = vadd.f32 %v8195, %v8327
  %v8329 = vpop.f32.mrf.mxu0
  %v8330 = vadd.f32 %v8197, %v8329
  %8331 = vmatmul.bf16.gmra.mxu0 %v5083
  %v8332 = vpop.f32.mrf.mxu0
  %v8333 = vadd.f32 %v8200, %v8332
  %v8334 = vpop.f32.mrf.mxu0
  %v8335 = vadd.f32 %v8202, %v8334
  %8336 = vmatmul.bf16.gmra.mxu0 %v5099
  %v8337 = vpop.f32.mrf.mxu0
  %v8338 = vadd.f32 %v8205, %v8337
  %v8339 = vpop.f32.mrf.mxu0
  %v8340 = vadd.f32 %v8207, %v8339
  %8341 = vmatmul.bf16.gmra.mxu0 %v5115
  %v8342 = vpop.f32.mrf.mxu0
  %v8343 = vadd.f32 %v8210, %v8342
  %v8344 = vpop.f32.mrf.mxu0
  %v8345 = vadd.f32 %v8212, %v8344
  %8346 = vmatmul.bf16.gmra.mxu0 %v5131
  %v8347 = vpop.f32.mrf.mxu0
  %v8348 = vadd.f32 %v8215, %v8347
  %v8349 = vpop.f32.mrf.mxu0
  %v8350 = vadd.f32 %v8217, %v8349
  %8351 = vmatmul.bf16.gmra.mxu0 %v5147
  %v8352 = vpop.f32.mrf.mxu0
  %v8353 = vadd.f32 %v8220, %v8352
  %v8354 = vpop.f32.mrf.mxu0
  %v8355 = vadd.f32 %v8222, %v8354
  %8356 = vmatmul.bf16.gmra.mxu0 %v5163
  %v8357 = vpop.f32.mrf.mxu0
  %v8358 = vadd.f32 %v8225, %v8357
  %v8359 = vpop.f32.mrf.mxu0
  %v8360 = vadd.f32 %v8227, %v8359
  %8361 = vmatmul.bf16.gmra.mxu0 %v5179
  %v8362 = vpop.f32.mrf.mxu0
  %v8363 = vadd.f32 %v8230, %v8362
  %v8364 = vpop.f32.mrf.mxu0
  %v8365 = vadd.f32 %v8232, %v8364
  %8366 = vmatmul.bf16.gmra.mxu0 %v5195
  %v8367 = vpop.f32.mrf.mxu0
  %v8368 = vadd.f32 %v8235, %v8367
  %v8369 = vpop.f32.mrf.mxu0
  %v8370 = vadd.f32 %v8237, %v8369
  %8371 = vmatmul.bf16.gmra.mxu0 %v5211
  %v8372 = vpop.f32.mrf.mxu0
  %v8373 = vadd.f32 %v8240, %v8372
  %v8374 = vpop.f32.mrf.mxu0
  %v8375 = vadd.f32 %v8242, %v8374
  %8376 = vmatmul.bf16.gmra.mxu0 %v5227
  %v8377 = vpop.f32.mrf.mxu0
  %v8378 = vadd.f32 %v8245, %v8377
  %v8379 = vpop.f32.mrf.mxu0
  %v8380 = vadd.f32 %v8247, %v8379
  %8381 = vmatmul.bf16.gmra.mxu0 %v5243
  %v8382 = vpop.f32.mrf.mxu0
  %v8383 = vadd.f32 %v8250, %v8382
  %v8384 = vpop.f32.mrf.mxu0
  %v8385 = vadd.f32 %v8252, %v8384
  %8386 = vmatmul.bf16.gmra.mxu0 %v5259
  %v8387 = vpop.f32.mrf.mxu0
  %v8388 = vadd.f32 %v8255, %v8387
  %v8389 = vpop.f32.mrf.mxu0
  %v8390 = vadd.f32 %v8257, %v8389
  %8391 = vmatmul.bf16.gmra.mxu0 %v5275
  %v8392 = vpop.f32.mrf.mxu0
  %v8393 = vadd.f32 %v8260, %v8392
  %v8394 = vpop.f32.mrf.mxu0
  %v8395 = vadd.f32 %v8262, %v8394
  %8396 = vmatmul.bf16.gmra.mxu0 %v5291
  %v8397 = vpop.f32.mrf.mxu0
  %v8398 = vadd.f32 %v8265, %v8397
  %v8399 = vpop.f32.mrf.mxu0
  %v8400 = vadd.f32 %v8267, %v8399
  %8401 = vmatmul.bf16.gmra.mxu0 %v5307
  %v8402 = vpop.f32.mrf.mxu0
  %v8403 = vadd.f32 %v8270, %v8402
  %v8404 = vpop.f32.mrf.mxu0
  %v8405 = vadd.f32 %v8272, %v8404
  %8406 = vmatmul.bf16.gmra.mxu0 %v5323
  %v8407 = vpop.f32.mrf.mxu0
  %v8408 = vadd.f32 %v8275, %v8407
  %v8409 = vpop.f32.mrf.mxu0
  %v8410 = vadd.f32 %v8277, %v8409
  %8411 = vmatmul.bf16.gmra.mxu0 %v5339
  %v8412 = vpop.f32.mrf.mxu0
  %v8413 = vadd.f32 %v8280, %v8412
  %v8414 = vpop.f32.mrf.mxu0
  %v8415 = vadd.f32 %v8282, %v8414
  %8416 = vmatmul.bf16.gmra.mxu0 %v5355
  %v8417 = vpop.f32.mrf.mxu0
  %v8418 = vadd.f32 %v8285, %v8417
  %v8419 = vpop.f32.mrf.mxu0
  %v8420 = vadd.f32 %v8287, %v8419
  %8421 = vmatmul.bf16.gmra.mxu0 %v5371
  %v8422 = vpop.f32.mrf.mxu0
  %v8423 = vadd.f32 %v8290, %v8422
  %v8424 = vpop.f32.mrf.mxu0
  %v8425 = vadd.f32 %v8292, %v8424
  %8426 = vmatmul.bf16.gmra.mxu0 %v5387
  %v8427 = vpop.f32.mrf.mxu0
  %v8428 = vadd.f32 %v8295, %v8427
  %v8429 = vpop.f32.mrf.mxu0
  %v8430 = vadd.f32 %v8297, %v8429
  %8431 = vmatmul.bf16.gmra.mxu0 %v5403
  %v8432 = vpop.f32.mrf.mxu0
  %v8433 = vadd.f32 %v8300, %v8432
  %v8434 = vpop.f32.mrf.mxu0
  %8435 = vdwg.mxu0
  %8436 = vmatpush.bf16.msra.mxu0 %v6437
  %8437 = vmatpush.bf16.msra.mxu0 %v6436
  %8438 = vmatpush.bf16.msra.mxu0 %v6435
  %8439 = vmatpush.bf16.msra.mxu0 %v6434
  %8440 = vmatpush.bf16.msra.mxu0 %v6433
  %8441 = vmatpush.bf16.msra.mxu0 %v6432
  %8442 = vmatpush.bf16.msra.mxu0 %v6431
  %8443 = vmatpush.bf16.msra.mxu0 %v6430
  %8444 = vmatmul.bf16.gmra.mxu0 %v5020
  %v8445 = vpop.f32.mrf.mxu0
  %v8446 = vadd.f32 %v8313, %v8445
  %v8447 = vpop.f32.mrf.mxu0
  %v8448 = vadd.f32 %v8315, %v8447
  %8449 = vmatmul.bf16.gmra.mxu0 %v5036
  %v8450 = vpop.f32.mrf.mxu0
  %v8451 = vadd.f32 %v8318, %v8450
  %v8452 = vpop.f32.mrf.mxu0
  %v8453 = vadd.f32 %v8320, %v8452
  %8454 = vmatmul.bf16.gmra.mxu0 %v5052
  %v8455 = vpop.f32.mrf.mxu0
  %v8456 = vadd.f32 %v8323, %v8455
  %v8457 = vpop.f32.mrf.mxu0
  %v8458 = vadd.f32 %v8325, %v8457
  %8459 = vmatmul.bf16.gmra.mxu0 %v5068
  %v8460 = vpop.f32.mrf.mxu0
  %v8461 = vadd.f32 %v8328, %v8460
  %v8462 = vpop.f32.mrf.mxu0
  %v8463 = vadd.f32 %v8330, %v8462
  %8464 = vmatmul.bf16.gmra.mxu0 %v5084
  %v8465 = vpop.f32.mrf.mxu0
  %v8466 = vadd.f32 %v8333, %v8465
  %v8467 = vpop.f32.mrf.mxu0
  %v8468 = vadd.f32 %v8335, %v8467
  %8469 = vmatmul.bf16.gmra.mxu0 %v5100
  %v8470 = vpop.f32.mrf.mxu0
  %v8471 = vadd.f32 %v8338, %v8470
  %v8472 = vpop.f32.mrf.mxu0
  %v8473 = vadd.f32 %v8340, %v8472
  %8474 = vmatmul.bf16.gmra.mxu0 %v5116
  %v8475 = vpop.f32.mrf.mxu0
  %v8476 = vadd.f32 %v8343, %v8475
  %v8477 = vpop.f32.mrf.mxu0
  %v8478 = vadd.f32 %v8345, %v8477
  %8479 = vmatmul.bf16.gmra.mxu0 %v5132
  %v8480 = vpop.f32.mrf.mxu0
  %v8481 = vadd.f32 %v8348, %v8480
  %v8482 = vpop.f32.mrf.mxu0
  %v8483 = vadd.f32 %v8350, %v8482
  %8484 = vmatmul.bf16.gmra.mxu0 %v5148
  %v8485 = vpop.f32.mrf.mxu0
  %v8486 = vadd.f32 %v8353, %v8485
  %v8487 = vpop.f32.mrf.mxu0
  %v8488 = vadd.f32 %v8355, %v8487
  %8489 = vmatmul.bf16.gmra.mxu0 %v5164
  %v8490 = vpop.f32.mrf.mxu0
  %v8491 = vadd.f32 %v8358, %v8490
  %v8492 = vpop.f32.mrf.mxu0
  %v8493 = vadd.f32 %v8360, %v8492
  %8494 = vmatmul.bf16.gmra.mxu0 %v5180
  %v8495 = vpop.f32.mrf.mxu0
  %v8496 = vadd.f32 %v8363, %v8495
  %v8497 = vpop.f32.mrf.mxu0
  %v8498 = vadd.f32 %v8365, %v8497
  %8499 = vmatmul.bf16.gmra.mxu0 %v5196
  %v8500 = vpop.f32.mrf.mxu0
  %v8501 = vadd.f32 %v8368, %v8500
  %v8502 = vpop.f32.mrf.mxu0
  %v8503 = vadd.f32 %v8370, %v8502
  %8504 = vmatmul.bf16.gmra.mxu0 %v5212
  %v8505 = vpop.f32.mrf.mxu0
  %v8506 = vadd.f32 %v8373, %v8505
  %v8507 = vpop.f32.mrf.mxu0
  %v8508 = vadd.f32 %v8375, %v8507
  %8509 = vmatmul.bf16.gmra.mxu0 %v5228
  %v8510 = vpop.f32.mrf.mxu0
  %v8511 = vadd.f32 %v8378, %v8510
  %v8512 = vpop.f32.mrf.mxu0
  %v8513 = vadd.f32 %v8380, %v8512
  %8514 = vmatmul.bf16.gmra.mxu0 %v5244
  %v8515 = vpop.f32.mrf.mxu0
  %v8516 = vadd.f32 %v8383, %v8515
  %v8517 = vpop.f32.mrf.mxu0
  %v8518 = vadd.f32 %v8385, %v8517
  %8519 = vmatmul.bf16.gmra.mxu0 %v5260
  %v8520 = vpop.f32.mrf.mxu0
  %v8521 = vadd.f32 %v8388, %v8520
  %v8522 = vpop.f32.mrf.mxu0
  %v8523 = vadd.f32 %v8390, %v8522
  %8524 = vmatmul.bf16.gmra.mxu0 %v5276
  %v8525 = vpop.f32.mrf.mxu0
  %v8526 = vadd.f32 %v8393, %v8525
  %v8527 = vpop.f32.mrf.mxu0
  %v8528 = vadd.f32 %v8395, %v8527
  %8529 = vmatmul.bf16.gmra.mxu0 %v5292
  %v8530 = vpop.f32.mrf.mxu0
  %v8531 = vadd.f32 %v8398, %v8530
  %v8532 = vpop.f32.mrf.mxu0
  %v8533 = vadd.f32 %v8400, %v8532
  %8534 = vmatmul.bf16.gmra.mxu0 %v5308
  %v8535 = vpop.f32.mrf.mxu0
  %v8536 = vadd.f32 %v8403, %v8535
  %v8537 = vpop.f32.mrf.mxu0
  %v8538 = vadd.f32 %v8405, %v8537
  %8539 = vmatmul.bf16.gmra.mxu0 %v5324
  %v8540 = vpop.f32.mrf.mxu0
  %v8541 = vadd.f32 %v8408, %v8540
  %v8542 = vpop.f32.mrf.mxu0
  %v8543 = vadd.f32 %v8410, %v8542
  %8544 = vmatmul.bf16.gmra.mxu0 %v5340
  %v8545 = vpop.f32.mrf.mxu0
  %v8546 = vadd.f32 %v8413, %v8545
  %v8547 = vpop.f32.mrf.mxu0
  %v8548 = vadd.f32 %v8415, %v8547
  %8549 = vmatmul.bf16.gmra.mxu0 %v5356
  %v8550 = vpop.f32.mrf.mxu0
  %v8551 = vadd.f32 %v8418, %v8550
  %v8552 = vpop.f32.mrf.mxu0
  %v8553 = vadd.f32 %v8420, %v8552
  %8554 = vmatmul.bf16.gmra.mxu0 %v5372
  %v8555 = vpop.f32.mrf.mxu0
  %v8556 = vadd.f32 %v8423, %v8555
  %v8557 = vpop.f32.mrf.mxu0
  %v8558 = vadd.f32 %v8425, %v8557
  %8559 = vmatmul.bf16.gmra.mxu0 %v5388
  %v8560 = vpop.f32.mrf.mxu0
  %v8561 = vadd.f32 %v8428, %v8560
  %v8562 = vpop.f32.mrf.mxu0
  %v8563 = vadd.f32 %v8430, %v8562
  %8564 = vmatmul.bf16.gmra.mxu0 %v5404
  %v8565 = vpop.f32.mrf.mxu0
  %v8566 = vadd.f32 %v8433, %v8565
  %v8567 = vpop.f32.mrf.mxu0
  %8568 = vdwg.mxu0
  %8569 = vmatpush.bf16.msra.mxu0 %v6445
  %8570 = vmatpush.bf16.msra.mxu0 %v6444
  %8571 = vmatpush.bf16.msra.mxu0 %v6443
  %8572 = vmatpush.bf16.msra.mxu0 %v6442
  %8573 = vmatpush.bf16.msra.mxu0 %v6441
  %8574 = vmatpush.bf16.msra.mxu0 %v6440
  %8575 = vmatpush.bf16.msra.mxu0 %v6439
  %8576 = vmatpush.bf16.msra.mxu0 %v6438
  %8577 = vmatmul.bf16.gmra.mxu0 %v5021
  %v8578 = vpop.f32.mrf.mxu0
  %v8579 = vadd.f32 %v8446, %v8578
  %v8580 = vpop.f32.mrf.mxu0
  %v8581 = vadd.f32 %v8448, %v8580
  %8582 = vmatmul.bf16.gmra.mxu0 %v5037
  %v8583 = vpop.f32.mrf.mxu0
  %v8584 = vadd.f32 %v8451, %v8583
  %v8585 = vpop.f32.mrf.mxu0
  %v8586 = vadd.f32 %v8453, %v8585
  %8587 = vmatmul.bf16.gmra.mxu0 %v5053
  %v8588 = vpop.f32.mrf.mxu0
  %v8589 = vadd.f32 %v8456, %v8588
  %v8590 = vpop.f32.mrf.mxu0
  %v8591 = vadd.f32 %v8458, %v8590
  %8592 = vmatmul.bf16.gmra.mxu0 %v5069
  %v8593 = vpop.f32.mrf.mxu0
  %v8594 = vadd.f32 %v8461, %v8593
  %v8595 = vpop.f32.mrf.mxu0
  %v8596 = vadd.f32 %v8463, %v8595
  %8597 = vmatmul.bf16.gmra.mxu0 %v5085
  %v8598 = vpop.f32.mrf.mxu0
  %v8599 = vadd.f32 %v8466, %v8598
  %v8600 = vpop.f32.mrf.mxu0
  %v8601 = vadd.f32 %v8468, %v8600
  %8602 = vmatmul.bf16.gmra.mxu0 %v5101
  %v8603 = vpop.f32.mrf.mxu0
  %v8604 = vadd.f32 %v8471, %v8603
  %v8605 = vpop.f32.mrf.mxu0
  %v8606 = vadd.f32 %v8473, %v8605
  %8607 = vmatmul.bf16.gmra.mxu0 %v5117
  %v8608 = vpop.f32.mrf.mxu0
  %v8609 = vadd.f32 %v8476, %v8608
  %v8610 = vpop.f32.mrf.mxu0
  %v8611 = vadd.f32 %v8478, %v8610
  %8612 = vmatmul.bf16.gmra.mxu0 %v5133
  %v8613 = vpop.f32.mrf.mxu0
  %v8614 = vadd.f32 %v8481, %v8613
  %v8615 = vpop.f32.mrf.mxu0
  %v8616 = vadd.f32 %v8483, %v8615
  %8617 = vmatmul.bf16.gmra.mxu0 %v5149
  %v8618 = vpop.f32.mrf.mxu0
  %v8619 = vadd.f32 %v8486, %v8618
  %v8620 = vpop.f32.mrf.mxu0
  %v8621 = vadd.f32 %v8488, %v8620
  %8622 = vmatmul.bf16.gmra.mxu0 %v5165
  %v8623 = vpop.f32.mrf.mxu0
  %v8624 = vadd.f32 %v8491, %v8623
  %v8625 = vpop.f32.mrf.mxu0
  %v8626 = vadd.f32 %v8493, %v8625
  %8627 = vmatmul.bf16.gmra.mxu0 %v5181
  %v8628 = vpop.f32.mrf.mxu0
  %v8629 = vadd.f32 %v8496, %v8628
  %v8630 = vpop.f32.mrf.mxu0
  %v8631 = vadd.f32 %v8498, %v8630
  %8632 = vmatmul.bf16.gmra.mxu0 %v5197
  %v8633 = vpop.f32.mrf.mxu0
  %v8634 = vadd.f32 %v8501, %v8633
  %v8635 = vpop.f32.mrf.mxu0
  %v8636 = vadd.f32 %v8503, %v8635
  %8637 = vmatmul.bf16.gmra.mxu0 %v5213
  %v8638 = vpop.f32.mrf.mxu0
  %v8639 = vadd.f32 %v8506, %v8638
  %v8640 = vpop.f32.mrf.mxu0
  %v8641 = vadd.f32 %v8508, %v8640
  %8642 = vmatmul.bf16.gmra.mxu0 %v5229
  %v8643 = vpop.f32.mrf.mxu0
  %v8644 = vadd.f32 %v8511, %v8643
  %v8645 = vpop.f32.mrf.mxu0
  %v8646 = vadd.f32 %v8513, %v8645
  %8647 = vmatmul.bf16.gmra.mxu0 %v5245
  %v8648 = vpop.f32.mrf.mxu0
  %v8649 = vadd.f32 %v8516, %v8648
  %v8650 = vpop.f32.mrf.mxu0
  %v8651 = vadd.f32 %v8518, %v8650
  %8652 = vmatmul.bf16.gmra.mxu0 %v5261
  %v8653 = vpop.f32.mrf.mxu0
  %v8654 = vadd.f32 %v8521, %v8653
  %v8655 = vpop.f32.mrf.mxu0
  %v8656 = vadd.f32 %v8523, %v8655
  %8657 = vmatmul.bf16.gmra.mxu0 %v5277
  %v8658 = vpop.f32.mrf.mxu0
  %v8659 = vadd.f32 %v8526, %v8658
  %v8660 = vpop.f32.mrf.mxu0
  %v8661 = vadd.f32 %v8528, %v8660
  %8662 = vmatmul.bf16.gmra.mxu0 %v5293
  %v8663 = vpop.f32.mrf.mxu0
  %v8664 = vadd.f32 %v8531, %v8663
  %v8665 = vpop.f32.mrf.mxu0
  %v8666 = vadd.f32 %v8533, %v8665
  %8667 = vmatmul.bf16.gmra.mxu0 %v5309
  %v8668 = vpop.f32.mrf.mxu0
  %v8669 = vadd.f32 %v8536, %v8668
  %v8670 = vpop.f32.mrf.mxu0
  %v8671 = vadd.f32 %v8538, %v8670
  %8672 = vmatmul.bf16.gmra.mxu0 %v5325
  %v8673 = vpop.f32.mrf.mxu0
  %v8674 = vadd.f32 %v8541, %v8673
  %v8675 = vpop.f32.mrf.mxu0
  %v8676 = vadd.f32 %v8543, %v8675
  %8677 = vmatmul.bf16.gmra.mxu0 %v5341
  %v8678 = vpop.f32.mrf.mxu0
  %v8679 = vadd.f32 %v8546, %v8678
  %v8680 = vpop.f32.mrf.mxu0
  %v8681 = vadd.f32 %v8548, %v8680
  %8682 = vmatmul.bf16.gmra.mxu0 %v5357
  %v8683 = vpop.f32.mrf.mxu0
  %v8684 = vadd.f32 %v8551, %v8683
  %v8685 = vpop.f32.mrf.mxu0
  %v8686 = vadd.f32 %v8553, %v8685
  %8687 = vmatmul.bf16.gmra.mxu0 %v5373
  %v8688 = vpop.f32.mrf.mxu0
  %v8689 = vadd.f32 %v8556, %v8688
  %v8690 = vpop.f32.mrf.mxu0
  %v8691 = vadd.f32 %v8558, %v8690
  %8692 = vmatmul.bf16.gmra.mxu0 %v5389
  %v8693 = vpop.f32.mrf.mxu0
  %v8694 = vadd.f32 %v8561, %v8693
  %v8695 = vpop.f32.mrf.mxu0
  %v8696 = vadd.f32 %v8563, %v8695
  %8697 = vmatmul.bf16.gmra.mxu0 %v5405
  %v8698 = vpop.f32.mrf.mxu0
  %v8699 = vadd.f32 %v8566, %v8698
  %v8700 = vpop.f32.mrf.mxu0
  %8701 = vdwg.mxu0
  %v8702 = vmax.f32 %v8579, 0.0
  %v8703 = vmax.f32 %v8581, 0.0
  %v8704 = vmax.f32 %v8584, 0.0
  %v8705 = vmax.f32 %v8586, 0.0
  %v8706 = vmax.f32 %v8589, 0.0
  %v8707 = vmax.f32 %v8591, 0.0
  %v8708 = vmax.f32 %v8594, 0.0
  %v8709 = vmax.f32 %v8596, 0.0
  %v8710 = vmax.f32 %v8599, 0.0
  %v8711 = vmax.f32 %v8601, 0.0
  %v8712 = vmax.f32 %v8604, 0.0
  %v8713 = vmax.f32 %v8606, 0.0
  %v8714 = vmax.f32 %v8609, 0.0
  %v8715 = vmax.f32 %v8611, 0.0
  %v8716 = vmax.f32 %v8614, 0.0
  %v8717 = vmax.f32 %v8616, 0.0
  %v8718 = vmax.f32 %v8619, 0.0
  %v8719 = vmax.f32 %v8621, 0.0
  %v8720 = vmax.f32 %v8624, 0.0
  %v8721 = vmax.f32 %v8626, 0.0
  %v8722 = vmax.f32 %v8629, 0.0
  %v8723 = vmax.f32 %v8631, 0.0
  %v8724 = vmax.f32 %v8634, 0.0
  %v8725 = vmax.f32 %v8636, 0.0
  %v8726 = vmax.f32 %v8639, 0.0
  %v8727 = vmax.f32 %v8641, 0.0
  %v8728 = vmax.f32 %v8644, 0.0
  %v8729 = vmax.f32 %v8646, 0.0
  %v8730 = vmax.f32 %v8649, 0.0
  %v8731 = vmax.f32 %v8651, 0.0
  %v8732 = vmax.f32 %v8654, 0.0
  %v8733 = vmax.f32 %v8656, 0.0
  %v8734 = vmax.f32 %v8659, 0.0
  %v8735 = vmax.f32 %v8661, 0.0
  %v8736 = vmax.f32 %v8664, 0.0
  %v8737 = vmax.f32 %v8666, 0.0
  %v8738 = vmax.f32 %v8669, 0.0
  %v8739 = vmax.f32 %v8671, 0.0
  %v8740 = vmax.f32 %v8674, 0.0
  %v8741 = vmax.f32 %v8676, 0.0
  %v8742 = vmax.f32 %v8679, 0.0
  %v8743 = vmax.f32 %v8681, 0.0
  %v8744 = vmax.f32 %v8684, 0.0
  %v8745 = vmax.f32 %v8686, 0.0
  %v8746 = vmax.f32 %v8689, 0.0
  %v8747 = vmax.f32 %v8691, 0.0
  %v8748 = vmax.f32 %v8694, 0.0
  %v8749 = vmax.f32 %v8696, 0.0
  %v8750 = vmax.f32 %v8699, 0.0
  %v8751 = vpack.c.bf16 %v8702, %v8702
  %v8752 = vpack.c.bf16 %v8703, %v8703
  %v8753 = vpack.c.bf16 %v8704, %v8704
  %v8754 = vpack.c.bf16 %v8705, %v8705
  %v8755 = vpack.c.bf16 %v8706, %v8706
  %v8756 = vpack.c.bf16 %v8707, %v8707
  %v8757 = vpack.c.bf16 %v8708, %v8708
  %v8758 = vpack.c.bf16 %v8709, %v8709
  %v8759 = vpack.c.bf16 %v8710, %v8710
  %v8760 = vpack.c.bf16 %v8711, %v8711
  %v8761 = vpack.c.bf16 %v8712, %v8712
  %v8762 = vpack.c.bf16 %v8713, %v8713
  %v8763 = vpack.c.bf16 %v8714, %v8714
  %v8764 = vpack.c.bf16 %v8715, %v8715
  %v8765 = vpack.c.bf16 %v8716, %v8716
  %v8766 = vpack.c.bf16 %v8717, %v8717
  %v8767 = vpack.c.bf16 %v8718, %v8718
  %v8768 = vpack.c.bf16 %v8719, %v8719
  %v8769 = vpack.c.bf16 %v8720, %v8720
  %v8770 = vpack.c.bf16 %v8721, %v8721
  %v8771 = vpack.c.bf16 %v8722, %v8722
  %v8772 = vpack.c.bf16 %v8723, %v8723
  %v8773 = vpack.c.bf16 %v8724, %v8724
  %v8774 = vpack.c.bf16 %v8725, %v8725
  %v8775 = vpack.c.bf16 %v8726, %v8726
  %v8776 = vpack.c.bf16 %v8727, %v8727
  %v8777 = vpack.c.bf16 %v8728, %v8728
  %v8778 = vpack.c.bf16 %v8729, %v8729
  %v8779 = vpack.c.bf16 %v8730, %v8730
  %v8780 = vpack.c.bf16 %v8731, %v8731
  %v8781 = vpack.c.bf16 %v8732, %v8732
  %v8782 = vpack.c.bf16 %v8733, %v8733
  %v8783 = vpack.c.bf16 %v8734, %v8734
  %v8784 = vpack.c.bf16 %v8735, %v8735
  %v8785 = vpack.c.bf16 %v8736, %v8736
  %v8786 = vpack.c.bf16 %v8737, %v8737
  %v8787 = vpack.c.bf16 %v8738, %v8738
  %v8788 = vpack.c.bf16 %v8739, %v8739
  %v8789 = vpack.c.bf16 %v8740, %v8740
  %v8790 = vpack.c.bf16 %v8741, %v8741
  %v8791 = vpack.c.bf16 %v8742, %v8742
  %v8792 = vpack.c.bf16 %v8743, %v8743
  %v8793 = vpack.c.bf16 %v8744, %v8744
  %v8794 = vpack.c.bf16 %v8745, %v8745
  %v8795 = vpack.c.bf16 %v8746, %v8746
  %v8796 = vpack.c.bf16 %v8747, %v8747
  %v8797 = vpack.c.bf16 %v8748, %v8748
  %v8798 = vpack.c.bf16 %v8749, %v8749
  %v8799 = vpack.c.bf16 %v8750, %v8750
  %v8800 = vld [vmem:[%s5] sm:$0xf]
  %v8801 = vld [vmem:[%s5 + $0x4] sm:$0xf]
  %v8802 = vld [vmem:[%s5 + $0x8] sm:$0xf]
  %v8803 = vld [vmem:[%s5 + $0xc] sm:$0xf]
  %v8804 = vld [vmem:[%s5 + $0x10] sm:$0xf]
  %v8805 = vld [vmem:[%s5 + $0x14] sm:$0xf]
  %v8806 = vld [vmem:[%s5 + $0x18] sm:$0xf]
  %v8807 = vld [vmem:[%s5 + $0x1c] sm:$0xf]
  %v8808 = vld [vmem:[%s5 + $0x20] sm:$0xf]
  %v8809 = vld [vmem:[%s5 + $0x24] sm:$0xf]
  %v8810 = vld [vmem:[%s5 + $0x28] sm:$0xf]
  %v8811 = vld [vmem:[%s5 + $0x2c] sm:$0xf]
  %v8812 = vld [vmem:[%s5 + $0x30] sm:$0xf]
  %v8813 = vld [vmem:[%s5 + $0x34] sm:$0xf]
  %v8814 = vld [vmem:[%s5 + $0x38] sm:$0xf]
  %v8815 = vld [vmem:[%s5 + $0x3c] sm:$0xf]
  %v8816 = vld [vmem:[%s5 + $0x40] sm:$0xf]
  %v8817 = vld [vmem:[%s5 + $0x44] sm:$0xf]
  %v8818 = vld [vmem:[%s5 + $0x48] sm:$0xf]
  %v8819 = vld [vmem:[%s5 + $0x4c] sm:$0xf]
  %v8820 = vld [vmem:[%s5 + $0x50] sm:$0xf]
  %v8821 = vld [vmem:[%s5 + $0x54] sm:$0xf]
  %v8822 = vld [vmem:[%s5 + $0x58] sm:$0xf]
  %v8823 = vld [vmem:[%s5 + $0x5c] sm:$0xf]
  %v8824 = vld [vmem:[%s5 + $0x60] sm:$0xf]
  %v8825 = vld [vmem:[%s5 + $0x64] sm:$0xf]
  %v8826 = vld [vmem:[%s5 + $0x68] sm:$0xf]
  %v8827 = vld [vmem:[%s5 + $0x6c] sm:$0xf]
  %v8828 = vld [vmem:[%s5 + $0x70] sm:$0xf]
  %v8829 = vld [vmem:[%s5 + $0x74] sm:$0xf]
  %v8830 = vld [vmem:[%s5 + $0x78] sm:$0xf]
  %v8831 = vld [vmem:[%s5 + $0x7c] sm:$0xf]
  %v8832 = vld [vmem:[%s5 + $0x80] sm:$0xf]
  %v8833 = vld [vmem:[%s5 + $0x84] sm:$0xf]
  %v8834 = vld [vmem:[%s5 + $0x88] sm:$0xf]
  %v8835 = vld [vmem:[%s5 + $0x8c] sm:$0xf]
  %v8836 = vld [vmem:[%s5 + $0x90] sm:$0xf]
  %v8837 = vld [vmem:[%s5 + $0x94] sm:$0xf]
  %v8838 = vld [vmem:[%s5 + $0x98] sm:$0xf]
  %v8839 = vld [vmem:[%s5 + $0x9c] sm:$0xf]
  %v8840 = vld [vmem:[%s5 + $0xa0] sm:$0xf]
  %v8841 = vld [vmem:[%s5 + $0xa4] sm:$0xf]
  %v8842 = vld [vmem:[%s5 + $0xa8] sm:$0xf]
  %v8843 = vld [vmem:[%s5 + $0xac] sm:$0xf]
  %v8844 = vld [vmem:[%s5 + $0xb0] sm:$0xf]
  %v8845 = vld [vmem:[%s5 + $0xb4] sm:$0xf]
  %v8846 = vld [vmem:[%s5 + $0xb8] sm:$0xf]
  %v8847 = vld [vmem:[%s5 + $0xbc] sm:$0xf]
  %v8848 = vld [vmem:[%s5 + $0xc0] sm:$0xf]
  %v8849 = vld [vmem:[%s5 + $0xc4] sm:$0xf]
  %v8850 = vld [vmem:[%s5 + $0xc8] sm:$0xf]
  %v8851 = vld [vmem:[%s5 + $0xcc] sm:$0xf]
  %v8852 = vld [vmem:[%s5 + $0xd0] sm:$0xf]
  %v8853 = vld [vmem:[%s5 + $0xd4] sm:$0xf]
  %v8854 = vld [vmem:[%s5 + $0xd8] sm:$0xf]
  %v8855 = vld [vmem:[%s5 + $0xdc] sm:$0xf]
  %v8856 = vld [vmem:[%s5 + $0xe0] sm:$0xf]
  %v8857 = vld [vmem:[%s5 + $0xe4] sm:$0xf]
  %v8858 = vld [vmem:[%s5 + $0xe8] sm:$0xf]
  %v8859 = vld [vmem:[%s5 + $0xec] sm:$0xf]
  %v8860 = vld [vmem:[%s5 + $0xf0] sm:$0xf]
  %v8861 = vld [vmem:[%s5 + $0xf4] sm:$0xf]
  %v8862 = vld [vmem:[%s5 + $0xf8] sm:$0xf]
  %v8863 = vld [vmem:[%s5 + $0xfc] sm:$0xf]
  %v8864 = vld [vmem:[%s5 + $0x100] sm:$0xf]
  %v8865 = vld [vmem:[%s5 + $0x104] sm:$0xf]
  %v8866 = vld [vmem:[%s5 + $0x108] sm:$0xf]
  %v8867 = vld [vmem:[%s5 + $0x10c] sm:$0xf]
  %v8868 = vld [vmem:[%s5 + $0x110] sm:$0xf]
  %v8869 = vld [vmem:[%s5 + $0x114] sm:$0xf]
  %v8870 = vld [vmem:[%s5 + $0x118] sm:$0xf]
  %v8871 = vld [vmem:[%s5 + $0x11c] sm:$0xf]
  %v8872 = vld [vmem:[%s5 + $0x120] sm:$0xf]
  %v8873 = vld [vmem:[%s5 + $0x124] sm:$0xf]
  %v8874 = vld [vmem:[%s5 + $0x128] sm:$0xf]
  %v8875 = vld [vmem:[%s5 + $0x12c] sm:$0xf]
  %v8876 = vld [vmem:[%s5 + $0x130] sm:$0xf]
  %v8877 = vld [vmem:[%s5 + $0x134] sm:$0xf]
  %v8878 = vld [vmem:[%s5 + $0x138] sm:$0xf]
  %v8879 = vld [vmem:[%s5 + $0x13c] sm:$0xf]
  %v8880 = vld [vmem:[%s5 + $0x140] sm:$0xf]
  %v8881 = vld [vmem:[%s5 + $0x144] sm:$0xf]
  %v8882 = vld [vmem:[%s5 + $0x148] sm:$0xf]
  %v8883 = vld [vmem:[%s5 + $0x14c] sm:$0xf]
  %v8884 = vld [vmem:[%s5 + $0x150] sm:$0xf]
  %v8885 = vld [vmem:[%s5 + $0x154] sm:$0xf]
  %v8886 = vld [vmem:[%s5 + $0x158] sm:$0xf]
  %v8887 = vld [vmem:[%s5 + $0x15c] sm:$0xf]
  %v8888 = vld [vmem:[%s5 + $0x160] sm:$0xf]
  %v8889 = vld [vmem:[%s5 + $0x164] sm:$0xf]
  %v8890 = vld [vmem:[%s5 + $0x168] sm:$0xf]
  %v8891 = vld [vmem:[%s5 + $0x16c] sm:$0xf]
  %v8892 = vld [vmem:[%s5 + $0x170] sm:$0xf]
  %v8893 = vld [vmem:[%s5 + $0x174] sm:$0xf]
  %v8894 = vld [vmem:[%s5 + $0x178] sm:$0xf]
  %v8895 = vld [vmem:[%s5 + $0x17c] sm:$0xf]
  %v8896 = vld [vmem:[%s5 + $0x180] sm:$0xf]
  %v8897 = vld [vmem:[%s5 + $0x184] sm:$0xf]
  %v8898 = vld [vmem:[%s5 + $0x188] sm:$0xf]
  %v8899 = vld [vmem:[%s5 + $0x18c] sm:$0xf]
  %v8900 = vld [vmem:[%s5 + $0x190] sm:$0xf]
  %v8901 = vld [vmem:[%s5 + $0x194] sm:$0xf]
  %v8902 = vld [vmem:[%s5 + $0x198] sm:$0xf]
  %v8903 = vld [vmem:[%s5 + $0x19c] sm:$0xf]
  %v8904 = vld [vmem:[%s5 + $0x1a0] sm:$0xf]
  %v8905 = vld [vmem:[%s5 + $0x1a4] sm:$0xf]
  %v8906 = vld [vmem:[%s5 + $0x1a8] sm:$0xf]
  %v8907 = vld [vmem:[%s5 + $0x1ac] sm:$0xf]
  %v8908 = vld [vmem:[%s5 + $0x1b0] sm:$0xf]
  %v8909 = vld [vmem:[%s5 + $0x1b4] sm:$0xf]
  %v8910 = vld [vmem:[%s5 + $0x1b8] sm:$0xf]
  %v8911 = vld [vmem:[%s5 + $0x1bc] sm:$0xf]
  %v8912 = vld [vmem:[%s5 + $0x1c0] sm:$0xf]
  %v8913 = vld [vmem:[%s5 + $0x1c4] sm:$0xf]
  %v8914 = vld [vmem:[%s5 + $0x1c8] sm:$0xf]
  %v8915 = vld [vmem:[%s5 + $0x1cc] sm:$0xf]
  %v8916 = vld [vmem:[%s5 + $0x1d0] sm:$0xf]
  %v8917 = vld [vmem:[%s5 + $0x1d4] sm:$0xf]
  %v8918 = vld [vmem:[%s5 + $0x1d8] sm:$0xf]
  %v8919 = vld [vmem:[%s5 + $0x1dc] sm:$0xf]
  %v8920 = vld [vmem:[%s5 + $0x1e0] sm:$0xf]
  %v8921 = vld [vmem:[%s5 + $0x1e4] sm:$0xf]
  %v8922 = vld [vmem:[%s5 + $0x1e8] sm:$0xf]
  %v8923 = vld [vmem:[%s5 + $0x1ec] sm:$0xf]
  %v8924 = vld [vmem:[%s5 + $0x1f0] sm:$0xf]
  %v8925 = vld [vmem:[%s5 + $0x1f4] sm:$0xf]
  %v8926 = vld [vmem:[%s5 + $0x1f8] sm:$0xf]
  %v8927 = vld [vmem:[%s5 + $0x1fc] sm:$0xf]
  %v8928 = vld [vmem:[%s5 + $0x200] sm:$0xf]
  %v8929 = vld [vmem:[%s5 + $0x204] sm:$0xf]
  %v8930 = vld [vmem:[%s5 + $0x208] sm:$0xf]
  %v8931 = vld [vmem:[%s5 + $0x20c] sm:$0xf]
  %v8932 = vld [vmem:[%s5 + $0x210] sm:$0xf]
  %v8933 = vld [vmem:[%s5 + $0x214] sm:$0xf]
  %v8934 = vld [vmem:[%s5 + $0x218] sm:$0xf]
  %v8935 = vld [vmem:[%s5 + $0x21c] sm:$0xf]
  %v8936 = vld [vmem:[%s5 + $0x220] sm:$0xf]
  %v8937 = vld [vmem:[%s5 + $0x224] sm:$0xf]
  %v8938 = vld [vmem:[%s5 + $0x228] sm:$0xf]
  %v8939 = vld [vmem:[%s5 + $0x22c] sm:$0xf]
  %v8940 = vld [vmem:[%s5 + $0x230] sm:$0xf]
  %v8941 = vld [vmem:[%s5 + $0x234] sm:$0xf]
  %v8942 = vld [vmem:[%s5 + $0x238] sm:$0xf]
  %v8943 = vld [vmem:[%s5 + $0x23c] sm:$0xf]
  %v8944 = vld [vmem:[%s5 + $0x240] sm:$0xf]
  %v8945 = vld [vmem:[%s5 + $0x244] sm:$0xf]
  %v8946 = vld [vmem:[%s5 + $0x248] sm:$0xf]
  %v8947 = vld [vmem:[%s5 + $0x24c] sm:$0xf]
  %v8948 = vld [vmem:[%s5 + $0x250] sm:$0xf]
  %v8949 = vld [vmem:[%s5 + $0x254] sm:$0xf]
  %v8950 = vld [vmem:[%s5 + $0x258] sm:$0xf]
  %v8951 = vld [vmem:[%s5 + $0x25c] sm:$0xf]
  %v8952 = vld [vmem:[%s5 + $0x260] sm:$0xf]
  %v8953 = vld [vmem:[%s5 + $0x264] sm:$0xf]
  %v8954 = vld [vmem:[%s5 + $0x268] sm:$0xf]
  %v8955 = vld [vmem:[%s5 + $0x26c] sm:$0xf]
  %v8956 = vld [vmem:[%s5 + $0x270] sm:$0xf]
  %v8957 = vld [vmem:[%s5 + $0x274] sm:$0xf]
  %v8958 = vld [vmem:[%s5 + $0x278] sm:$0xf]
  %v8959 = vld [vmem:[%s5 + $0x27c] sm:$0xf]
  %v8960 = vld [vmem:[%s5 + $0x280] sm:$0xf]
  %v8961 = vld [vmem:[%s5 + $0x284] sm:$0xf]
  %v8962 = vld [vmem:[%s5 + $0x288] sm:$0xf]
  %v8963 = vld [vmem:[%s5 + $0x28c] sm:$0xf]
  %v8964 = vld [vmem:[%s5 + $0x290] sm:$0xf]
  %v8965 = vld [vmem:[%s5 + $0x294] sm:$0xf]
  %v8966 = vld [vmem:[%s5 + $0x298] sm:$0xf]
  %v8967 = vld [vmem:[%s5 + $0x29c] sm:$0xf]
  %v8968 = vld [vmem:[%s5 + $0x2a0] sm:$0xf]
  %v8969 = vld [vmem:[%s5 + $0x2a4] sm:$0xf]
  %v8970 = vld [vmem:[%s5 + $0x2a8] sm:$0xf]
  %v8971 = vld [vmem:[%s5 + $0x2ac] sm:$0xf]
  %v8972 = vld [vmem:[%s5 + $0x2b0] sm:$0xf]
  %v8973 = vld [vmem:[%s5 + $0x2b4] sm:$0xf]
  %v8974 = vld [vmem:[%s5 + $0x2b8] sm:$0xf]
  %v8975 = vld [vmem:[%s5 + $0x2bc] sm:$0xf]
  %v8976 = vld [vmem:[%s5 + $0x2c0] sm:$0xf]
  %v8977 = vld [vmem:[%s5 + $0x2c4] sm:$0xf]
  %v8978 = vld [vmem:[%s5 + $0x2c8] sm:$0xf]
  %v8979 = vld [vmem:[%s5 + $0x2cc] sm:$0xf]
  %v8980 = vld [vmem:[%s5 + $0x2d0] sm:$0xf]
  %v8981 = vld [vmem:[%s5 + $0x2d4] sm:$0xf]
  %v8982 = vld [vmem:[%s5 + $0x2d8] sm:$0xf]
  %v8983 = vld [vmem:[%s5 + $0x2dc] sm:$0xf]
  %v8984 = vld [vmem:[%s5 + $0x2e0] sm:$0xf]
  %v8985 = vld [vmem:[%s5 + $0x2e4] sm:$0xf]
  %v8986 = vld [vmem:[%s5 + $0x2e8] sm:$0xf]
  %v8987 = vld [vmem:[%s5 + $0x2ec] sm:$0xf]
  %v8988 = vld [vmem:[%s5 + $0x2f0] sm:$0xf]
  %v8989 = vld [vmem:[%s5 + $0x2f4] sm:$0xf]
  %v8990 = vld [vmem:[%s5 + $0x2f8] sm:$0xf]
  %v8991 = vld [vmem:[%s5 + $0x2fc] sm:$0xf]
  %v8992 = vld [vmem:[%s5 + $0x300] sm:$0xf]
  %v8993 = vld [vmem:[%s5 + $0x304] sm:$0xf]
  %v8994 = vld [vmem:[%s5 + $0x308] sm:$0xf]
  %v8995 = vld [vmem:[%s5 + $0x30c] sm:$0xf]
  %v8996 = vld [vmem:[%s5 + $0x310] sm:$0xf]
  %v8997 = vld [vmem:[%s5 + $0x314] sm:$0xf]
  %v8998 = vld [vmem:[%s5 + $0x318] sm:$0xf]
  %v8999 = vld [vmem:[%s5 + $0x31c] sm:$0xf]
  %v9000 = vld [vmem:[%s5 + $0x320] sm:$0xf]
  %v9001 = vld [vmem:[%s5 + $0x324] sm:$0xf]
  %v9002 = vld [vmem:[%s5 + $0x328] sm:$0xf]
  %v9003 = vld [vmem:[%s5 + $0x32c] sm:$0xf]
  %v9004 = vld [vmem:[%s5 + $0x330] sm:$0xf]
  %v9005 = vld [vmem:[%s5 + $0x334] sm:$0xf]
  %v9006 = vld [vmem:[%s5 + $0x338] sm:$0xf]
  %v9007 = vld [vmem:[%s5 + $0x33c] sm:$0xf]
  %v9008 = vld [vmem:[%s5 + $0x340] sm:$0xf]
  %v9009 = vld [vmem:[%s5 + $0x344] sm:$0xf]
  %v9010 = vld [vmem:[%s5 + $0x348] sm:$0xf]
  %v9011 = vld [vmem:[%s5 + $0x34c] sm:$0xf]
  %v9012 = vld [vmem:[%s5 + $0x350] sm:$0xf]
  %v9013 = vld [vmem:[%s5 + $0x354] sm:$0xf]
  %v9014 = vld [vmem:[%s5 + $0x358] sm:$0xf]
  %v9015 = vld [vmem:[%s5 + $0x35c] sm:$0xf]
  %v9016 = vld [vmem:[%s5 + $0x360] sm:$0xf]
  %v9017 = vld [vmem:[%s5 + $0x364] sm:$0xf]
  %v9018 = vld [vmem:[%s5 + $0x368] sm:$0xf]
  %v9019 = vld [vmem:[%s5 + $0x36c] sm:$0xf]
  %v9020 = vld [vmem:[%s5 + $0x370] sm:$0xf]
  %v9021 = vld [vmem:[%s5 + $0x374] sm:$0xf]
  %v9022 = vld [vmem:[%s5 + $0x378] sm:$0xf]
  %v9023 = vld [vmem:[%s5 + $0x37c] sm:$0xf]
  %v9024 = vld [vmem:[%s5 + $0x380] sm:$0xf]
  %v9025 = vld [vmem:[%s5 + $0x384] sm:$0xf]
  %v9026 = vld [vmem:[%s5 + $0x388] sm:$0xf]
  %v9027 = vld [vmem:[%s5 + $0x38c] sm:$0xf]
  %v9028 = vld [vmem:[%s5 + $0x390] sm:$0xf]
  %v9029 = vld [vmem:[%s5 + $0x394] sm:$0xf]
  %v9030 = vld [vmem:[%s5 + $0x398] sm:$0xf]
  %v9031 = vld [vmem:[%s5 + $0x39c] sm:$0xf]
  %v9032 = vld [vmem:[%s5 + $0x3a0] sm:$0xf]
  %v9033 = vld [vmem:[%s5 + $0x3a4] sm:$0xf]
  %v9034 = vld [vmem:[%s5 + $0x3a8] sm:$0xf]
  %v9035 = vld [vmem:[%s5 + $0x3ac] sm:$0xf]
  %v9036 = vld [vmem:[%s5 + $0x3b0] sm:$0xf]
  %v9037 = vld [vmem:[%s5 + $0x3b4] sm:$0xf]
  %v9038 = vld [vmem:[%s5 + $0x3b8] sm:$0xf]
  %v9039 = vld [vmem:[%s5 + $0x3bc] sm:$0xf]
  %v9040 = vld [vmem:[%s5 + $0x3c0] sm:$0xf]
  %v9041 = vld [vmem:[%s5 + $0x3c4] sm:$0xf]
  %v9042 = vld [vmem:[%s5 + $0x3c8] sm:$0xf]
  %v9043 = vld [vmem:[%s5 + $0x3cc] sm:$0xf]
  %v9044 = vld [vmem:[%s5 + $0x3d0] sm:$0xf]
  %v9045 = vld [vmem:[%s5 + $0x3d4] sm:$0xf]
  %v9046 = vld [vmem:[%s5 + $0x3d8] sm:$0xf]
  %v9047 = vld [vmem:[%s5 + $0x3dc] sm:$0xf]
  %v9048 = vld [vmem:[%s5 + $0x3e0] sm:$0xf]
  %v9049 = vld [vmem:[%s5 + $0x3e4] sm:$0xf]
  %v9050 = vld [vmem:[%s5 + $0x3e8] sm:$0xf]
  %v9051 = vld [vmem:[%s5 + $0x3ec] sm:$0xf]
  %v9052 = vld [vmem:[%s5 + $0x3f0] sm:$0xf]
  %v9053 = vld [vmem:[%s5 + $0x3f4] sm:$0xf]
  %v9054 = vld [vmem:[%s5 + $0x3f8] sm:$0xf]
  %v9055 = vld [vmem:[%s5 + $0x3fc] sm:$0xf]
  %v9056 = vld [vmem:[%s5 + $0x400] sm:$0xf]
  %v9057 = vld [vmem:[%s5 + $0x404] sm:$0xf]
  %v9058 = vld [vmem:[%s5 + $0x408] sm:$0xf]
  %v9059 = vld [vmem:[%s5 + $0x40c] sm:$0xf]
  %v9060 = vld [vmem:[%s5 + $0x410] sm:$0xf]
  %v9061 = vld [vmem:[%s5 + $0x414] sm:$0xf]
  %v9062 = vld [vmem:[%s5 + $0x418] sm:$0xf]
  %v9063 = vld [vmem:[%s5 + $0x41c] sm:$0xf]
  %v9064 = vld [vmem:[%s5 + $0x420] sm:$0xf]
  %v9065 = vld [vmem:[%s5 + $0x424] sm:$0xf]
  %v9066 = vld [vmem:[%s5 + $0x428] sm:$0xf]
  %v9067 = vld [vmem:[%s5 + $0x42c] sm:$0xf]
  %v9068 = vld [vmem:[%s5 + $0x430] sm:$0xf]
  %v9069 = vld [vmem:[%s5 + $0x434] sm:$0xf]
  %v9070 = vld [vmem:[%s5 + $0x438] sm:$0xf]
  %v9071 = vld [vmem:[%s5 + $0x43c] sm:$0xf]
  %v9072 = vld [vmem:[%s5 + $0x440] sm:$0xf]
  %v9073 = vld [vmem:[%s5 + $0x444] sm:$0xf]
  %v9074 = vld [vmem:[%s5 + $0x448] sm:$0xf]
  %v9075 = vld [vmem:[%s5 + $0x44c] sm:$0xf]
  %v9076 = vld [vmem:[%s5 + $0x450] sm:$0xf]
  %v9077 = vld [vmem:[%s5 + $0x454] sm:$0xf]
  %v9078 = vld [vmem:[%s5 + $0x458] sm:$0xf]
  %v9079 = vld [vmem:[%s5 + $0x45c] sm:$0xf]
  %v9080 = vld [vmem:[%s5 + $0x460] sm:$0xf]
  %v9081 = vld [vmem:[%s5 + $0x464] sm:$0xf]
  %v9082 = vld [vmem:[%s5 + $0x468] sm:$0xf]
  %v9083 = vld [vmem:[%s5 + $0x46c] sm:$0xf]
  %v9084 = vld [vmem:[%s5 + $0x470] sm:$0xf]
  %v9085 = vld [vmem:[%s5 + $0x474] sm:$0xf]
  %v9086 = vld [vmem:[%s5 + $0x478] sm:$0xf]
  %v9087 = vld [vmem:[%s5 + $0x47c] sm:$0xf]
  %v9088 = vld [vmem:[%s5 + $0x480] sm:$0xf]
  %v9089 = vld [vmem:[%s5 + $0x484] sm:$0xf]
  %v9090 = vld [vmem:[%s5 + $0x488] sm:$0xf]
  %v9091 = vld [vmem:[%s5 + $0x48c] sm:$0xf]
  %v9092 = vld [vmem:[%s5 + $0x490] sm:$0xf]
  %v9093 = vld [vmem:[%s5 + $0x494] sm:$0xf]
  %v9094 = vld [vmem:[%s5 + $0x498] sm:$0xf]
  %v9095 = vld [vmem:[%s5 + $0x49c] sm:$0xf]
  %v9096 = vld [vmem:[%s5 + $0x4a0] sm:$0xf]
  %v9097 = vld [vmem:[%s5 + $0x4a4] sm:$0xf]
  %v9098 = vld [vmem:[%s5 + $0x4a8] sm:$0xf]
  %v9099 = vld [vmem:[%s5 + $0x4ac] sm:$0xf]
  %v9100 = vld [vmem:[%s5 + $0x4b0] sm:$0xf]
  %v9101 = vld [vmem:[%s5 + $0x4b4] sm:$0xf]
  %v9102 = vld [vmem:[%s5 + $0x4b8] sm:$0xf]
  %v9103 = vld [vmem:[%s5 + $0x4bc] sm:$0xf]
  %v9104 = vld [vmem:[%s5 + $0x4c0] sm:$0xf]
  %v9105 = vld [vmem:[%s5 + $0x4c4] sm:$0xf]
  %v9106 = vld [vmem:[%s5 + $0x4c8] sm:$0xf]
  %v9107 = vld [vmem:[%s5 + $0x4cc] sm:$0xf]
  %v9108 = vld [vmem:[%s5 + $0x4d0] sm:$0xf]
  %v9109 = vld [vmem:[%s5 + $0x4d4] sm:$0xf]
  %v9110 = vld [vmem:[%s5 + $0x4d8] sm:$0xf]
  %v9111 = vld [vmem:[%s5 + $0x4dc] sm:$0xf]
  %v9112 = vld [vmem:[%s5 + $0x4e0] sm:$0xf]
  %v9113 = vld [vmem:[%s5 + $0x4e4] sm:$0xf]
  %v9114 = vld [vmem:[%s5 + $0x4e8] sm:$0xf]
  %v9115 = vld [vmem:[%s5 + $0x4ec] sm:$0xf]
  %v9116 = vld [vmem:[%s5 + $0x4f0] sm:$0xf]
  %v9117 = vld [vmem:[%s5 + $0x4f4] sm:$0xf]
  %v9118 = vld [vmem:[%s5 + $0x4f8] sm:$0xf]
  %v9119 = vld [vmem:[%s5 + $0x4fc] sm:$0xf]
  %v9120 = vld [vmem:[%s5 + $0x500] sm:$0xf]
  %v9121 = vld [vmem:[%s5 + $0x504] sm:$0xf]
  %v9122 = vld [vmem:[%s5 + $0x508] sm:$0xf]
  %v9123 = vld [vmem:[%s5 + $0x50c] sm:$0xf]
  %v9124 = vld [vmem:[%s5 + $0x510] sm:$0xf]
  %v9125 = vld [vmem:[%s5 + $0x514] sm:$0xf]
  %v9126 = vld [vmem:[%s5 + $0x518] sm:$0xf]
  %v9127 = vld [vmem:[%s5 + $0x51c] sm:$0xf]
  %v9128 = vld [vmem:[%s5 + $0x520] sm:$0xf]
  %v9129 = vld [vmem:[%s5 + $0x524] sm:$0xf]
  %v9130 = vld [vmem:[%s5 + $0x528] sm:$0xf]
  %v9131 = vld [vmem:[%s5 + $0x52c] sm:$0xf]
  %v9132 = vld [vmem:[%s5 + $0x530] sm:$0xf]
  %v9133 = vld [vmem:[%s5 + $0x534] sm:$0xf]
  %v9134 = vld [vmem:[%s5 + $0x538] sm:$0xf]
  %v9135 = vld [vmem:[%s5 + $0x53c] sm:$0xf]
  %v9136 = vld [vmem:[%s5 + $0x540] sm:$0xf]
  %v9137 = vld [vmem:[%s5 + $0x544] sm:$0xf]
  %v9138 = vld [vmem:[%s5 + $0x548] sm:$0xf]
  %v9139 = vld [vmem:[%s5 + $0x54c] sm:$0xf]
  %v9140 = vld [vmem:[%s5 + $0x550] sm:$0xf]
  %v9141 = vld [vmem:[%s5 + $0x554] sm:$0xf]
  %v9142 = vld [vmem:[%s5 + $0x558] sm:$0xf]
  %v9143 = vld [vmem:[%s5 + $0x55c] sm:$0xf]
  %v9144 = vld [vmem:[%s5 + $0x560] sm:$0xf]
  %v9145 = vld [vmem:[%s5 + $0x564] sm:$0xf]
  %v9146 = vld [vmem:[%s5 + $0x568] sm:$0xf]
  %v9147 = vld [vmem:[%s5 + $0x56c] sm:$0xf]
  %v9148 = vld [vmem:[%s5 + $0x570] sm:$0xf]
  %v9149 = vld [vmem:[%s5 + $0x574] sm:$0xf]
  %v9150 = vld [vmem:[%s5 + $0x578] sm:$0xf]
  %v9151 = vld [vmem:[%s5 + $0x57c] sm:$0xf]
  %v9152 = vld [vmem:[%s5 + $0x580] sm:$0xf]
  %v9153 = vld [vmem:[%s5 + $0x584] sm:$0xf]
  %v9154 = vld [vmem:[%s5 + $0x588] sm:$0xf]
  %v9155 = vld [vmem:[%s5 + $0x58c] sm:$0xf]
  %v9156 = vld [vmem:[%s5 + $0x590] sm:$0xf]
  %v9157 = vld [vmem:[%s5 + $0x594] sm:$0xf]
  %v9158 = vld [vmem:[%s5 + $0x598] sm:$0xf]
  %v9159 = vld [vmem:[%s5 + $0x59c] sm:$0xf]
  %v9160 = vld [vmem:[%s5 + $0x5a0] sm:$0xf]
  %v9161 = vld [vmem:[%s5 + $0x5a4] sm:$0xf]
  %v9162 = vld [vmem:[%s5 + $0x5a8] sm:$0xf]
  %v9163 = vld [vmem:[%s5 + $0x5ac] sm:$0xf]
  %v9164 = vld [vmem:[%s5 + $0x5b0] sm:$0xf]
  %v9165 = vld [vmem:[%s5 + $0x5b4] sm:$0xf]
  %v9166 = vld [vmem:[%s5 + $0x5b8] sm:$0xf]
  %v9167 = vld [vmem:[%s5 + $0x5bc] sm:$0xf]
  %v9168 = vld [vmem:[%s5 + $0x5c0] sm:$0xf]
  %v9169 = vld [vmem:[%s5 + $0x5c4] sm:$0xf]
  %v9170 = vld [vmem:[%s5 + $0x5c8] sm:$0xf]
  %v9171 = vld [vmem:[%s5 + $0x5cc] sm:$0xf]
  %v9172 = vld [vmem:[%s5 + $0x5d0] sm:$0xf]
  %v9173 = vld [vmem:[%s5 + $0x5d4] sm:$0xf]
  %v9174 = vld [vmem:[%s5 + $0x5d8] sm:$0xf]
  %v9175 = vld [vmem:[%s5 + $0x5dc] sm:$0xf]
  %v9176 = vld [vmem:[%s5 + $0x5e0] sm:$0xf]
  %v9177 = vld [vmem:[%s5 + $0x5e4] sm:$0xf]
  %v9178 = vld [vmem:[%s5 + $0x5e8] sm:$0xf]
  %v9179 = vld [vmem:[%s5 + $0x5ec] sm:$0xf]
  %v9180 = vld [vmem:[%s5 + $0x5f0] sm:$0xf]
  %v9181 = vld [vmem:[%s5 + $0x5f4] sm:$0xf]
  %v9182 = vld [vmem:[%s5 + $0x5f8] sm:$0xf]
  %v9183 = vld [vmem:[%s5 + $0x5fc] sm:$0xf]
  %v9184 = vld [vmem:[%s5 + $0x600] sm:$0xf]
  %v9185 = vld [vmem:[%s5 + $0x604] sm:$0xf]
  %v9186 = vld [vmem:[%s5 + $0x608] sm:$0xf]
  %v9187 = vld [vmem:[%s5 + $0x60c] sm:$0xf]
  %v9188 = vld [vmem:[%s5 + $0x610] sm:$0xf]
  %v9189 = vld [vmem:[%s5 + $0x614] sm:$0xf]
  %v9190 = vld [vmem:[%s5 + $0x618] sm:$0xf]
  %v9191 = vld [vmem:[%s5 + $0x61c] sm:$0xf]
  %v9192 = vld [vmem:[%s5 + $0x620] sm:$0xf]
  %v9193 = vld [vmem:[%s5 + $0x624] sm:$0xf]
  %v9194 = vld [vmem:[%s5 + $0x628] sm:$0xf]
  %v9195 = vld [vmem:[%s5 + $0x62c] sm:$0xf]
  %v9196 = vld [vmem:[%s5 + $0x630] sm:$0xf]
  %v9197 = vld [vmem:[%s5 + $0x634] sm:$0xf]
  %v9198 = vld [vmem:[%s5 + $0x638] sm:$0xf]
  %v9199 = vld [vmem:[%s5 + $0x63c] sm:$0xf]
  %v9200 = vld [vmem:[%s5 + $0x640] sm:$0xf]
  %v9201 = vld [vmem:[%s5 + $0x644] sm:$0xf]
  %v9202 = vld [vmem:[%s5 + $0x648] sm:$0xf]
  %v9203 = vld [vmem:[%s5 + $0x64c] sm:$0xf]
  %v9204 = vld [vmem:[%s5 + $0x650] sm:$0xf]
  %v9205 = vld [vmem:[%s5 + $0x654] sm:$0xf]
  %v9206 = vld [vmem:[%s5 + $0x658] sm:$0xf]
  %v9207 = vld [vmem:[%s5 + $0x65c] sm:$0xf]
  %v9208 = vld [vmem:[%s5 + $0x660] sm:$0xf]
  %v9209 = vld [vmem:[%s5 + $0x664] sm:$0xf]
  %v9210 = vld [vmem:[%s5 + $0x668] sm:$0xf]
  %v9211 = vld [vmem:[%s5 + $0x66c] sm:$0xf]
  %v9212 = vld [vmem:[%s5 + $0x670] sm:$0xf]
  %v9213 = vld [vmem:[%s5 + $0x674] sm:$0xf]
  %v9214 = vld [vmem:[%s5 + $0x678] sm:$0xf]
  %v9215 = vld [vmem:[%s5 + $0x67c] sm:$0xf]
  %v9216 = vld [vmem:[%s5 + $0x680] sm:$0xf]
  %v9217 = vld [vmem:[%s5 + $0x684] sm:$0xf]
  %v9218 = vld [vmem:[%s5 + $0x688] sm:$0xf]
  %v9219 = vld [vmem:[%s5 + $0x68c] sm:$0xf]
  %v9220 = vld [vmem:[%s5 + $0x690] sm:$0xf]
  %v9221 = vld [vmem:[%s5 + $0x694] sm:$0xf]
  %v9222 = vld [vmem:[%s5 + $0x698] sm:$0xf]
  %v9223 = vld [vmem:[%s5 + $0x69c] sm:$0xf]
  %v9224 = vld [vmem:[%s5 + $0x6a0] sm:$0xf]
  %v9225 = vld [vmem:[%s5 + $0x6a4] sm:$0xf]
  %v9226 = vld [vmem:[%s5 + $0x6a8] sm:$0xf]
  %v9227 = vld [vmem:[%s5 + $0x6ac] sm:$0xf]
  %v9228 = vld [vmem:[%s5 + $0x6b0] sm:$0xf]
  %v9229 = vld [vmem:[%s5 + $0x6b4] sm:$0xf]
  %v9230 = vld [vmem:[%s5 + $0x6b8] sm:$0xf]
  %v9231 = vld [vmem:[%s5 + $0x6bc] sm:$0xf]
  %v9232 = vld [vmem:[%s5 + $0x6c0] sm:$0xf]
  %v9233 = vld [vmem:[%s5 + $0x6c4] sm:$0xf]
  %v9234 = vld [vmem:[%s5 + $0x6c8] sm:$0xf]
  %v9235 = vld [vmem:[%s5 + $0x6cc] sm:$0xf]
  %v9236 = vld [vmem:[%s5 + $0x6d0] sm:$0xf]
  %v9237 = vld [vmem:[%s5 + $0x6d4] sm:$0xf]
  %v9238 = vld [vmem:[%s5 + $0x6d8] sm:$0xf]
  %v9239 = vld [vmem:[%s5 + $0x6dc] sm:$0xf]
  %v9240 = vld [vmem:[%s5 + $0x6e0] sm:$0xf]
  %v9241 = vld [vmem:[%s5 + $0x6e4] sm:$0xf]
  %v9242 = vld [vmem:[%s5 + $0x6e8] sm:$0xf]
  %v9243 = vld [vmem:[%s5 + $0x6ec] sm:$0xf]
  %v9244 = vld [vmem:[%s5 + $0x6f0] sm:$0xf]
  %v9245 = vld [vmem:[%s5 + $0x6f4] sm:$0xf]
  %v9246 = vld [vmem:[%s5 + $0x6f8] sm:$0xf]
  %v9247 = vld [vmem:[%s5 + $0x6fc] sm:$0xf]
  %v9248 = vld [vmem:[%s5 + $0x700] sm:$0xf]
  %v9249 = vld [vmem:[%s5 + $0x704] sm:$0xf]
  %v9250 = vld [vmem:[%s5 + $0x708] sm:$0xf]
  %v9251 = vld [vmem:[%s5 + $0x70c] sm:$0xf]
  %v9252 = vld [vmem:[%s5 + $0x710] sm:$0xf]
  %v9253 = vld [vmem:[%s5 + $0x714] sm:$0xf]
  %v9254 = vld [vmem:[%s5 + $0x718] sm:$0xf]
  %v9255 = vld [vmem:[%s5 + $0x71c] sm:$0xf]
  %v9256 = vld [vmem:[%s5 + $0x720] sm:$0xf]
  %v9257 = vld [vmem:[%s5 + $0x724] sm:$0xf]
  %v9258 = vld [vmem:[%s5 + $0x728] sm:$0xf]
  %v9259 = vld [vmem:[%s5 + $0x72c] sm:$0xf]
  %v9260 = vld [vmem:[%s5 + $0x730] sm:$0xf]
  %v9261 = vld [vmem:[%s5 + $0x734] sm:$0xf]
  %v9262 = vld [vmem:[%s5 + $0x738] sm:$0xf]
  %v9263 = vld [vmem:[%s5 + $0x73c] sm:$0xf]
  %v9264 = vld [vmem:[%s5 + $0x740] sm:$0xf]
  %v9265 = vld [vmem:[%s5 + $0x744] sm:$0xf]
  %v9266 = vld [vmem:[%s5 + $0x748] sm:$0xf]
  %v9267 = vld [vmem:[%s5 + $0x74c] sm:$0xf]
  %v9268 = vld [vmem:[%s5 + $0x750] sm:$0xf]
  %v9269 = vld [vmem:[%s5 + $0x754] sm:$0xf]
  %v9270 = vld [vmem:[%s5 + $0x758] sm:$0xf]
  %v9271 = vld [vmem:[%s5 + $0x75c] sm:$0xf]
  %v9272 = vld [vmem:[%s5 + $0x760] sm:$0xf]
  %v9273 = vld [vmem:[%s5 + $0x764] sm:$0xf]
  %v9274 = vld [vmem:[%s5 + $0x768] sm:$0xf]
  %v9275 = vld [vmem:[%s5 + $0x76c] sm:$0xf]
  %v9276 = vld [vmem:[%s5 + $0x770] sm:$0xf]
  %v9277 = vld [vmem:[%s5 + $0x774] sm:$0xf]
  %v9278 = vld [vmem:[%s5 + $0x778] sm:$0xf]
  %v9279 = vld [vmem:[%s5 + $0x77c] sm:$0xf]
  %v9280 = vld [vmem:[%s5 + $0x780] sm:$0xf]
  %v9281 = vld [vmem:[%s5 + $0x784] sm:$0xf]
  %v9282 = vld [vmem:[%s5 + $0x788] sm:$0xf]
  %v9283 = vld [vmem:[%s5 + $0x78c] sm:$0xf]
  %v9284 = vld [vmem:[%s5 + $0x790] sm:$0xf]
  %v9285 = vld [vmem:[%s5 + $0x794] sm:$0xf]
  %v9286 = vld [vmem:[%s5 + $0x798] sm:$0xf]
  %v9287 = vld [vmem:[%s5 + $0x79c] sm:$0xf]
  %v9288 = vld [vmem:[%s5 + $0x7a0] sm:$0xf]
  %v9289 = vld [vmem:[%s5 + $0x7a4] sm:$0xf]
  %v9290 = vld [vmem:[%s5 + $0x7a8] sm:$0xf]
  %v9291 = vld [vmem:[%s5 + $0x7ac] sm:$0xf]
  %v9292 = vld [vmem:[%s5 + $0x7b0] sm:$0xf]
  %v9293 = vld [vmem:[%s5 + $0x7b4] sm:$0xf]
  %v9294 = vld [vmem:[%s5 + $0x7b8] sm:$0xf]
  %v9295 = vld [vmem:[%s5 + $0x7bc] sm:$0xf]
  %v9296 = vld [vmem:[%s5 + $0x7c0] sm:$0xf]
  %v9297 = vld [vmem:[%s5 + $0x7c4] sm:$0xf]
  %v9298 = vld [vmem:[%s5 + $0x7c8] sm:$0xf]
  %v9299 = vld [vmem:[%s5 + $0x7cc] sm:$0xf]
  %v9300 = vld [vmem:[%s5 + $0x7d0] sm:$0xf]
  %v9301 = vld [vmem:[%s5 + $0x7d4] sm:$0xf]
  %v9302 = vld [vmem:[%s5 + $0x7d8] sm:$0xf]
  %v9303 = vld [vmem:[%s5 + $0x7dc] sm:$0xf]
  %v9304 = vld [vmem:[%s5 + $0x7e0] sm:$0xf]
  %v9305 = vld [vmem:[%s5 + $0x7e4] sm:$0xf]
  %v9306 = vld [vmem:[%s5 + $0x7e8] sm:$0xf]
  %v9307 = vld [vmem:[%s5 + $0x7ec] sm:$0xf]
  %v9308 = vld [vmem:[%s5 + $0x7f0] sm:$0xf]
  %v9309 = vld [vmem:[%s5 + $0x7f4] sm:$0xf]
  %v9310 = vld [vmem:[%s5 + $0x7f8] sm:$0xf]
  %v9311 = vld [vmem:[%s5 + $0x7fc] sm:$0xf]
  %v9312 = vld [vmem:[%s5 + $0x800] sm:$0xf]
  %v9313 = vld [vmem:[%s5 + $0x804] sm:$0xf]
  %v9314 = vld [vmem:[%s5 + $0x808] sm:$0xf]
  %v9315 = vld [vmem:[%s5 + $0x80c] sm:$0xf]
  %v9316 = vld [vmem:[%s5 + $0x810] sm:$0xf]
  %v9317 = vld [vmem:[%s5 + $0x814] sm:$0xf]
  %v9318 = vld [vmem:[%s5 + $0x818] sm:$0xf]
  %v9319 = vld [vmem:[%s5 + $0x81c] sm:$0xf]
  %v9320 = vld [vmem:[%s5 + $0x820] sm:$0xf]
  %v9321 = vld [vmem:[%s5 + $0x824] sm:$0xf]
  %v9322 = vld [vmem:[%s5 + $0x828] sm:$0xf]
  %v9323 = vld [vmem:[%s5 + $0x82c] sm:$0xf]
  %v9324 = vld [vmem:[%s5 + $0x830] sm:$0xf]
  %v9325 = vld [vmem:[%s5 + $0x834] sm:$0xf]
  %v9326 = vld [vmem:[%s5 + $0x838] sm:$0xf]
  %v9327 = vld [vmem:[%s5 + $0x83c] sm:$0xf]
  %v9328 = vld [vmem:[%s5 + $0x840] sm:$0xf]
  %v9329 = vld [vmem:[%s5 + $0x844] sm:$0xf]
  %v9330 = vld [vmem:[%s5 + $0x848] sm:$0xf]
  %v9331 = vld [vmem:[%s5 + $0x84c] sm:$0xf]
  %v9332 = vld [vmem:[%s5 + $0x850] sm:$0xf]
  %v9333 = vld [vmem:[%s5 + $0x854] sm:$0xf]
  %v9334 = vld [vmem:[%s5 + $0x858] sm:$0xf]
  %v9335 = vld [vmem:[%s5 + $0x85c] sm:$0xf]
  %v9336 = vld [vmem:[%s5 + $0x860] sm:$0xf]
  %v9337 = vld [vmem:[%s5 + $0x864] sm:$0xf]
  %v9338 = vld [vmem:[%s5 + $0x868] sm:$0xf]
  %v9339 = vld [vmem:[%s5 + $0x86c] sm:$0xf]
  %v9340 = vld [vmem:[%s5 + $0x870] sm:$0xf]
  %v9341 = vld [vmem:[%s5 + $0x874] sm:$0xf]
  %v9342 = vld [vmem:[%s5 + $0x878] sm:$0xf]
  %v9343 = vld [vmem:[%s5 + $0x87c] sm:$0xf]
  %v9344 = vld [vmem:[%s5 + $0x880] sm:$0xf]
  %v9345 = vld [vmem:[%s5 + $0x884] sm:$0xf]
  %v9346 = vld [vmem:[%s5 + $0x888] sm:$0xf]
  %v9347 = vld [vmem:[%s5 + $0x88c] sm:$0xf]
  %v9348 = vld [vmem:[%s5 + $0x890] sm:$0xf]
  %v9349 = vld [vmem:[%s5 + $0x894] sm:$0xf]
  %v9350 = vld [vmem:[%s5 + $0x898] sm:$0xf]
  %v9351 = vld [vmem:[%s5 + $0x89c] sm:$0xf]
  %v9352 = vld [vmem:[%s5 + $0x8a0] sm:$0xf]
  %v9353 = vld [vmem:[%s5 + $0x8a4] sm:$0xf]
  %v9354 = vld [vmem:[%s5 + $0x8a8] sm:$0xf]
  %v9355 = vld [vmem:[%s5 + $0x8ac] sm:$0xf]
  %v9356 = vld [vmem:[%s5 + $0x8b0] sm:$0xf]
  %v9357 = vld [vmem:[%s5 + $0x8b4] sm:$0xf]
  %v9358 = vld [vmem:[%s5 + $0x8b8] sm:$0xf]
  %v9359 = vld [vmem:[%s5 + $0x8bc] sm:$0xf]
  %v9360 = vld [vmem:[%s5 + $0x8c0] sm:$0xf]
  %v9361 = vld [vmem:[%s5 + $0x8c4] sm:$0xf]
  %v9362 = vld [vmem:[%s5 + $0x8c8] sm:$0xf]
  %v9363 = vld [vmem:[%s5 + $0x8cc] sm:$0xf]
  %v9364 = vld [vmem:[%s5 + $0x8d0] sm:$0xf]
  %v9365 = vld [vmem:[%s5 + $0x8d4] sm:$0xf]
  %v9366 = vld [vmem:[%s5 + $0x8d8] sm:$0xf]
  %v9367 = vld [vmem:[%s5 + $0x8dc] sm:$0xf]
  %v9368 = vld [vmem:[%s5 + $0x8e0] sm:$0xf]
  %v9369 = vld [vmem:[%s5 + $0x8e4] sm:$0xf]
  %v9370 = vld [vmem:[%s5 + $0x8e8] sm:$0xf]
  %v9371 = vld [vmem:[%s5 + $0x8ec] sm:$0xf]
  %v9372 = vld [vmem:[%s5 + $0x8f0] sm:$0xf]
  %v9373 = vld [vmem:[%s5 + $0x8f4] sm:$0xf]
  %v9374 = vld [vmem:[%s5 + $0x8f8] sm:$0xf]
  %v9375 = vld [vmem:[%s5 + $0x8fc] sm:$0xf]
  %v9376 = vld [vmem:[%s5 + $0x900] sm:$0xf]
  %v9377 = vld [vmem:[%s5 + $0x904] sm:$0xf]
  %v9378 = vld [vmem:[%s5 + $0x908] sm:$0xf]
  %v9379 = vld [vmem:[%s5 + $0x90c] sm:$0xf]
  %v9380 = vld [vmem:[%s5 + $0x910] sm:$0xf]
  %v9381 = vld [vmem:[%s5 + $0x914] sm:$0xf]
  %v9382 = vld [vmem:[%s5 + $0x918] sm:$0xf]
  %v9383 = vld [vmem:[%s5 + $0x91c] sm:$0xf]
  %v9384 = vld [vmem:[%s5 + $0x920] sm:$0xf]
  %v9385 = vld [vmem:[%s5 + $0x924] sm:$0xf]
  %v9386 = vld [vmem:[%s5 + $0x928] sm:$0xf]
  %v9387 = vld [vmem:[%s5 + $0x92c] sm:$0xf]
  %v9388 = vld [vmem:[%s5 + $0x930] sm:$0xf]
  %v9389 = vld [vmem:[%s5 + $0x934] sm:$0xf]
  %v9390 = vld [vmem:[%s5 + $0x938] sm:$0xf]
  %v9391 = vld [vmem:[%s5 + $0x93c] sm:$0xf]
  %v9392 = vld [vmem:[%s5 + $0x940] sm:$0xf]
  %v9393 = vld [vmem:[%s5 + $0x944] sm:$0xf]
  %v9394 = vld [vmem:[%s5 + $0x948] sm:$0xf]
  %v9395 = vld [vmem:[%s5 + $0x94c] sm:$0xf]
  %v9396 = vld [vmem:[%s5 + $0x950] sm:$0xf]
  %v9397 = vld [vmem:[%s5 + $0x954] sm:$0xf]
  %v9398 = vld [vmem:[%s5 + $0x958] sm:$0xf]
  %v9399 = vld [vmem:[%s5 + $0x95c] sm:$0xf]
  %v9400 = vld [vmem:[%s5 + $0x960] sm:$0xf]
  %v9401 = vld [vmem:[%s5 + $0x964] sm:$0xf]
  %v9402 = vld [vmem:[%s5 + $0x968] sm:$0xf]
  %v9403 = vld [vmem:[%s5 + $0x96c] sm:$0xf]
  %v9404 = vld [vmem:[%s5 + $0x970] sm:$0xf]
  %v9405 = vld [vmem:[%s5 + $0x974] sm:$0xf]
  %v9406 = vld [vmem:[%s5 + $0x978] sm:$0xf]
  %v9407 = vld [vmem:[%s5 + $0x97c] sm:$0xf]
  %v9408 = vld [vmem:[%s5 + $0x980] sm:$0xf]
  %v9409 = vld [vmem:[%s5 + $0x984] sm:$0xf]
  %v9410 = vld [vmem:[%s5 + $0x988] sm:$0xf]
  %v9411 = vld [vmem:[%s5 + $0x98c] sm:$0xf]
  %v9412 = vld [vmem:[%s5 + $0x990] sm:$0xf]
  %v9413 = vld [vmem:[%s5 + $0x994] sm:$0xf]
  %v9414 = vld [vmem:[%s5 + $0x998] sm:$0xf]
  %v9415 = vld [vmem:[%s5 + $0x99c] sm:$0xf]
  %v9416 = vld [vmem:[%s5 + $0x9a0] sm:$0xf]
  %v9417 = vld [vmem:[%s5 + $0x9a4] sm:$0xf]
  %v9418 = vld [vmem:[%s5 + $0x9a8] sm:$0xf]
  %v9419 = vld [vmem:[%s5 + $0x9ac] sm:$0xf]
  %v9420 = vld [vmem:[%s5 + $0x9b0] sm:$0xf]
  %v9421 = vld [vmem:[%s5 + $0x9b4] sm:$0xf]
  %v9422 = vld [vmem:[%s5 + $0x9b8] sm:$0xf]
  %v9423 = vld [vmem:[%s5 + $0x9bc] sm:$0xf]
  %v9424 = vld [vmem:[%s5 + $0x9c0] sm:$0xf]
  %v9425 = vld [vmem:[%s5 + $0x9c4] sm:$0xf]
  %v9426 = vld [vmem:[%s5 + $0x9c8] sm:$0xf]
  %v9427 = vld [vmem:[%s5 + $0x9cc] sm:$0xf]
  %v9428 = vld [vmem:[%s5 + $0x9d0] sm:$0xf]
  %v9429 = vld [vmem:[%s5 + $0x9d4] sm:$0xf]
  %v9430 = vld [vmem:[%s5 + $0x9d8] sm:$0xf]
  %v9431 = vld [vmem:[%s5 + $0x9dc] sm:$0xf]
  %v9432 = vld [vmem:[%s5 + $0x9e0] sm:$0xf]
  %v9433 = vld [vmem:[%s5 + $0x9e4] sm:$0xf]
  %v9434 = vld [vmem:[%s5 + $0x9e8] sm:$0xf]
  %v9435 = vld [vmem:[%s5 + $0x9ec] sm:$0xf]
  %v9436 = vld [vmem:[%s5 + $0x9f0] sm:$0xf]
  %v9437 = vld [vmem:[%s5 + $0x9f4] sm:$0xf]
  %v9438 = vld [vmem:[%s5 + $0x9f8] sm:$0xf]
  %v9439 = vld [vmem:[%s5 + $0x9fc] sm:$0xf]
  %v9440 = vld [vmem:[%s5 + $0xa00] sm:$0xf]
  %v9441 = vld [vmem:[%s5 + $0xa04] sm:$0xf]
  %v9442 = vld [vmem:[%s5 + $0xa08] sm:$0xf]
  %v9443 = vld [vmem:[%s5 + $0xa0c] sm:$0xf]
  %v9444 = vld [vmem:[%s5 + $0xa10] sm:$0xf]
  %v9445 = vld [vmem:[%s5 + $0xa14] sm:$0xf]
  %v9446 = vld [vmem:[%s5 + $0xa18] sm:$0xf]
  %v9447 = vld [vmem:[%s5 + $0xa1c] sm:$0xf]
  %v9448 = vld [vmem:[%s5 + $0xa20] sm:$0xf]
  %v9449 = vld [vmem:[%s5 + $0xa24] sm:$0xf]
  %v9450 = vld [vmem:[%s5 + $0xa28] sm:$0xf]
  %v9451 = vld [vmem:[%s5 + $0xa2c] sm:$0xf]
  %v9452 = vld [vmem:[%s5 + $0xa30] sm:$0xf]
  %v9453 = vld [vmem:[%s5 + $0xa34] sm:$0xf]
  %v9454 = vld [vmem:[%s5 + $0xa38] sm:$0xf]
  %v9455 = vld [vmem:[%s5 + $0xa3c] sm:$0xf]
  %v9456 = vld [vmem:[%s5 + $0xa40] sm:$0xf]
  %v9457 = vld [vmem:[%s5 + $0xa44] sm:$0xf]
  %v9458 = vld [vmem:[%s5 + $0xa48] sm:$0xf]
  %v9459 = vld [vmem:[%s5 + $0xa4c] sm:$0xf]
  %v9460 = vld [vmem:[%s5 + $0xa50] sm:$0xf]
  %v9461 = vld [vmem:[%s5 + $0xa54] sm:$0xf]
  %v9462 = vld [vmem:[%s5 + $0xa58] sm:$0xf]
  %v9463 = vld [vmem:[%s5 + $0xa5c] sm:$0xf]
  %v9464 = vld [vmem:[%s5 + $0xa60] sm:$0xf]
  %v9465 = vld [vmem:[%s5 + $0xa64] sm:$0xf]
  %v9466 = vld [vmem:[%s5 + $0xa68] sm:$0xf]
  %v9467 = vld [vmem:[%s5 + $0xa6c] sm:$0xf]
  %v9468 = vld [vmem:[%s5 + $0xa70] sm:$0xf]
  %v9469 = vld [vmem:[%s5 + $0xa74] sm:$0xf]
  %v9470 = vld [vmem:[%s5 + $0xa78] sm:$0xf]
  %v9471 = vld [vmem:[%s5 + $0xa7c] sm:$0xf]
  %v9472 = vld [vmem:[%s5 + $0xa80] sm:$0xf]
  %v9473 = vld [vmem:[%s5 + $0xa84] sm:$0xf]
  %v9474 = vld [vmem:[%s5 + $0xa88] sm:$0xf]
  %v9475 = vld [vmem:[%s5 + $0xa8c] sm:$0xf]
  %v9476 = vld [vmem:[%s5 + $0xa90] sm:$0xf]
  %v9477 = vld [vmem:[%s5 + $0xa94] sm:$0xf]
  %v9478 = vld [vmem:[%s5 + $0xa98] sm:$0xf]
  %v9479 = vld [vmem:[%s5 + $0xa9c] sm:$0xf]
  %v9480 = vld [vmem:[%s5 + $0xaa0] sm:$0xf]
  %v9481 = vld [vmem:[%s5 + $0xaa4] sm:$0xf]
  %v9482 = vld [vmem:[%s5 + $0xaa8] sm:$0xf]
  %v9483 = vld [vmem:[%s5 + $0xaac] sm:$0xf]
  %v9484 = vld [vmem:[%s5 + $0xab0] sm:$0xf]
  %v9485 = vld [vmem:[%s5 + $0xab4] sm:$0xf]
  %v9486 = vld [vmem:[%s5 + $0xab8] sm:$0xf]
  %v9487 = vld [vmem:[%s5 + $0xabc] sm:$0xf]
  %v9488 = vld [vmem:[%s5 + $0xac0] sm:$0xf]
  %v9489 = vld [vmem:[%s5 + $0xac4] sm:$0xf]
  %v9490 = vld [vmem:[%s5 + $0xac8] sm:$0xf]
  %v9491 = vld [vmem:[%s5 + $0xacc] sm:$0xf]
  %v9492 = vld [vmem:[%s5 + $0xad0] sm:$0xf]
  %v9493 = vld [vmem:[%s5 + $0xad4] sm:$0xf]
  %v9494 = vld [vmem:[%s5 + $0xad8] sm:$0xf]
  %v9495 = vld [vmem:[%s5 + $0xadc] sm:$0xf]
  %v9496 = vld [vmem:[%s5 + $0xae0] sm:$0xf]
  %v9497 = vld [vmem:[%s5 + $0xae4] sm:$0xf]
  %v9498 = vld [vmem:[%s5 + $0xae8] sm:$0xf]
  %v9499 = vld [vmem:[%s5 + $0xaec] sm:$0xf]
  %v9500 = vld [vmem:[%s5 + $0xaf0] sm:$0xf]
  %v9501 = vld [vmem:[%s5 + $0xaf4] sm:$0xf]
  %v9502 = vld [vmem:[%s5 + $0xaf8] sm:$0xf]
  %v9503 = vld [vmem:[%s5 + $0xafc] sm:$0xf]
  %v9504 = vld [vmem:[%s5 + $0xb00] sm:$0xf]
  %v9505 = vld [vmem:[%s5 + $0xb04] sm:$0xf]
  %v9506 = vld [vmem:[%s5 + $0xb08] sm:$0xf]
  %v9507 = vld [vmem:[%s5 + $0xb0c] sm:$0xf]
  %v9508 = vld [vmem:[%s5 + $0xb10] sm:$0xf]
  %v9509 = vld [vmem:[%s5 + $0xb14] sm:$0xf]
  %v9510 = vld [vmem:[%s5 + $0xb18] sm:$0xf]
  %v9511 = vld [vmem:[%s5 + $0xb1c] sm:$0xf]
  %v9512 = vld [vmem:[%s5 + $0xb20] sm:$0xf]
  %v9513 = vld [vmem:[%s5 + $0xb24] sm:$0xf]
  %v9514 = vld [vmem:[%s5 + $0xb28] sm:$0xf]
  %v9515 = vld [vmem:[%s5 + $0xb2c] sm:$0xf]
  %v9516 = vld [vmem:[%s5 + $0xb30] sm:$0xf]
  %v9517 = vld [vmem:[%s5 + $0xb34] sm:$0xf]
  %v9518 = vld [vmem:[%s5 + $0xb38] sm:$0xf]
  %v9519 = vld [vmem:[%s5 + $0xb3c] sm:$0xf]
  %v9520 = vld [vmem:[%s5 + $0xb40] sm:$0xf]
  %v9521 = vld [vmem:[%s5 + $0xb44] sm:$0xf]
  %v9522 = vld [vmem:[%s5 + $0xb48] sm:$0xf]
  %v9523 = vld [vmem:[%s5 + $0xb4c] sm:$0xf]
  %v9524 = vld [vmem:[%s5 + $0xb50] sm:$0xf]
  %v9525 = vld [vmem:[%s5 + $0xb54] sm:$0xf]
  %v9526 = vld [vmem:[%s5 + $0xb58] sm:$0xf]
  %v9527 = vld [vmem:[%s5 + $0xb5c] sm:$0xf]
  %v9528 = vld [vmem:[%s5 + $0xb60] sm:$0xf]
  %v9529 = vld [vmem:[%s5 + $0xb64] sm:$0xf]
  %v9530 = vld [vmem:[%s5 + $0xb68] sm:$0xf]
  %v9531 = vld [vmem:[%s5 + $0xb6c] sm:$0xf]
  %v9532 = vld [vmem:[%s5 + $0xb70] sm:$0xf]
  %v9533 = vld [vmem:[%s5 + $0xb74] sm:$0xf]
  %v9534 = vld [vmem:[%s5 + $0xb78] sm:$0xf]
  %v9535 = vld [vmem:[%s5 + $0xb7c] sm:$0xf]
  %v9536 = vld [vmem:[%s5 + $0xb80] sm:$0xf]
  %v9537 = vld [vmem:[%s5 + $0xb84] sm:$0xf]
  %v9538 = vld [vmem:[%s5 + $0xb88] sm:$0xf]
  %v9539 = vld [vmem:[%s5 + $0xb8c] sm:$0xf]
  %v9540 = vld [vmem:[%s5 + $0xb90] sm:$0xf]
  %v9541 = vld [vmem:[%s5 + $0xb94] sm:$0xf]
  %v9542 = vld [vmem:[%s5 + $0xb98] sm:$0xf]
  %v9543 = vld [vmem:[%s5 + $0xb9c] sm:$0xf]
  %v9544 = vld [vmem:[%s5 + $0xba0] sm:$0xf]
  %v9545 = vld [vmem:[%s5 + $0xba4] sm:$0xf]
  %v9546 = vld [vmem:[%s5 + $0xba8] sm:$0xf]
  %v9547 = vld [vmem:[%s5 + $0xbac] sm:$0xf]
  %v9548 = vld [vmem:[%s5 + $0xbb0] sm:$0xf]
  %v9549 = vld [vmem:[%s5 + $0xbb4] sm:$0xf]
  %v9550 = vld [vmem:[%s5 + $0xbb8] sm:$0xf]
  %v9551 = vld [vmem:[%s5 + $0xbbc] sm:$0xf]
  %v9552 = vld [vmem:[%s5 + $0xbc0] sm:$0xf]
  %v9553 = vld [vmem:[%s5 + $0xbc4] sm:$0xf]
  %v9554 = vld [vmem:[%s5 + $0xbc8] sm:$0xf]
  %v9555 = vld [vmem:[%s5 + $0xbcc] sm:$0xf]
  %v9556 = vld [vmem:[%s5 + $0xbd0] sm:$0xf]
  %v9557 = vld [vmem:[%s5 + $0xbd4] sm:$0xf]
  %v9558 = vld [vmem:[%s5 + $0xbd8] sm:$0xf]
  %v9559 = vld [vmem:[%s5 + $0xbdc] sm:$0xf]
  %v9560 = vld [vmem:[%s5 + $0xbe0] sm:$0xf]
  %v9561 = vld [vmem:[%s5 + $0xbe4] sm:$0xf]
  %v9562 = vld [vmem:[%s5 + $0xbe8] sm:$0xf]
  %v9563 = vld [vmem:[%s5 + $0xbec] sm:$0xf]
  %v9564 = vld [vmem:[%s5 + $0xbf0] sm:$0xf]
  %v9565 = vld [vmem:[%s5 + $0xbf4] sm:$0xf]
  %v9566 = vld [vmem:[%s5 + $0xbf8] sm:$0xf]
  %v9567 = vld [vmem:[%s5 + $0xbfc] sm:$0xf]
  %v9568 = vld [vmem:[%s5 + $0xc00] sm:$0xf]
  %v9569 = vld [vmem:[%s5 + $0xc04] sm:$0xf]
  %v9570 = vld [vmem:[%s5 + $0xc08] sm:$0xf]
  %v9571 = vld [vmem:[%s5 + $0xc0c] sm:$0xf]
  %v9572 = vld [vmem:[%s5 + $0xc10] sm:$0xf]
  %v9573 = vld [vmem:[%s5 + $0xc14] sm:$0xf]
  %v9574 = vld [vmem:[%s5 + $0xc18] sm:$0xf]
  %v9575 = vld [vmem:[%s5 + $0xc1c] sm:$0xf]
  %v9576 = vld [vmem:[%s5 + $0xc20] sm:$0xf]
  %v9577 = vld [vmem:[%s5 + $0xc24] sm:$0xf]
  %v9578 = vld [vmem:[%s5 + $0xc28] sm:$0xf]
  %v9579 = vld [vmem:[%s5 + $0xc2c] sm:$0xf]
  %v9580 = vld [vmem:[%s5 + $0xc30] sm:$0xf]
  %v9581 = vld [vmem:[%s5 + $0xc34] sm:$0xf]
  %v9582 = vld [vmem:[%s5 + $0xc38] sm:$0xf]
  %v9583 = vld [vmem:[%s5 + $0xc3c] sm:$0xf]
  %v9600 = vunpack.c.l.b16 %v8800
  %v9601 = vunpack.c.l.b16 %v8801
  %v9602 = vunpack.c.l.b16 %v8802
  %v9603 = vunpack.c.l.b16 %v8803
  %v9604 = vunpack.c.l.b16 %v8804
  %v9605 = vunpack.c.l.b16 %v8805
  %v9606 = vunpack.c.l.b16 %v8806
  %v9607 = vunpack.c.l.b16 %v8807
  %v9608 = vunpack.c.l.b16 %v8808
  %v9609 = vunpack.c.l.b16 %v8809
  %v9610 = vunpack.c.l.b16 %v8810
  %v9611 = vunpack.c.l.b16 %v8811
  %v9612 = vunpack.c.l.b16 %v8812
  %v9613 = vunpack.c.l.b16 %v8813
  %v9614 = vunpack.c.l.b16 %v8814
  %v9615 = vunpack.c.l.b16 %v8815
  %v9616 = vpack.c.b16 %v9601, %v9600
  %v9617 = vpack.c.b16 %v9603, %v9602
  %v9618 = vpack.c.b16 %v9605, %v9604
  %v9619 = vpack.c.b16 %v9607, %v9606
  %v9620 = vpack.c.b16 %v9609, %v9608
  %v9621 = vpack.c.b16 %v9611, %v9610
  %v9622 = vpack.c.b16 %v9613, %v9612
  %v9623 = vpack.c.b16 %v9615, %v9614
  %9632 = vmatpush.bf16.msra.mxu0 %v9623
  %9633 = vmatpush.bf16.msra.mxu0 %v9622
  %9634 = vmatpush.bf16.msra.mxu0 %v9621
  %9635 = vmatpush.bf16.msra.mxu0 %v9620
  %9636 = vmatpush.bf16.msra.mxu0 %v9619
  %9637 = vmatpush.bf16.msra.mxu0 %v9618
  %9638 = vmatpush.bf16.msra.mxu0 %v9617
  %9639 = vmatpush.bf16.msra.mxu0 %v9616
  %9640 = vmatmul.bf16.gmra.mxu0 %v8751
  %v9641 = vpop.f32.mrf.mxu0
  %v9642 = vadd.f32 0.0, %v9641
  %v9643 = vpop.f32.mrf.mxu0
  %9644 = vdwg.mxu0
  %v9661 = vunpack.c.l.b16 %v8816
  %v9662 = vunpack.c.l.b16 %v8817
  %v9663 = vunpack.c.l.b16 %v8818
  %v9664 = vunpack.c.l.b16 %v8819
  %v9665 = vunpack.c.l.b16 %v8820
  %v9666 = vunpack.c.l.b16 %v8821
  %v9667 = vunpack.c.l.b16 %v8822
  %v9668 = vunpack.c.l.b16 %v8823
  %v9669 = vunpack.c.l.b16 %v8824
  %v9670 = vunpack.c.l.b16 %v8825
  %v9671 = vunpack.c.l.b16 %v8826
  %v9672 = vunpack.c.l.b16 %v8827
  %v9673 = vunpack.c.l.b16 %v8828
  %v9674 = vunpack.c.l.b16 %v8829
  %v9675 = vunpack.c.l.b16 %v8830
  %v9676 = vunpack.c.l.b16 %v8831
  %v9677 = vpack.c.b16 %v9662, %v9661
  %v9678 = vpack.c.b16 %v9664, %v9663
  %v9679 = vpack.c.b16 %v9666, %v9665
  %v9680 = vpack.c.b16 %v9668, %v9667
  %v9681 = vpack.c.b16 %v9670, %v9669
  %v9682 = vpack.c.b16 %v9672, %v9671
  %v9683 = vpack.c.b16 %v9674, %v9673
  %v9684 = vpack.c.b16 %v9676, %v9675
  %9693 = vmatpush.bf16.msra.mxu0 %v9684
  %9694 = vmatpush.bf16.msra.mxu0 %v9683
  %9695 = vmatpush.bf16.msra.mxu0 %v9682
  %9696 = vmatpush.bf16.msra.mxu0 %v9681
  %9697 = vmatpush.bf16.msra.mxu0 %v9680
  %9698 = vmatpush.bf16.msra.mxu0 %v9679
  %9699 = vmatpush.bf16.msra.mxu0 %v9678
  %9700 = vmatpush.bf16.msra.mxu0 %v9677
  %9701 = vmatmul.bf16.gmra.mxu0 %v8752
  %v9702 = vpop.f32.mrf.mxu0
  %v9703 = vadd.f32 0.0, %v9702
  %v9704 = vpop.f32.mrf.mxu0
  %9705 = vdwg.mxu0
  %v9722 = vunpack.c.l.b16 %v8832
  %v9723 = vunpack.c.l.b16 %v8833
  %v9724 = vunpack.c.l.b16 %v8834
  %v9725 = vunpack.c.l.b16 %v8835
  %v9726 = vunpack.c.l.b16 %v8836
  %v9727 = vunpack.c.l.b16 %v8837
  %v9728 = vunpack.c.l.b16 %v8838
  %v9729 = vunpack.c.l.b16 %v8839
  %v9730 = vunpack.c.l.b16 %v8840
  %v9731 = vunpack.c.l.b16 %v8841
  %v9732 = vunpack.c.l.b16 %v8842
  %v9733 = vunpack.c.l.b16 %v8843
  %v9734 = vunpack.c.l.b16 %v8844
  %v9735 = vunpack.c.l.b16 %v8845
  %v9736 = vunpack.c.l.b16 %v8846
  %v9737 = vunpack.c.l.b16 %v8847
  %v9738 = vpack.c.b16 %v9723, %v9722
  %v9739 = vpack.c.b16 %v9725, %v9724
  %v9740 = vpack.c.b16 %v9727, %v9726
  %v9741 = vpack.c.b16 %v9729, %v9728
  %v9742 = vpack.c.b16 %v9731, %v9730
  %v9743 = vpack.c.b16 %v9733, %v9732
  %v9744 = vpack.c.b16 %v9735, %v9734
  %v9745 = vpack.c.b16 %v9737, %v9736
  %9754 = vmatpush.bf16.msra.mxu0 %v9745
  %9755 = vmatpush.bf16.msra.mxu0 %v9744
  %9756 = vmatpush.bf16.msra.mxu0 %v9743
  %9757 = vmatpush.bf16.msra.mxu0 %v9742
  %9758 = vmatpush.bf16.msra.mxu0 %v9741
  %9759 = vmatpush.bf16.msra.mxu0 %v9740
  %9760 = vmatpush.bf16.msra.mxu0 %v9739
  %9761 = vmatpush.bf16.msra.mxu0 %v9738
  %9762 = vmatmul.bf16.gmra.mxu0 %v8753
  %v9763 = vpop.f32.mrf.mxu0
  %v9764 = vadd.f32 0.0, %v9763
  %v9765 = vpop.f32.mrf.mxu0
  %9766 = vdwg.mxu0
  %v9783 = vunpack.c.l.b16 %v8848
  %v9784 = vunpack.c.l.b16 %v8849
  %v9785 = vunpack.c.l.b16 %v8850
  %v9786 = vunpack.c.l.b16 %v8851
  %v9787 = vunpack.c.l.b16 %v8852
  %v9788 = vunpack.c.l.b16 %v8853
  %v9789 = vunpack.c.l.b16 %v8854
  %v9790 = vunpack.c.l.b16 %v8855
  %v9791 = vunpack.c.l.b16 %v8856
  %v9792 = vunpack.c.l.b16 %v8857
  %v9793 = vunpack.c.l.b16 %v8858
  %v9794 = vunpack.c.l.b16 %v8859
  %v9795 = vunpack.c.l.b16 %v8860
  %v9796 = vunpack.c.l.b16 %v8861
  %v9797 = vunpack.c.l.b16 %v8862
  %v9798 = vunpack.c.l.b16 %v8863
  %v9799 = vpack.c.b16 %v9784, %v9783
  %v9800 = vpack.c.b16 %v9786, %v9785
  %v9801 = vpack.c.b16 %v9788, %v9787
  %v9802 = vpack.c.b16 %v9790, %v9789
  %v9803 = vpack.c.b16 %v9792, %v9791
  %v9804 = vpack.c.b16 %v9794, %v9793
  %v9805 = vpack.c.b16 %v9796, %v9795
  %v9806 = vpack.c.b16 %v9798, %v9797
  %9815 = vmatpush.bf16.msra.mxu0 %v9806
  %9816 = vmatpush.bf16.msra.mxu0 %v9805
  %9817 = vmatpush.bf16.msra.mxu0 %v9804
  %9818 = vmatpush.bf16.msra.mxu0 %v9803
  %9819 = vmatpush.bf16.msra.mxu0 %v9802
  %9820 = vmatpush.bf16.msra.mxu0 %v9801
  %9821 = vmatpush.bf16.msra.mxu0 %v9800
  %9822 = vmatpush.bf16.msra.mxu0 %v9799
  %9823 = vmatmul.bf16.gmra.mxu0 %v8754
  %v9824 = vpop.f32.mrf.mxu0
  %v9825 = vadd.f32 0.0, %v9824
  %v9826 = vpop.f32.mrf.mxu0
  %9827 = vdwg.mxu0
  %v9844 = vunpack.c.l.b16 %v8864
  %v9845 = vunpack.c.l.b16 %v8865
  %v9846 = vunpack.c.l.b16 %v8866
  %v9847 = vunpack.c.l.b16 %v8867
  %v9848 = vunpack.c.l.b16 %v8868
  %v9849 = vunpack.c.l.b16 %v8869
  %v9850 = vunpack.c.l.b16 %v8870
  %v9851 = vunpack.c.l.b16 %v8871
  %v9852 = vunpack.c.l.b16 %v8872
  %v9853 = vunpack.c.l.b16 %v8873
  %v9854 = vunpack.c.l.b16 %v8874
  %v9855 = vunpack.c.l.b16 %v8875
  %v9856 = vunpack.c.l.b16 %v8876
  %v9857 = vunpack.c.l.b16 %v8877
  %v9858 = vunpack.c.l.b16 %v8878
  %v9859 = vunpack.c.l.b16 %v8879
  %v9860 = vpack.c.b16 %v9845, %v9844
  %v9861 = vpack.c.b16 %v9847, %v9846
  %v9862 = vpack.c.b16 %v9849, %v9848
  %v9863 = vpack.c.b16 %v9851, %v9850
  %v9864 = vpack.c.b16 %v9853, %v9852
  %v9865 = vpack.c.b16 %v9855, %v9854
  %v9866 = vpack.c.b16 %v9857, %v9856
  %v9867 = vpack.c.b16 %v9859, %v9858
  %9876 = vmatpush.bf16.msra.mxu0 %v9867
  %9877 = vmatpush.bf16.msra.mxu0 %v9866
  %9878 = vmatpush.bf16.msra.mxu0 %v9865
  %9879 = vmatpush.bf16.msra.mxu0 %v9864
  %9880 = vmatpush.bf16.msra.mxu0 %v9863
  %9881 = vmatpush.bf16.msra.mxu0 %v9862
  %9882 = vmatpush.bf16.msra.mxu0 %v9861
  %9883 = vmatpush.bf16.msra.mxu0 %v9860
  %9884 = vmatmul.bf16.gmra.mxu0 %v8755
  %v9885 = vpop.f32.mrf.mxu0
  %v9886 = vadd.f32 0.0, %v9885
  %v9887 = vpop.f32.mrf.mxu0
  %9888 = vdwg.mxu0
  %v9905 = vunpack.c.l.b16 %v8880
  %v9906 = vunpack.c.l.b16 %v8881
  %v9907 = vunpack.c.l.b16 %v8882
  %v9908 = vunpack.c.l.b16 %v8883
  %v9909 = vunpack.c.l.b16 %v8884
  %v9910 = vunpack.c.l.b16 %v8885
  %v9911 = vunpack.c.l.b16 %v8886
  %v9912 = vunpack.c.l.b16 %v8887
  %v9913 = vunpack.c.l.b16 %v8888
  %v9914 = vunpack.c.l.b16 %v8889
  %v9915 = vunpack.c.l.b16 %v8890
  %v9916 = vunpack.c.l.b16 %v8891
  %v9917 = vunpack.c.l.b16 %v8892
  %v9918 = vunpack.c.l.b16 %v8893
  %v9919 = vunpack.c.l.b16 %v8894
  %v9920 = vunpack.c.l.b16 %v8895
  %v9921 = vpack.c.b16 %v9906, %v9905
  %v9922 = vpack.c.b16 %v9908, %v9907
  %v9923 = vpack.c.b16 %v9910, %v9909
  %v9924 = vpack.c.b16 %v9912, %v9911
  %v9925 = vpack.c.b16 %v9914, %v9913
  %v9926 = vpack.c.b16 %v9916, %v9915
  %v9927 = vpack.c.b16 %v9918, %v9917
  %v9928 = vpack.c.b16 %v9920, %v9919
  %9937 = vmatpush.bf16.msra.mxu0 %v9928
  %9938 = vmatpush.bf16.msra.mxu0 %v9927
  %9939 = vmatpush.bf16.msra.mxu0 %v9926
  %9940 = vmatpush.bf16.msra.mxu0 %v9925
  %9941 = vmatpush.bf16.msra.mxu0 %v9924
  %9942 = vmatpush.bf16.msra.mxu0 %v9923
  %9943 = vmatpush.bf16.msra.mxu0 %v9922
  %9944 = vmatpush.bf16.msra.mxu0 %v9921
  %9945 = vmatmul.bf16.gmra.mxu0 %v8756
  %v9946 = vpop.f32.mrf.mxu0
  %v9947 = vadd.f32 0.0, %v9946
  %v9948 = vpop.f32.mrf.mxu0
  %9949 = vdwg.mxu0
  %v9966 = vunpack.c.l.b16 %v8896
  %v9967 = vunpack.c.l.b16 %v8897
  %v9968 = vunpack.c.l.b16 %v8898
  %v9969 = vunpack.c.l.b16 %v8899
  %v9970 = vunpack.c.l.b16 %v8900
  %v9971 = vunpack.c.l.b16 %v8901
  %v9972 = vunpack.c.l.b16 %v8902
  %v9973 = vunpack.c.l.b16 %v8903
  %v9974 = vunpack.c.l.b16 %v8904
  %v9975 = vunpack.c.l.b16 %v8905
  %v9976 = vunpack.c.l.b16 %v8906
  %v9977 = vunpack.c.l.b16 %v8907
  %v9978 = vunpack.c.l.b16 %v8908
  %v9979 = vunpack.c.l.b16 %v8909
  %v9980 = vunpack.c.l.b16 %v8910
  %v9981 = vunpack.c.l.b16 %v8911
  %v9982 = vpack.c.b16 %v9967, %v9966
  %v9983 = vpack.c.b16 %v9969, %v9968
  %v9984 = vpack.c.b16 %v9971, %v9970
  %v9985 = vpack.c.b16 %v9973, %v9972
  %v9986 = vpack.c.b16 %v9975, %v9974
  %v9987 = vpack.c.b16 %v9977, %v9976
  %v9988 = vpack.c.b16 %v9979, %v9978
  %v9989 = vpack.c.b16 %v9981, %v9980
  %9998 = vmatpush.bf16.msra.mxu0 %v9989
  %9999 = vmatpush.bf16.msra.mxu0 %v9988
  %10000 = vmatpush.bf16.msra.mxu0 %v9987
  %10001 = vmatpush.bf16.msra.mxu0 %v9986
  %10002 = vmatpush.bf16.msra.mxu0 %v9985
  %10003 = vmatpush.bf16.msra.mxu0 %v9984
  %10004 = vmatpush.bf16.msra.mxu0 %v9983
  %10005 = vmatpush.bf16.msra.mxu0 %v9982
  %10006 = vmatmul.bf16.gmra.mxu0 %v8757
  %v10007 = vpop.f32.mrf.mxu0
  %v10008 = vadd.f32 0.0, %v10007
  %v10009 = vpop.f32.mrf.mxu0
  %10010 = vdwg.mxu0
  %v10027 = vunpack.c.l.b16 %v8912
  %v10028 = vunpack.c.l.b16 %v8913
  %v10029 = vunpack.c.l.b16 %v8914
  %v10030 = vunpack.c.l.b16 %v8915
  %v10031 = vunpack.c.l.b16 %v8916
  %v10032 = vunpack.c.l.b16 %v8917
  %v10033 = vunpack.c.l.b16 %v8918
  %v10034 = vunpack.c.l.b16 %v8919
  %v10035 = vunpack.c.l.b16 %v8920
  %v10036 = vunpack.c.l.b16 %v8921
  %v10037 = vunpack.c.l.b16 %v8922
  %v10038 = vunpack.c.l.b16 %v8923
  %v10039 = vunpack.c.l.b16 %v8924
  %v10040 = vunpack.c.l.b16 %v8925
  %v10041 = vunpack.c.l.b16 %v8926
  %v10042 = vunpack.c.l.b16 %v8927
  %v10043 = vpack.c.b16 %v10028, %v10027
  %v10044 = vpack.c.b16 %v10030, %v10029
  %v10045 = vpack.c.b16 %v10032, %v10031
  %v10046 = vpack.c.b16 %v10034, %v10033
  %v10047 = vpack.c.b16 %v10036, %v10035
  %v10048 = vpack.c.b16 %v10038, %v10037
  %v10049 = vpack.c.b16 %v10040, %v10039
  %v10050 = vpack.c.b16 %v10042, %v10041
  %10059 = vmatpush.bf16.msra.mxu0 %v10050
  %10060 = vmatpush.bf16.msra.mxu0 %v10049
  %10061 = vmatpush.bf16.msra.mxu0 %v10048
  %10062 = vmatpush.bf16.msra.mxu0 %v10047
  %10063 = vmatpush.bf16.msra.mxu0 %v10046
  %10064 = vmatpush.bf16.msra.mxu0 %v10045
  %10065 = vmatpush.bf16.msra.mxu0 %v10044
  %10066 = vmatpush.bf16.msra.mxu0 %v10043
  %10067 = vmatmul.bf16.gmra.mxu0 %v8758
  %v10068 = vpop.f32.mrf.mxu0
  %v10069 = vadd.f32 0.0, %v10068
  %v10070 = vpop.f32.mrf.mxu0
  %10071 = vdwg.mxu0
  %v10088 = vunpack.c.l.b16 %v8928
  %v10089 = vunpack.c.l.b16 %v8929
  %v10090 = vunpack.c.l.b16 %v8930
  %v10091 = vunpack.c.l.b16 %v8931
  %v10092 = vunpack.c.l.b16 %v8932
  %v10093 = vunpack.c.l.b16 %v8933
  %v10094 = vunpack.c.l.b16 %v8934
  %v10095 = vunpack.c.l.b16 %v8935
  %v10096 = vunpack.c.l.b16 %v8936
  %v10097 = vunpack.c.l.b16 %v8937
  %v10098 = vunpack.c.l.b16 %v8938
  %v10099 = vunpack.c.l.b16 %v8939
  %v10100 = vunpack.c.l.b16 %v8940
  %v10101 = vunpack.c.l.b16 %v8941
  %v10102 = vunpack.c.l.b16 %v8942
  %v10103 = vunpack.c.l.b16 %v8943
  %v10104 = vpack.c.b16 %v10089, %v10088
  %v10105 = vpack.c.b16 %v10091, %v10090
  %v10106 = vpack.c.b16 %v10093, %v10092
  %v10107 = vpack.c.b16 %v10095, %v10094
  %v10108 = vpack.c.b16 %v10097, %v10096
  %v10109 = vpack.c.b16 %v10099, %v10098
  %v10110 = vpack.c.b16 %v10101, %v10100
  %v10111 = vpack.c.b16 %v10103, %v10102
  %10120 = vmatpush.bf16.msra.mxu0 %v10111
  %10121 = vmatpush.bf16.msra.mxu0 %v10110
  %10122 = vmatpush.bf16.msra.mxu0 %v10109
  %10123 = vmatpush.bf16.msra.mxu0 %v10108
  %10124 = vmatpush.bf16.msra.mxu0 %v10107
  %10125 = vmatpush.bf16.msra.mxu0 %v10106
  %10126 = vmatpush.bf16.msra.mxu0 %v10105
  %10127 = vmatpush.bf16.msra.mxu0 %v10104
  %10128 = vmatmul.bf16.gmra.mxu0 %v8759
  %v10129 = vpop.f32.mrf.mxu0
  %v10130 = vadd.f32 0.0, %v10129
  %v10131 = vpop.f32.mrf.mxu0
  %10132 = vdwg.mxu0
  %v10149 = vunpack.c.l.b16 %v8944
  %v10150 = vunpack.c.l.b16 %v8945
  %v10151 = vunpack.c.l.b16 %v8946
  %v10152 = vunpack.c.l.b16 %v8947
  %v10153 = vunpack.c.l.b16 %v8948
  %v10154 = vunpack.c.l.b16 %v8949
  %v10155 = vunpack.c.l.b16 %v8950
  %v10156 = vunpack.c.l.b16 %v8951
  %v10157 = vunpack.c.l.b16 %v8952
  %v10158 = vunpack.c.l.b16 %v8953
  %v10159 = vunpack.c.l.b16 %v8954
  %v10160 = vunpack.c.l.b16 %v8955
  %v10161 = vunpack.c.l.b16 %v8956
  %v10162 = vunpack.c.l.b16 %v8957
  %v10163 = vunpack.c.l.b16 %v8958
  %v10164 = vunpack.c.l.b16 %v8959
  %v10165 = vpack.c.b16 %v10150, %v10149
  %v10166 = vpack.c.b16 %v10152, %v10151
  %v10167 = vpack.c.b16 %v10154, %v10153
  %v10168 = vpack.c.b16 %v10156, %v10155
  %v10169 = vpack.c.b16 %v10158, %v10157
  %v10170 = vpack.c.b16 %v10160, %v10159
  %v10171 = vpack.c.b16 %v10162, %v10161
  %v10172 = vpack.c.b16 %v10164, %v10163
  %10181 = vmatpush.bf16.msra.mxu0 %v10172
  %10182 = vmatpush.bf16.msra.mxu0 %v10171
  %10183 = vmatpush.bf16.msra.mxu0 %v10170
  %10184 = vmatpush.bf16.msra.mxu0 %v10169
  %10185 = vmatpush.bf16.msra.mxu0 %v10168
  %10186 = vmatpush.bf16.msra.mxu0 %v10167
  %10187 = vmatpush.bf16.msra.mxu0 %v10166
  %10188 = vmatpush.bf16.msra.mxu0 %v10165
  %10189 = vmatmul.bf16.gmra.mxu0 %v8760
  %v10190 = vpop.f32.mrf.mxu0
  %v10191 = vadd.f32 0.0, %v10190
  %v10192 = vpop.f32.mrf.mxu0
  %10193 = vdwg.mxu0
  %v10210 = vunpack.c.l.b16 %v8960
  %v10211 = vunpack.c.l.b16 %v8961
  %v10212 = vunpack.c.l.b16 %v8962
  %v10213 = vunpack.c.l.b16 %v8963
  %v10214 = vunpack.c.l.b16 %v8964
  %v10215 = vunpack.c.l.b16 %v8965
  %v10216 = vunpack.c.l.b16 %v8966
  %v10217 = vunpack.c.l.b16 %v8967
  %v10218 = vunpack.c.l.b16 %v8968
  %v10219 = vunpack.c.l.b16 %v8969
  %v10220 = vunpack.c.l.b16 %v8970
  %v10221 = vunpack.c.l.b16 %v8971
  %v10222 = vunpack.c.l.b16 %v8972
  %v10223 = vunpack.c.l.b16 %v8973
  %v10224 = vunpack.c.l.b16 %v8974
  %v10225 = vunpack.c.l.b16 %v8975
  %v10226 = vpack.c.b16 %v10211, %v10210
  %v10227 = vpack.c.b16 %v10213, %v10212
  %v10228 = vpack.c.b16 %v10215, %v10214
  %v10229 = vpack.c.b16 %v10217, %v10216
  %v10230 = vpack.c.b16 %v10219, %v10218
  %v10231 = vpack.c.b16 %v10221, %v10220
  %v10232 = vpack.c.b16 %v10223, %v10222
  %v10233 = vpack.c.b16 %v10225, %v10224
  %10242 = vmatpush.bf16.msra.mxu0 %v10233
  %10243 = vmatpush.bf16.msra.mxu0 %v10232
  %10244 = vmatpush.bf16.msra.mxu0 %v10231
  %10245 = vmatpush.bf16.msra.mxu0 %v10230
  %10246 = vmatpush.bf16.msra.mxu0 %v10229
  %10247 = vmatpush.bf16.msra.mxu0 %v10228
  %10248 = vmatpush.bf16.msra.mxu0 %v10227
  %10249 = vmatpush.bf16.msra.mxu0 %v10226
  %10250 = vmatmul.bf16.gmra.mxu0 %v8761
  %v10251 = vpop.f32.mrf.mxu0
  %v10252 = vadd.f32 0.0, %v10251
  %v10253 = vpop.f32.mrf.mxu0
  %10254 = vdwg.mxu0
  %v10271 = vunpack.c.l.b16 %v8976
  %v10272 = vunpack.c.l.b16 %v8977
  %v10273 = vunpack.c.l.b16 %v8978
  %v10274 = vunpack.c.l.b16 %v8979
  %v10275 = vunpack.c.l.b16 %v8980
  %v10276 = vunpack.c.l.b16 %v8981
  %v10277 = vunpack.c.l.b16 %v8982
  %v10278 = vunpack.c.l.b16 %v8983
  %v10279 = vunpack.c.l.b16 %v8984
  %v10280 = vunpack.c.l.b16 %v8985
  %v10281 = vunpack.c.l.b16 %v8986
  %v10282 = vunpack.c.l.b16 %v8987
  %v10283 = vunpack.c.l.b16 %v8988
  %v10284 = vunpack.c.l.b16 %v8989
  %v10285 = vunpack.c.l.b16 %v8990
  %v10286 = vunpack.c.l.b16 %v8991
  %v10287 = vpack.c.b16 %v10272, %v10271
  %v10288 = vpack.c.b16 %v10274, %v10273
  %v10289 = vpack.c.b16 %v10276, %v10275
  %v10290 = vpack.c.b16 %v10278, %v10277
  %v10291 = vpack.c.b16 %v10280, %v10279
  %v10292 = vpack.c.b16 %v10282, %v10281
  %v10293 = vpack.c.b16 %v10284, %v10283
  %v10294 = vpack.c.b16 %v10286, %v10285
  %10303 = vmatpush.bf16.msra.mxu0 %v10294
  %10304 = vmatpush.bf16.msra.mxu0 %v10293
  %10305 = vmatpush.bf16.msra.mxu0 %v10292
  %10306 = vmatpush.bf16.msra.mxu0 %v10291
  %10307 = vmatpush.bf16.msra.mxu0 %v10290
  %10308 = vmatpush.bf16.msra.mxu0 %v10289
  %10309 = vmatpush.bf16.msra.mxu0 %v10288
  %10310 = vmatpush.bf16.msra.mxu0 %v10287
  %10311 = vmatmul.bf16.gmra.mxu0 %v8762
  %v10312 = vpop.f32.mrf.mxu0
  %v10313 = vadd.f32 0.0, %v10312
  %v10314 = vpop.f32.mrf.mxu0
  %10315 = vdwg.mxu0
  %v10332 = vunpack.c.l.b16 %v8992
  %v10333 = vunpack.c.l.b16 %v8993
  %v10334 = vunpack.c.l.b16 %v8994
  %v10335 = vunpack.c.l.b16 %v8995
  %v10336 = vunpack.c.l.b16 %v8996
  %v10337 = vunpack.c.l.b16 %v8997
  %v10338 = vunpack.c.l.b16 %v8998
  %v10339 = vunpack.c.l.b16 %v8999
  %v10340 = vunpack.c.l.b16 %v9000
  %v10341 = vunpack.c.l.b16 %v9001
  %v10342 = vunpack.c.l.b16 %v9002
  %v10343 = vunpack.c.l.b16 %v9003
  %v10344 = vunpack.c.l.b16 %v9004
  %v10345 = vunpack.c.l.b16 %v9005
  %v10346 = vunpack.c.l.b16 %v9006
  %v10347 = vunpack.c.l.b16 %v9007
  %v10348 = vpack.c.b16 %v10333, %v10332
  %v10349 = vpack.c.b16 %v10335, %v10334
  %v10350 = vpack.c.b16 %v10337, %v10336
  %v10351 = vpack.c.b16 %v10339, %v10338
  %v10352 = vpack.c.b16 %v10341, %v10340
  %v10353 = vpack.c.b16 %v10343, %v10342
  %v10354 = vpack.c.b16 %v10345, %v10344
  %v10355 = vpack.c.b16 %v10347, %v10346
  %10364 = vmatpush.bf16.msra.mxu0 %v10355
  %10365 = vmatpush.bf16.msra.mxu0 %v10354
  %10366 = vmatpush.bf16.msra.mxu0 %v10353
  %10367 = vmatpush.bf16.msra.mxu0 %v10352
  %10368 = vmatpush.bf16.msra.mxu0 %v10351
  %10369 = vmatpush.bf16.msra.mxu0 %v10350
  %10370 = vmatpush.bf16.msra.mxu0 %v10349
  %10371 = vmatpush.bf16.msra.mxu0 %v10348
  %10372 = vmatmul.bf16.gmra.mxu0 %v8763
  %v10373 = vpop.f32.mrf.mxu0
  %v10374 = vadd.f32 0.0, %v10373
  %v10375 = vpop.f32.mrf.mxu0
  %10376 = vdwg.mxu0
  %v10393 = vunpack.c.l.b16 %v9008
  %v10394 = vunpack.c.l.b16 %v9009
  %v10395 = vunpack.c.l.b16 %v9010
  %v10396 = vunpack.c.l.b16 %v9011
  %v10397 = vunpack.c.l.b16 %v9012
  %v10398 = vunpack.c.l.b16 %v9013
  %v10399 = vunpack.c.l.b16 %v9014
  %v10400 = vunpack.c.l.b16 %v9015
  %v10401 = vunpack.c.l.b16 %v9016
  %v10402 = vunpack.c.l.b16 %v9017
  %v10403 = vunpack.c.l.b16 %v9018
  %v10404 = vunpack.c.l.b16 %v9019
  %v10405 = vunpack.c.l.b16 %v9020
  %v10406 = vunpack.c.l.b16 %v9021
  %v10407 = vunpack.c.l.b16 %v9022
  %v10408 = vunpack.c.l.b16 %v9023
  %v10409 = vpack.c.b16 %v10394, %v10393
  %v10410 = vpack.c.b16 %v10396, %v10395
  %v10411 = vpack.c.b16 %v10398, %v10397
  %v10412 = vpack.c.b16 %v10400, %v10399
  %v10413 = vpack.c.b16 %v10402, %v10401
  %v10414 = vpack.c.b16 %v10404, %v10403
  %v10415 = vpack.c.b16 %v10406, %v10405
  %v10416 = vpack.c.b16 %v10408, %v10407
  %10425 = vmatpush.bf16.msra.mxu0 %v10416
  %10426 = vmatpush.bf16.msra.mxu0 %v10415
  %10427 = vmatpush.bf16.msra.mxu0 %v10414
  %10428 = vmatpush.bf16.msra.mxu0 %v10413
  %10429 = vmatpush.bf16.msra.mxu0 %v10412
  %10430 = vmatpush.bf16.msra.mxu0 %v10411
  %10431 = vmatpush.bf16.msra.mxu0 %v10410
  %10432 = vmatpush.bf16.msra.mxu0 %v10409
  %10433 = vmatmul.bf16.gmra.mxu0 %v8764
  %v10434 = vpop.f32.mrf.mxu0
  %v10435 = vadd.f32 0.0, %v10434
  %v10436 = vpop.f32.mrf.mxu0
  %10437 = vdwg.mxu0
  %v10454 = vunpack.c.l.b16 %v9024
  %v10455 = vunpack.c.l.b16 %v9025
  %v10456 = vunpack.c.l.b16 %v9026
  %v10457 = vunpack.c.l.b16 %v9027
  %v10458 = vunpack.c.l.b16 %v9028
  %v10459 = vunpack.c.l.b16 %v9029
  %v10460 = vunpack.c.l.b16 %v9030
  %v10461 = vunpack.c.l.b16 %v9031
  %v10462 = vunpack.c.l.b16 %v9032
  %v10463 = vunpack.c.l.b16 %v9033
  %v10464 = vunpack.c.l.b16 %v9034
  %v10465 = vunpack.c.l.b16 %v9035
  %v10466 = vunpack.c.l.b16 %v9036
  %v10467 = vunpack.c.l.b16 %v9037
  %v10468 = vunpack.c.l.b16 %v9038
  %v10469 = vunpack.c.l.b16 %v9039
  %v10470 = vpack.c.b16 %v10455, %v10454
  %v10471 = vpack.c.b16 %v10457, %v10456
  %v10472 = vpack.c.b16 %v10459, %v10458
  %v10473 = vpack.c.b16 %v10461, %v10460
  %v10474 = vpack.c.b16 %v10463, %v10462
  %v10475 = vpack.c.b16 %v10465, %v10464
  %v10476 = vpack.c.b16 %v10467, %v10466
  %v10477 = vpack.c.b16 %v10469, %v10468
  %10486 = vmatpush.bf16.msra.mxu0 %v10477
  %10487 = vmatpush.bf16.msra.mxu0 %v10476
  %10488 = vmatpush.bf16.msra.mxu0 %v10475
  %10489 = vmatpush.bf16.msra.mxu0 %v10474
  %10490 = vmatpush.bf16.msra.mxu0 %v10473
  %10491 = vmatpush.bf16.msra.mxu0 %v10472
  %10492 = vmatpush.bf16.msra.mxu0 %v10471
  %10493 = vmatpush.bf16.msra.mxu0 %v10470
  %10494 = vmatmul.bf16.gmra.mxu0 %v8765
  %v10495 = vpop.f32.mrf.mxu0
  %v10496 = vadd.f32 0.0, %v10495
  %v10497 = vpop.f32.mrf.mxu0
  %10498 = vdwg.mxu0
  %v10515 = vunpack.c.l.b16 %v9040
  %v10516 = vunpack.c.l.b16 %v9041
  %v10517 = vunpack.c.l.b16 %v9042
  %v10518 = vunpack.c.l.b16 %v9043
  %v10519 = vunpack.c.l.b16 %v9044
  %v10520 = vunpack.c.l.b16 %v9045
  %v10521 = vunpack.c.l.b16 %v9046
  %v10522 = vunpack.c.l.b16 %v9047
  %v10523 = vunpack.c.l.b16 %v9048
  %v10524 = vunpack.c.l.b16 %v9049
  %v10525 = vunpack.c.l.b16 %v9050
  %v10526 = vunpack.c.l.b16 %v9051
  %v10527 = vunpack.c.l.b16 %v9052
  %v10528 = vunpack.c.l.b16 %v9053
  %v10529 = vunpack.c.l.b16 %v9054
  %v10530 = vunpack.c.l.b16 %v9055
  %v10531 = vpack.c.b16 %v10516, %v10515
  %v10532 = vpack.c.b16 %v10518, %v10517
  %v10533 = vpack.c.b16 %v10520, %v10519
  %v10534 = vpack.c.b16 %v10522, %v10521
  %v10535 = vpack.c.b16 %v10524, %v10523
  %v10536 = vpack.c.b16 %v10526, %v10525
  %v10537 = vpack.c.b16 %v10528, %v10527
  %v10538 = vpack.c.b16 %v10530, %v10529
  %10547 = vmatpush.bf16.msra.mxu0 %v10538
  %10548 = vmatpush.bf16.msra.mxu0 %v10537
  %10549 = vmatpush.bf16.msra.mxu0 %v10536
  %10550 = vmatpush.bf16.msra.mxu0 %v10535
  %10551 = vmatpush.bf16.msra.mxu0 %v10534
  %10552 = vmatpush.bf16.msra.mxu0 %v10533
  %10553 = vmatpush.bf16.msra.mxu0 %v10532
  %10554 = vmatpush.bf16.msra.mxu0 %v10531
  %10555 = vmatmul.bf16.gmra.mxu0 %v8766
  %v10556 = vpop.f32.mrf.mxu0
  %v10557 = vadd.f32 0.0, %v10556
  %v10558 = vpop.f32.mrf.mxu0
  %10559 = vdwg.mxu0
  %v10576 = vunpack.c.l.b16 %v9056
  %v10577 = vunpack.c.l.b16 %v9057
  %v10578 = vunpack.c.l.b16 %v9058
  %v10579 = vunpack.c.l.b16 %v9059
  %v10580 = vunpack.c.l.b16 %v9060
  %v10581 = vunpack.c.l.b16 %v9061
  %v10582 = vunpack.c.l.b16 %v9062
  %v10583 = vunpack.c.l.b16 %v9063
  %v10584 = vunpack.c.l.b16 %v9064
  %v10585 = vunpack.c.l.b16 %v9065
  %v10586 = vunpack.c.l.b16 %v9066
  %v10587 = vunpack.c.l.b16 %v9067
  %v10588 = vunpack.c.l.b16 %v9068
  %v10589 = vunpack.c.l.b16 %v9069
  %v10590 = vunpack.c.l.b16 %v9070
  %v10591 = vunpack.c.l.b16 %v9071
  %v10592 = vpack.c.b16 %v10577, %v10576
  %v10593 = vpack.c.b16 %v10579, %v10578
  %v10594 = vpack.c.b16 %v10581, %v10580
  %v10595 = vpack.c.b16 %v10583, %v10582
  %v10596 = vpack.c.b16 %v10585, %v10584
  %v10597 = vpack.c.b16 %v10587, %v10586
  %v10598 = vpack.c.b16 %v10589, %v10588
  %v10599 = vpack.c.b16 %v10591, %v10590
  %10608 = vmatpush.bf16.msra.mxu0 %v10599
  %10609 = vmatpush.bf16.msra.mxu0 %v10598
  %10610 = vmatpush.bf16.msra.mxu0 %v10597
  %10611 = vmatpush.bf16.msra.mxu0 %v10596
  %10612 = vmatpush.bf16.msra.mxu0 %v10595
  %10613 = vmatpush.bf16.msra.mxu0 %v10594
  %10614 = vmatpush.bf16.msra.mxu0 %v10593
  %10615 = vmatpush.bf16.msra.mxu0 %v10592
  %10616 = vmatmul.bf16.gmra.mxu0 %v8767
  %v10617 = vpop.f32.mrf.mxu0
  %v10618 = vadd.f32 0.0, %v10617
  %v10619 = vpop.f32.mrf.mxu0
  %10620 = vdwg.mxu0
  %v10637 = vunpack.c.l.b16 %v9072
  %v10638 = vunpack.c.l.b16 %v9073
  %v10639 = vunpack.c.l.b16 %v9074
  %v10640 = vunpack.c.l.b16 %v9075
  %v10641 = vunpack.c.l.b16 %v9076
  %v10642 = vunpack.c.l.b16 %v9077
  %v10643 = vunpack.c.l.b16 %v9078
  %v10644 = vunpack.c.l.b16 %v9079
  %v10645 = vunpack.c.l.b16 %v9080
  %v10646 = vunpack.c.l.b16 %v9081
  %v10647 = vunpack.c.l.b16 %v9082
  %v10648 = vunpack.c.l.b16 %v9083
  %v10649 = vunpack.c.l.b16 %v9084
  %v10650 = vunpack.c.l.b16 %v9085
  %v10651 = vunpack.c.l.b16 %v9086
  %v10652 = vunpack.c.l.b16 %v9087
  %v10653 = vpack.c.b16 %v10638, %v10637
  %v10654 = vpack.c.b16 %v10640, %v10639
  %v10655 = vpack.c.b16 %v10642, %v10641
  %v10656 = vpack.c.b16 %v10644, %v10643
  %v10657 = vpack.c.b16 %v10646, %v10645
  %v10658 = vpack.c.b16 %v10648, %v10647
  %v10659 = vpack.c.b16 %v10650, %v10649
  %v10660 = vpack.c.b16 %v10652, %v10651
  %10669 = vmatpush.bf16.msra.mxu0 %v10660
  %10670 = vmatpush.bf16.msra.mxu0 %v10659
  %10671 = vmatpush.bf16.msra.mxu0 %v10658
  %10672 = vmatpush.bf16.msra.mxu0 %v10657
  %10673 = vmatpush.bf16.msra.mxu0 %v10656
  %10674 = vmatpush.bf16.msra.mxu0 %v10655
  %10675 = vmatpush.bf16.msra.mxu0 %v10654
  %10676 = vmatpush.bf16.msra.mxu0 %v10653
  %10677 = vmatmul.bf16.gmra.mxu0 %v8768
  %v10678 = vpop.f32.mrf.mxu0
  %v10679 = vadd.f32 0.0, %v10678
  %v10680 = vpop.f32.mrf.mxu0
  %10681 = vdwg.mxu0
  %v10698 = vunpack.c.l.b16 %v9088
  %v10699 = vunpack.c.l.b16 %v9089
  %v10700 = vunpack.c.l.b16 %v9090
  %v10701 = vunpack.c.l.b16 %v9091
  %v10702 = vunpack.c.l.b16 %v9092
  %v10703 = vunpack.c.l.b16 %v9093
  %v10704 = vunpack.c.l.b16 %v9094
  %v10705 = vunpack.c.l.b16 %v9095
  %v10706 = vunpack.c.l.b16 %v9096
  %v10707 = vunpack.c.l.b16 %v9097
  %v10708 = vunpack.c.l.b16 %v9098
  %v10709 = vunpack.c.l.b16 %v9099
  %v10710 = vunpack.c.l.b16 %v9100
  %v10711 = vunpack.c.l.b16 %v9101
  %v10712 = vunpack.c.l.b16 %v9102
  %v10713 = vunpack.c.l.b16 %v9103
  %v10714 = vpack.c.b16 %v10699, %v10698
  %v10715 = vpack.c.b16 %v10701, %v10700
  %v10716 = vpack.c.b16 %v10703, %v10702
  %v10717 = vpack.c.b16 %v10705, %v10704
  %v10718 = vpack.c.b16 %v10707, %v10706
  %v10719 = vpack.c.b16 %v10709, %v10708
  %v10720 = vpack.c.b16 %v10711, %v10710
  %v10721 = vpack.c.b16 %v10713, %v10712
  %10730 = vmatpush.bf16.msra.mxu0 %v10721
  %10731 = vmatpush.bf16.msra.mxu0 %v10720
  %10732 = vmatpush.bf16.msra.mxu0 %v10719
  %10733 = vmatpush.bf16.msra.mxu0 %v10718
  %10734 = vmatpush.bf16.msra.mxu0 %v10717
  %10735 = vmatpush.bf16.msra.mxu0 %v10716
  %10736 = vmatpush.bf16.msra.mxu0 %v10715
  %10737 = vmatpush.bf16.msra.mxu0 %v10714
  %10738 = vmatmul.bf16.gmra.mxu0 %v8769
  %v10739 = vpop.f32.mrf.mxu0
  %v10740 = vadd.f32 0.0, %v10739
  %v10741 = vpop.f32.mrf.mxu0
  %10742 = vdwg.mxu0
  %v10759 = vunpack.c.l.b16 %v9104
  %v10760 = vunpack.c.l.b16 %v9105
  %v10761 = vunpack.c.l.b16 %v9106
  %v10762 = vunpack.c.l.b16 %v9107
  %v10763 = vunpack.c.l.b16 %v9108
  %v10764 = vunpack.c.l.b16 %v9109
  %v10765 = vunpack.c.l.b16 %v9110
  %v10766 = vunpack.c.l.b16 %v9111
  %v10767 = vunpack.c.l.b16 %v9112
  %v10768 = vunpack.c.l.b16 %v9113
  %v10769 = vunpack.c.l.b16 %v9114
  %v10770 = vunpack.c.l.b16 %v9115
  %v10771 = vunpack.c.l.b16 %v9116
  %v10772 = vunpack.c.l.b16 %v9117
  %v10773 = vunpack.c.l.b16 %v9118
  %v10774 = vunpack.c.l.b16 %v9119
  %v10775 = vpack.c.b16 %v10760, %v10759
  %v10776 = vpack.c.b16 %v10762, %v10761
  %v10777 = vpack.c.b16 %v10764, %v10763
  %v10778 = vpack.c.b16 %v10766, %v10765
  %v10779 = vpack.c.b16 %v10768, %v10767
  %v10780 = vpack.c.b16 %v10770, %v10769
  %v10781 = vpack.c.b16 %v10772, %v10771
  %v10782 = vpack.c.b16 %v10774, %v10773
  %10791 = vmatpush.bf16.msra.mxu0 %v10782
  %10792 = vmatpush.bf16.msra.mxu0 %v10781
  %10793 = vmatpush.bf16.msra.mxu0 %v10780
  %10794 = vmatpush.bf16.msra.mxu0 %v10779
  %10795 = vmatpush.bf16.msra.mxu0 %v10778
  %10796 = vmatpush.bf16.msra.mxu0 %v10777
  %10797 = vmatpush.bf16.msra.mxu0 %v10776
  %10798 = vmatpush.bf16.msra.mxu0 %v10775
  %10799 = vmatmul.bf16.gmra.mxu0 %v8770
  %v10800 = vpop.f32.mrf.mxu0
  %v10801 = vadd.f32 0.0, %v10800
  %v10802 = vpop.f32.mrf.mxu0
  %10803 = vdwg.mxu0
  %v10820 = vunpack.c.l.b16 %v9120
  %v10821 = vunpack.c.l.b16 %v9121
  %v10822 = vunpack.c.l.b16 %v9122
  %v10823 = vunpack.c.l.b16 %v9123
  %v10824 = vunpack.c.l.b16 %v9124
  %v10825 = vunpack.c.l.b16 %v9125
  %v10826 = vunpack.c.l.b16 %v9126
  %v10827 = vunpack.c.l.b16 %v9127
  %v10828 = vunpack.c.l.b16 %v9128
  %v10829 = vunpack.c.l.b16 %v9129
  %v10830 = vunpack.c.l.b16 %v9130
  %v10831 = vunpack.c.l.b16 %v9131
  %v10832 = vunpack.c.l.b16 %v9132
  %v10833 = vunpack.c.l.b16 %v9133
  %v10834 = vunpack.c.l.b16 %v9134
  %v10835 = vunpack.c.l.b16 %v9135
  %v10836 = vpack.c.b16 %v10821, %v10820
  %v10837 = vpack.c.b16 %v10823, %v10822
  %v10838 = vpack.c.b16 %v10825, %v10824
  %v10839 = vpack.c.b16 %v10827, %v10826
  %v10840 = vpack.c.b16 %v10829, %v10828
  %v10841 = vpack.c.b16 %v10831, %v10830
  %v10842 = vpack.c.b16 %v10833, %v10832
  %v10843 = vpack.c.b16 %v10835, %v10834
  %10852 = vmatpush.bf16.msra.mxu0 %v10843
  %10853 = vmatpush.bf16.msra.mxu0 %v10842
  %10854 = vmatpush.bf16.msra.mxu0 %v10841
  %10855 = vmatpush.bf16.msra.mxu0 %v10840
  %10856 = vmatpush.bf16.msra.mxu0 %v10839
  %10857 = vmatpush.bf16.msra.mxu0 %v10838
  %10858 = vmatpush.bf16.msra.mxu0 %v10837
  %10859 = vmatpush.bf16.msra.mxu0 %v10836
  %10860 = vmatmul.bf16.gmra.mxu0 %v8771
  %v10861 = vpop.f32.mrf.mxu0
  %v10862 = vadd.f32 0.0, %v10861
  %v10863 = vpop.f32.mrf.mxu0
  %10864 = vdwg.mxu0
  %v10881 = vunpack.c.l.b16 %v9136
  %v10882 = vunpack.c.l.b16 %v9137
  %v10883 = vunpack.c.l.b16 %v9138
  %v10884 = vunpack.c.l.b16 %v9139
  %v10885 = vunpack.c.l.b16 %v9140
  %v10886 = vunpack.c.l.b16 %v9141
  %v10887 = vunpack.c.l.b16 %v9142
  %v10888 = vunpack.c.l.b16 %v9143
  %v10889 = vunpack.c.l.b16 %v9144
  %v10890 = vunpack.c.l.b16 %v9145
  %v10891 = vunpack.c.l.b16 %v9146
  %v10892 = vunpack.c.l.b16 %v9147
  %v10893 = vunpack.c.l.b16 %v9148
  %v10894 = vunpack.c.l.b16 %v9149
  %v10895 = vunpack.c.l.b16 %v9150
  %v10896 = vunpack.c.l.b16 %v9151
  %v10897 = vpack.c.b16 %v10882, %v10881
  %v10898 = vpack.c.b16 %v10884, %v10883
  %v10899 = vpack.c.b16 %v10886, %v10885
  %v10900 = vpack.c.b16 %v10888, %v10887
  %v10901 = vpack.c.b16 %v10890, %v10889
  %v10902 = vpack.c.b16 %v10892, %v10891
  %v10903 = vpack.c.b16 %v10894, %v10893
  %v10904 = vpack.c.b16 %v10896, %v10895
  %10913 = vmatpush.bf16.msra.mxu0 %v10904
  %10914 = vmatpush.bf16.msra.mxu0 %v10903
  %10915 = vmatpush.bf16.msra.mxu0 %v10902
  %10916 = vmatpush.bf16.msra.mxu0 %v10901
  %10917 = vmatpush.bf16.msra.mxu0 %v10900
  %10918 = vmatpush.bf16.msra.mxu0 %v10899
  %10919 = vmatpush.bf16.msra.mxu0 %v10898
  %10920 = vmatpush.bf16.msra.mxu0 %v10897
  %10921 = vmatmul.bf16.gmra.mxu0 %v8772
  %v10922 = vpop.f32.mrf.mxu0
  %v10923 = vadd.f32 0.0, %v10922
  %v10924 = vpop.f32.mrf.mxu0
  %10925 = vdwg.mxu0
  %v10942 = vunpack.c.l.b16 %v9152
  %v10943 = vunpack.c.l.b16 %v9153
  %v10944 = vunpack.c.l.b16 %v9154
  %v10945 = vunpack.c.l.b16 %v9155
  %v10946 = vunpack.c.l.b16 %v9156
  %v10947 = vunpack.c.l.b16 %v9157
  %v10948 = vunpack.c.l.b16 %v9158
  %v10949 = vunpack.c.l.b16 %v9159
  %v10950 = vunpack.c.l.b16 %v9160
  %v10951 = vunpack.c.l.b16 %v9161
  %v10952 = vunpack.c.l.b16 %v9162
  %v10953 = vunpack.c.l.b16 %v9163
  %v10954 = vunpack.c.l.b16 %v9164
  %v10955 = vunpack.c.l.b16 %v9165
  %v10956 = vunpack.c.l.b16 %v9166
  %v10957 = vunpack.c.l.b16 %v9167
  %v10958 = vpack.c.b16 %v10943, %v10942
  %v10959 = vpack.c.b16 %v10945, %v10944
  %v10960 = vpack.c.b16 %v10947, %v10946
  %v10961 = vpack.c.b16 %v10949, %v10948
  %v10962 = vpack.c.b16 %v10951, %v10950
  %v10963 = vpack.c.b16 %v10953, %v10952
  %v10964 = vpack.c.b16 %v10955, %v10954
  %v10965 = vpack.c.b16 %v10957, %v10956
  %10974 = vmatpush.bf16.msra.mxu0 %v10965
  %10975 = vmatpush.bf16.msra.mxu0 %v10964
  %10976 = vmatpush.bf16.msra.mxu0 %v10963
  %10977 = vmatpush.bf16.msra.mxu0 %v10962
  %10978 = vmatpush.bf16.msra.mxu0 %v10961
  %10979 = vmatpush.bf16.msra.mxu0 %v10960
  %10980 = vmatpush.bf16.msra.mxu0 %v10959
  %10981 = vmatpush.bf16.msra.mxu0 %v10958
  %10982 = vmatmul.bf16.gmra.mxu0 %v8773
  %v10983 = vpop.f32.mrf.mxu0
  %v10984 = vadd.f32 0.0, %v10983
  %v10985 = vpop.f32.mrf.mxu0
  %10986 = vdwg.mxu0
  %v11003 = vunpack.c.l.b16 %v9168
  %v11004 = vunpack.c.l.b16 %v9169
  %v11005 = vunpack.c.l.b16 %v9170
  %v11006 = vunpack.c.l.b16 %v9171
  %v11007 = vunpack.c.l.b16 %v9172
  %v11008 = vunpack.c.l.b16 %v9173
  %v11009 = vunpack.c.l.b16 %v9174
  %v11010 = vunpack.c.l.b16 %v9175
  %v11011 = vunpack.c.l.b16 %v9176
  %v11012 = vunpack.c.l.b16 %v9177
  %v11013 = vunpack.c.l.b16 %v9178
  %v11014 = vunpack.c.l.b16 %v9179
  %v11015 = vunpack.c.l.b16 %v9180
  %v11016 = vunpack.c.l.b16 %v9181
  %v11017 = vunpack.c.l.b16 %v9182
  %v11018 = vunpack.c.l.b16 %v9183
  %v11019 = vpack.c.b16 %v11004, %v11003
  %v11020 = vpack.c.b16 %v11006, %v11005
  %v11021 = vpack.c.b16 %v11008, %v11007
  %v11022 = vpack.c.b16 %v11010, %v11009
  %v11023 = vpack.c.b16 %v11012, %v11011
  %v11024 = vpack.c.b16 %v11014, %v11013
  %v11025 = vpack.c.b16 %v11016, %v11015
  %v11026 = vpack.c.b16 %v11018, %v11017
  %11035 = vmatpush.bf16.msra.mxu0 %v11026
  %11036 = vmatpush.bf16.msra.mxu0 %v11025
  %11037 = vmatpush.bf16.msra.mxu0 %v11024
  %11038 = vmatpush.bf16.msra.mxu0 %v11023
  %11039 = vmatpush.bf16.msra.mxu0 %v11022
  %11040 = vmatpush.bf16.msra.mxu0 %v11021
  %11041 = vmatpush.bf16.msra.mxu0 %v11020
  %11042 = vmatpush.bf16.msra.mxu0 %v11019
  %11043 = vmatmul.bf16.gmra.mxu0 %v8774
  %v11044 = vpop.f32.mrf.mxu0
  %v11045 = vadd.f32 0.0, %v11044
  %v11046 = vpop.f32.mrf.mxu0
  %11047 = vdwg.mxu0
  %v11064 = vunpack.c.l.b16 %v9184
  %v11065 = vunpack.c.l.b16 %v9185
  %v11066 = vunpack.c.l.b16 %v9186
  %v11067 = vunpack.c.l.b16 %v9187
  %v11068 = vunpack.c.l.b16 %v9188
  %v11069 = vunpack.c.l.b16 %v9189
  %v11070 = vunpack.c.l.b16 %v9190
  %v11071 = vunpack.c.l.b16 %v9191
  %v11072 = vunpack.c.l.b16 %v9192
  %v11073 = vunpack.c.l.b16 %v9193
  %v11074 = vunpack.c.l.b16 %v9194
  %v11075 = vunpack.c.l.b16 %v9195
  %v11076 = vunpack.c.l.b16 %v9196
  %v11077 = vunpack.c.l.b16 %v9197
  %v11078 = vunpack.c.l.b16 %v9198
  %v11079 = vunpack.c.l.b16 %v9199
  %v11080 = vpack.c.b16 %v11065, %v11064
  %v11081 = vpack.c.b16 %v11067, %v11066
  %v11082 = vpack.c.b16 %v11069, %v11068
  %v11083 = vpack.c.b16 %v11071, %v11070
  %v11084 = vpack.c.b16 %v11073, %v11072
  %v11085 = vpack.c.b16 %v11075, %v11074
  %v11086 = vpack.c.b16 %v11077, %v11076
  %v11087 = vpack.c.b16 %v11079, %v11078
  %11096 = vmatpush.bf16.msra.mxu0 %v11087
  %11097 = vmatpush.bf16.msra.mxu0 %v11086
  %11098 = vmatpush.bf16.msra.mxu0 %v11085
  %11099 = vmatpush.bf16.msra.mxu0 %v11084
  %11100 = vmatpush.bf16.msra.mxu0 %v11083
  %11101 = vmatpush.bf16.msra.mxu0 %v11082
  %11102 = vmatpush.bf16.msra.mxu0 %v11081
  %11103 = vmatpush.bf16.msra.mxu0 %v11080
  %11104 = vmatmul.bf16.gmra.mxu0 %v8775
  %v11105 = vpop.f32.mrf.mxu0
  %v11106 = vadd.f32 0.0, %v11105
  %v11107 = vpop.f32.mrf.mxu0
  %11108 = vdwg.mxu0
  %v11125 = vunpack.c.l.b16 %v9200
  %v11126 = vunpack.c.l.b16 %v9201
  %v11127 = vunpack.c.l.b16 %v9202
  %v11128 = vunpack.c.l.b16 %v9203
  %v11129 = vunpack.c.l.b16 %v9204
  %v11130 = vunpack.c.l.b16 %v9205
  %v11131 = vunpack.c.l.b16 %v9206
  %v11132 = vunpack.c.l.b16 %v9207
  %v11133 = vunpack.c.l.b16 %v9208
  %v11134 = vunpack.c.l.b16 %v9209
  %v11135 = vunpack.c.l.b16 %v9210
  %v11136 = vunpack.c.l.b16 %v9211
  %v11137 = vunpack.c.l.b16 %v9212
  %v11138 = vunpack.c.l.b16 %v9213
  %v11139 = vunpack.c.l.b16 %v9214
  %v11140 = vunpack.c.l.b16 %v9215
  %v11141 = vpack.c.b16 %v11126, %v11125
  %v11142 = vpack.c.b16 %v11128, %v11127
  %v11143 = vpack.c.b16 %v11130, %v11129
  %v11144 = vpack.c.b16 %v11132, %v11131
  %v11145 = vpack.c.b16 %v11134, %v11133
  %v11146 = vpack.c.b16 %v11136, %v11135
  %v11147 = vpack.c.b16 %v11138, %v11137
  %v11148 = vpack.c.b16 %v11140, %v11139
  %11157 = vmatpush.bf16.msra.mxu0 %v11148
  %11158 = vmatpush.bf16.msra.mxu0 %v11147
  %11159 = vmatpush.bf16.msra.mxu0 %v11146
  %11160 = vmatpush.bf16.msra.mxu0 %v11145
  %11161 = vmatpush.bf16.msra.mxu0 %v11144
  %11162 = vmatpush.bf16.msra.mxu0 %v11143
  %11163 = vmatpush.bf16.msra.mxu0 %v11142
  %11164 = vmatpush.bf16.msra.mxu0 %v11141
  %11165 = vmatmul.bf16.gmra.mxu0 %v8776
  %v11166 = vpop.f32.mrf.mxu0
  %v11167 = vadd.f32 0.0, %v11166
  %v11168 = vpop.f32.mrf.mxu0
  %11169 = vdwg.mxu0
  %v11186 = vunpack.c.l.b16 %v9216
  %v11187 = vunpack.c.l.b16 %v9217
  %v11188 = vunpack.c.l.b16 %v9218
  %v11189 = vunpack.c.l.b16 %v9219
  %v11190 = vunpack.c.l.b16 %v9220
  %v11191 = vunpack.c.l.b16 %v9221
  %v11192 = vunpack.c.l.b16 %v9222
  %v11193 = vunpack.c.l.b16 %v9223
  %v11194 = vunpack.c.l.b16 %v9224
  %v11195 = vunpack.c.l.b16 %v9225
  %v11196 = vunpack.c.l.b16 %v9226
  %v11197 = vunpack.c.l.b16 %v9227
  %v11198 = vunpack.c.l.b16 %v9228
  %v11199 = vunpack.c.l.b16 %v9229
  %v11200 = vunpack.c.l.b16 %v9230
  %v11201 = vunpack.c.l.b16 %v9231
  %v11202 = vpack.c.b16 %v11187, %v11186
  %v11203 = vpack.c.b16 %v11189, %v11188
  %v11204 = vpack.c.b16 %v11191, %v11190
  %v11205 = vpack.c.b16 %v11193, %v11192
  %v11206 = vpack.c.b16 %v11195, %v11194
  %v11207 = vpack.c.b16 %v11197, %v11196
  %v11208 = vpack.c.b16 %v11199, %v11198
  %v11209 = vpack.c.b16 %v11201, %v11200
  %11218 = vmatpush.bf16.msra.mxu0 %v11209
  %11219 = vmatpush.bf16.msra.mxu0 %v11208
  %11220 = vmatpush.bf16.msra.mxu0 %v11207
  %11221 = vmatpush.bf16.msra.mxu0 %v11206
  %11222 = vmatpush.bf16.msra.mxu0 %v11205
  %11223 = vmatpush.bf16.msra.mxu0 %v11204
  %11224 = vmatpush.bf16.msra.mxu0 %v11203
  %11225 = vmatpush.bf16.msra.mxu0 %v11202
  %11226 = vmatmul.bf16.gmra.mxu0 %v8777
  %v11227 = vpop.f32.mrf.mxu0
  %v11228 = vadd.f32 0.0, %v11227
  %v11229 = vpop.f32.mrf.mxu0
  %11230 = vdwg.mxu0
  %v11247 = vunpack.c.l.b16 %v9232
  %v11248 = vunpack.c.l.b16 %v9233
  %v11249 = vunpack.c.l.b16 %v9234
  %v11250 = vunpack.c.l.b16 %v9235
  %v11251 = vunpack.c.l.b16 %v9236
  %v11252 = vunpack.c.l.b16 %v9237
  %v11253 = vunpack.c.l.b16 %v9238
  %v11254 = vunpack.c.l.b16 %v9239
  %v11255 = vunpack.c.l.b16 %v9240
  %v11256 = vunpack.c.l.b16 %v9241
  %v11257 = vunpack.c.l.b16 %v9242
  %v11258 = vunpack.c.l.b16 %v9243
  %v11259 = vunpack.c.l.b16 %v9244
  %v11260 = vunpack.c.l.b16 %v9245
  %v11261 = vunpack.c.l.b16 %v9246
  %v11262 = vunpack.c.l.b16 %v9247
  %v11263 = vpack.c.b16 %v11248, %v11247
  %v11264 = vpack.c.b16 %v11250, %v11249
  %v11265 = vpack.c.b16 %v11252, %v11251
  %v11266 = vpack.c.b16 %v11254, %v11253
  %v11267 = vpack.c.b16 %v11256, %v11255
  %v11268 = vpack.c.b16 %v11258, %v11257
  %v11269 = vpack.c.b16 %v11260, %v11259
  %v11270 = vpack.c.b16 %v11262, %v11261
  %11279 = vmatpush.bf16.msra.mxu0 %v11270
  %11280 = vmatpush.bf16.msra.mxu0 %v11269
  %11281 = vmatpush.bf16.msra.mxu0 %v11268
  %11282 = vmatpush.bf16.msra.mxu0 %v11267
  %11283 = vmatpush.bf16.msra.mxu0 %v11266
  %11284 = vmatpush.bf16.msra.mxu0 %v11265
  %11285 = vmatpush.bf16.msra.mxu0 %v11264
  %11286 = vmatpush.bf16.msra.mxu0 %v11263
  %11287 = vmatmul.bf16.gmra.mxu0 %v8778
  %v11288 = vpop.f32.mrf.mxu0
  %v11289 = vadd.f32 0.0, %v11288
  %v11290 = vpop.f32.mrf.mxu0
  %11291 = vdwg.mxu0
  %v11308 = vunpack.c.l.b16 %v9248
  %v11309 = vunpack.c.l.b16 %v9249
  %v11310 = vunpack.c.l.b16 %v9250
  %v11311 = vunpack.c.l.b16 %v9251
  %v11312 = vunpack.c.l.b16 %v9252
  %v11313 = vunpack.c.l.b16 %v9253
  %v11314 = vunpack.c.l.b16 %v9254
  %v11315 = vunpack.c.l.b16 %v9255
  %v11316 = vunpack.c.l.b16 %v9256
  %v11317 = vunpack.c.l.b16 %v9257
  %v11318 = vunpack.c.l.b16 %v9258
  %v11319 = vunpack.c.l.b16 %v9259
  %v11320 = vunpack.c.l.b16 %v9260
  %v11321 = vunpack.c.l.b16 %v9261
  %v11322 = vunpack.c.l.b16 %v9262
  %v11323 = vunpack.c.l.b16 %v9263
  %v11324 = vpack.c.b16 %v11309, %v11308
  %v11325 = vpack.c.b16 %v11311, %v11310
  %v11326 = vpack.c.b16 %v11313, %v11312
  %v11327 = vpack.c.b16 %v11315, %v11314
  %v11328 = vpack.c.b16 %v11317, %v11316
  %v11329 = vpack.c.b16 %v11319, %v11318
  %v11330 = vpack.c.b16 %v11321, %v11320
  %v11331 = vpack.c.b16 %v11323, %v11322
  %11340 = vmatpush.bf16.msra.mxu0 %v11331
  %11341 = vmatpush.bf16.msra.mxu0 %v11330
  %11342 = vmatpush.bf16.msra.mxu0 %v11329
  %11343 = vmatpush.bf16.msra.mxu0 %v11328
  %11344 = vmatpush.bf16.msra.mxu0 %v11327
  %11345 = vmatpush.bf16.msra.mxu0 %v11326
  %11346 = vmatpush.bf16.msra.mxu0 %v11325
  %11347 = vmatpush.bf16.msra.mxu0 %v11324
  %11348 = vmatmul.bf16.gmra.mxu0 %v8779
  %v11349 = vpop.f32.mrf.mxu0
  %v11350 = vadd.f32 0.0, %v11349
  %v11351 = vpop.f32.mrf.mxu0
  %11352 = vdwg.mxu0
  %v11369 = vunpack.c.l.b16 %v9264
  %v11370 = vunpack.c.l.b16 %v9265
  %v11371 = vunpack.c.l.b16 %v9266
  %v11372 = vunpack.c.l.b16 %v9267
  %v11373 = vunpack.c.l.b16 %v9268
  %v11374 = vunpack.c.l.b16 %v9269
  %v11375 = vunpack.c.l.b16 %v9270
  %v11376 = vunpack.c.l.b16 %v9271
  %v11377 = vunpack.c.l.b16 %v9272
  %v11378 = vunpack.c.l.b16 %v9273
  %v11379 = vunpack.c.l.b16 %v9274
  %v11380 = vunpack.c.l.b16 %v9275
  %v11381 = vunpack.c.l.b16 %v9276
  %v11382 = vunpack.c.l.b16 %v9277
  %v11383 = vunpack.c.l.b16 %v9278
  %v11384 = vunpack.c.l.b16 %v9279
  %v11385 = vpack.c.b16 %v11370, %v11369
  %v11386 = vpack.c.b16 %v11372, %v11371
  %v11387 = vpack.c.b16 %v11374, %v11373
  %v11388 = vpack.c.b16 %v11376, %v11375
  %v11389 = vpack.c.b16 %v11378, %v11377
  %v11390 = vpack.c.b16 %v11380, %v11379
  %v11391 = vpack.c.b16 %v11382, %v11381
  %v11392 = vpack.c.b16 %v11384, %v11383
  %11401 = vmatpush.bf16.msra.mxu0 %v11392
  %11402 = vmatpush.bf16.msra.mxu0 %v11391
  %11403 = vmatpush.bf16.msra.mxu0 %v11390
  %11404 = vmatpush.bf16.msra.mxu0 %v11389
  %11405 = vmatpush.bf16.msra.mxu0 %v11388
  %11406 = vmatpush.bf16.msra.mxu0 %v11387
  %11407 = vmatpush.bf16.msra.mxu0 %v11386
  %11408 = vmatpush.bf16.msra.mxu0 %v11385
  %11409 = vmatmul.bf16.gmra.mxu0 %v8780
  %v11410 = vpop.f32.mrf.mxu0
  %v11411 = vadd.f32 0.0, %v11410
  %v11412 = vpop.f32.mrf.mxu0
  %11413 = vdwg.mxu0
  %v11430 = vunpack.c.l.b16 %v9280
  %v11431 = vunpack.c.l.b16 %v9281
  %v11432 = vunpack.c.l.b16 %v9282
  %v11433 = vunpack.c.l.b16 %v9283
  %v11434 = vunpack.c.l.b16 %v9284
  %v11435 = vunpack.c.l.b16 %v9285
  %v11436 = vunpack.c.l.b16 %v9286
  %v11437 = vunpack.c.l.b16 %v9287
  %v11438 = vunpack.c.l.b16 %v9288
  %v11439 = vunpack.c.l.b16 %v9289
  %v11440 = vunpack.c.l.b16 %v9290
  %v11441 = vunpack.c.l.b16 %v9291
  %v11442 = vunpack.c.l.b16 %v9292
  %v11443 = vunpack.c.l.b16 %v9293
  %v11444 = vunpack.c.l.b16 %v9294
  %v11445 = vunpack.c.l.b16 %v9295
  %v11446 = vpack.c.b16 %v11431, %v11430
  %v11447 = vpack.c.b16 %v11433, %v11432
  %v11448 = vpack.c.b16 %v11435, %v11434
  %v11449 = vpack.c.b16 %v11437, %v11436
  %v11450 = vpack.c.b16 %v11439, %v11438
  %v11451 = vpack.c.b16 %v11441, %v11440
  %v11452 = vpack.c.b16 %v11443, %v11442
  %v11453 = vpack.c.b16 %v11445, %v11444
  %11462 = vmatpush.bf16.msra.mxu0 %v11453
  %11463 = vmatpush.bf16.msra.mxu0 %v11452
  %11464 = vmatpush.bf16.msra.mxu0 %v11451
  %11465 = vmatpush.bf16.msra.mxu0 %v11450
  %11466 = vmatpush.bf16.msra.mxu0 %v11449
  %11467 = vmatpush.bf16.msra.mxu0 %v11448
  %11468 = vmatpush.bf16.msra.mxu0 %v11447
  %11469 = vmatpush.bf16.msra.mxu0 %v11446
  %11470 = vmatmul.bf16.gmra.mxu0 %v8781
  %v11471 = vpop.f32.mrf.mxu0
  %v11472 = vadd.f32 0.0, %v11471
  %v11473 = vpop.f32.mrf.mxu0
  %11474 = vdwg.mxu0
  %v11491 = vunpack.c.l.b16 %v9296
  %v11492 = vunpack.c.l.b16 %v9297
  %v11493 = vunpack.c.l.b16 %v9298
  %v11494 = vunpack.c.l.b16 %v9299
  %v11495 = vunpack.c.l.b16 %v9300
  %v11496 = vunpack.c.l.b16 %v9301
  %v11497 = vunpack.c.l.b16 %v9302
  %v11498 = vunpack.c.l.b16 %v9303
  %v11499 = vunpack.c.l.b16 %v9304
  %v11500 = vunpack.c.l.b16 %v9305
  %v11501 = vunpack.c.l.b16 %v9306
  %v11502 = vunpack.c.l.b16 %v9307
  %v11503 = vunpack.c.l.b16 %v9308
  %v11504 = vunpack.c.l.b16 %v9309
  %v11505 = vunpack.c.l.b16 %v9310
  %v11506 = vunpack.c.l.b16 %v9311
  %v11507 = vpack.c.b16 %v11492, %v11491
  %v11508 = vpack.c.b16 %v11494, %v11493
  %v11509 = vpack.c.b16 %v11496, %v11495
  %v11510 = vpack.c.b16 %v11498, %v11497
  %v11511 = vpack.c.b16 %v11500, %v11499
  %v11512 = vpack.c.b16 %v11502, %v11501
  %v11513 = vpack.c.b16 %v11504, %v11503
  %v11514 = vpack.c.b16 %v11506, %v11505
  %11523 = vmatpush.bf16.msra.mxu0 %v11514
  %11524 = vmatpush.bf16.msra.mxu0 %v11513
  %11525 = vmatpush.bf16.msra.mxu0 %v11512
  %11526 = vmatpush.bf16.msra.mxu0 %v11511
  %11527 = vmatpush.bf16.msra.mxu0 %v11510
  %11528 = vmatpush.bf16.msra.mxu0 %v11509
  %11529 = vmatpush.bf16.msra.mxu0 %v11508
  %11530 = vmatpush.bf16.msra.mxu0 %v11507
  %11531 = vmatmul.bf16.gmra.mxu0 %v8782
  %v11532 = vpop.f32.mrf.mxu0
  %v11533 = vadd.f32 0.0, %v11532
  %v11534 = vpop.f32.mrf.mxu0
  %11535 = vdwg.mxu0
  %v11552 = vunpack.c.l.b16 %v9312
  %v11553 = vunpack.c.l.b16 %v9313
  %v11554 = vunpack.c.l.b16 %v9314
  %v11555 = vunpack.c.l.b16 %v9315
  %v11556 = vunpack.c.l.b16 %v9316
  %v11557 = vunpack.c.l.b16 %v9317
  %v11558 = vunpack.c.l.b16 %v9318
  %v11559 = vunpack.c.l.b16 %v9319
  %v11560 = vunpack.c.l.b16 %v9320
  %v11561 = vunpack.c.l.b16 %v9321
  %v11562 = vunpack.c.l.b16 %v9322
  %v11563 = vunpack.c.l.b16 %v9323
  %v11564 = vunpack.c.l.b16 %v9324
  %v11565 = vunpack.c.l.b16 %v9325
  %v11566 = vunpack.c.l.b16 %v9326
  %v11567 = vunpack.c.l.b16 %v9327
  %v11568 = vpack.c.b16 %v11553, %v11552
  %v11569 = vpack.c.b16 %v11555, %v11554
  %v11570 = vpack.c.b16 %v11557, %v11556
  %v11571 = vpack.c.b16 %v11559, %v11558
  %v11572 = vpack.c.b16 %v11561, %v11560
  %v11573 = vpack.c.b16 %v11563, %v11562
  %v11574 = vpack.c.b16 %v11565, %v11564
  %v11575 = vpack.c.b16 %v11567, %v11566
  %11584 = vmatpush.bf16.msra.mxu0 %v11575
  %11585 = vmatpush.bf16.msra.mxu0 %v11574
  %11586 = vmatpush.bf16.msra.mxu0 %v11573
  %11587 = vmatpush.bf16.msra.mxu0 %v11572
  %11588 = vmatpush.bf16.msra.mxu0 %v11571
  %11589 = vmatpush.bf16.msra.mxu0 %v11570
  %11590 = vmatpush.bf16.msra.mxu0 %v11569
  %11591 = vmatpush.bf16.msra.mxu0 %v11568
  %11592 = vmatmul.bf16.gmra.mxu0 %v8783
  %v11593 = vpop.f32.mrf.mxu0
  %v11594 = vadd.f32 0.0, %v11593
  %v11595 = vpop.f32.mrf.mxu0
  %11596 = vdwg.mxu0
  %v11613 = vunpack.c.l.b16 %v9328
  %v11614 = vunpack.c.l.b16 %v9329
  %v11615 = vunpack.c.l.b16 %v9330
  %v11616 = vunpack.c.l.b16 %v9331
  %v11617 = vunpack.c.l.b16 %v9332
  %v11618 = vunpack.c.l.b16 %v9333
  %v11619 = vunpack.c.l.b16 %v9334
  %v11620 = vunpack.c.l.b16 %v9335
  %v11621 = vunpack.c.l.b16 %v9336
  %v11622 = vunpack.c.l.b16 %v9337
  %v11623 = vunpack.c.l.b16 %v9338
  %v11624 = vunpack.c.l.b16 %v9339
  %v11625 = vunpack.c.l.b16 %v9340
  %v11626 = vunpack.c.l.b16 %v9341
  %v11627 = vunpack.c.l.b16 %v9342
  %v11628 = vunpack.c.l.b16 %v9343
  %v11629 = vpack.c.b16 %v11614, %v11613
  %v11630 = vpack.c.b16 %v11616, %v11615
  %v11631 = vpack.c.b16 %v11618, %v11617
  %v11632 = vpack.c.b16 %v11620, %v11619
  %v11633 = vpack.c.b16 %v11622, %v11621
  %v11634 = vpack.c.b16 %v11624, %v11623
  %v11635 = vpack.c.b16 %v11626, %v11625
  %v11636 = vpack.c.b16 %v11628, %v11627
  %11645 = vmatpush.bf16.msra.mxu0 %v11636
  %11646 = vmatpush.bf16.msra.mxu0 %v11635
  %11647 = vmatpush.bf16.msra.mxu0 %v11634
  %11648 = vmatpush.bf16.msra.mxu0 %v11633
  %11649 = vmatpush.bf16.msra.mxu0 %v11632
  %11650 = vmatpush.bf16.msra.mxu0 %v11631
  %11651 = vmatpush.bf16.msra.mxu0 %v11630
  %11652 = vmatpush.bf16.msra.mxu0 %v11629
  %11653 = vmatmul.bf16.gmra.mxu0 %v8784
  %v11654 = vpop.f32.mrf.mxu0
  %v11655 = vadd.f32 0.0, %v11654
  %v11656 = vpop.f32.mrf.mxu0
  %11657 = vdwg.mxu0
  %v11674 = vunpack.c.l.b16 %v9344
  %v11675 = vunpack.c.l.b16 %v9345
  %v11676 = vunpack.c.l.b16 %v9346
  %v11677 = vunpack.c.l.b16 %v9347
  %v11678 = vunpack.c.l.b16 %v9348
  %v11679 = vunpack.c.l.b16 %v9349
  %v11680 = vunpack.c.l.b16 %v9350
  %v11681 = vunpack.c.l.b16 %v9351
  %v11682 = vunpack.c.l.b16 %v9352
  %v11683 = vunpack.c.l.b16 %v9353
  %v11684 = vunpack.c.l.b16 %v9354
  %v11685 = vunpack.c.l.b16 %v9355
  %v11686 = vunpack.c.l.b16 %v9356
  %v11687 = vunpack.c.l.b16 %v9357
  %v11688 = vunpack.c.l.b16 %v9358
  %v11689 = vunpack.c.l.b16 %v9359
  %v11690 = vpack.c.b16 %v11675, %v11674
  %v11691 = vpack.c.b16 %v11677, %v11676
  %v11692 = vpack.c.b16 %v11679, %v11678
  %v11693 = vpack.c.b16 %v11681, %v11680
  %v11694 = vpack.c.b16 %v11683, %v11682
  %v11695 = vpack.c.b16 %v11685, %v11684
  %v11696 = vpack.c.b16 %v11687, %v11686
  %v11697 = vpack.c.b16 %v11689, %v11688
  %11706 = vmatpush.bf16.msra.mxu0 %v11697
  %11707 = vmatpush.bf16.msra.mxu0 %v11696
  %11708 = vmatpush.bf16.msra.mxu0 %v11695
  %11709 = vmatpush.bf16.msra.mxu0 %v11694
  %11710 = vmatpush.bf16.msra.mxu0 %v11693
  %11711 = vmatpush.bf16.msra.mxu0 %v11692
  %11712 = vmatpush.bf16.msra.mxu0 %v11691
  %11713 = vmatpush.bf16.msra.mxu0 %v11690
  %11714 = vmatmul.bf16.gmra.mxu0 %v8785
  %v11715 = vpop.f32.mrf.mxu0
  %v11716 = vadd.f32 0.0, %v11715
  %v11717 = vpop.f32.mrf.mxu0
  %11718 = vdwg.mxu0
  %v11735 = vunpack.c.l.b16 %v9360
  %v11736 = vunpack.c.l.b16 %v9361
  %v11737 = vunpack.c.l.b16 %v9362
  %v11738 = vunpack.c.l.b16 %v9363
  %v11739 = vunpack.c.l.b16 %v9364
  %v11740 = vunpack.c.l.b16 %v9365
  %v11741 = vunpack.c.l.b16 %v9366
  %v11742 = vunpack.c.l.b16 %v9367
  %v11743 = vunpack.c.l.b16 %v9368
  %v11744 = vunpack.c.l.b16 %v9369
  %v11745 = vunpack.c.l.b16 %v9370
  %v11746 = vunpack.c.l.b16 %v9371
  %v11747 = vunpack.c.l.b16 %v9372
  %v11748 = vunpack.c.l.b16 %v9373
  %v11749 = vunpack.c.l.b16 %v9374
  %v11750 = vunpack.c.l.b16 %v9375
  %v11751 = vpack.c.b16 %v11736, %v11735
  %v11752 = vpack.c.b16 %v11738, %v11737
  %v11753 = vpack.c.b16 %v11740, %v11739
  %v11754 = vpack.c.b16 %v11742, %v11741
  %v11755 = vpack.c.b16 %v11744, %v11743
  %v11756 = vpack.c.b16 %v11746, %v11745
  %v11757 = vpack.c.b16 %v11748, %v11747
  %v11758 = vpack.c.b16 %v11750, %v11749
  %11767 = vmatpush.bf16.msra.mxu0 %v11758
  %11768 = vmatpush.bf16.msra.mxu0 %v11757
  %11769 = vmatpush.bf16.msra.mxu0 %v11756
  %11770 = vmatpush.bf16.msra.mxu0 %v11755
  %11771 = vmatpush.bf16.msra.mxu0 %v11754
  %11772 = vmatpush.bf16.msra.mxu0 %v11753
  %11773 = vmatpush.bf16.msra.mxu0 %v11752
  %11774 = vmatpush.bf16.msra.mxu0 %v11751
  %11775 = vmatmul.bf16.gmra.mxu0 %v8786
  %v11776 = vpop.f32.mrf.mxu0
  %v11777 = vadd.f32 0.0, %v11776
  %v11778 = vpop.f32.mrf.mxu0
  %11779 = vdwg.mxu0
  %v11796 = vunpack.c.l.b16 %v9376
  %v11797 = vunpack.c.l.b16 %v9377
  %v11798 = vunpack.c.l.b16 %v9378
  %v11799 = vunpack.c.l.b16 %v9379
  %v11800 = vunpack.c.l.b16 %v9380
  %v11801 = vunpack.c.l.b16 %v9381
  %v11802 = vunpack.c.l.b16 %v9382
  %v11803 = vunpack.c.l.b16 %v9383
  %v11804 = vunpack.c.l.b16 %v9384
  %v11805 = vunpack.c.l.b16 %v9385
  %v11806 = vunpack.c.l.b16 %v9386
  %v11807 = vunpack.c.l.b16 %v9387
  %v11808 = vunpack.c.l.b16 %v9388
  %v11809 = vunpack.c.l.b16 %v9389
  %v11810 = vunpack.c.l.b16 %v9390
  %v11811 = vunpack.c.l.b16 %v9391
  %v11812 = vpack.c.b16 %v11797, %v11796
  %v11813 = vpack.c.b16 %v11799, %v11798
  %v11814 = vpack.c.b16 %v11801, %v11800
  %v11815 = vpack.c.b16 %v11803, %v11802
  %v11816 = vpack.c.b16 %v11805, %v11804
  %v11817 = vpack.c.b16 %v11807, %v11806
  %v11818 = vpack.c.b16 %v11809, %v11808
  %v11819 = vpack.c.b16 %v11811, %v11810
  %11828 = vmatpush.bf16.msra.mxu0 %v11819
  %11829 = vmatpush.bf16.msra.mxu0 %v11818
  %11830 = vmatpush.bf16.msra.mxu0 %v11817
  %11831 = vmatpush.bf16.msra.mxu0 %v11816
  %11832 = vmatpush.bf16.msra.mxu0 %v11815
  %11833 = vmatpush.bf16.msra.mxu0 %v11814
  %11834 = vmatpush.bf16.msra.mxu0 %v11813
  %11835 = vmatpush.bf16.msra.mxu0 %v11812
  %11836 = vmatmul.bf16.gmra.mxu0 %v8787
  %v11837 = vpop.f32.mrf.mxu0
  %v11838 = vadd.f32 0.0, %v11837
  %v11839 = vpop.f32.mrf.mxu0
  %11840 = vdwg.mxu0
  %v11857 = vunpack.c.l.b16 %v9392
  %v11858 = vunpack.c.l.b16 %v9393
  %v11859 = vunpack.c.l.b16 %v9394
  %v11860 = vunpack.c.l.b16 %v9395
  %v11861 = vunpack.c.l.b16 %v9396
  %v11862 = vunpack.c.l.b16 %v9397
  %v11863 = vunpack.c.l.b16 %v9398
  %v11864 = vunpack.c.l.b16 %v9399
  %v11865 = vunpack.c.l.b16 %v9400
  %v11866 = vunpack.c.l.b16 %v9401
  %v11867 = vunpack.c.l.b16 %v9402
  %v11868 = vunpack.c.l.b16 %v9403
  %v11869 = vunpack.c.l.b16 %v9404
  %v11870 = vunpack.c.l.b16 %v9405
  %v11871 = vunpack.c.l.b16 %v9406
  %v11872 = vunpack.c.l.b16 %v9407
  %v11873 = vpack.c.b16 %v11858, %v11857
  %v11874 = vpack.c.b16 %v11860, %v11859
  %v11875 = vpack.c.b16 %v11862, %v11861
  %v11876 = vpack.c.b16 %v11864, %v11863
  %v11877 = vpack.c.b16 %v11866, %v11865
  %v11878 = vpack.c.b16 %v11868, %v11867
  %v11879 = vpack.c.b16 %v11870, %v11869
  %v11880 = vpack.c.b16 %v11872, %v11871
  %11889 = vmatpush.bf16.msra.mxu0 %v11880
  %11890 = vmatpush.bf16.msra.mxu0 %v11879
  %11891 = vmatpush.bf16.msra.mxu0 %v11878
  %11892 = vmatpush.bf16.msra.mxu0 %v11877
  %11893 = vmatpush.bf16.msra.mxu0 %v11876
  %11894 = vmatpush.bf16.msra.mxu0 %v11875
  %11895 = vmatpush.bf16.msra.mxu0 %v11874
  %11896 = vmatpush.bf16.msra.mxu0 %v11873
  %11897 = vmatmul.bf16.gmra.mxu0 %v8788
  %v11898 = vpop.f32.mrf.mxu0
  %v11899 = vadd.f32 0.0, %v11898
  %v11900 = vpop.f32.mrf.mxu0
  %11901 = vdwg.mxu0
  %v11918 = vunpack.c.l.b16 %v9408
  %v11919 = vunpack.c.l.b16 %v9409
  %v11920 = vunpack.c.l.b16 %v9410
  %v11921 = vunpack.c.l.b16 %v9411
  %v11922 = vunpack.c.l.b16 %v9412
  %v11923 = vunpack.c.l.b16 %v9413
  %v11924 = vunpack.c.l.b16 %v9414
  %v11925 = vunpack.c.l.b16 %v9415
  %v11926 = vunpack.c.l.b16 %v9416
  %v11927 = vunpack.c.l.b16 %v9417
  %v11928 = vunpack.c.l.b16 %v9418
  %v11929 = vunpack.c.l.b16 %v9419
  %v11930 = vunpack.c.l.b16 %v9420
  %v11931 = vunpack.c.l.b16 %v9421
  %v11932 = vunpack.c.l.b16 %v9422
  %v11933 = vunpack.c.l.b16 %v9423
  %v11934 = vpack.c.b16 %v11919, %v11918
  %v11935 = vpack.c.b16 %v11921, %v11920
  %v11936 = vpack.c.b16 %v11923, %v11922
  %v11937 = vpack.c.b16 %v11925, %v11924
  %v11938 = vpack.c.b16 %v11927, %v11926
  %v11939 = vpack.c.b16 %v11929, %v11928
  %v11940 = vpack.c.b16 %v11931, %v11930
  %v11941 = vpack.c.b16 %v11933, %v11932
  %11950 = vmatpush.bf16.msra.mxu0 %v11941
  %11951 = vmatpush.bf16.msra.mxu0 %v11940
  %11952 = vmatpush.bf16.msra.mxu0 %v11939
  %11953 = vmatpush.bf16.msra.mxu0 %v11938
  %11954 = vmatpush.bf16.msra.mxu0 %v11937
  %11955 = vmatpush.bf16.msra.mxu0 %v11936
  %11956 = vmatpush.bf16.msra.mxu0 %v11935
  %11957 = vmatpush.bf16.msra.mxu0 %v11934
  %11958 = vmatmul.bf16.gmra.mxu0 %v8789
  %v11959 = vpop.f32.mrf.mxu0
  %v11960 = vadd.f32 0.0, %v11959
  %v11961 = vpop.f32.mrf.mxu0
  %11962 = vdwg.mxu0
  %v11979 = vunpack.c.l.b16 %v9424
  %v11980 = vunpack.c.l.b16 %v9425
  %v11981 = vunpack.c.l.b16 %v9426
  %v11982 = vunpack.c.l.b16 %v9427
  %v11983 = vunpack.c.l.b16 %v9428
  %v11984 = vunpack.c.l.b16 %v9429
  %v11985 = vunpack.c.l.b16 %v9430
  %v11986 = vunpack.c.l.b16 %v9431
  %v11987 = vunpack.c.l.b16 %v9432
  %v11988 = vunpack.c.l.b16 %v9433
  %v11989 = vunpack.c.l.b16 %v9434
  %v11990 = vunpack.c.l.b16 %v9435
  %v11991 = vunpack.c.l.b16 %v9436
  %v11992 = vunpack.c.l.b16 %v9437
  %v11993 = vunpack.c.l.b16 %v9438
  %v11994 = vunpack.c.l.b16 %v9439
  %v11995 = vpack.c.b16 %v11980, %v11979
  %v11996 = vpack.c.b16 %v11982, %v11981
  %v11997 = vpack.c.b16 %v11984, %v11983
  %v11998 = vpack.c.b16 %v11986, %v11985
  %v11999 = vpack.c.b16 %v11988, %v11987
  %v12000 = vpack.c.b16 %v11990, %v11989
  %v12001 = vpack.c.b16 %v11992, %v11991
  %v12002 = vpack.c.b16 %v11994, %v11993
  %12011 = vmatpush.bf16.msra.mxu0 %v12002
  %12012 = vmatpush.bf16.msra.mxu0 %v12001
  %12013 = vmatpush.bf16.msra.mxu0 %v12000
  %12014 = vmatpush.bf16.msra.mxu0 %v11999
  %12015 = vmatpush.bf16.msra.mxu0 %v11998
  %12016 = vmatpush.bf16.msra.mxu0 %v11997
  %12017 = vmatpush.bf16.msra.mxu0 %v11996
  %12018 = vmatpush.bf16.msra.mxu0 %v11995
  %12019 = vmatmul.bf16.gmra.mxu0 %v8790
  %v12020 = vpop.f32.mrf.mxu0
  %v12021 = vadd.f32 0.0, %v12020
  %v12022 = vpop.f32.mrf.mxu0
  %12023 = vdwg.mxu0
  %v12040 = vunpack.c.l.b16 %v9440
  %v12041 = vunpack.c.l.b16 %v9441
  %v12042 = vunpack.c.l.b16 %v9442
  %v12043 = vunpack.c.l.b16 %v9443
  %v12044 = vunpack.c.l.b16 %v9444
  %v12045 = vunpack.c.l.b16 %v9445
  %v12046 = vunpack.c.l.b16 %v9446
  %v12047 = vunpack.c.l.b16 %v9447
  %v12048 = vunpack.c.l.b16 %v9448
  %v12049 = vunpack.c.l.b16 %v9449
  %v12050 = vunpack.c.l.b16 %v9450
  %v12051 = vunpack.c.l.b16 %v9451
  %v12052 = vunpack.c.l.b16 %v9452
  %v12053 = vunpack.c.l.b16 %v9453
  %v12054 = vunpack.c.l.b16 %v9454
  %v12055 = vunpack.c.l.b16 %v9455
  %v12056 = vpack.c.b16 %v12041, %v12040
  %v12057 = vpack.c.b16 %v12043, %v12042
  %v12058 = vpack.c.b16 %v12045, %v12044
  %v12059 = vpack.c.b16 %v12047, %v12046
  %v12060 = vpack.c.b16 %v12049, %v12048
  %v12061 = vpack.c.b16 %v12051, %v12050
  %v12062 = vpack.c.b16 %v12053, %v12052
  %v12063 = vpack.c.b16 %v12055, %v12054
  %12072 = vmatpush.bf16.msra.mxu0 %v12063
  %12073 = vmatpush.bf16.msra.mxu0 %v12062
  %12074 = vmatpush.bf16.msra.mxu0 %v12061
  %12075 = vmatpush.bf16.msra.mxu0 %v12060
  %12076 = vmatpush.bf16.msra.mxu0 %v12059
  %12077 = vmatpush.bf16.msra.mxu0 %v12058
  %12078 = vmatpush.bf16.msra.mxu0 %v12057
  %12079 = vmatpush.bf16.msra.mxu0 %v12056
  %12080 = vmatmul.bf16.gmra.mxu0 %v8791
  %v12081 = vpop.f32.mrf.mxu0
  %v12082 = vadd.f32 0.0, %v12081
  %v12083 = vpop.f32.mrf.mxu0
  %12084 = vdwg.mxu0
  %v12101 = vunpack.c.l.b16 %v9456
  %v12102 = vunpack.c.l.b16 %v9457
  %v12103 = vunpack.c.l.b16 %v9458
  %v12104 = vunpack.c.l.b16 %v9459
  %v12105 = vunpack.c.l.b16 %v9460
  %v12106 = vunpack.c.l.b16 %v9461
  %v12107 = vunpack.c.l.b16 %v9462
  %v12108 = vunpack.c.l.b16 %v9463
  %v12109 = vunpack.c.l.b16 %v9464
  %v12110 = vunpack.c.l.b16 %v9465
  %v12111 = vunpack.c.l.b16 %v9466
  %v12112 = vunpack.c.l.b16 %v9467
  %v12113 = vunpack.c.l.b16 %v9468
  %v12114 = vunpack.c.l.b16 %v9469
  %v12115 = vunpack.c.l.b16 %v9470
  %v12116 = vunpack.c.l.b16 %v9471
  %v12117 = vpack.c.b16 %v12102, %v12101
  %v12118 = vpack.c.b16 %v12104, %v12103
  %v12119 = vpack.c.b16 %v12106, %v12105
  %v12120 = vpack.c.b16 %v12108, %v12107
  %v12121 = vpack.c.b16 %v12110, %v12109
  %v12122 = vpack.c.b16 %v12112, %v12111
  %v12123 = vpack.c.b16 %v12114, %v12113
  %v12124 = vpack.c.b16 %v12116, %v12115
  %12133 = vmatpush.bf16.msra.mxu0 %v12124
  %12134 = vmatpush.bf16.msra.mxu0 %v12123
  %12135 = vmatpush.bf16.msra.mxu0 %v12122
  %12136 = vmatpush.bf16.msra.mxu0 %v12121
  %12137 = vmatpush.bf16.msra.mxu0 %v12120
  %12138 = vmatpush.bf16.msra.mxu0 %v12119
  %12139 = vmatpush.bf16.msra.mxu0 %v12118
  %12140 = vmatpush.bf16.msra.mxu0 %v12117
  %12141 = vmatmul.bf16.gmra.mxu0 %v8792
  %v12142 = vpop.f32.mrf.mxu0
  %v12143 = vadd.f32 0.0, %v12142
  %v12144 = vpop.f32.mrf.mxu0
  %12145 = vdwg.mxu0
  %v12162 = vunpack.c.l.b16 %v9472
  %v12163 = vunpack.c.l.b16 %v9473
  %v12164 = vunpack.c.l.b16 %v9474
  %v12165 = vunpack.c.l.b16 %v9475
  %v12166 = vunpack.c.l.b16 %v9476
  %v12167 = vunpack.c.l.b16 %v9477
  %v12168 = vunpack.c.l.b16 %v9478
  %v12169 = vunpack.c.l.b16 %v9479
  %v12170 = vunpack.c.l.b16 %v9480
  %v12171 = vunpack.c.l.b16 %v9481
  %v12172 = vunpack.c.l.b16 %v9482
  %v12173 = vunpack.c.l.b16 %v9483
  %v12174 = vunpack.c.l.b16 %v9484
  %v12175 = vunpack.c.l.b16 %v9485
  %v12176 = vunpack.c.l.b16 %v9486
  %v12177 = vunpack.c.l.b16 %v9487
  %v12178 = vpack.c.b16 %v12163, %v12162
  %v12179 = vpack.c.b16 %v12165, %v12164
  %v12180 = vpack.c.b16 %v12167, %v12166
  %v12181 = vpack.c.b16 %v12169, %v12168
  %v12182 = vpack.c.b16 %v12171, %v12170
  %v12183 = vpack.c.b16 %v12173, %v12172
  %v12184 = vpack.c.b16 %v12175, %v12174
  %v12185 = vpack.c.b16 %v12177, %v12176
  %12194 = vmatpush.bf16.msra.mxu0 %v12185
  %12195 = vmatpush.bf16.msra.mxu0 %v12184
  %12196 = vmatpush.bf16.msra.mxu0 %v12183
  %12197 = vmatpush.bf16.msra.mxu0 %v12182
  %12198 = vmatpush.bf16.msra.mxu0 %v12181
  %12199 = vmatpush.bf16.msra.mxu0 %v12180
  %12200 = vmatpush.bf16.msra.mxu0 %v12179
  %12201 = vmatpush.bf16.msra.mxu0 %v12178
  %12202 = vmatmul.bf16.gmra.mxu0 %v8793
  %v12203 = vpop.f32.mrf.mxu0
  %v12204 = vadd.f32 0.0, %v12203
  %v12205 = vpop.f32.mrf.mxu0
  %12206 = vdwg.mxu0
  %v12223 = vunpack.c.l.b16 %v9488
  %v12224 = vunpack.c.l.b16 %v9489
  %v12225 = vunpack.c.l.b16 %v9490
  %v12226 = vunpack.c.l.b16 %v9491
  %v12227 = vunpack.c.l.b16 %v9492
  %v12228 = vunpack.c.l.b16 %v9493
  %v12229 = vunpack.c.l.b16 %v9494
  %v12230 = vunpack.c.l.b16 %v9495
  %v12231 = vunpack.c.l.b16 %v9496
  %v12232 = vunpack.c.l.b16 %v9497
  %v12233 = vunpack.c.l.b16 %v9498
  %v12234 = vunpack.c.l.b16 %v9499
  %v12235 = vunpack.c.l.b16 %v9500
  %v12236 = vunpack.c.l.b16 %v9501
  %v12237 = vunpack.c.l.b16 %v9502
  %v12238 = vunpack.c.l.b16 %v9503
  %v12239 = vpack.c.b16 %v12224, %v12223
  %v12240 = vpack.c.b16 %v12226, %v12225
  %v12241 = vpack.c.b16 %v12228, %v12227
  %v12242 = vpack.c.b16 %v12230, %v12229
  %v12243 = vpack.c.b16 %v12232, %v12231
  %v12244 = vpack.c.b16 %v12234, %v12233
  %v12245 = vpack.c.b16 %v12236, %v12235
  %v12246 = vpack.c.b16 %v12238, %v12237
  %12255 = vmatpush.bf16.msra.mxu0 %v12246
  %12256 = vmatpush.bf16.msra.mxu0 %v12245
  %12257 = vmatpush.bf16.msra.mxu0 %v12244
  %12258 = vmatpush.bf16.msra.mxu0 %v12243
  %12259 = vmatpush.bf16.msra.mxu0 %v12242
  %12260 = vmatpush.bf16.msra.mxu0 %v12241
  %12261 = vmatpush.bf16.msra.mxu0 %v12240
  %12262 = vmatpush.bf16.msra.mxu0 %v12239
  %12263 = vmatmul.bf16.gmra.mxu0 %v8794
  %v12264 = vpop.f32.mrf.mxu0
  %v12265 = vadd.f32 0.0, %v12264
  %v12266 = vpop.f32.mrf.mxu0
  %12267 = vdwg.mxu0
  %v12284 = vunpack.c.l.b16 %v9504
  %v12285 = vunpack.c.l.b16 %v9505
  %v12286 = vunpack.c.l.b16 %v9506
  %v12287 = vunpack.c.l.b16 %v9507
  %v12288 = vunpack.c.l.b16 %v9508
  %v12289 = vunpack.c.l.b16 %v9509
  %v12290 = vunpack.c.l.b16 %v9510
  %v12291 = vunpack.c.l.b16 %v9511
  %v12292 = vunpack.c.l.b16 %v9512
  %v12293 = vunpack.c.l.b16 %v9513
  %v12294 = vunpack.c.l.b16 %v9514
  %v12295 = vunpack.c.l.b16 %v9515
  %v12296 = vunpack.c.l.b16 %v9516
  %v12297 = vunpack.c.l.b16 %v9517
  %v12298 = vunpack.c.l.b16 %v9518
  %v12299 = vunpack.c.l.b16 %v9519
  %v12300 = vpack.c.b16 %v12285, %v12284
  %v12301 = vpack.c.b16 %v12287, %v12286
  %v12302 = vpack.c.b16 %v12289, %v12288
  %v12303 = vpack.c.b16 %v12291, %v12290
  %v12304 = vpack.c.b16 %v12293, %v12292
  %v12305 = vpack.c.b16 %v12295, %v12294
  %v12306 = vpack.c.b16 %v12297, %v12296
  %v12307 = vpack.c.b16 %v12299, %v12298
  %12316 = vmatpush.bf16.msra.mxu0 %v12307
  %12317 = vmatpush.bf16.msra.mxu0 %v12306
  %12318 = vmatpush.bf16.msra.mxu0 %v12305
  %12319 = vmatpush.bf16.msra.mxu0 %v12304
  %12320 = vmatpush.bf16.msra.mxu0 %v12303
  %12321 = vmatpush.bf16.msra.mxu0 %v12302
  %12322 = vmatpush.bf16.msra.mxu0 %v12301
  %12323 = vmatpush.bf16.msra.mxu0 %v12300
  %12324 = vmatmul.bf16.gmra.mxu0 %v8795
  %v12325 = vpop.f32.mrf.mxu0
  %v12326 = vadd.f32 0.0, %v12325
  %v12327 = vpop.f32.mrf.mxu0
  %12328 = vdwg.mxu0
  %v12345 = vunpack.c.l.b16 %v9520
  %v12346 = vunpack.c.l.b16 %v9521
  %v12347 = vunpack.c.l.b16 %v9522
  %v12348 = vunpack.c.l.b16 %v9523
  %v12349 = vunpack.c.l.b16 %v9524
  %v12350 = vunpack.c.l.b16 %v9525
  %v12351 = vunpack.c.l.b16 %v9526
  %v12352 = vunpack.c.l.b16 %v9527
  %v12353 = vunpack.c.l.b16 %v9528
  %v12354 = vunpack.c.l.b16 %v9529
  %v12355 = vunpack.c.l.b16 %v9530
  %v12356 = vunpack.c.l.b16 %v9531
  %v12357 = vunpack.c.l.b16 %v9532
  %v12358 = vunpack.c.l.b16 %v9533
  %v12359 = vunpack.c.l.b16 %v9534
  %v12360 = vunpack.c.l.b16 %v9535
  %v12361 = vpack.c.b16 %v12346, %v12345
  %v12362 = vpack.c.b16 %v12348, %v12347
  %v12363 = vpack.c.b16 %v12350, %v12349
  %v12364 = vpack.c.b16 %v12352, %v12351
  %v12365 = vpack.c.b16 %v12354, %v12353
  %v12366 = vpack.c.b16 %v12356, %v12355
  %v12367 = vpack.c.b16 %v12358, %v12357
  %v12368 = vpack.c.b16 %v12360, %v12359
  %12377 = vmatpush.bf16.msra.mxu0 %v12368
  %12378 = vmatpush.bf16.msra.mxu0 %v12367
  %12379 = vmatpush.bf16.msra.mxu0 %v12366
  %12380 = vmatpush.bf16.msra.mxu0 %v12365
  %12381 = vmatpush.bf16.msra.mxu0 %v12364
  %12382 = vmatpush.bf16.msra.mxu0 %v12363
  %12383 = vmatpush.bf16.msra.mxu0 %v12362
  %12384 = vmatpush.bf16.msra.mxu0 %v12361
  %12385 = vmatmul.bf16.gmra.mxu0 %v8796
  %v12386 = vpop.f32.mrf.mxu0
  %v12387 = vadd.f32 0.0, %v12386
  %v12388 = vpop.f32.mrf.mxu0
  %12389 = vdwg.mxu0
  %v12406 = vunpack.c.l.b16 %v9536
  %v12407 = vunpack.c.l.b16 %v9537
  %v12408 = vunpack.c.l.b16 %v9538
  %v12409 = vunpack.c.l.b16 %v9539
  %v12410 = vunpack.c.l.b16 %v9540
  %v12411 = vunpack.c.l.b16 %v9541
  %v12412 = vunpack.c.l.b16 %v9542
  %v12413 = vunpack.c.l.b16 %v9543
  %v12414 = vunpack.c.l.b16 %v9544
  %v12415 = vunpack.c.l.b16 %v9545
  %v12416 = vunpack.c.l.b16 %v9546
  %v12417 = vunpack.c.l.b16 %v9547
  %v12418 = vunpack.c.l.b16 %v9548
  %v12419 = vunpack.c.l.b16 %v9549
  %v12420 = vunpack.c.l.b16 %v9550
  %v12421 = vunpack.c.l.b16 %v9551
  %v12422 = vpack.c.b16 %v12407, %v12406
  %v12423 = vpack.c.b16 %v12409, %v12408
  %v12424 = vpack.c.b16 %v12411, %v12410
  %v12425 = vpack.c.b16 %v12413, %v12412
  %v12426 = vpack.c.b16 %v12415, %v12414
  %v12427 = vpack.c.b16 %v12417, %v12416
  %v12428 = vpack.c.b16 %v12419, %v12418
  %v12429 = vpack.c.b16 %v12421, %v12420
  %12438 = vmatpush.bf16.msra.mxu0 %v12429
  %12439 = vmatpush.bf16.msra.mxu0 %v12428
  %12440 = vmatpush.bf16.msra.mxu0 %v12427
  %12441 = vmatpush.bf16.msra.mxu0 %v12426
  %12442 = vmatpush.bf16.msra.mxu0 %v12425
  %12443 = vmatpush.bf16.msra.mxu0 %v12424
  %12444 = vmatpush.bf16.msra.mxu0 %v12423
  %12445 = vmatpush.bf16.msra.mxu0 %v12422
  %12446 = vmatmul.bf16.gmra.mxu0 %v8797
  %v12447 = vpop.f32.mrf.mxu0
  %v12448 = vadd.f32 0.0, %v12447
  %v12449 = vpop.f32.mrf.mxu0
  %12450 = vdwg.mxu0
  %v12467 = vunpack.c.l.b16 %v9552
  %v12468 = vunpack.c.l.b16 %v9553
  %v12469 = vunpack.c.l.b16 %v9554
  %v12470 = vunpack.c.l.b16 %v9555
  %v12471 = vunpack.c.l.b16 %v9556
  %v12472 = vunpack.c.l.b16 %v9557
  %v12473 = vunpack.c.l.b16 %v9558
  %v12474 = vunpack.c.l.b16 %v9559
  %v12475 = vunpack.c.l.b16 %v9560
  %v12476 = vunpack.c.l.b16 %v9561
  %v12477 = vunpack.c.l.b16 %v9562
  %v12478 = vunpack.c.l.b16 %v9563
  %v12479 = vunpack.c.l.b16 %v9564
  %v12480 = vunpack.c.l.b16 %v9565
  %v12481 = vunpack.c.l.b16 %v9566
  %v12482 = vunpack.c.l.b16 %v9567
  %v12483 = vpack.c.b16 %v12468, %v12467
  %v12484 = vpack.c.b16 %v12470, %v12469
  %v12485 = vpack.c.b16 %v12472, %v12471
  %v12486 = vpack.c.b16 %v12474, %v12473
  %v12487 = vpack.c.b16 %v12476, %v12475
  %v12488 = vpack.c.b16 %v12478, %v12477
  %v12489 = vpack.c.b16 %v12480, %v12479
  %v12490 = vpack.c.b16 %v12482, %v12481
  %12499 = vmatpush.bf16.msra.mxu0 %v12490
  %12500 = vmatpush.bf16.msra.mxu0 %v12489
  %12501 = vmatpush.bf16.msra.mxu0 %v12488
  %12502 = vmatpush.bf16.msra.mxu0 %v12487
  %12503 = vmatpush.bf16.msra.mxu0 %v12486
  %12504 = vmatpush.bf16.msra.mxu0 %v12485
  %12505 = vmatpush.bf16.msra.mxu0 %v12484
  %12506 = vmatpush.bf16.msra.mxu0 %v12483
  %12507 = vmatmul.bf16.gmra.mxu0 %v8798
  %v12508 = vpop.f32.mrf.mxu0
  %v12509 = vadd.f32 0.0, %v12508
  %v12510 = vpop.f32.mrf.mxu0
  %12511 = vdwg.mxu0
  %v12528 = vunpack.c.l.b16 %v9568
  %v12529 = vunpack.c.l.b16 %v9569
  %v12530 = vunpack.c.l.b16 %v9570
  %v12531 = vunpack.c.l.b16 %v9571
  %v12532 = vunpack.c.l.b16 %v9572
  %v12533 = vunpack.c.l.b16 %v9573
  %v12534 = vunpack.c.l.b16 %v9574
  %v12535 = vunpack.c.l.b16 %v9575
  %v12536 = vunpack.c.l.b16 %v9576
  %v12537 = vunpack.c.l.b16 %v9577
  %v12538 = vunpack.c.l.b16 %v9578
  %v12539 = vunpack.c.l.b16 %v9579
  %v12540 = vunpack.c.l.b16 %v9580
  %v12541 = vunpack.c.l.b16 %v9581
  %v12542 = vunpack.c.l.b16 %v9582
  %v12543 = vunpack.c.l.b16 %v9583
  %v12544 = vpack.c.b16 %v12529, %v12528
  %v12545 = vpack.c.b16 %v12531, %v12530
  %v12546 = vpack.c.b16 %v12533, %v12532
  %v12547 = vpack.c.b16 %v12535, %v12534
  %v12548 = vpack.c.b16 %v12537, %v12536
  %v12549 = vpack.c.b16 %v12539, %v12538
  %v12550 = vpack.c.b16 %v12541, %v12540
  %v12551 = vpack.c.b16 %v12543, %v12542
  %12560 = vmatpush.bf16.msra.mxu0 %v12551
  %12561 = vmatpush.bf16.msra.mxu0 %v12550
  %12562 = vmatpush.bf16.msra.mxu0 %v12549
  %12563 = vmatpush.bf16.msra.mxu0 %v12548
  %12564 = vmatpush.bf16.msra.mxu0 %v12547
  %12565 = vmatpush.bf16.msra.mxu0 %v12546
  %12566 = vmatpush.bf16.msra.mxu0 %v12545
  %12567 = vmatpush.bf16.msra.mxu0 %v12544
  %12568 = vmatmul.bf16.gmra.mxu0 %v8799
  %v12569 = vpop.f32.mrf.mxu0
  %v12570 = vadd.f32 0.0, %v12569
  %v12571 = vpop.f32.mrf.mxu0
  %12572 = vdwg.mxu0
  %v12573 = vadd.f32 %v9642, %v9703
  %v12574 = vadd.f32 %v12573, %v9764
  %v12575 = vadd.f32 %v12574, %v9825
  %v12576 = vadd.f32 %v12575, %v9886
  %v12577 = vadd.f32 %v12576, %v9947
  %v12578 = vadd.f32 %v12577, %v10008
  %v12579 = vadd.f32 %v12578, %v10069
  %v12580 = vadd.f32 %v12579, %v10130
  %v12581 = vadd.f32 %v12580, %v10191
  %v12582 = vadd.f32 %v12581, %v10252
  %v12583 = vadd.f32 %v12582, %v10313
  %v12584 = vadd.f32 %v12583, %v10374
  %v12585 = vadd.f32 %v12584, %v10435
  %v12586 = vadd.f32 %v12585, %v10496
  %v12587 = vadd.f32 %v12586, %v10557
  %v12588 = vadd.f32 %v12587, %v10618
  %v12589 = vadd.f32 %v12588, %v10679
  %v12590 = vadd.f32 %v12589, %v10740
  %v12591 = vadd.f32 %v12590, %v10801
  %v12592 = vadd.f32 %v12591, %v10862
  %v12593 = vadd.f32 %v12592, %v10923
  %v12594 = vadd.f32 %v12593, %v10984
  %v12595 = vadd.f32 %v12594, %v11045
  %v12596 = vadd.f32 %v12595, %v11106
  %v12597 = vadd.f32 %v12596, %v11167
  %v12598 = vadd.f32 %v12597, %v11228
  %v12599 = vadd.f32 %v12598, %v11289
  %v12600 = vadd.f32 %v12599, %v11350
  %v12601 = vadd.f32 %v12600, %v11411
  %v12602 = vadd.f32 %v12601, %v11472
  %v12603 = vadd.f32 %v12602, %v11533
  %v12604 = vadd.f32 %v12603, %v11594
  %v12605 = vadd.f32 %v12604, %v11655
  %v12606 = vadd.f32 %v12605, %v11716
  %v12607 = vadd.f32 %v12606, %v11777
  %v12608 = vadd.f32 %v12607, %v11838
  %v12609 = vadd.f32 %v12608, %v11899
  %v12610 = vadd.f32 %v12609, %v11960
  %v12611 = vadd.f32 %v12610, %v12021
  %v12612 = vadd.f32 %v12611, %v12082
  %v12613 = vadd.f32 %v12612, %v12143
  %v12614 = vadd.f32 %v12613, %v12204
  %v12615 = vadd.f32 %v12614, %v12265
  %v12616 = vadd.f32 %v12615, %v12326
  %v12617 = vadd.f32 %v12616, %v12387
  %v12618 = vadd.f32 %v12617, %v12448
  %v12619 = vadd.f32 %v12618, %v12509
  %v12620 = vadd.f32 %v12619, %v12570
  %v12621 = vld [vmem:[%s6] sm:$0x1]
  %v12623 = vperm.slane %v12621, 0
  %v12625 = vadd.f32 %v12620, %v12623
  %v12626 = vmax.f32 %v12625, 0.0
  %v12627 = vpack.c.bf16 %v12626, %v12626
  %v12628 = vld [vmem:[%s7] sm:$0xf]
  %v12629 = vld [vmem:[%s7 + $0x4] sm:$0xf]
  %v12630 = vld [vmem:[%s7 + $0x8] sm:$0xf]
  %v12631 = vld [vmem:[%s7 + $0xc] sm:$0xf]
  %v12632 = vld [vmem:[%s7 + $0x10] sm:$0xf]
  %v12633 = vld [vmem:[%s7 + $0x14] sm:$0xf]
  %v12634 = vld [vmem:[%s7 + $0x18] sm:$0xf]
  %v12635 = vld [vmem:[%s7 + $0x1c] sm:$0xf]
  %v12636 = vld [vmem:[%s7 + $0x20] sm:$0xf]
  %v12637 = vld [vmem:[%s7 + $0x24] sm:$0xf]
  %v12638 = vld [vmem:[%s7 + $0x28] sm:$0xf]
  %v12639 = vld [vmem:[%s7 + $0x2c] sm:$0xf]
  %v12640 = vld [vmem:[%s7 + $0x30] sm:$0xf]
  %v12641 = vld [vmem:[%s7 + $0x34] sm:$0xf]
  %v12642 = vld [vmem:[%s7 + $0x38] sm:$0xf]
  %v12643 = vld [vmem:[%s7 + $0x3c] sm:$0xf]
  %v12644 = vld [vmem:[%s8] sm:$0x1]
  %v12646 = vperm.slane %v12644, 0
  %v12664 = vunpack.c.l.b16 %v12628
  %v12665 = vunpack.c.l.b16 %v12629
  %v12666 = vunpack.c.l.b16 %v12630
  %v12667 = vunpack.c.l.b16 %v12631
  %v12668 = vunpack.c.l.b16 %v12632
  %v12669 = vunpack.c.l.b16 %v12633
  %v12670 = vunpack.c.l.b16 %v12634
  %v12671 = vunpack.c.l.b16 %v12635
  %v12672 = vunpack.c.l.b16 %v12636
  %v12673 = vunpack.c.l.b16 %v12637
  %v12674 = vunpack.c.l.b16 %v12638
  %v12675 = vunpack.c.l.b16 %v12639
  %v12676 = vunpack.c.l.b16 %v12640
  %v12677 = vunpack.c.l.b16 %v12641
  %v12678 = vunpack.c.l.b16 %v12642
  %v12679 = vunpack.c.l.b16 %v12643
  %v12680 = vpack.c.b16 %v12665, %v12664
  %v12681 = vpack.c.b16 %v12667, %v12666
  %v12682 = vpack.c.b16 %v12669, %v12668
  %v12683 = vpack.c.b16 %v12671, %v12670
  %v12684 = vpack.c.b16 %v12673, %v12672
  %v12685 = vpack.c.b16 %v12675, %v12674
  %v12686 = vpack.c.b16 %v12677, %v12676
  %v12687 = vpack.c.b16 %v12679, %v12678
  %12696 = vmatpush.bf16.msra.mxu0 %v12687
  %12697 = vmatpush.bf16.msra.mxu0 %v12686
  %12698 = vmatpush.bf16.msra.mxu0 %v12685
  %12699 = vmatpush.bf16.msra.mxu0 %v12684
  %12700 = vmatpush.bf16.msra.mxu0 %v12683
  %12701 = vmatpush.bf16.msra.mxu0 %v12682
  %12702 = vmatpush.bf16.msra.mxu0 %v12681
  %12703 = vmatpush.bf16.msra.mxu0 %v12680
  %12704 = vmatmul.bf16.gmra.mxu0 %v12627
  %v12705 = vpop.f32.mrf.mxu0
  %v12706 = vadd.f32 %v12646, %v12705
  %v12707 = vpop.f32.mrf.mxu0
  %12708 = vdwg.mxu0
  %12709 = vst [vmem:[%s9] sm:$0xff] %v12706
  // Predicated region
  $region38: #{clf_img_forward.1} parent=0 // pred_check
    _
  $region39: #{clf_img_forward.1} parent=0 // pred_check_branch
    %12711 = sbr.rel (0) target = $region41
  $region40: #{clf_img_forward.1} parent=0 // pred_region
    _
  $region41: #{clf_img_forward.1} parent=0 // pred_fallthru
    _
  // Predicated region
  $region42: #{clf_img_forward.1} parent=0 // pred_check
    _
  $region43: #{clf_img_forward.1} parent=0 // pred_check_branch
    %12713 = sbr.rel (0) target = $region45
  $region44: #{clf_img_forward.1} parent=0 // pred_region
    _
  $region45: #{clf_img_forward.1} parent=0 // pred_fallthru
    _

</llo_original>
